<compile_context>
chip_gen: v7x
topology: tpu7x:2x2x1
jax: 0.10.0
libtpu: 0.0.40
codegen_flags: <defaults>
</compile_context>

<pallas_src>
import jax
import jax.numpy as jnp
import numpy as np
from jax.experimental import pallas as pl
from jax.experimental.pallas import tpu as pltpu

_HI = jax.lax.Precision.HIGHEST


def _mxu_bf16(a, b_bf16):
    # native single-pass MXU: bf16 x bf16 -> f32 accumulate
    return jnp.dot(a.astype(jnp.bfloat16), b_bf16,
                   preferred_element_type=jnp.float32)


def _dot_f32(a, b):
    # small, exponent-sensitive dots kept in full f32
    return jnp.dot(a, b, precision=_HI, preferred_element_type=jnp.float32)


def _softplus(x):
    return jnp.maximum(x, 0.0) + jnp.log1p(jnp.exp(-jnp.abs(x)))


def mamba_kernel(x_ref, in_w_ref, in_b_ref, conv_w_ref, conv_b_ref,
                 xp_ts_ref, xp_bc_ref, dt_w_ref, dt_b_ref, a_ref, d_ref,
                 out_w_ref, out_b_ref,
                 o_ref,
                 conv_scr, state_scr, dt_scr, du_scr, bc_scr, y_scr):
    c = pl.program_id(1)          # sequence-chunk index (sequential axis)
    lt = x_ref.shape[1]           # L_tile
    I = d_ref.shape[1]            # intermediate_size
    N = a_ref.shape[0]            # ssm_state_size
    K = conv_w_ref.shape[0]       # conv kernel size
    halo = K - 1

    # ---- per-sequence init / carry of conv halo + SSM state across chunks ---
    @pl.when(c == 0)
    def _():
        conv_scr[0:halo, :] = jnp.zeros((halo, I), jnp.float32)
        state_scr[...] = jnp.zeros_like(state_scr)

    @pl.when(c > 0)
    def _():
        # last (K-1) conv-input rows of the previous chunk become the halo
        conv_scr[0:halo, :] = conv_scr[lt:lt + halo, :]

    x = x_ref[0]                                               # (lt, H)

    # ---- fused in_proj: one (H, 2I) bf16 matmul, then static slices ---------
    hg = _mxu_bf16(x, in_w_ref[...]) + in_b_ref[...]           # (lt, 2I) f32
    h = hg[:, :I]                                              # hidden
    gate = hg[:, I:]                                           # gate

    # ---- causal depthwise conv1d via halo scratch ----------------------------
    # TODO(synk): if the k>0 taps materialize relayout copies at production I,
    # switch to pltpu.roll on the sublane axis (XLU slot is idle here).
    conv_scr[halo:halo + lt, :] = h
    acc = jnp.broadcast_to(conv_b_ref[...], (lt, I)).astype(jnp.float32)
    for k in range(K):                                          # static K taps
        acc = acc + conv_scr[k:k + lt, :] * conv_w_ref[k:k + 1, :]
    hc = acc * jax.nn.sigmoid(acc)                              # SiLU, (lt, I)

    # ---- x_proj (ts part f32, BC part bf16) + dt_proj + softplus ------------
    ts = _dot_f32(hc, xp_ts_ref[...])                           # (lt, R)  f32
    bc = _mxu_bf16(hc, xp_bc_ref[...])                          # (lt, 2N) = [B|C]
    dt = _softplus(_dot_f32(ts, dt_w_ref[...]) + dt_b_ref[...])  # (lt, I) f32

    dt_scr[...] = dt
    du_scr[...] = dt * hc
    bc_scr[...] = bc

    A = a_ref[...]                                              # (N, I) = -exp(A_log).T

    # small identity used to transpose an (8, 2N) slab on the MXU
    rid = jax.lax.broadcasted_iota(jnp.int32, (8, 8), 0)
    cid = jax.lax.broadcasted_iota(jnp.int32, (8, 8), 1)
    eye8 = (rid == cid).astype(jnp.float32)

    # ---- selective scan: 8-step blocks, lane-dense (N, I) state -------------
    nblk = lt // 8

    def blk(j, state):
        t0 = pl.multiple_of(j * 8, 8)
        dt_blk = dt_scr[pl.ds(t0, 8), :]                        # (8, I) aligned
        du_blk = du_scr[pl.ds(t0, 8), :]                        # (8, I) aligned
        bc_blk = bc_scr[pl.ds(t0, 8), :]                        # (8, 2N) aligned
        # transpose (8, 2N) -> (2N, 8) once per block via tiny MXU identity dot
        bct = jax.lax.dot_general(
            bc_blk, eye8, (((0,), (0,)), ((), ())),
            precision=_HI, preferred_element_type=jnp.float32)  # (2N, 8)
        rows = []
        for s in range(8):                                      # unrolled 8 steps
            dt_row = dt_blk[s:s + 1, :]                         # (1, I)
            du_row = du_blk[s:s + 1, :]                         # (1, I)
            b_col = bct[:N, s:s + 1]                            # (N, 1)
            c_col = bct[N:, s:s + 1]                            # (N, 1)
            dA = jnp.exp(A * dt_row)                            # (N, I)
            state = dA * state + du_row * b_col                 # (N, I)
            rows.append(jnp.sum(state * c_col, axis=0, keepdims=True))  # (1, I)
        y_scr[pl.ds(t0, 8), :] = jnp.concatenate(rows, axis=0)  # one (8, I) store
        return state

    state = jax.lax.fori_loop(0, nblk, blk, state_scr[...], unroll=True)
    state_scr[...] = state                                      # carry to next chunk

    # ---- skip (D), gating, out_proj ------------------------------------------
    y = y_scr[...]
    so = (y + hc * d_ref[...]) * (gate * jax.nn.sigmoid(gate))  # (lt, I)
    out = _mxu_bf16(so, out_w_ref[...]) + out_b_ref[...]        # (lt, H)
    o_ref[0] = out.astype(o_ref.dtype)


def _pick_l_tile(L, target):
    best = None
    t = 8
    while t <= min(L, target):
        if L % t == 0:
            best = t
        t += 8
    return best


def mamba_forward(x, params, l_tile=None, single_buffer_weights=True):
    B, L, H = x.shape
    I = params['D'].shape[0]
    N = params['A_log'].shape[1]
    R = params['dt_w'].shape[1]
    K = params['conv_w'].shape[-1]

    if l_tile is None:
        target = 128
        try:
            kind = jax.devices()[0].device_kind.lower()
            if 'v6' in kind or 'v7' in kind:
                target = 256   # match 256-wide MXU on v6e/v7x
        except Exception:
            pass
        l_tile = _pick_l_tile(L, target)
    assert l_tile is not None and L % l_tile == 0 and l_tile % 8 == 0
    C = L // l_tile

    f32, bf16 = jnp.float32, jnp.bfloat16
    in_w = params['in_w'].astype(f32)            # (2I, H)
    xproj_w = params['xproj_w'].astype(f32)      # (R + 2N, I)

    # host-side weight prep: fused/pre-transposed, heavy matmul weights in bf16,
    # dt-path + scan constants in f32, A = -exp(A_log) in lane-dense (N, I).
    prep = [
        in_w.T.astype(bf16),                         # in_w    (H, 2I)   bf16
        params['in_b'].reshape(1, 2 * I).astype(f32),  # in_b  (1, 2I)
        params['conv_w'][:, 0, :].T.astype(f32),     # conv_w  (K, I)
        params['conv_b'].reshape(1, I).astype(f32),  # conv_b  (1, I)
        xproj_w[:R, :].T.astype(f32),                # xp_ts   (I, R)    f32
        xproj_w[R:, :].T.astype(bf16),               # xp_bc   (I, 2N)   bf16
        params['dt_w'].T.astype(f32),                # dt_w    (R, I)    f32
        params['dt_b'].reshape(1, I).astype(f32),    # dt_b    (1, I)
        (-jnp.exp(params['A_log'].astype(f32))).T,   # A       (N, I)
        params['D'].reshape(1, I).astype(f32),       # D       (1, I)
        params['out_w'].T.astype(bf16),              # out_w   (I, H)    bf16
        params['out_b'].reshape(1, H).astype(f32),   # out_b   (1, H)
    ]

    # weights: constant index_map -> single-buffer them (halves weight VMEM)
    w_kwargs = {}
    if single_buffer_weights:
        w_kwargs = dict(pipeline_mode=pl.Buffered(1))

    in_specs = [pl.BlockSpec((1, l_tile, H), lambda b, c: (b, c, 0))]
    for p in prep:
        in_specs.append(pl.BlockSpec(p.shape, lambda b, c: (0, 0), **w_kwargs))

    scratch = [
        pltpu.VMEM((l_tile + K - 1, I), f32),   # conv halo + conv-input rows
        pltpu.VMEM((N, I), f32),                # SSM state (lane-dense)
        pltpu.VMEM((l_tile, I), f32),           # dt
        pltpu.VMEM((l_tile, I), f32),           # dt * u
        pltpu.VMEM((l_tile, 2 * N), f32),       # [B | C]
        pltpu.VMEM((l_tile, I), f32),           # scan outputs y
    ]

    # explicit VMEM budget: weights (+buffering) + scratch + I/O blocks + headroom
    def nbytes(a):
        return int(np.prod(a.shape)) * a.dtype.itemsize
    w_bufs = 1 if single_buffer_weights else 2
    weight_bytes = sum(nbytes(p) for p in prep) * w_bufs
    scratch_bytes = 4 * ((l_tile + K - 1) * I + N * I + 3 * l_tile * I
                         + l_tile * 2 * N)
    io_bytes = 2 * 2 * l_tile * H * x.dtype.itemsize
    vmem_limit = int(1.25 * (weight_bytes + scratch_bytes + io_bytes)) + (4 << 20)
    vmem_limit = min(max(vmem_limit, 32 << 20), 96 << 20)   # v7x: only 64 MiB physical

    return pl.pallas_call(
        mamba_kernel,
        out_shape=jax.ShapeDtypeStruct((B, L, H), x.dtype),
        grid_spec=pltpu.PrefetchScalarGridSpec(
            num_scalar_prefetch=0,
            grid=(B, C),
            in_specs=in_specs,
            out_specs=pl.BlockSpec((1, l_tile, H), lambda b, c: (b, c, 0)),
            scratch_shapes=scratch),
        compiler_params=pltpu.CompilerParams(
            # NOTE: seq-chunk axis must stay "arbitrary" (VMEM-carried state/halo)
            dimension_semantics=("parallel", "arbitrary"),
            vmem_limit_bytes=vmem_limit),
    )(x, *prep)


# ------------------------- pure-JAX reference --------------------------------
def mamba_ref(x, p):
    I = p['D'].shape[0]
    N = p['A_log'].shape[1]
    R = p['dt_w'].shape[1]
    K = p['conv_w'].shape[-1]
    Bsz, L, H = x.shape

    proj = jnp.einsum('blh,ph->blp', x, p['in_w'], precision=_HI) + p['in_b']
    h, gate = proj[..., :I], proj[..., I:]

    w = p['conv_w'][:, 0, :]                                    # (I, K)
    hp = jnp.pad(h, ((0, 0), (K - 1, 0), (0, 0)))
    conv = jnp.zeros((Bsz, L, I), jnp.float32) + p['conv_b']
    for k in range(K):
        conv = conv + hp[:, k:k + L, :] * w[:, k]
    hc = conv * jax.nn.sigmoid(conv)

    ssm = jnp.einsum('bli,pi->blp', hc, p['xproj_w'], precision=_HI)
    ts, Bm, Cm = ssm[..., :R], ssm[..., R:R + N], ssm[..., R + N:]
    dt = _softplus(jnp.einsum('blr,ir->bli', ts, p['dt_w'], precision=_HI)
                   + p['dt_b'])
    A = -jnp.exp(p['A_log'])                                    # (I, N)

    state = jnp.zeros((Bsz, I, N), jnp.float32)
    ys = []
    for t in range(L):
        dA = jnp.exp(dt[:, t, :, None] * A[None])
        state = dA * state + (dt[:, t, :, None] * Bm[:, t, None, :]
                              * hc[:, t, :, None])
        ys.append(jnp.einsum('bin,bn->bi', state, Cm[:, t], precision=_HI))
    y = jnp.stack(ys, axis=1)
    so = (y + hc * p['D']) * (gate * jax.nn.sigmoid(gate))
    return jnp.einsum('bli,hi->blh', so, p['out_w'], precision=_HI) + p['out_b']


if __name__ == "__main__":
    # small shapes consistent with the module's forward
    B, L, H = 2, 16, 32
    I, N, R, K = 64, 16, 8, 4

    key = jax.random.PRNGKey(0)
    ks = jax.random.split(key, 10)

    def rnd(k, shape, scale=1.0):
        v = jax.random.normal(k, shape, jnp.float32) * scale
        # checkpoint-style bf16-representable parameters (kernel stores the
        # heavy projection weights in bf16)
        return v.astype(jnp.bfloat16).astype(jnp.float32)

    def bf16r(v):
        return v.astype(jnp.bfloat16).astype(jnp.float32)

    # parameters in PyTorch layouts
    params = {
        'in_w':    rnd(ks[0], (2 * I, H), 1.0 / H ** 0.5),
        'in_b':    rnd(ks[1], (2 * I,), 0.1),
        'conv_w':  rnd(ks[2], (I, 1, K), 1.0 / K ** 0.5),
        'conv_b':  rnd(ks[3], (I,), 0.1),
        'xproj_w': rnd(ks[4], (R + 2 * N, I), 1.0 / I ** 0.5),
        'dt_w':    rnd(ks[5], (I, R), 1.0 / R ** 0.5),
        'dt_b':    rnd(ks[6], (I,), 0.1),
        'A_log':   bf16r(jnp.log(jnp.broadcast_to(
            jnp.arange(1, N + 1, dtype=jnp.float32)[None, :], (I, N)))),
        'D':       jnp.ones((I,), jnp.float32),
        'out_w':   rnd(ks[7], (H, I), 1.0 / I ** 0.5),
        'out_b':   rnd(ks[8], (H,), 0.1),
    }

    x = jax.random.normal(ks[9], (B, L, H), jnp.float32)

    try:
        # l_tile=8 -> 2 seq chunks, exercises the halo / state carry
        out = jax.block_until_ready(mamba_forward(x, params, l_tile=8))
    except Exception:
        # fallback if single-buffered weights (pl.Buffered(1)) are rejected
        out = jax.block_until_ready(
            mamba_forward(x, params, l_tile=8, single_buffer_weights=False))

    ref = mamba_ref(x, params)
    assert out.shape == (B, L, H)
    np.testing.assert_allclose(np.asarray(out), np.asarray(ref),
                               rtol=3e-2, atol=3e-2)
    print("KERNEL_OK")
</pallas_src>

<mosaic_0001>
module attributes {stable_mosaic.version = 11 : i64} {
  func.func @mamba_kernel(%arg0: i32, %arg1: i32, %arg2: memref<1x8x32xf32, #tpu.memory_space<vmem>>, %arg3: memref<32x128xbf16, #tpu.memory_space<vmem>>, %arg4: memref<1x128xf32, #tpu.memory_space<vmem>>, %arg5: memref<4x64xf32, #tpu.memory_space<vmem>>, %arg6: memref<1x64xf32, #tpu.memory_space<vmem>>, %arg7: memref<64x8xf32, #tpu.memory_space<vmem>>, %arg8: memref<64x32xbf16, #tpu.memory_space<vmem>>, %arg9: memref<8x64xf32, #tpu.memory_space<vmem>>, %arg10: memref<1x64xf32, #tpu.memory_space<vmem>>, %arg11: memref<16x64xf32, #tpu.memory_space<vmem>>, %arg12: memref<1x64xf32, #tpu.memory_space<vmem>>, %arg13: memref<64x32xbf16, #tpu.memory_space<vmem>>, %arg14: memref<1x32xf32, #tpu.memory_space<vmem>>, %arg15: memref<1x8x32xf32, #tpu.memory_space<vmem>>, %arg16: memref<11x64xf32, #tpu.memory_space<vmem>>, %arg17: memref<16x64xf32, #tpu.memory_space<vmem>>, %arg18: memref<8x64xf32, #tpu.memory_space<vmem>>, %arg19: memref<8x64xf32, #tpu.memory_space<vmem>>, %arg20: memref<8x32xf32, #tpu.memory_space<vmem>>, %arg21: memref<8x64xf32, #tpu.memory_space<vmem>>) attributes {dimension_semantics = [#tpu.dimension_semantics<parallel>, #tpu.dimension_semantics<arbitrary>], iteration_bounds = array<i64: 2, 2>, scalar_prefetch = 0 : i64, scratch_operands = 6 : i64, tpu.core_type = #tpu.core_type<tc>, window_params = [{transform_indices = @transform_0, window_bounds = array<i64: 1, 8, 32>}, {pipeline_mode = #tpu.pipeline_mode<synchronous>, transform_indices = @transform_1, window_bounds = array<i64: 32, 128>}, {pipeline_mode = #tpu.pipeline_mode<synchronous>, transform_indices = @transform_2, window_bounds = array<i64: 1, 128>}, {pipeline_mode = #tpu.pipeline_mode<synchronous>, transform_indices = @transform_3, window_bounds = array<i64: 4, 64>}, {pipeline_mode = #tpu.pipeline_mode<synchronous>, transform_indices = @transform_4, window_bounds = array<i64: 1, 64>}, {pipeline_mode = #tpu.pipeline_mode<synchronous>, transform_indices = @transform_5, window_bounds = array<i64: 64, 8>}, {pipeline_mode = #tpu.pipeline_mode<synchronous>, transform_indices = @transform_6, window_bounds = array<i64: 64, 32>}, {pipeline_mode = #tpu.pipeline_mode<synchronous>, transform_indices = @transform_7, window_bounds = array<i64: 8, 64>}, {pipeline_mode = #tpu.pipeline_mode<synchronous>, transform_indices = @transform_8, window_bounds = array<i64: 1, 64>}, {pipeline_mode = #tpu.pipeline_mode<synchronous>, transform_indices = @transform_9, window_bounds = array<i64: 16, 64>}, {pipeline_mode = #tpu.pipeline_mode<synchronous>, transform_indices = @transform_10, window_bounds = array<i64: 1, 64>}, {pipeline_mode = #tpu.pipeline_mode<synchronous>, transform_indices = @transform_11, window_bounds = array<i64: 64, 32>}, {pipeline_mode = #tpu.pipeline_mode<synchronous>, transform_indices = @transform_12, window_bounds = array<i64: 1, 32>}, {transform_indices = @transform_13, window_bounds = array<i64: 1, 8, 32>}]} {
    %c0_i32 = arith.constant 0 : i32
    %0 = arith.cmpi eq, %arg1, %c0_i32 : i32
    %1 = arith.extui %0 : i1 to i32
    %c0_i32_0 = arith.constant 0 : i32
    %2 = arith.cmpi ne, %1, %c0_i32_0 : i32
    scf.if %2 {
      %cst_79 = arith.constant 0.000000e+00 : f32
      %237 = vector.broadcast %cst_79 : f32 to vector<3x64xf32>
      %c0_80 = arith.constant 0 : index
      %c0_81 = arith.constant 0 : index
      %238 = vector.load %arg16[%c0_80, %c0_81] : memref<11x64xf32, #tpu.memory_space<vmem>>, vector<3x64xf32>
      tpu.vector_store %arg16[%c0_80, %c0_81], %237 {strides = array<i32>} : memref<11x64xf32, #tpu.memory_space<vmem>>, vector<3x64xf32>,
      %cst_82 = arith.constant 0.000000e+00 : f32
      %239 = vector.broadcast %cst_82 : f32 to vector<16x64xf32>
      %c0_83 = arith.constant 0 : index
      %c0_84 = arith.constant 0 : index
      %240 = vector.load %arg17[%c0_83, %c0_84] : memref<16x64xf32, #tpu.memory_space<vmem>>, vector<16x64xf32>
      tpu.vector_store %arg17[%c0_83, %c0_84], %239 {strides = array<i32>} : memref<16x64xf32, #tpu.memory_space<vmem>>, vector<16x64xf32>,
    } else {
    }
    %c0_i32_1 = arith.constant 0 : i32
    %3 = arith.cmpi sgt, %arg1, %c0_i32_1 : i32
    %4 = arith.extui %3 : i1 to i32
    %c0_i32_2 = arith.constant 0 : i32
    %5 = arith.cmpi ne, %4, %c0_i32_2 : i32
    scf.if %5 {
      %c8 = arith.constant 8 : index
      %c0_79 = arith.constant 0 : index
      %237 = vector.load %arg16[%c8, %c0_79] : memref<11x64xf32, #tpu.memory_space<vmem>>, vector<3x64xf32>
      %c0_80 = arith.constant 0 : index
      %c0_81 = arith.constant 0 : index
      %238 = vector.load %arg16[%c0_80, %c0_81] : memref<11x64xf32, #tpu.memory_space<vmem>>, vector<3x64xf32>
      tpu.vector_store %arg16[%c0_80, %c0_81], %237 {strides = array<i32>} : memref<11x64xf32, #tpu.memory_space<vmem>>, vector<3x64xf32>,
    } else {
    }
    %c0 = arith.constant 0 : index
    %c0_3 = arith.constant 0 : index
    %c0_4 = arith.constant 0 : index
    %6 = vector.load %arg2[%c0, %c0_3, %c0_4] : memref<1x8x32xf32, #tpu.memory_space<vmem>>, vector<1x8x32xf32>
    %7 = vector.shape_cast %6 : vector<1x8x32xf32> to vector<8x32xf32>
    %c0_5 = arith.constant 0 : index
    %c0_6 = arith.constant 0 : index
    %8 = vector.load %arg3[%c0_5, %c0_6] : memref<32x128xbf16, #tpu.memory_space<vmem>>, vector<32x128xbf16>
    %9 = arith.truncf %7 : vector<8x32xf32> to vector<8x32xbf16>
    %cst = arith.constant dense<0.000000e+00> : vector<8x128xf32>
    %10 = tpu.matmul %9, %8, %cst {dimension_numbers = #tpu.dot_dimension_numbers<[1], [0], [0], [1], [0, 0, 1, 1], [], []>} : vector<8x32xbf16>, vector<32x128xbf16>, vector<8x128xf32> -> vector<8x128xf32>
    %c0_7 = arith.constant 0 : index
    %c0_8 = arith.constant 0 : index
    %11 = vector.load %arg4[%c0_7, %c0_8] : memref<1x128xf32, #tpu.memory_space<vmem>>, vector<1x128xf32>
    %12 = vector.broadcast %11 : vector<1x128xf32> to vector<8x128xf32>
    %13 = arith.addf %10, %12 : vector<8x128xf32>
    %14 = vector.extract_strided_slice %13 {offsets = [0, 0], sizes = [8, 64], strides = [1, 1]} : vector<8x128xf32> to vector<8x64xf32>
    %15 = vector.extract_strided_slice %13 {offsets = [0, 64], sizes = [8, 64], strides = [1, 1]} : vector<8x128xf32> to vector<8x64xf32>
    %c3 = arith.constant 3 : index
    %c0_9 = arith.constant 0 : index
    %16 = vector.load %arg16[%c3, %c0_9] : memref<11x64xf32, #tpu.memory_space<vmem>>, vector<8x64xf32>
    tpu.vector_store %arg16[%c3, %c0_9], %14 {strides = array<i32>} : memref<11x64xf32, #tpu.memory_space<vmem>>, vector<8x64xf32>,
    %c0_10 = arith.constant 0 : index
    %c0_11 = arith.constant 0 : index
    %17 = vector.load %arg6[%c0_10, %c0_11] : memref<1x64xf32, #tpu.memory_space<vmem>>, vector<1x64xf32>
    %18 = vector.shape_cast %17 : vector<1x64xf32> to vector<1x64xf32>
    %19 = vector.broadcast %18 : vector<1x64xf32> to vector<8x64xf32>
    %c0_12 = arith.constant 0 : index
    %c0_13 = arith.constant 0 : index
    %20 = vector.load %arg16[%c0_12, %c0_13] : memref<11x64xf32, #tpu.memory_space<vmem>>, vector<8x64xf32>
    %c0_14 = arith.constant 0 : index
    %c0_15 = arith.constant 0 : index
    %21 = vector.load %arg5[%c0_14, %c0_15] : memref<4x64xf32, #tpu.memory_space<vmem>>, vector<1x64xf32>
    %22 = vector.broadcast %21 : vector<1x64xf32> to vector<8x64xf32>
    %23 = arith.mulf %20, %22 : vector<8x64xf32>
    %24 = arith.addf %19, %23 : vector<8x64xf32>
    %c1 = arith.constant 1 : index
    %c0_16 = arith.constant 0 : index
    %25 = vector.load %arg16[%c1, %c0_16] : memref<11x64xf32, #tpu.memory_space<vmem>>, vector<8x64xf32>
    %c1_17 = arith.constant 1 : index
    %c0_18 = arith.constant 0 : index
    %26 = vector.load %arg5[%c1_17, %c0_18] : memref<4x64xf32, #tpu.memory_space<vmem>>, vector<1x64xf32>
    %27 = vector.broadcast %26 : vector<1x64xf32> to vector<8x64xf32>
    %28 = arith.mulf %25, %27 : vector<8x64xf32>
    %29 = arith.addf %24, %28 : vector<8x64xf32>
    %c2 = arith.constant 2 : index
    %c0_19 = arith.constant 0 : index
    %30 = vector.load %arg16[%c2, %c0_19] : memref<11x64xf32, #tpu.memory_space<vmem>>, vector<8x64xf32>
    %c2_20 = arith.constant 2 : index
    %c0_21 = arith.constant 0 : index
    %31 = vector.load %arg5[%c2_20, %c0_21] : memref<4x64xf32, #tpu.memory_space<vmem>>, vector<1x64xf32>
    %32 = vector.broadcast %31 : vector<1x64xf32> to vector<8x64xf32>
    %33 = arith.mulf %30, %32 : vector<8x64xf32>
    %34 = arith.addf %29, %33 : vector<8x64xf32>
    %c3_22 = arith.constant 3 : index
    %c0_23 = arith.constant 0 : index
    %35 = vector.load %arg16[%c3_22, %c0_23] : memref<11x64xf32, #tpu.memory_space<vmem>>, vector<8x64xf32>
    %c3_24 = arith.constant 3 : index
    %c0_25 = arith.constant 0 : index
    %36 = vector.load %arg5[%c3_24, %c0_25] : memref<4x64xf32, #tpu.memory_space<vmem>>, vector<1x64xf32>
    %37 = vector.broadcast %36 : vector<1x64xf32> to vector<8x64xf32>
    %38 = arith.mulf %35, %37 : vector<8x64xf32>
    %39 = arith.addf %34, %38 : vector<8x64xf32>
    %40 = arith.negf %39 : vector<8x64xf32>
    %41 = math.exp %40 : vector<8x64xf32>
    %cst_26 = arith.constant 1.000000e+00 : f32
    %42 = vector.broadcast %cst_26 : f32 to vector<8x64xf32>
    %43 = arith.addf %42, %41 : vector<8x64xf32>
    %44 = arith.divf %42, %43 : vector<8x64xf32>
    %45 = arith.mulf %39, %44 : vector<8x64xf32>
    %c0_27 = arith.constant 0 : index
    %c0_28 = arith.constant 0 : index
    %46 = vector.load %arg7[%c0_27, %c0_28] : memref<64x8xf32, #tpu.memory_space<vmem>>, vector<64x8xf32>
    %cst_29 = arith.constant dense<0.000000e+00> : vector<8x8xf32>
    %47 = tpu.matmul %45, %46, %cst_29 {dimension_numbers = #tpu.dot_dimension_numbers<[1], [0], [0], [1], [0, 0, 1, 1], [], []>, precision = #tpu.contract_precision<fp32>} : vector<8x64xf32>, vector<64x8xf32>, vector<8x8xf32> -> vector<8x8xf32>
    %c0_30 = arith.constant 0 : index
    %c0_31 = arith.constant 0 : index
    %48 = vector.load %arg8[%c0_30, %c0_31] : memref<64x32xbf16, #tpu.memory_space<vmem>>, vector<64x32xbf16>
    %49 = arith.truncf %45 : vector<8x64xf32> to vector<8x64xbf16>
    %cst_32 = arith.constant dense<0.000000e+00> : vector<8x32xf32>
    %50 = tpu.matmul %49, %48, %cst_32 {dimension_numbers = #tpu.dot_dimension_numbers<[1], [0], [0], [1], [0, 0, 1, 1], [], []>} : vector<8x64xbf16>, vector<64x32xbf16>, vector<8x32xf32> -> vector<8x32xf32>
    %c0_33 = arith.constant 0 : index
    %c0_34 = arith.constant 0 : index
    %51 = vector.load %arg9[%c0_33, %c0_34] : memref<8x64xf32, #tpu.memory_space<vmem>>, vector<8x64xf32>
    %cst_35 = arith.constant dense<0.000000e+00> : vector<8x64xf32>
    %52 = tpu.matmul %47, %51, %cst_35 {dimension_numbers = #tpu.dot_dimension_numbers<[1], [0], [0], [1], [0, 0, 1, 1], [], []>, precision = #tpu.contract_precision<fp32>} : vector<8x8xf32>, vector<8x64xf32>, vector<8x64xf32> -> vector<8x64xf32>
    %c0_36 = arith.constant 0 : index
    %c0_37 = arith.constant 0 : index
    %53 = vector.load %arg10[%c0_36, %c0_37] : memref<1x64xf32, #tpu.memory_space<vmem>>, vector<1x64xf32>
    %54 = vector.broadcast %53 : vector<1x64xf32> to vector<8x64xf32>
    %55 = arith.addf %52, %54 : vector<8x64xf32>
    %cst_38 = arith.constant 0.000000e+00 : f32
    %56 = vector.broadcast %cst_38 : f32 to vector<8x64xf32>
    %57 = arith.maximumf %55, %56 : vector<8x64xf32>
    %58 = math.absf %55 : vector<8x64xf32>
    %cst_39 = arith.constant 0.000000e+00 : f32
    %59 = vector.broadcast %cst_39 : f32 to vector<8x64xf32>
    %60 = arith.subf %59, %58 : vector<8x64xf32>
    %61 = math.exp %60 : vector<8x64xf32>
    %62 = math.log1p %61 : vector<8x64xf32>
    %63 = arith.addf %57, %62 : vector<8x64xf32>
    %c0_40 = arith.constant 0 : index
    %c0_41 = arith.constant 0 : index
    %64 = vector.load %arg18[%c0_40, %c0_41] : memref<8x64xf32, #tpu.memory_space<vmem>>, vector<8x64xf32>
    tpu.vector_store %arg18[%c0_40, %c0_41], %63 {strides = array<i32>} : memref<8x64xf32, #tpu.memory_space<vmem>>, vector<8x64xf32>,
    %65 = arith.mulf %63, %45 : vector<8x64xf32>
    %c0_42 = arith.constant 0 : index
    %c0_43 = arith.constant 0 : index
    %66 = vector.load %arg19[%c0_42, %c0_43] : memref<8x64xf32, #tpu.memory_space<vmem>>, vector<8x64xf32>
    tpu.vector_store %arg19[%c0_42, %c0_43], %65 {strides = array<i32>} : memref<8x64xf32, #tpu.memory_space<vmem>>, vector<8x64xf32>,
    %c0_44 = arith.constant 0 : index
    %c0_45 = arith.constant 0 : index
    %67 = vector.load %arg20[%c0_44, %c0_45] : memref<8x32xf32, #tpu.memory_space<vmem>>, vector<8x32xf32>
    tpu.vector_store %arg20[%c0_44, %c0_45], %50 {strides = array<i32>} : memref<8x32xf32, #tpu.memory_space<vmem>>, vector<8x32xf32>,
    %c0_46 = arith.constant 0 : index
    %c0_47 = arith.constant 0 : index
    %68 = vector.load %arg11[%c0_46, %c0_47] : memref<16x64xf32, #tpu.memory_space<vmem>>, vector<16x64xf32>
    %69 = tpu.iota {dimensions = array<i32: 0>} : vector<8x8xi32>
    %70 = tpu.iota {dimensions = array<i32: 1>} : vector<8x8xi32>
    %71 = arith.cmpi eq, %69, %70 : vector<8x8xi32>
    %72 = arith.extui %71 : vector<8x8xi1> to vector<8x8xi32>
    %73 = arith.sitofp %72 : vector<8x8xi32> to vector<8x8xf32>
    %c0_48 = arith.constant 0 : index
    %c0_49 = arith.constant 0 : index
    %74 = vector.load %arg17[%c0_48, %c0_49] : memref<16x64xf32, #tpu.memory_space<vmem>>, vector<16x64xf32>
    %c0_i32_50 = arith.constant 0 : i32
    %c8_i32 = arith.constant 8 : i32
    %75 = arith.muli %c0_i32_50, %c8_i32 : i32
    %76 = tpu.assume_multiple %75, 8 : i32
    %77 = arith.index_cast %76 : i32 to index
    %c0_51 = arith.constant 0 : index
    %78 = vector.load %arg18[%77, %c0_51] : memref<8x64xf32, #tpu.memory_space<vmem>>, vector<8x64xf32>
    %79 = arith.index_cast %76 : i32 to index
    %c0_52 = arith.constant 0 : index
    %80 = vector.load %arg19[%79, %c0_52] : memref<8x64xf32, #tpu.memory_space<vmem>>, vector<8x64xf32>
    %81 = arith.index_cast %76 : i32 to index
    %c0_53 = arith.constant 0 : index
    %82 = vector.load %arg20[%81, %c0_53] : memref<8x32xf32, #tpu.memory_space<vmem>>, vector<8x32xf32>
    %cst_54 = arith.constant dense<0.000000e+00> : vector<32x8xf32>
    %83 = tpu.matmul %82, %73, %cst_54 {dimension_numbers = #tpu.dot_dimension_numbers<[0], [0], [1], [1], [0, 1, 1, 1], [], []>, precision = #tpu.contract_precision<fp32>} : vector<8x32xf32>, vector<8x8xf32>, vector<32x8xf32> -> vector<32x8xf32>
    %84 = vector.extract_strided_slice %78 {offsets = [0, 0], sizes = [1, 64], strides = [1, 1]} : vector<8x64xf32> to vector<1x64xf32>
    %85 = vector.extract_strided_slice %80 {offsets = [0, 0], sizes = [1, 64], strides = [1, 1]} : vector<8x64xf32> to vector<1x64xf32>
    %86 = vector.extract_strided_slice %83 {offsets = [0, 0], sizes = [16, 1], strides = [1, 1]} : vector<32x8xf32> to vector<16x1xf32>
    %87 = vector.extract_strided_slice %83 {offsets = [16, 0], sizes = [16, 1], strides = [1, 1]} : vector<32x8xf32> to vector<16x1xf32>
    %88 = vector.broadcast %84 : vector<1x64xf32> to vector<16x64xf32>
    %89 = arith.mulf %68, %88 : vector<16x64xf32>
    %90 = math.exp %89 : vector<16x64xf32>
    %91 = arith.mulf %90, %74 : vector<16x64xf32>
    %92 = vector.broadcast %85 : vector<1x64xf32> to vector<16x64xf32>
    %93 = vector.broadcast %86 : vector<16x1xf32> to vector<16x64xf32>
    %94 = arith.mulf %92, %93 : vector<16x64xf32>
    %95 = arith.addf %91, %94 : vector<16x64xf32>
    %96 = vector.broadcast %87 : vector<16x1xf32> to vector<16x64xf32>
    %97 = arith.mulf %95, %96 : vector<16x64xf32>
    %cst_55 = arith.constant dense<0.000000e+00> : vector<64xf32>
    %98 = vector.multi_reduction <add>, %97, %cst_55 [0] : vector<16x64xf32> to vector<64xf32>
    %99 = vector.shape_cast %98 : vector<64xf32> to vector<1x64xf32>
    %100 = vector.extract_strided_slice %78 {offsets = [1, 0], sizes = [1, 64], strides = [1, 1]} : vector<8x64xf32> to vector<1x64xf32>
    %101 = vector.extract_strided_slice %80 {offsets = [1, 0], sizes = [1, 64], strides = [1, 1]} : vector<8x64xf32> to vector<1x64xf32>
    %102 = vector.extract_strided_slice %83 {offsets = [0, 1], sizes = [16, 1], strides = [1, 1]} : vector<32x8xf32> to vector<16x1xf32>
    %103 = vector.extract_strided_slice %83 {offsets = [16, 1], sizes = [16, 1], strides = [1, 1]} : vector<32x8xf32> to vector<16x1xf32>
    %104 = vector.broadcast %100 : vector<1x64xf32> to vector<16x64xf32>
    %105 = arith.mulf %68, %104 : vector<16x64xf32>
    %106 = math.exp %105 : vector<16x64xf32>
    %107 = arith.mulf %106, %95 : vector<16x64xf32>
    %108 = vector.broadcast %101 : vector<1x64xf32> to vector<16x64xf32>
    %109 = vector.broadcast %102 : vector<16x1xf32> to vector<16x64xf32>
    %110 = arith.mulf %108, %109 : vector<16x64xf32>
    %111 = arith.addf %107, %110 : vector<16x64xf32>
    %112 = vector.broadcast %103 : vector<16x1xf32> to vector<16x64xf32>
    %113 = arith.mulf %111, %112 : vector<16x64xf32>
    %cst_56 = arith.constant dense<0.000000e+00> : vector<64xf32>
    %114 = vector.multi_reduction <add>, %113, %cst_56 [0] : vector<16x64xf32> to vector<64xf32>
    %115 = vector.shape_cast %114 : vector<64xf32> to vector<1x64xf32>
    %116 = vector.extract_strided_slice %78 {offsets = [2, 0], sizes = [1, 64], strides = [1, 1]} : vector<8x64xf32> to vector<1x64xf32>
    %117 = vector.extract_strided_slice %80 {offsets = [2, 0], sizes = [1, 64], strides = [1, 1]} : vector<8x64xf32> to vector<1x64xf32>
    %118 = vector.extract_strided_slice %83 {offsets = [0, 2], sizes = [16, 1], strides = [1, 1]} : vector<32x8xf32> to vector<16x1xf32>
    %119 = vector.extract_strided_slice %83 {offsets = [16, 2], sizes = [16, 1], strides = [1, 1]} : vector<32x8xf32> to vector<16x1xf32>
    %120 = vector.broadcast %116 : vector<1x64xf32> to vector<16x64xf32>
    %121 = arith.mulf %68, %120 : vector<16x64xf32>
    %122 = math.exp %121 : vector<16x64xf32>
    %123 = arith.mulf %122, %111 : vector<16x64xf32>
    %124 = vector.broadcast %117 : vector<1x64xf32> to vector<16x64xf32>
    %125 = vector.broadcast %118 : vector<16x1xf32> to vector<16x64xf32>
    %126 = arith.mulf %124, %125 : vector<16x64xf32>
    %127 = arith.addf %123, %126 : vector<16x64xf32>
    %128 = vector.broadcast %119 : vector<16x1xf32> to vector<16x64xf32>
    %129 = arith.mulf %127, %128 : vector<16x64xf32>
    %cst_57 = arith.constant dense<0.000000e+00> : vector<64xf32>
    %130 = vector.multi_reduction <add>, %129, %cst_57 [0] : vector<16x64xf32> to vector<64xf32>
    %131 = vector.shape_cast %130 : vector<64xf32> to vector<1x64xf32>
    %132 = vector.extract_strided_slice %78 {offsets = [3, 0], sizes = [1, 64], strides = [1, 1]} : vector<8x64xf32> to vector<1x64xf32>
    %133 = vector.extract_strided_slice %80 {offsets = [3, 0], sizes = [1, 64], strides = [1, 1]} : vector<8x64xf32> to vector<1x64xf32>
    %134 = vector.extract_strided_slice %83 {offsets = [0, 3], sizes = [16, 1], strides = [1, 1]} : vector<32x8xf32> to vector<16x1xf32>
    %135 = vector.extract_strided_slice %83 {offsets = [16, 3], sizes = [16, 1], strides = [1, 1]} : vector<32x8xf32> to vector<16x1xf32>
    %136 = vector.broadcast %132 : vector<1x64xf32> to vector<16x64xf32>
    %137 = arith.mulf %68, %136 : vector<16x64xf32>
    %138 = math.exp %137 : vector<16x64xf32>
    %139 = arith.mulf %138, %127 : vector<16x64xf32>
    %140 = vector.broadcast %133 : vector<1x64xf32> to vector<16x64xf32>
    %141 = vector.broadcast %134 : vector<16x1xf32> to vector<16x64xf32>
    %142 = arith.mulf %140, %141 : vector<16x64xf32>
    %143 = arith.addf %139, %142 : vector<16x64xf32>
    %144 = vector.broadcast %135 : vector<16x1xf32> to vector<16x64xf32>
    %145 = arith.mulf %143, %144 : vector<16x64xf32>
    %cst_58 = arith.constant dense<0.000000e+00> : vector<64xf32>
    %146 = vector.multi_reduction <add>, %145, %cst_58 [0] : vector<16x64xf32> to vector<64xf32>
    %147 = vector.shape_cast %146 : vector<64xf32> to vector<1x64xf32>
    %148 = vector.extract_strided_slice %78 {offsets = [4, 0], sizes = [1, 64], strides = [1, 1]} : vector<8x64xf32> to vector<1x64xf32>
    %149 = vector.extract_strided_slice %80 {offsets = [4, 0], sizes = [1, 64], strides = [1, 1]} : vector<8x64xf32> to vector<1x64xf32>
    %150 = vector.extract_strided_slice %83 {offsets = [0, 4], sizes = [16, 1], strides = [1, 1]} : vector<32x8xf32> to vector<16x1xf32>
    %151 = vector.extract_strided_slice %83 {offsets = [16, 4], sizes = [16, 1], strides = [1, 1]} : vector<32x8xf32> to vector<16x1xf32>
    %152 = vector.broadcast %148 : vector<1x64xf32> to vector<16x64xf32>
    %153 = arith.mulf %68, %152 : vector<16x64xf32>
    %154 = math.exp %153 : vector<16x64xf32>
    %155 = arith.mulf %154, %143 : vector<16x64xf32>
    %156 = vector.broadcast %149 : vector<1x64xf32> to vector<16x64xf32>
    %157 = vector.broadcast %150 : vector<16x1xf32> to vector<16x64xf32>
    %158 = arith.mulf %156, %157 : vector<16x64xf32>
    %159 = arith.addf %155, %158 : vector<16x64xf32>
    %160 = vector.broadcast %151 : vector<16x1xf32> to vector<16x64xf32>
    %161 = arith.mulf %159, %160 : vector<16x64xf32>
    %cst_59 = arith.constant dense<0.000000e+00> : vector<64xf32>
    %162 = vector.multi_reduction <add>, %161, %cst_59 [0] : vector<16x64xf32> to vector<64xf32>
    %163 = vector.shape_cast %162 : vector<64xf32> to vector<1x64xf32>
    %164 = vector.extract_strided_slice %78 {offsets = [5, 0], sizes = [1, 64], strides = [1, 1]} : vector<8x64xf32> to vector<1x64xf32>
    %165 = vector.extract_strided_slice %80 {offsets = [5, 0], sizes = [1, 64], strides = [1, 1]} : vector<8x64xf32> to vector<1x64xf32>
    %166 = vector.extract_strided_slice %83 {offsets = [0, 5], sizes = [16, 1], strides = [1, 1]} : vector<32x8xf32> to vector<16x1xf32>
    %167 = vector.extract_strided_slice %83 {offsets = [16, 5], sizes = [16, 1], strides = [1, 1]} : vector<32x8xf32> to vector<16x1xf32>
    %168 = vector.broadcast %164 : vector<1x64xf32> to vector<16x64xf32>
    %169 = arith.mulf %68, %168 : vector<16x64xf32>
    %170 = math.exp %169 : vector<16x64xf32>
    %171 = arith.mulf %170, %159 : vector<16x64xf32>
    %172 = vector.broadcast %165 : vector<1x64xf32> to vector<16x64xf32>
    %173 = vector.broadcast %166 : vector<16x1xf32> to vector<16x64xf32>
    %174 = arith.mulf %172, %173 : vector<16x64xf32>
    %175 = arith.addf %171, %174 : vector<16x64xf32>
    %176 = vector.broadcast %167 : vector<16x1xf32> to vector<16x64xf32>
    %177 = arith.mulf %175, %176 : vector<16x64xf32>
    %cst_60 = arith.constant dense<0.000000e+00> : vector<64xf32>
    %178 = vector.multi_reduction <add>, %177, %cst_60 [0] : vector<16x64xf32> to vector<64xf32>
    %179 = vector.shape_cast %178 : vector<64xf32> to vector<1x64xf32>
    %180 = vector.extract_strided_slice %78 {offsets = [6, 0], sizes = [1, 64], strides = [1, 1]} : vector<8x64xf32> to vector<1x64xf32>
    %181 = vector.extract_strided_slice %80 {offsets = [6, 0], sizes = [1, 64], strides = [1, 1]} : vector<8x64xf32> to vector<1x64xf32>
    %182 = vector.extract_strided_slice %83 {offsets = [0, 6], sizes = [16, 1], strides = [1, 1]} : vector<32x8xf32> to vector<16x1xf32>
    %183 = vector.extract_strided_slice %83 {offsets = [16, 6], sizes = [16, 1], strides = [1, 1]} : vector<32x8xf32> to vector<16x1xf32>
    %184 = vector.broadcast %180 : vector<1x64xf32> to vector<16x64xf32>
    %185 = arith.mulf %68, %184 : vector<16x64xf32>
    %186 = math.exp %185 : vector<16x64xf32>
    %187 = arith.mulf %186, %175 : vector<16x64xf32>
    %188 = vector.broadcast %181 : vector<1x64xf32> to vector<16x64xf32>
    %189 = vector.broadcast %182 : vector<16x1xf32> to vector<16x64xf32>
    %190 = arith.mulf %188, %189 : vector<16x64xf32>
    %191 = arith.addf %187, %190 : vector<16x64xf32>
    %192 = vector.broadcast %183 : vector<16x1xf32> to vector<16x64xf32>
    %193 = arith.mulf %191, %192 : vector<16x64xf32>
    %cst_61 = arith.constant dense<0.000000e+00> : vector<64xf32>
    %194 = vector.multi_reduction <add>, %193, %cst_61 [0] : vector<16x64xf32> to vector<64xf32>
    %195 = vector.shape_cast %194 : vector<64xf32> to vector<1x64xf32>
    %196 = vector.extract_strided_slice %78 {offsets = [7, 0], sizes = [1, 64], strides = [1, 1]} : vector<8x64xf32> to vector<1x64xf32>
    %197 = vector.extract_strided_slice %80 {offsets = [7, 0], sizes = [1, 64], strides = [1, 1]} : vector<8x64xf32> to vector<1x64xf32>
    %198 = vector.extract_strided_slice %83 {offsets = [0, 7], sizes = [16, 1], strides = [1, 1]} : vector<32x8xf32> to vector<16x1xf32>
    %199 = vector.extract_strided_slice %83 {offsets = [16, 7], sizes = [16, 1], strides = [1, 1]} : vector<32x8xf32> to vector<16x1xf32>
    %200 = vector.broadcast %196 : vector<1x64xf32> to vector<16x64xf32>
    %201 = arith.mulf %68, %200 : vector<16x64xf32>
    %202 = math.exp %201 : vector<16x64xf32>
    %203 = arith.mulf %202, %191 : vector<16x64xf32>
    %204 = vector.broadcast %197 : vector<1x64xf32> to vector<16x64xf32>
    %205 = vector.broadcast %198 : vector<16x1xf32> to vector<16x64xf32>
    %206 = arith.mulf %204, %205 : vector<16x64xf32>
    %207 = arith.addf %203, %206 : vector<16x64xf32>
    %208 = vector.broadcast %199 : vector<16x1xf32> to vector<16x64xf32>
    %209 = arith.mulf %207, %208 : vector<16x64xf32>
    %cst_62 = arith.constant dense<0.000000e+00> : vector<64xf32>
    %210 = vector.multi_reduction <add>, %209, %cst_62 [0] : vector<16x64xf32> to vector<64xf32>
    %211 = vector.shape_cast %210 : vector<64xf32> to vector<1x64xf32>
    %212 = tpu.concatenate %99, %115, %131, %147, %163, %179, %195, %211 in 0 : vector<1x64xf32>, vector<1x64xf32>, vector<1x64xf32>, vector<1x64xf32>, vector<1x64xf32>, vector<1x64xf32>, vector<1x64xf32>, vector<1x64xf32> -> vector<8x64xf32>
    %213 = arith.index_cast %76 : i32 to index
    %c0_63 = arith.constant 0 : index
    %214 = vector.load %arg21[%213, %c0_63] : memref<8x64xf32, #tpu.memory_space<vmem>>, vector<8x64xf32>
    tpu.vector_store %arg21[%213, %c0_63], %212 {strides = array<i32>} : memref<8x64xf32, #tpu.memory_space<vmem>>, vector<8x64xf32>,
    %c1_i32 = arith.constant 1 : i32
    %c0_64 = arith.constant 0 : index
    %c0_65 = arith.constant 0 : index
    %215 = vector.load %arg17[%c0_64, %c0_65] : memref<16x64xf32, #tpu.memory_space<vmem>>, vector<16x64xf32>
    tpu.vector_store %arg17[%c0_64, %c0_65], %207 {strides = array<i32>} : memref<16x64xf32, #tpu.memory_space<vmem>>, vector<16x64xf32>,
    %c0_66 = arith.constant 0 : index
    %c0_67 = arith.constant 0 : index
    %216 = vector.load %arg21[%c0_66, %c0_67] : memref<8x64xf32, #tpu.memory_space<vmem>>, vector<8x64xf32>
    %c0_68 = arith.constant 0 : index
    %c0_69 = arith.constant 0 : index
    %217 = vector.load %arg12[%c0_68, %c0_69] : memref<1x64xf32, #tpu.memory_space<vmem>>, vector<1x64xf32>
    %218 = vector.broadcast %217 : vector<1x64xf32> to vector<8x64xf32>
    %219 = arith.mulf %45, %218 : vector<8x64xf32>
    %220 = arith.addf %216, %219 : vector<8x64xf32>
    %221 = arith.negf %15 : vector<8x64xf32>
    %222 = math.exp %221 : vector<8x64xf32>
    %cst_70 = arith.constant 1.000000e+00 : f32
    %223 = vector.broadcast %cst_70 : f32 to vector<8x64xf32>
    %224 = arith.addf %223, %222 : vector<8x64xf32>
    %225 = arith.divf %223, %224 : vector<8x64xf32>
    %226 = arith.mulf %15, %225 : vector<8x64xf32>
    %227 = arith.mulf %220, %226 : vector<8x64xf32>
    %c0_71 = arith.constant 0 : index
    %c0_72 = arith.constant 0 : index
    %228 = vector.load %arg13[%c0_71, %c0_72] : memref<64x32xbf16, #tpu.memory_space<vmem>>, vector<64x32xbf16>
    %229 = arith.truncf %227 : vector<8x64xf32> to vector<8x64xbf16>
    %cst_73 = arith.constant dense<0.000000e+00> : vector<8x32xf32>
    %230 = tpu.matmul %229, %228, %cst_73 {dimension_numbers = #tpu.dot_dimension_numbers<[1], [0], [0], [1], [0, 0, 1, 1], [], []>} : vector<8x64xbf16>, vector<64x32xbf16>, vector<8x32xf32> -> vector<8x32xf32>
    %c0_74 = arith.constant 0 : index
    %c0_75 = arith.constant 0 : index
    %231 = vector.load %arg14[%c0_74, %c0_75] : memref<1x32xf32, #tpu.memory_space<vmem>>, vector<1x32xf32>
    %232 = vector.broadcast %231 : vector<1x32xf32> to vector<8x32xf32>
    %233 = arith.addf %230, %232 : vector<8x32xf32>
    %c0_76 = arith.constant 0 : index
    %c0_77 = arith.constant 0 : index
    %c0_78 = arith.constant 0 : index
    %234 = vector.load %arg15[%c0_76, %c0_77, %c0_78] : memref<1x8x32xf32, #tpu.memory_space<vmem>>, vector<1x8x32xf32>
    %235 = vector.shape_cast %234 : vector<1x8x32xf32> to vector<8x32xf32>
    %236 = vector.shape_cast %233 : vector<8x32xf32> to vector<1x8x32xf32>
    tpu.vector_store %arg15[%c0_76, %c0_77, %c0_78], %236 {strides = array<i32>} : memref<1x8x32xf32, #tpu.memory_space<vmem>>, vector<1x8x32xf32>,
    return
  }
  func.func @transform_0(%arg0: i32, %arg1: i32) -> (i32, i32, i32) {
    %c0_i32 = arith.constant 0 : i32
    %c0_i32_0 = arith.constant 0 : i32
    return %arg0, %arg1, %c0_i32 : i32, i32, i32
  }
  func.func @transform_1(%arg0: i32, %arg1: i32) -> (i32, i32) {
    %c0_i32 = arith.constant 0 : i32
    %c0_i32_0 = arith.constant 0 : i32
    %c0_i32_1 = arith.constant 0 : i32
    return %c0_i32, %c0_i32_0 : i32, i32
  }
  func.func @transform_2(%arg0: i32, %arg1: i32) -> (i32, i32) {
    %c0_i32 = arith.constant 0 : i32
    %c0_i32_0 = arith.constant 0 : i32
    %c0_i32_1 = arith.constant 0 : i32
    return %c0_i32, %c0_i32_0 : i32, i32
  }
  func.func @transform_3(%arg0: i32, %arg1: i32) -> (i32, i32) {
    %c0_i32 = arith.constant 0 : i32
    %c0_i32_0 = arith.constant 0 : i32
    %c0_i32_1 = arith.constant 0 : i32
    return %c0_i32, %c0_i32_0 : i32, i32
  }
  func.func @transform_4(%arg0: i32, %arg1: i32) -> (i32, i32) {
    %c0_i32 = arith.constant 0 : i32
    %c0_i32_0 = arith.constant 0 : i32
    %c0_i32_1 = arith.constant 0 : i32
    return %c0_i32, %c0_i32_0 : i32, i32
  }
  func.func @transform_5(%arg0: i32, %arg1: i32) -> (i32, i32) {
    %c0_i32 = arith.constant 0 : i32
    %c0_i32_0 = arith.constant 0 : i32
    %c0_i32_1 = arith.constant 0 : i32
    return %c0_i32, %c0_i32_0 : i32, i32
  }
  func.func @transform_6(%arg0: i32, %arg1: i32) -> (i32, i32) {
    %c0_i32 = arith.constant 0 : i32
    %c0_i32_0 = arith.constant 0 : i32
    %c0_i32_1 = arith.constant 0 : i32
    return %c0_i32, %c0_i32_0 : i32, i32
  }
  func.func @transform_7(%arg0: i32, %arg1: i32) -> (i32, i32) {
    %c0_i32 = arith.constant 0 : i32
    %c0_i32_0 = arith.constant 0 : i32
    %c0_i32_1 = arith.constant 0 : i32
    return %c0_i32, %c0_i32_0 : i32, i32
  }
  func.func @transform_8(%arg0: i32, %arg1: i32) -> (i32, i32) {
    %c0_i32 = arith.constant 0 : i32
    %c0_i32_0 = arith.constant 0 : i32
    %c0_i32_1 = arith.constant 0 : i32
    return %c0_i32, %c0_i32_0 : i32, i32
  }
  func.func @transform_9(%arg0: i32, %arg1: i32) -> (i32, i32) {
    %c0_i32 = arith.constant 0 : i32
    %c0_i32_0 = arith.constant 0 : i32
    %c0_i32_1 = arith.constant 0 : i32
    return %c0_i32, %c0_i32_0 : i32, i32
  }
  func.func @transform_10(%arg0: i32, %arg1: i32) -> (i32, i32) {
    %c0_i32 = arith.constant 0 : i32
    %c0_i32_0 = arith.constant 0 : i32
    %c0_i32_1 = arith.constant 0 : i32
    return %c0_i32, %c0_i32_0 : i32, i32
  }
  func.func @transform_11(%arg0: i32, %arg1: i32) -> (i32, i32) {
    %c0_i32 = arith.constant 0 : i32
    %c0_i32_0 = arith.constant 0 : i32
    %c0_i32_1 = arith.constant 0 : i32
    return %c0_i32, %c0_i32_0 : i32, i32
  }
  func.func @transform_12(%arg0: i32, %arg1: i32) -> (i32, i32) {
    %c0_i32 = arith.constant 0 : i32
    %c0_i32_0 = arith.constant 0 : i32
    %c0_i32_1 = arith.constant 0 : i32
    return %c0_i32, %c0_i32_0 : i32, i32
  }
  func.func @transform_13(%arg0: i32, %arg1: i32) -> (i32, i32, i32) {
    %c0_i32 = arith.constant 0 : i32
    %c0_i32_0 = arith.constant 0 : i32
    return %arg0, %arg1, %c0_i32 : i32, i32, i32
  }
}

module attributes {stable_mosaic.version = 11 : i64} {
  func.func @mamba_kernel(%arg0: i32, %arg1: i32, %arg2: memref<1x8x32xf32, #tpu.memory_space<vmem>>, %arg3: memref<32x128xbf16, #tpu.memory_space<vmem>>, %arg4: memref<1x128xf32, #tpu.memory_space<vmem>>, %arg5: memref<4x64xf32, #tpu.memory_space<vmem>>, %arg6: memref<1x64xf32, #tpu.memory_space<vmem>>, %arg7: memref<64x8xf32, #tpu.memory_space<vmem>>, %arg8: memref<64x32xbf16, #tpu.memory_space<vmem>>, %arg9: memref<8x64xf32, #tpu.memory_space<vmem>>, %arg10: memref<1x64xf32, #tpu.memory_space<vmem>>, %arg11: memref<16x64xf32, #tpu.memory_space<vmem>>, %arg12: memref<1x64xf32, #tpu.memory_space<vmem>>, %arg13: memref<64x32xbf16, #tpu.memory_space<vmem>>, %arg14: memref<1x32xf32, #tpu.memory_space<vmem>>, %arg15: memref<1x8x32xf32, #tpu.memory_space<vmem>>, %arg16: memref<11x64xf32, #tpu.memory_space<vmem>>, %arg17: memref<16x64xf32, #tpu.memory_space<vmem>>, %arg18: memref<8x64xf32, #tpu.memory_space<vmem>>, %arg19: memref<8x64xf32, #tpu.memory_space<vmem>>, %arg20: memref<8x32xf32, #tpu.memory_space<vmem>>, %arg21: memref<8x64xf32, #tpu.memory_space<vmem>>) attributes {dimension_semantics = [#tpu.dimension_semantics<parallel>, #tpu.dimension_semantics<arbitrary>], iteration_bounds = array<i64: 2, 2>, scalar_prefetch = 0 : i64, scratch_operands = 6 : i64, tpu.core_type = #tpu.core_type<tc>, window_params = [{transform_indices = @transform_0, window_bounds = array<i64: 1, 8, 32>}, {pipeline_mode = #tpu.pipeline_mode<synchronous>, transform_indices = @transform_1, window_bounds = array<i64: 32, 128>}, {pipeline_mode = #tpu.pipeline_mode<synchronous>, transform_indices = @transform_2, window_bounds = array<i64: 1, 128>}, {pipeline_mode = #tpu.pipeline_mode<synchronous>, transform_indices = @transform_3, window_bounds = array<i64: 4, 64>}, {pipeline_mode = #tpu.pipeline_mode<synchronous>, transform_indices = @transform_4, window_bounds = array<i64: 1, 64>}, {pipeline_mode = #tpu.pipeline_mode<synchronous>, transform_indices = @transform_5, window_bounds = array<i64: 64, 8>}, {pipeline_mode = #tpu.pipeline_mode<synchronous>, transform_indices = @transform_6, window_bounds = array<i64: 64, 32>}, {pipeline_mode = #tpu.pipeline_mode<synchronous>, transform_indices = @transform_7, window_bounds = array<i64: 8, 64>}, {pipeline_mode = #tpu.pipeline_mode<synchronous>, transform_indices = @transform_8, window_bounds = array<i64: 1, 64>}, {pipeline_mode = #tpu.pipeline_mode<synchronous>, transform_indices = @transform_9, window_bounds = array<i64: 16, 64>}, {pipeline_mode = #tpu.pipeline_mode<synchronous>, transform_indices = @transform_10, window_bounds = array<i64: 1, 64>}, {pipeline_mode = #tpu.pipeline_mode<synchronous>, transform_indices = @transform_11, window_bounds = array<i64: 64, 32>}, {pipeline_mode = #tpu.pipeline_mode<synchronous>, transform_indices = @transform_12, window_bounds = array<i64: 1, 32>}, {transform_indices = @transform_13, window_bounds = array<i64: 1, 8, 32>}]} {
    %c0_i32 = arith.constant 0 : i32
    %0 = arith.cmpi eq, %arg1, %c0_i32 : i32
    %1 = arith.extui %0 : i1 to i32
    %c0_i32_0 = arith.constant 0 : i32
    %2 = arith.cmpi ne, %1, %c0_i32_0 : i32
    scf.if %2 {
      %cst_79 = arith.constant 0.000000e+00 : f32
      %237 = vector.broadcast %cst_79 : f32 to vector<3x64xf32>
      %c0_80 = arith.constant 0 : index
      %c0_81 = arith.constant 0 : index
      %238 = vector.load %arg16[%c0_80, %c0_81] : memref<11x64xf32, #tpu.memory_space<vmem>>, vector<3x64xf32>
      tpu.vector_store %arg16[%c0_80, %c0_81], %237 {strides = array<i32>} : memref<11x64xf32, #tpu.memory_space<vmem>>, vector<3x64xf32>,
      %cst_82 = arith.constant 0.000000e+00 : f32
      %239 = vector.broadcast %cst_82 : f32 to vector<16x64xf32>
      %c0_83 = arith.constant 0 : index
      %c0_84 = arith.constant 0 : index
      %240 = vector.load %arg17[%c0_83, %c0_84] : memref<16x64xf32, #tpu.memory_space<vmem>>, vector<16x64xf32>
      tpu.vector_store %arg17[%c0_83, %c0_84], %239 {strides = array<i32>} : memref<16x64xf32, #tpu.memory_space<vmem>>, vector<16x64xf32>,
    } else {
    }
    %c0_i32_1 = arith.constant 0 : i32
    %3 = arith.cmpi sgt, %arg1, %c0_i32_1 : i32
    %4 = arith.extui %3 : i1 to i32
    %c0_i32_2 = arith.constant 0 : i32
    %5 = arith.cmpi ne, %4, %c0_i32_2 : i32
    scf.if %5 {
      %c8 = arith.constant 8 : index
      %c0_79 = arith.constant 0 : index
      %237 = vector.load %arg16[%c8, %c0_79] : memref<11x64xf32, #tpu.memory_space<vmem>>, vector<3x64xf32>
      %c0_80 = arith.constant 0 : index
      %c0_81 = arith.constant 0 : index
      %238 = vector.load %arg16[%c0_80, %c0_81] : memref<11x64xf32, #tpu.memory_space<vmem>>, vector<3x64xf32>
      tpu.vector_store %arg16[%c0_80, %c0_81], %237 {strides = array<i32>} : memref<11x64xf32, #tpu.memory_space<vmem>>, vector<3x64xf32>,
    } else {
    }
    %c0 = arith.constant 0 : index
    %c0_3 = arith.constant 0 : index
    %c0_4 = arith.constant 0 : index
    %6 = vector.load %arg2[%c0, %c0_3, %c0_4] : memref<1x8x32xf32, #tpu.memory_space<vmem>>, vector<1x8x32xf32>
    %7 = vector.shape_cast %6 : vector<1x8x32xf32> to vector<8x32xf32>
    %c0_5 = arith.constant 0 : index
    %c0_6 = arith.constant 0 : index
    %8 = vector.load %arg3[%c0_5, %c0_6] : memref<32x128xbf16, #tpu.memory_space<vmem>>, vector<32x128xbf16>
    %9 = arith.truncf %7 : vector<8x32xf32> to vector<8x32xbf16>
    %cst = arith.constant dense<0.000000e+00> : vector<8x128xf32>
    %10 = tpu.matmul %9, %8, %cst {dimension_numbers = #tpu.dot_dimension_numbers<[1], [0], [0], [1], [0, 0, 1, 1], [], []>} : vector<8x32xbf16>, vector<32x128xbf16>, vector<8x128xf32> -> vector<8x128xf32>
    %c0_7 = arith.constant 0 : index
    %c0_8 = arith.constant 0 : index
    %11 = vector.load %arg4[%c0_7, %c0_8] : memref<1x128xf32, #tpu.memory_space<vmem>>, vector<1x128xf32>
    %12 = vector.broadcast %11 : vector<1x128xf32> to vector<8x128xf32>
    %13 = arith.addf %10, %12 : vector<8x128xf32>
    %14 = vector.extract_strided_slice %13 {offsets = [0, 0], sizes = [8, 64], strides = [1, 1]} : vector<8x128xf32> to vector<8x64xf32>
    %15 = vector.extract_strided_slice %13 {offsets = [0, 64], sizes = [8, 64], strides = [1, 1]} : vector<8x128xf32> to vector<8x64xf32>
    %c3 = arith.constant 3 : index
    %c0_9 = arith.constant 0 : index
    %16 = vector.load %arg16[%c3, %c0_9] : memref<11x64xf32, #tpu.memory_space<vmem>>, vector<8x64xf32>
    tpu.vector_store %arg16[%c3, %c0_9], %14 {strides = array<i32>} : memref<11x64xf32, #tpu.memory_space<vmem>>, vector<8x64xf32>,
    %c0_10 = arith.constant 0 : index
    %c0_11 = arith.constant 0 : index
    %17 = vector.load %arg6[%c0_10, %c0_11] : memref<1x64xf32, #tpu.memory_space<vmem>>, vector<1x64xf32>
    %18 = vector.shape_cast %17 : vector<1x64xf32> to vector<1x64xf32>
    %19 = vector.broadcast %18 : vector<1x64xf32> to vector<8x64xf32>
    %c0_12 = arith.constant 0 : index
    %c0_13 = arith.constant 0 : index
    %20 = vector.load %arg16[%c0_12, %c0_13] : memref<11x64xf32, #tpu.memory_space<vmem>>, vector<8x64xf32>
    %c0_14 = arith.constant 0 : index
    %c0_15 = arith.constant 0 : index
    %21 = vector.load %arg5[%c0_14, %c0_15] : memref<4x64xf32, #tpu.memory_space<vmem>>, vector<1x64xf32>
    %22 = vector.broadcast %21 : vector<1x64xf32> to vector<8x64xf32>
    %23 = arith.mulf %20, %22 : vector<8x64xf32>
    %24 = arith.addf %19, %23 : vector<8x64xf32>
    %c1 = arith.constant 1 : index
    %c0_16 = arith.constant 0 : index
    %25 = vector.load %arg16[%c1, %c0_16] : memref<11x64xf32, #tpu.memory_space<vmem>>, vector<8x64xf32>
    %c1_17 = arith.constant 1 : index
    %c0_18 = arith.constant 0 : index
    %26 = vector.load %arg5[%c1_17, %c0_18] : memref<4x64xf32, #tpu.memory_space<vmem>>, vector<1x64xf32>
    %27 = vector.broadcast %26 : vector<1x64xf32> to vector<8x64xf32>
    %28 = arith.mulf %25, %27 : vector<8x64xf32>
    %29 = arith.addf %24, %28 : vector<8x64xf32>
    %c2 = arith.constant 2 : index
    %c0_19 = arith.constant 0 : index
    %30 = vector.load %arg16[%c2, %c0_19] : memref<11x64xf32, #tpu.memory_space<vmem>>, vector<8x64xf32>
    %c2_20 = arith.constant 2 : index
    %c0_21 = arith.constant 0 : index
    %31 = vector.load %arg5[%c2_20, %c0_21] : memref<4x64xf32, #tpu.memory_space<vmem>>, vector<1x64xf32>
    %32 = vector.broadcast %31 : vector<1x64xf32> to vector<8x64xf32>
    %33 = arith.mulf %30, %32 : vector<8x64xf32>
    %34 = arith.addf %29, %33 : vector<8x64xf32>
    %c3_22 = arith.constant 3 : index
    %c0_23 = arith.constant 0 : index
    %35 = vector.load %arg16[%c3_22, %c0_23] : memref<11x64xf32, #tpu.memory_space<vmem>>, vector<8x64xf32>
    %c3_24 = arith.constant 3 : index
    %c0_25 = arith.constant 0 : index
    %36 = vector.load %arg5[%c3_24, %c0_25] : memref<4x64xf32, #tpu.memory_space<vmem>>, vector<1x64xf32>
    %37 = vector.broadcast %36 : vector<1x64xf32> to vector<8x64xf32>
    %38 = arith.mulf %35, %37 : vector<8x64xf32>
    %39 = arith.addf %34, %38 : vector<8x64xf32>
    %40 = arith.negf %39 : vector<8x64xf32>
    %41 = math.exp %40 : vector<8x64xf32>
    %cst_26 = arith.constant 1.000000e+00 : f32
    %42 = vector.broadcast %cst_26 : f32 to vector<8x64xf32>
    %43 = arith.addf %42, %41 : vector<8x64xf32>
    %44 = arith.divf %42, %43 : vector<8x64xf32>
    %45 = arith.mulf %39, %44 : vector<8x64xf32>
    %c0_27 = arith.constant 0 : index
    %c0_28 = arith.constant 0 : index
    %46 = vector.load %arg7[%c0_27, %c0_28] : memref<64x8xf32, #tpu.memory_space<vmem>>, vector<64x8xf32>
    %cst_29 = arith.constant dense<0.000000e+00> : vector<8x8xf32>
    %47 = tpu.matmul %45, %46, %cst_29 {dimension_numbers = #tpu.dot_dimension_numbers<[1], [0], [0], [1], [0, 0, 1, 1], [], []>, precision = #tpu.contract_precision<fp32>} : vector<8x64xf32>, vector<64x8xf32>, vector<8x8xf32> -> vector<8x8xf32>
    %c0_30 = arith.constant 0 : index
    %c0_31 = arith.constant 0 : index
    %48 = vector.load %arg8[%c0_30, %c0_31] : memref<64x32xbf16, #tpu.memory_space<vmem>>, vector<64x32xbf16>
    %49 = arith.truncf %45 : vector<8x64xf32> to vector<8x64xbf16>
    %cst_32 = arith.constant dense<0.000000e+00> : vector<8x32xf32>
    %50 = tpu.matmul %49, %48, %cst_32 {dimension_numbers = #tpu.dot_dimension_numbers<[1], [0], [0], [1], [0, 0, 1, 1], [], []>} : vector<8x64xbf16>, vector<64x32xbf16>, vector<8x32xf32> -> vector<8x32xf32>
    %c0_33 = arith.constant 0 : index
    %c0_34 = arith.constant 0 : index
    %51 = vector.load %arg9[%c0_33, %c0_34] : memref<8x64xf32, #tpu.memory_space<vmem>>, vector<8x64xf32>
    %cst_35 = arith.constant dense<0.000000e+00> : vector<8x64xf32>
    %52 = tpu.matmul %47, %51, %cst_35 {dimension_numbers = #tpu.dot_dimension_numbers<[1], [0], [0], [1], [0, 0, 1, 1], [], []>, precision = #tpu.contract_precision<fp32>} : vector<8x8xf32>, vector<8x64xf32>, vector<8x64xf32> -> vector<8x64xf32>
    %c0_36 = arith.constant 0 : index
    %c0_37 = arith.constant 0 : index
    %53 = vector.load %arg10[%c0_36, %c0_37] : memref<1x64xf32, #tpu.memory_space<vmem>>, vector<1x64xf32>
    %54 = vector.broadcast %53 : vector<1x64xf32> to vector<8x64xf32>
    %55 = arith.addf %52, %54 : vector<8x64xf32>
    %cst_38 = arith.constant 0.000000e+00 : f32
    %56 = vector.broadcast %cst_38 : f32 to vector<8x64xf32>
    %57 = arith.maximumf %55, %56 : vector<8x64xf32>
    %58 = math.absf %55 : vector<8x64xf32>
    %cst_39 = arith.constant 0.000000e+00 : f32
    %59 = vector.broadcast %cst_39 : f32 to vector<8x64xf32>
    %60 = arith.subf %59, %58 : vector<8x64xf32>
    %61 = math.exp %60 : vector<8x64xf32>
    %62 = math.log1p %61 : vector<8x64xf32>
    %63 = arith.addf %57, %62 : vector<8x64xf32>
    %c0_40 = arith.constant 0 : index
    %c0_41 = arith.constant 0 : index
    %64 = vector.load %arg18[%c0_40, %c0_41] : memref<8x64xf32, #tpu.memory_space<vmem>>, vector<8x64xf32>
    tpu.vector_store %arg18[%c0_40, %c0_41], %63 {strides = array<i32>} : memref<8x64xf32, #tpu.memory_space<vmem>>, vector<8x64xf32>,
    %65 = arith.mulf %63, %45 : vector<8x64xf32>
    %c0_42 = arith.constant 0 : index
    %c0_43 = arith.constant 0 : index
    %66 = vector.load %arg19[%c0_42, %c0_43] : memref<8x64xf32, #tpu.memory_space<vmem>>, vector<8x64xf32>
    tpu.vector_store %arg19[%c0_42, %c0_43], %65 {strides = array<i32>} : memref<8x64xf32, #tpu.memory_space<vmem>>, vector<8x64xf32>,
    %c0_44 = arith.constant 0 : index
    %c0_45 = arith.constant 0 : index
    %67 = vector.load %arg20[%c0_44, %c0_45] : memref<8x32xf32, #tpu.memory_space<vmem>>, vector<8x32xf32>
    tpu.vector_store %arg20[%c0_44, %c0_45], %50 {strides = array<i32>} : memref<8x32xf32, #tpu.memory_space<vmem>>, vector<8x32xf32>,
    %c0_46 = arith.constant 0 : index
    %c0_47 = arith.constant 0 : index
    %68 = vector.load %arg11[%c0_46, %c0_47] : memref<16x64xf32, #tpu.memory_space<vmem>>, vector<16x64xf32>
    %69 = tpu.iota {dimensions = array<i32: 0>} : vector<8x8xi32>
    %70 = tpu.iota {dimensions = array<i32: 1>} : vector<8x8xi32>
    %71 = arith.cmpi eq, %69, %70 : vector<8x8xi32>
    %72 = arith.extui %71 : vector<8x8xi1> to vector<8x8xi32>
    %73 = arith.sitofp %72 : vector<8x8xi32> to vector<8x8xf32>
    %c0_48 = arith.constant 0 : index
    %c0_49 = arith.constant 0 : index
    %74 = vector.load %arg17[%c0_48, %c0_49] : memref<16x64xf32, #tpu.memory_space<vmem>>, vector<16x64xf32>
    %c0_i32_50 = arith.constant 0 : i32
    %c8_i32 = arith.constant 8 : i32
    %75 = arith.muli %c0_i32_50, %c8_i32 : i32
    %76 = tpu.assume_multiple %75, 8 : i32
    %77 = arith.index_cast %76 : i32 to index
    %c0_51 = arith.constant 0 : index
    %78 = vector.load %arg18[%77, %c0_51] : memref<8x64xf32, #tpu.memory_space<vmem>>, vector<8x64xf32>
    %79 = arith.index_cast %76 : i32 to index
    %c0_52 = arith.constant 0 : index
    %80 = vector.load %arg19[%79, %c0_52] : memref<8x64xf32, #tpu.memory_space<vmem>>, vector<8x64xf32>
    %81 = arith.index_cast %76 : i32 to index
    %c0_53 = arith.constant 0 : index
    %82 = vector.load %arg20[%81, %c0_53] : memref<8x32xf32, #tpu.memory_space<vmem>>, vector<8x32xf32>
    %cst_54 = arith.constant dense<0.000000e+00> : vector<32x8xf32>
    %83 = tpu.matmul %82, %73, %cst_54 {dimension_numbers = #tpu.dot_dimension_numbers<[0], [0], [1], [1], [0, 1, 1, 1], [], []>, precision = #tpu.contract_precision<fp32>} : vector<8x32xf32>, vector<8x8xf32>, vector<32x8xf32> -> vector<32x8xf32>
    %84 = vector.extract_strided_slice %78 {offsets = [0, 0], sizes = [1, 64], strides = [1, 1]} : vector<8x64xf32> to vector<1x64xf32>
    %85 = vector.extract_strided_slice %80 {offsets = [0, 0], sizes = [1, 64], strides = [1, 1]} : vector<8x64xf32> to vector<1x64xf32>
    %86 = vector.extract_strided_slice %83 {offsets = [0, 0], sizes = [16, 1], strides = [1, 1]} : vector<32x8xf32> to vector<16x1xf32>
    %87 = vector.extract_strided_slice %83 {offsets = [16, 0], sizes = [16, 1], strides = [1, 1]} : vector<32x8xf32> to vector<16x1xf32>
    %88 = vector.broadcast %84 : vector<1x64xf32> to vector<16x64xf32>
    %89 = arith.mulf %68, %88 : vector<16x64xf32>
    %90 = math.exp %89 : vector<16x64xf32>
    %91 = arith.mulf %90, %74 : vector<16x64xf32>
    %92 = vector.broadcast %85 : vector<1x64xf32> to vector<16x64xf32>
    %93 = vector.broadcast %86 : vector<16x1xf32> to vector<16x64xf32>
    %94 = arith.mulf %92, %93 : vector<16x64xf32>
    %95 = arith.addf %91, %94 : vector<16x64xf32>
    %96 = vector.broadcast %87 : vector<16x1xf32> to vector<16x64xf32>
    %97 = arith.mulf %95, %96 : vector<16x64xf32>
    %cst_55 = arith.constant dense<0.000000e+00> : vector<64xf32>
    %98 = vector.multi_reduction <add>, %97, %cst_55 [0] : vector<16x64xf32> to vector<64xf32>
    %99 = vector.shape_cast %98 : vector<64xf32> to vector<1x64xf32>
    %100 = vector.extract_strided_slice %78 {offsets = [1, 0], sizes = [1, 64], strides = [1, 1]} : vector<8x64xf32> to vector<1x64xf32>
    %101 = vector.extract_strided_slice %80 {offsets = [1, 0], sizes = [1, 64], strides = [1, 1]} : vector<8x64xf32> to vector<1x64xf32>
    %102 = vector.extract_strided_slice %83 {offsets = [0, 1], sizes = [16, 1], strides = [1, 1]} : vector<32x8xf32> to vector<16x1xf32>
    %103 = vector.extract_strided_slice %83 {offsets = [16, 1], sizes = [16, 1], strides = [1, 1]} : vector<32x8xf32> to vector<16x1xf32>
    %104 = vector.broadcast %100 : vector<1x64xf32> to vector<16x64xf32>
    %105 = arith.mulf %68, %104 : vector<16x64xf32>
    %106 = math.exp %105 : vector<16x64xf32>
    %107 = arith.mulf %106, %95 : vector<16x64xf32>
    %108 = vector.broadcast %101 : vector<1x64xf32> to vector<16x64xf32>
    %109 = vector.broadcast %102 : vector<16x1xf32> to vector<16x64xf32>
    %110 = arith.mulf %108, %109 : vector<16x64xf32>
    %111 = arith.addf %107, %110 : vector<16x64xf32>
    %112 = vector.broadcast %103 : vector<16x1xf32> to vector<16x64xf32>
    %113 = arith.mulf %111, %112 : vector<16x64xf32>
    %cst_56 = arith.constant dense<0.000000e+00> : vector<64xf32>
    %114 = vector.multi_reduction <add>, %113, %cst_56 [0] : vector<16x64xf32> to vector<64xf32>
    %115 = vector.shape_cast %114 : vector<64xf32> to vector<1x64xf32>
    %116 = vector.extract_strided_slice %78 {offsets = [2, 0], sizes = [1, 64], strides = [1, 1]} : vector<8x64xf32> to vector<1x64xf32>
    %117 = vector.extract_strided_slice %80 {offsets = [2, 0], sizes = [1, 64], strides = [1, 1]} : vector<8x64xf32> to vector<1x64xf32>
    %118 = vector.extract_strided_slice %83 {offsets = [0, 2], sizes = [16, 1], strides = [1, 1]} : vector<32x8xf32> to vector<16x1xf32>
    %119 = vector.extract_strided_slice %83 {offsets = [16, 2], sizes = [16, 1], strides = [1, 1]} : vector<32x8xf32> to vector<16x1xf32>
    %120 = vector.broadcast %116 : vector<1x64xf32> to vector<16x64xf32>
    %121 = arith.mulf %68, %120 : vector<16x64xf32>
    %122 = math.exp %121 : vector<16x64xf32>
    %123 = arith.mulf %122, %111 : vector<16x64xf32>
    %124 = vector.broadcast %117 : vector<1x64xf32> to vector<16x64xf32>
    %125 = vector.broadcast %118 : vector<16x1xf32> to vector<16x64xf32>
    %126 = arith.mulf %124, %125 : vector<16x64xf32>
    %127 = arith.addf %123, %126 : vector<16x64xf32>
    %128 = vector.broadcast %119 : vector<16x1xf32> to vector<16x64xf32>
    %129 = arith.mulf %127, %128 : vector<16x64xf32>
    %cst_57 = arith.constant dense<0.000000e+00> : vector<64xf32>
    %130 = vector.multi_reduction <add>, %129, %cst_57 [0] : vector<16x64xf32> to vector<64xf32>
    %131 = vector.shape_cast %130 : vector<64xf32> to vector<1x64xf32>
    %132 = vector.extract_strided_slice %78 {offsets = [3, 0], sizes = [1, 64], strides = [1, 1]} : vector<8x64xf32> to vector<1x64xf32>
    %133 = vector.extract_strided_slice %80 {offsets = [3, 0], sizes = [1, 64], strides = [1, 1]} : vector<8x64xf32> to vector<1x64xf32>
    %134 = vector.extract_strided_slice %83 {offsets = [0, 3], sizes = [16, 1], strides = [1, 1]} : vector<32x8xf32> to vector<16x1xf32>
    %135 = vector.extract_strided_slice %83 {offsets = [16, 3], sizes = [16, 1], strides = [1, 1]} : vector<32x8xf32> to vector<16x1xf32>
    %136 = vector.broadcast %132 : vector<1x64xf32> to vector<16x64xf32>
    %137 = arith.mulf %68, %136 : vector<16x64xf32>
    %138 = math.exp %137 : vector<16x64xf32>
    %139 = arith.mulf %138, %127 : vector<16x64xf32>
    %140 = vector.broadcast %133 : vector<1x64xf32> to vector<16x64xf32>
    %141 = vector.broadcast %134 : vector<16x1xf32> to vector<16x64xf32>
    %142 = arith.mulf %140, %141 : vector<16x64xf32>
    %143 = arith.addf %139, %142 : vector<16x64xf32>
    %144 = vector.broadcast %135 : vector<16x1xf32> to vector<16x64xf32>
    %145 = arith.mulf %143, %144 : vector<16x64xf32>
    %cst_58 = arith.constant dense<0.000000e+00> : vector<64xf32>
    %146 = vector.multi_reduction <add>, %145, %cst_58 [0] : vector<16x64xf32> to vector<64xf32>
    %147 = vector.shape_cast %146 : vector<64xf32> to vector<1x64xf32>
    %148 = vector.extract_strided_slice %78 {offsets = [4, 0], sizes = [1, 64], strides = [1, 1]} : vector<8x64xf32> to vector<1x64xf32>
    %149 = vector.extract_strided_slice %80 {offsets = [4, 0], sizes = [1, 64], strides = [1, 1]} : vector<8x64xf32> to vector<1x64xf32>
    %150 = vector.extract_strided_slice %83 {offsets = [0, 4], sizes = [16, 1], strides = [1, 1]} : vector<32x8xf32> to vector<16x1xf32>
    %151 = vector.extract_strided_slice %83 {offsets = [16, 4], sizes = [16, 1], strides = [1, 1]} : vector<32x8xf32> to vector<16x1xf32>
    %152 = vector.broadcast %148 : vector<1x64xf32> to vector<16x64xf32>
    %153 = arith.mulf %68, %152 : vector<16x64xf32>
    %154 = math.exp %153 : vector<16x64xf32>
    %155 = arith.mulf %154, %143 : vector<16x64xf32>
    %156 = vector.broadcast %149 : vector<1x64xf32> to vector<16x64xf32>
    %157 = vector.broadcast %150 : vector<16x1xf32> to vector<16x64xf32>
    %158 = arith.mulf %156, %157 : vector<16x64xf32>
    %159 = arith.addf %155, %158 : vector<16x64xf32>
    %160 = vector.broadcast %151 : vector<16x1xf32> to vector<16x64xf32>
    %161 = arith.mulf %159, %160 : vector<16x64xf32>
    %cst_59 = arith.constant dense<0.000000e+00> : vector<64xf32>
    %162 = vector.multi_reduction <add>, %161, %cst_59 [0] : vector<16x64xf32> to vector<64xf32>
    %163 = vector.shape_cast %162 : vector<64xf32> to vector<1x64xf32>
    %164 = vector.extract_strided_slice %78 {offsets = [5, 0], sizes = [1, 64], strides = [1, 1]} : vector<8x64xf32> to vector<1x64xf32>
    %165 = vector.extract_strided_slice %80 {offsets = [5, 0], sizes = [1, 64], strides = [1, 1]} : vector<8x64xf32> to vector<1x64xf32>
    %166 = vector.extract_strided_slice %83 {offsets = [0, 5], sizes = [16, 1], strides = [1, 1]} : vector<32x8xf32> to vector<16x1xf32>
    %167 = vector.extract_strided_slice %83 {offsets = [16, 5], sizes = [16, 1], strides = [1, 1]} : vector<32x8xf32> to vector<16x1xf32>
    %168 = vector.broadcast %164 : vector<1x64xf32> to vector<16x64xf32>
    %169 = arith.mulf %68, %168 : vector<16x64xf32>
    %170 = math.exp %169 : vector<16x64xf32>
    %171 = arith.mulf %170, %159 : vector<16x64xf32>
    %172 = vector.broadcast %165 : vector<1x64xf32> to vector<16x64xf32>
    %173 = vector.broadcast %166 : vector<16x1xf32> to vector<16x64xf32>
    %174 = arith.mulf %172, %173 : vector<16x64xf32>
    %175 = arith.addf %171, %174 : vector<16x64xf32>
    %176 = vector.broadcast %167 : vector<16x1xf32> to vector<16x64xf32>
    %177 = arith.mulf %175, %176 : vector<16x64xf32>
    %cst_60 = arith.constant dense<0.000000e+00> : vector<64xf32>
    %178 = vector.multi_reduction <add>, %177, %cst_60 [0] : vector<16x64xf32> to vector<64xf32>
    %179 = vector.shape_cast %178 : vector<64xf32> to vector<1x64xf32>
    %180 = vector.extract_strided_slice %78 {offsets = [6, 0], sizes = [1, 64], strides = [1, 1]} : vector<8x64xf32> to vector<1x64xf32>
    %181 = vector.extract_strided_slice %80 {offsets = [6, 0], sizes = [1, 64], strides = [1, 1]} : vector<8x64xf32> to vector<1x64xf32>
    %182 = vector.extract_strided_slice %83 {offsets = [0, 6], sizes = [16, 1], strides = [1, 1]} : vector<32x8xf32> to vector<16x1xf32>
    %183 = vector.extract_strided_slice %83 {offsets = [16, 6], sizes = [16, 1], strides = [1, 1]} : vector<32x8xf32> to vector<16x1xf32>
    %184 = vector.broadcast %180 : vector<1x64xf32> to vector<16x64xf32>
    %185 = arith.mulf %68, %184 : vector<16x64xf32>
    %186 = math.exp %185 : vector<16x64xf32>
    %187 = arith.mulf %186, %175 : vector<16x64xf32>
    %188 = vector.broadcast %181 : vector<1x64xf32> to vector<16x64xf32>
    %189 = vector.broadcast %182 : vector<16x1xf32> to vector<16x64xf32>
    %190 = arith.mulf %188, %189 : vector<16x64xf32>
    %191 = arith.addf %187, %190 : vector<16x64xf32>
    %192 = vector.broadcast %183 : vector<16x1xf32> to vector<16x64xf32>
    %193 = arith.mulf %191, %192 : vector<16x64xf32>
    %cst_61 = arith.constant dense<0.000000e+00> : vector<64xf32>
    %194 = vector.multi_reduction <add>, %193, %cst_61 [0] : vector<16x64xf32> to vector<64xf32>
    %195 = vector.shape_cast %194 : vector<64xf32> to vector<1x64xf32>
    %196 = vector.extract_strided_slice %78 {offsets = [7, 0], sizes = [1, 64], strides = [1, 1]} : vector<8x64xf32> to vector<1x64xf32>
    %197 = vector.extract_strided_slice %80 {offsets = [7, 0], sizes = [1, 64], strides = [1, 1]} : vector<8x64xf32> to vector<1x64xf32>
    %198 = vector.extract_strided_slice %83 {offsets = [0, 7], sizes = [16, 1], strides = [1, 1]} : vector<32x8xf32> to vector<16x1xf32>
    %199 = vector.extract_strided_slice %83 {offsets = [16, 7], sizes = [16, 1], strides = [1, 1]} : vector<32x8xf32> to vector<16x1xf32>
    %200 = vector.broadcast %196 : vector<1x64xf32> to vector<16x64xf32>
    %201 = arith.mulf %68, %200 : vector<16x64xf32>
    %202 = math.exp %201 : vector<16x64xf32>
    %203 = arith.mulf %202, %191 : vector<16x64xf32>
    %204 = vector.broadcast %197 : vector<1x64xf32> to vector<16x64xf32>
    %205 = vector.broadcast %198 : vector<16x1xf32> to vector<16x64xf32>
    %206 = arith.mulf %204, %205 : vector<16x64xf32>
    %207 = arith.addf %203, %206 : vector<16x64xf32>
    %208 = vector.broadcast %199 : vector<16x1xf32> to vector<16x64xf32>
    %209 = arith.mulf %207, %208 : vector<16x64xf32>
    %cst_62 = arith.constant dense<0.000000e+00> : vector<64xf32>
    %210 = vector.multi_reduction <add>, %209, %cst_62 [0] : vector<16x64xf32> to vector<64xf32>
    %211 = vector.shape_cast %210 : vector<64xf32> to vector<1x64xf32>
    %212 = tpu.concatenate %99, %115, %131, %147, %163, %179, %195, %211 in 0 : vector<1x64xf32>, vector<1x64xf32>, vector<1x64xf32>, vector<1x64xf32>, vector<1x64xf32>, vector<1x64xf32>, vector<1x64xf32>, vector<1x64xf32> -> vector<8x64xf32>
    %213 = arith.index_cast %76 : i32 to index
    %c0_63 = arith.constant 0 : index
    %214 = vector.load %arg21[%213, %c0_63] : memref<8x64xf32, #tpu.memory_space<vmem>>, vector<8x64xf32>
    tpu.vector_store %arg21[%213, %c0_63], %212 {strides = array<i32>} : memref<8x64xf32, #tpu.memory_space<vmem>>, vector<8x64xf32>,
    %c1_i32 = arith.constant 1 : i32
    %c0_64 = arith.constant 0 : index
    %c0_65 = arith.constant 0 : index
    %215 = vector.load %arg17[%c0_64, %c0_65] : memref<16x64xf32, #tpu.memory_space<vmem>>, vector<16x64xf32>
    tpu.vector_store %arg17[%c0_64, %c0_65], %207 {strides = array<i32>} : memref<16x64xf32, #tpu.memory_space<vmem>>, vector<16x64xf32>,
    %c0_66 = arith.constant 0 : index
    %c0_67 = arith.constant 0 : index
    %216 = vector.load %arg21[%c0_66, %c0_67] : memref<8x64xf32, #tpu.memory_space<vmem>>, vector<8x64xf32>
    %c0_68 = arith.constant 0 : index
    %c0_69 = arith.constant 0 : index
    %217 = vector.load %arg12[%c0_68, %c0_69] : memref<1x64xf32, #tpu.memory_space<vmem>>, vector<1x64xf32>
    %218 = vector.broadcast %217 : vector<1x64xf32> to vector<8x64xf32>
    %219 = arith.mulf %45, %218 : vector<8x64xf32>
    %220 = arith.addf %216, %219 : vector<8x64xf32>
    %221 = arith.negf %15 : vector<8x64xf32>
    %222 = math.exp %221 : vector<8x64xf32>
    %cst_70 = arith.constant 1.000000e+00 : f32
    %223 = vector.broadcast %cst_70 : f32 to vector<8x64xf32>
    %224 = arith.addf %223, %222 : vector<8x64xf32>
    %225 = arith.divf %223, %224 : vector<8x64xf32>
    %226 = arith.mulf %15, %225 : vector<8x64xf32>
    %227 = arith.mulf %220, %226 : vector<8x64xf32>
    %c0_71 = arith.constant 0 : index
    %c0_72 = arith.constant 0 : index
    %228 = vector.load %arg13[%c0_71, %c0_72] : memref<64x32xbf16, #tpu.memory_space<vmem>>, vector<64x32xbf16>
    %229 = arith.truncf %227 : vector<8x64xf32> to vector<8x64xbf16>
    %cst_73 = arith.constant dense<0.000000e+00> : vector<8x32xf32>
    %230 = tpu.matmul %229, %228, %cst_73 {dimension_numbers = #tpu.dot_dimension_numbers<[1], [0], [0], [1], [0, 0, 1, 1], [], []>} : vector<8x64xbf16>, vector<64x32xbf16>, vector<8x32xf32> -> vector<8x32xf32>
    %c0_74 = arith.constant 0 : index
    %c0_75 = arith.constant 0 : index
    %231 = vector.load %arg14[%c0_74, %c0_75] : memref<1x32xf32, #tpu.memory_space<vmem>>, vector<1x32xf32>
    %232 = vector.broadcast %231 : vector<1x32xf32> to vector<8x32xf32>
    %233 = arith.addf %230, %232 : vector<8x32xf32>
    %c0_76 = arith.constant 0 : index
    %c0_77 = arith.constant 0 : index
    %c0_78 = arith.constant 0 : index
    %234 = vector.load %arg15[%c0_76, %c0_77, %c0_78] : memref<1x8x32xf32, #tpu.memory_space<vmem>>, vector<1x8x32xf32>
    %235 = vector.shape_cast %234 : vector<1x8x32xf32> to vector<8x32xf32>
    %236 = vector.shape_cast %233 : vector<8x32xf32> to vector<1x8x32xf32>
    tpu.vector_store %arg15[%c0_76, %c0_77, %c0_78], %236 {strides = array<i32>} : memref<1x8x32xf32, #tpu.memory_space<vmem>>, vector<1x8x32xf32>,
    return
  }
  func.func @transform_0(%arg0: i32, %arg1: i32) -> (i32, i32, i32) {
    %c0_i32 = arith.constant 0 : i32
    %c0_i32_0 = arith.constant 0 : i32
    return %arg0, %arg1, %c0_i32 : i32, i32, i32
  }
  func.func @transform_1(%arg0: i32, %arg1: i32) -> (i32, i32) {
    %c0_i32 = arith.constant 0 : i32
    %c0_i32_0 = arith.constant 0 : i32
    %c0_i32_1 = arith.constant 0 : i32
    return %c0_i32, %c0_i32_0 : i32, i32
  }
  func.func @transform_2(%arg0: i32, %arg1: i32) -> (i32, i32) {
    %c0_i32 = arith.constant 0 : i32
    %c0_i32_0 = arith.constant 0 : i32
    %c0_i32_1 = arith.constant 0 : i32
    return %c0_i32, %c0_i32_0 : i32, i32
  }
  func.func @transform_3(%arg0: i32, %arg1: i32) -> (i32, i32) {
    %c0_i32 = arith.constant 0 : i32
    %c0_i32_0 = arith.constant 0 : i32
    %c0_i32_1 = arith.constant 0 : i32
    return %c0_i32, %c0_i32_0 : i32, i32
  }
  func.func @transform_4(%arg0: i32, %arg1: i32) -> (i32, i32) {
    %c0_i32 = arith.constant 0 : i32
    %c0_i32_0 = arith.constant 0 : i32
    %c0_i32_1 = arith.constant 0 : i32
    return %c0_i32, %c0_i32_0 : i32, i32
  }
  func.func @transform_5(%arg0: i32, %arg1: i32) -> (i32, i32) {
    %c0_i32 = arith.constant 0 : i32
    %c0_i32_0 = arith.constant 0 : i32
    %c0_i32_1 = arith.constant 0 : i32
    return %c0_i32, %c0_i32_0 : i32, i32
  }
  func.func @transform_6(%arg0: i32, %arg1: i32) -> (i32, i32) {
    %c0_i32 = arith.constant 0 : i32
    %c0_i32_0 = arith.constant 0 : i32
    %c0_i32_1 = arith.constant 0 : i32
    return %c0_i32, %c0_i32_0 : i32, i32
  }
  func.func @transform_7(%arg0: i32, %arg1: i32) -> (i32, i32) {
    %c0_i32 = arith.constant 0 : i32
    %c0_i32_0 = arith.constant 0 : i32
    %c0_i32_1 = arith.constant 0 : i32
    return %c0_i32, %c0_i32_0 : i32, i32
  }
  func.func @transform_8(%arg0: i32, %arg1: i32) -> (i32, i32) {
    %c0_i32 = arith.constant 0 : i32
    %c0_i32_0 = arith.constant 0 : i32
    %c0_i32_1 = arith.constant 0 : i32
    return %c0_i32, %c0_i32_0 : i32, i32
  }
  func.func @transform_9(%arg0: i32, %arg1: i32) -> (i32, i32) {
    %c0_i32 = arith.constant 0 : i32
    %c0_i32_0 = arith.constant 0 : i32
    %c0_i32_1 = arith.constant 0 : i32
    return %c0_i32, %c0_i32_0 : i32, i32
  }
  func.func @transform_10(%arg0: i32, %arg1: i32) -> (i32, i32) {
    %c0_i32 = arith.constant 0 : i32
    %c0_i32_0 = arith.constant 0 : i32
    %c0_i32_1 = arith.constant 0 : i32
    return %c0_i32, %c0_i32_0 : i32, i32
  }
  func.func @transform_11(%arg0: i32, %arg1: i32) -> (i32, i32) {
    %c0_i32 = arith.constant 0 : i32
    %c0_i32_0 = arith.constant 0 : i32
    %c0_i32_1 = arith.constant 0 : i32
    return %c0_i32, %c0_i32_0 : i32, i32
  }
  func.func @transform_12(%arg0: i32, %arg1: i32) -> (i32, i32) {
    %c0_i32 = arith.constant 0 : i32
    %c0_i32_0 = arith.constant 0 : i32
    %c0_i32_1 = arith.constant 0 : i32
    return %c0_i32, %c0_i32_0 : i32, i32
  }
  func.func @transform_13(%arg0: i32, %arg1: i32) -> (i32, i32, i32) {
    %c0_i32 = arith.constant 0 : i32
    %c0_i32_0 = arith.constant 0 : i32
    return %arg0, %arg1, %c0_i32 : i32, i32, i32
  }
}

</mosaic_0001>

<llo_original>
// kernel: tpu_custom_call.1
$region0: #{tpu_custom_call.1}
  #allocation0 [shape = 'u32[]', space=smem, size = 0x4, offset = 0x4, fixed_abs, tag = 'smem constant byte address 0x4 - core index']
  #allocation1 [shape = 'u32[144,128]{1,0:T(1,128)}', space=vmem, size = 0x12000, scoped, tag = 'internal scratch']
  #allocation2 [shape = 'f32[11,64]{1,0:T(8,128)}', space=vmem, size = 0x2000, scoped, tag = 'scratch operand']
  #allocation3 [shape = 'f32[16,64]{1,0:T(8,128)}', space=vmem, size = 0x2000, scoped, tag = 'scratch operand']
  #allocation4 [shape = 'f32[8,64]{1,0:T(8,128)}', space=vmem, size = 0x1000, scoped, tag = 'scratch operand']
  #allocation5 [shape = 'f32[8,64]{1,0:T(8,128)}', space=vmem, size = 0x1000, scoped, tag = 'scratch operand']
  #allocation6 [shape = 'f32[8,32]{1,0:T(8,128)}', space=vmem, size = 0x1000, scoped, tag = 'scratch operand']
  #allocation7 [shape = 'f32[8,64]{1,0:T(8,128)}', space=vmem, size = 0x1000, scoped, tag = 'scratch operand']
  %s0 = inlined_call_operand.vmem [shape: f32[2,16,32], index: 0, kind: input, shape index: {}]
  %s1 = inlined_call_operand.vmem [shape: bf16[32,128], index: 1, kind: input, shape index: {}]
  %s2 = inlined_call_operand.vmem [shape: f32[1,128], index: 2, kind: input, shape index: {}]
  %s3 = inlined_call_operand.vmem [shape: f32[4,64], index: 3, kind: input, shape index: {}]
  %s4 = inlined_call_operand.vmem [shape: f32[1,64], index: 4, kind: input, shape index: {}]
  %s5 = inlined_call_operand.vmem [shape: f32[64,8], index: 5, kind: input, shape index: {}]
  %s6 = inlined_call_operand.vmem [shape: bf16[64,32], index: 6, kind: input, shape index: {}]
  %s7 = inlined_call_operand.vmem [shape: f32[8,64], index: 7, kind: input, shape index: {}]
  %s8 = inlined_call_operand.vmem [shape: f32[1,64], index: 8, kind: input, shape index: {}]
  %s9 = inlined_call_operand.vmem [shape: f32[16,64], index: 9, kind: input, shape index: {}]
  %s10 = inlined_call_operand.vmem [shape: f32[1,64], index: 10, kind: input, shape index: {}]
  %s11 = inlined_call_operand.vmem [shape: bf16[64,32], index: 11, kind: input, shape index: {}]
  %s12 = inlined_call_operand.vmem [shape: f32[1,32], index: 12, kind: input, shape index: {}]
  %s13 = inlined_call_operand.hbm [shape: f32[2,16,32], index: 13, kind: output, shape index: {}]
  %s14 = sld [smem:[#allocation0]]
  $region93: #{tpu_custom_call.1} parent=0
    _
  %s16 = ssub.s32 1, %s14
  %s17 = scalar_select 0, %s16, %s14
  $region1: #{tpu_custom_call.1} parent=0
    #allocation8 [shape = 'u8[8192]{0}', space=vmem, size = 0x2000, scoped, tag = 'output window, operand 0']
    #allocation9 [shape = 's32[2]{0}', space=sflag, size = 0x8, scoped, tag = 'scoped memory for tpu_custom_call.1']
    %18 = vsyncpa [#allocation9], 0
    %s19 = scalar_lea.sflag [#allocation9], 1
    %20 = vsyncpa %s19, 0
    loop: start=0, step=1, limit=6
    $region2: #{tpu_custom_call.1} parent=1 // loop_pre_header
      _
    $region3: #{tpu_custom_call.1} parent=1 // loop_header
      %s22 = sphi 0, %s26
      %p23 = scmp.ge.s32.totalorder %s22, 6
      %s29 = sphi 0, %s41
      %s30 = sphi 0, %s37
      %s31 = sphi 0, %s29
      %s32 = sphi 0, %s30
      %s33 = sphi 0, %s31
      %s34 = sphi 0, %s32
      %s46 = sphi 0, %s48
      %s49 = sphi 0, %s46
      %s50 = sphi 0, %s49
      %s66 = sphi 0, %s50
      %s70 = sphi 0, %s70
      %s72 = sphi 0, %s70
      %s73 = sphi 0, %s72
      %s87 = sphi 0, %s73
      %s91 = sphi 0, %s91
      %s93 = sphi 0, %s91
      %s94 = sphi 0, %s93
      %s108 = sphi 0, %s94
      %s112 = sphi 0, %s112
      %s114 = sphi 0, %s112
      %s115 = sphi 0, %s114
      %s129 = sphi 0, %s115
      %s133 = sphi 0, %s133
      %s135 = sphi 0, %s133
      %s136 = sphi 0, %s135
      %s150 = sphi 0, %s136
      %s154 = sphi 0, %s154
      %s156 = sphi 0, %s154
      %s157 = sphi 0, %s156
      %s171 = sphi 0, %s157
      %s175 = sphi 0, %s175
      %s177 = sphi 0, %s175
      %s178 = sphi 0, %s177
      %s192 = sphi 0, %s178
      %s196 = sphi 0, %s196
      %s198 = sphi 0, %s196
      %s199 = sphi 0, %s198
      %s213 = sphi 0, %s199
      %s217 = sphi 0, %s217
      %s219 = sphi 0, %s217
      %s220 = sphi 0, %s219
      %s234 = sphi 0, %s220
      %s238 = sphi 0, %s238
      %s240 = sphi 0, %s238
      %s241 = sphi 0, %s240
      %s255 = sphi 0, %s241
      %s259 = sphi 0, %s259
      %s261 = sphi 0, %s259
      %s262 = sphi 0, %s261
      %s276 = sphi 0, %s262
      %s280 = sphi 0, %s280
      %s282 = sphi 0, %s280
      %s283 = sphi 0, %s282
      %s297 = sphi 0, %s283
      %s301 = sphi 0, %s301
      %s303 = sphi 0, %s301
      %s304 = sphi 0, %s303
      %s318 = sphi 0, %s304
      %s326 = sphi 0, %s328
      %s329 = sphi 0, %s326
      %s330 = sphi 0, %s329
      %s346 = sphi 0, %s330
    $region4: #{tpu_custom_call.1} parent=1 // loop_header_branch
      %25 = sbr.rel (%p23) target = $region8
    $region5: #{tpu_custom_call.1} parent=1 // loop_body
      %s27 = ssub.s32 %s22, 1
      %s28 = ssub.s32 %s22, 2
      %s35 = sadd.s32 1, %s30
      %p36 = scmp.ge.s32.totalorder %s35, 2
      %s37 = scalar_select %p36, 0, %s35
      %s38 = sadd.s32 1, %s29
      %s39 = scalar_select %p36, %s38, %s29
      %p40 = scmp.ge.s32.totalorder %s39, 2
      %s41 = scalar_select %p40, 0, %s39
      %s42 = ssub.s32 %s29, %s41
      %s43 = ssub.s32 %s30, %s37
      %s44 = sor.u32 %s42, %s43
      %p45 = scmp.eq.s32.totalorder %s44, 0
      %s47 = sadd.s32 %s46, 1
      %s48 = scalar_select %p45, %s46, %s47
      %p51 = pneg %p45
      %p52 = scmp.eq.s32.totalorder %s22, 3
      %p53 = por %p51, %p52
      %p54 = scmp.ne.s32.totalorder %s46, %s49
      %p55 = scmp.eq.s32.totalorder %s22, 0
      %p56 = por %p54, %p55
      %p57 = scmp.ne.s32.totalorder %s46, %s49
      %p58 = scmp.eq.s32.totalorder %s27, 3
      %p59 = por %p57, %p58
      %p60 = scmp.ne.s32.totalorder %s49, %s50
      %p61 = scmp.eq.s32.totalorder %s27, 0
      %p62 = por %p60, %p61
      %p63 = scmp.ne.s32.totalorder %s49, %s50
      %p64 = scmp.eq.s32.totalorder %s28, 3
      %p65 = por %p63, %p64
      %p67 = scmp.ne.s32.totalorder %s50, %s66
      %p68 = scmp.eq.s32.totalorder %s28, 0
      %p69 = por %p67, %p68
      %s71 = sadd.s32 %s70, 1
      %p74 = scmp.eq.s32.totalorder %s22, 3
      %p75 = scmp.ne.s32.totalorder %s70, %s72
      %p76 = scmp.eq.s32.totalorder %s22, 0
      %p77 = por %p75, %p76
      %p78 = scmp.ne.s32.totalorder %s70, %s72
      %p79 = scmp.eq.s32.totalorder %s27, 3
      %p80 = por %p78, %p79
      %p81 = scmp.ne.s32.totalorder %s72, %s73
      %p82 = scmp.eq.s32.totalorder %s27, 0
      %p83 = por %p81, %p82
      %p84 = scmp.ne.s32.totalorder %s72, %s73
      %p85 = scmp.eq.s32.totalorder %s28, 3
      %p86 = por %p84, %p85
      %p88 = scmp.ne.s32.totalorder %s73, %s87
      %p89 = scmp.eq.s32.totalorder %s28, 0
      %p90 = por %p88, %p89
      %s92 = sadd.s32 %s91, 1
      %p95 = scmp.eq.s32.totalorder %s22, 3
      %p96 = scmp.ne.s32.totalorder %s91, %s93
      %p97 = scmp.eq.s32.totalorder %s22, 0
      %p98 = por %p96, %p97
      %p99 = scmp.ne.s32.totalorder %s91, %s93
      %p100 = scmp.eq.s32.totalorder %s27, 3
      %p101 = por %p99, %p100
      %p102 = scmp.ne.s32.totalorder %s93, %s94
      %p103 = scmp.eq.s32.totalorder %s27, 0
      %p104 = por %p102, %p103
      %p105 = scmp.ne.s32.totalorder %s93, %s94
      %p106 = scmp.eq.s32.totalorder %s28, 3
      %p107 = por %p105, %p106
      %p109 = scmp.ne.s32.totalorder %s94, %s108
      %p110 = scmp.eq.s32.totalorder %s28, 0
      %p111 = por %p109, %p110
      %s113 = sadd.s32 %s112, 1
      %p116 = scmp.eq.s32.totalorder %s22, 3
      %p117 = scmp.ne.s32.totalorder %s112, %s114
      %p118 = scmp.eq.s32.totalorder %s22, 0
      %p119 = por %p117, %p118
      %p120 = scmp.ne.s32.totalorder %s112, %s114
      %p121 = scmp.eq.s32.totalorder %s27, 3
      %p122 = por %p120, %p121
      %p123 = scmp.ne.s32.totalorder %s114, %s115
      %p124 = scmp.eq.s32.totalorder %s27, 0
      %p125 = por %p123, %p124
      %p126 = scmp.ne.s32.totalorder %s114, %s115
      %p127 = scmp.eq.s32.totalorder %s28, 3
      %p128 = por %p126, %p127
      %p130 = scmp.ne.s32.totalorder %s115, %s129
      %p131 = scmp.eq.s32.totalorder %s28, 0
      %p132 = por %p130, %p131
      %s134 = sadd.s32 %s133, 1
      %p137 = scmp.eq.s32.totalorder %s22, 3
      %p138 = scmp.ne.s32.totalorder %s133, %s135
      %p139 = scmp.eq.s32.totalorder %s22, 0
      %p140 = por %p138, %p139
      %p141 = scmp.ne.s32.totalorder %s133, %s135
      %p142 = scmp.eq.s32.totalorder %s27, 3
      %p143 = por %p141, %p142
      %p144 = scmp.ne.s32.totalorder %s135, %s136
      %p145 = scmp.eq.s32.totalorder %s27, 0
      %p146 = por %p144, %p145
      %p147 = scmp.ne.s32.totalorder %s135, %s136
      %p148 = scmp.eq.s32.totalorder %s28, 3
      %p149 = por %p147, %p148
      %p151 = scmp.ne.s32.totalorder %s136, %s150
      %p152 = scmp.eq.s32.totalorder %s28, 0
      %p153 = por %p151, %p152
      %s155 = sadd.s32 %s154, 1
      %p158 = scmp.eq.s32.totalorder %s22, 3
      %p159 = scmp.ne.s32.totalorder %s154, %s156
      %p160 = scmp.eq.s32.totalorder %s22, 0
      %p161 = por %p159, %p160
      %p162 = scmp.ne.s32.totalorder %s154, %s156
      %p163 = scmp.eq.s32.totalorder %s27, 3
      %p164 = por %p162, %p163
      %p165 = scmp.ne.s32.totalorder %s156, %s157
      %p166 = scmp.eq.s32.totalorder %s27, 0
      %p167 = por %p165, %p166
      %p168 = scmp.ne.s32.totalorder %s156, %s157
      %p169 = scmp.eq.s32.totalorder %s28, 3
      %p170 = por %p168, %p169
      %p172 = scmp.ne.s32.totalorder %s157, %s171
      %p173 = scmp.eq.s32.totalorder %s28, 0
      %p174 = por %p172, %p173
      %s176 = sadd.s32 %s175, 1
      %p179 = scmp.eq.s32.totalorder %s22, 3
      %p180 = scmp.ne.s32.totalorder %s175, %s177
      %p181 = scmp.eq.s32.totalorder %s22, 0
      %p182 = por %p180, %p181
      %p183 = scmp.ne.s32.totalorder %s175, %s177
      %p184 = scmp.eq.s32.totalorder %s27, 3
      %p185 = por %p183, %p184
      %p186 = scmp.ne.s32.totalorder %s177, %s178
      %p187 = scmp.eq.s32.totalorder %s27, 0
      %p188 = por %p186, %p187
      %p189 = scmp.ne.s32.totalorder %s177, %s178
      %p190 = scmp.eq.s32.totalorder %s28, 3
      %p191 = por %p189, %p190
      %p193 = scmp.ne.s32.totalorder %s178, %s192
      %p194 = scmp.eq.s32.totalorder %s28, 0
      %p195 = por %p193, %p194
      %s197 = sadd.s32 %s196, 1
      %p200 = scmp.eq.s32.totalorder %s22, 3
      %p201 = scmp.ne.s32.totalorder %s196, %s198
      %p202 = scmp.eq.s32.totalorder %s22, 0
      %p203 = por %p201, %p202
      %p204 = scmp.ne.s32.totalorder %s196, %s198
      %p205 = scmp.eq.s32.totalorder %s27, 3
      %p206 = por %p204, %p205
      %p207 = scmp.ne.s32.totalorder %s198, %s199
      %p208 = scmp.eq.s32.totalorder %s27, 0
      %p209 = por %p207, %p208
      %p210 = scmp.ne.s32.totalorder %s198, %s199
      %p211 = scmp.eq.s32.totalorder %s28, 3
      %p212 = por %p210, %p211
      %p214 = scmp.ne.s32.totalorder %s199, %s213
      %p215 = scmp.eq.s32.totalorder %s28, 0
      %p216 = por %p214, %p215
      %s218 = sadd.s32 %s217, 1
      %p221 = scmp.eq.s32.totalorder %s22, 3
      %p222 = scmp.ne.s32.totalorder %s217, %s219
      %p223 = scmp.eq.s32.totalorder %s22, 0
      %p224 = por %p222, %p223
      %p225 = scmp.ne.s32.totalorder %s217, %s219
      %p226 = scmp.eq.s32.totalorder %s27, 3
      %p227 = por %p225, %p226
      %p228 = scmp.ne.s32.totalorder %s219, %s220
      %p229 = scmp.eq.s32.totalorder %s27, 0
      %p230 = por %p228, %p229
      %p231 = scmp.ne.s32.totalorder %s219, %s220
      %p232 = scmp.eq.s32.totalorder %s28, 3
      %p233 = por %p231, %p232
      %p235 = scmp.ne.s32.totalorder %s220, %s234
      %p236 = scmp.eq.s32.totalorder %s28, 0
      %p237 = por %p235, %p236
      %s239 = sadd.s32 %s238, 1
      %p242 = scmp.eq.s32.totalorder %s22, 3
      %p243 = scmp.ne.s32.totalorder %s238, %s240
      %p244 = scmp.eq.s32.totalorder %s22, 0
      %p245 = por %p243, %p244
      %p246 = scmp.ne.s32.totalorder %s238, %s240
      %p247 = scmp.eq.s32.totalorder %s27, 3
      %p248 = por %p246, %p247
      %p249 = scmp.ne.s32.totalorder %s240, %s241
      %p250 = scmp.eq.s32.totalorder %s27, 0
      %p251 = por %p249, %p250
      %p252 = scmp.ne.s32.totalorder %s240, %s241
      %p253 = scmp.eq.s32.totalorder %s28, 3
      %p254 = por %p252, %p253
      %p256 = scmp.ne.s32.totalorder %s241, %s255
      %p257 = scmp.eq.s32.totalorder %s28, 0
      %p258 = por %p256, %p257
      %s260 = sadd.s32 %s259, 1
      %p263 = scmp.eq.s32.totalorder %s22, 3
      %p264 = scmp.ne.s32.totalorder %s259, %s261
      %p265 = scmp.eq.s32.totalorder %s22, 0
      %p266 = por %p264, %p265
      %p267 = scmp.ne.s32.totalorder %s259, %s261
      %p268 = scmp.eq.s32.totalorder %s27, 3
      %p269 = por %p267, %p268
      %p270 = scmp.ne.s32.totalorder %s261, %s262
      %p271 = scmp.eq.s32.totalorder %s27, 0
      %p272 = por %p270, %p271
      %p273 = scmp.ne.s32.totalorder %s261, %s262
      %p274 = scmp.eq.s32.totalorder %s28, 3
      %p275 = por %p273, %p274
      %p277 = scmp.ne.s32.totalorder %s262, %s276
      %p278 = scmp.eq.s32.totalorder %s28, 0
      %p279 = por %p277, %p278
      %s281 = sadd.s32 %s280, 1
      %p284 = scmp.eq.s32.totalorder %s22, 3
      %p285 = scmp.ne.s32.totalorder %s280, %s282
      %p286 = scmp.eq.s32.totalorder %s22, 0
      %p287 = por %p285, %p286
      %p288 = scmp.ne.s32.totalorder %s280, %s282
      %p289 = scmp.eq.s32.totalorder %s27, 3
      %p290 = por %p288, %p289
      %p291 = scmp.ne.s32.totalorder %s282, %s283
      %p292 = scmp.eq.s32.totalorder %s27, 0
      %p293 = por %p291, %p292
      %p294 = scmp.ne.s32.totalorder %s282, %s283
      %p295 = scmp.eq.s32.totalorder %s28, 3
      %p296 = por %p294, %p295
      %p298 = scmp.ne.s32.totalorder %s283, %s297
      %p299 = scmp.eq.s32.totalorder %s28, 0
      %p300 = por %p298, %p299
      %s302 = sadd.s32 %s301, 1
      %p305 = scmp.eq.s32.totalorder %s22, 3
      %p306 = scmp.ne.s32.totalorder %s301, %s303
      %p307 = scmp.eq.s32.totalorder %s22, 0
      %p308 = por %p306, %p307
      %p309 = scmp.ne.s32.totalorder %s301, %s303
      %p310 = scmp.eq.s32.totalorder %s27, 3
      %p311 = por %p309, %p310
      %p312 = scmp.ne.s32.totalorder %s303, %s304
      %p313 = scmp.eq.s32.totalorder %s27, 0
      %p314 = por %p312, %p313
      %p315 = scmp.ne.s32.totalorder %s303, %s304
      %p316 = scmp.eq.s32.totalorder %s28, 3
      %p317 = por %p315, %p316
      %p319 = scmp.ne.s32.totalorder %s304, %s318
      %p320 = scmp.eq.s32.totalorder %s28, 0
      %p321 = por %p319, %p320
      %s322 = ssub.s32 %s29, %s41
      %s323 = ssub.s32 %s30, %s37
      %s324 = sor.u32 %s322, %s323
      %p325 = scmp.eq.s32.totalorder %s324, 0
      %s327 = sadd.s32 %s326, 1
      %s328 = scalar_select %p325, %s326, %s327
      %p331 = pneg %p325
      %p332 = scmp.eq.s32.totalorder %s22, 3
      %p333 = por %p331, %p332
      %p334 = scmp.ne.s32.totalorder %s326, %s329
      %p335 = scmp.eq.s32.totalorder %s22, 0
      %p336 = por %p334, %p335
      %p337 = scmp.ne.s32.totalorder %s326, %s329
      %p338 = scmp.eq.s32.totalorder %s27, 3
      %p339 = por %p337, %p338
      %p340 = scmp.ne.s32.totalorder %s329, %s330
      %p341 = scmp.eq.s32.totalorder %s27, 0
      %p342 = por %p340, %p341
      %p343 = scmp.ne.s32.totalorder %s329, %s330
      %p344 = scmp.eq.s32.totalorder %s28, 3
      %p345 = por %p343, %p344
      %p347 = scmp.ne.s32.totalorder %s330, %s346
      %p348 = scmp.eq.s32.totalorder %s28, 0
      %p349 = por %p347, %p348
      %p350 = scmp.le.s32.totalorder 1, %s22
      %p351 = scmp.lt.s32.totalorder %s22, 5
      %p352 = pnand %p350, %p351
      %p353 = pneg %p352
      // Predicated region
      $region9: #{tpu_custom_call.1} parent=5 // pred_check
        _
      $region10: #{tpu_custom_call.1} parent=5 // pred_check_branch
        %355 = sbr.rel (%p352) target = $region12
      $region11: #{tpu_custom_call.1} parent=5 // pred_region
        %s356 = ssub.s32 %s22, 1
        // Predicated region
        $region13: #{tpu_custom_call.1} parent=11 // pred_check
          %p357 = pneg %p83
        $region14: #{tpu_custom_call.1} parent=11 // pred_check_branch
          %359 = sbr.rel (%p357) target = $region16
        $region15: #{tpu_custom_call.1} parent=11 // pred_region
          _
        $region16: #{tpu_custom_call.1} parent=11 // pred_fallthru
          _
        // Predicated region
        $region17: #{tpu_custom_call.1} parent=11 // pred_check
          %p360 = pneg %p104
        $region18: #{tpu_custom_call.1} parent=11 // pred_check_branch
          %362 = sbr.rel (%p360) target = $region20
        $region19: #{tpu_custom_call.1} parent=11 // pred_region
          _
        $region20: #{tpu_custom_call.1} parent=11 // pred_fallthru
          _
        // Predicated region
        $region21: #{tpu_custom_call.1} parent=11 // pred_check
          %p363 = pneg %p125
        $region22: #{tpu_custom_call.1} parent=11 // pred_check_branch
          %365 = sbr.rel (%p363) target = $region24
        $region23: #{tpu_custom_call.1} parent=11 // pred_region
          _
        $region24: #{tpu_custom_call.1} parent=11 // pred_fallthru
          _
        // Predicated region
        $region25: #{tpu_custom_call.1} parent=11 // pred_check
          %p366 = pneg %p146
        $region26: #{tpu_custom_call.1} parent=11 // pred_check_branch
          %368 = sbr.rel (%p366) target = $region28
        $region27: #{tpu_custom_call.1} parent=11 // pred_region
          _
        $region28: #{tpu_custom_call.1} parent=11 // pred_fallthru
          _
        // Predicated region
        $region29: #{tpu_custom_call.1} parent=11 // pred_check
          %p369 = pneg %p167
        $region30: #{tpu_custom_call.1} parent=11 // pred_check_branch
          %371 = sbr.rel (%p369) target = $region32
        $region31: #{tpu_custom_call.1} parent=11 // pred_region
          _
        $region32: #{tpu_custom_call.1} parent=11 // pred_fallthru
          _
        // Predicated region
        $region33: #{tpu_custom_call.1} parent=11 // pred_check
          %p372 = pneg %p188
        $region34: #{tpu_custom_call.1} parent=11 // pred_check_branch
          %374 = sbr.rel (%p372) target = $region36
        $region35: #{tpu_custom_call.1} parent=11 // pred_region
          _
        $region36: #{tpu_custom_call.1} parent=11 // pred_fallthru
          _
        // Predicated region
        $region37: #{tpu_custom_call.1} parent=11 // pred_check
          %p375 = pneg %p209
        $region38: #{tpu_custom_call.1} parent=11 // pred_check_branch
          %377 = sbr.rel (%p375) target = $region40
        $region39: #{tpu_custom_call.1} parent=11 // pred_region
          _
        $region40: #{tpu_custom_call.1} parent=11 // pred_fallthru
          _
        // Predicated region
        $region41: #{tpu_custom_call.1} parent=11 // pred_check
          %p378 = pneg %p230
        $region42: #{tpu_custom_call.1} parent=11 // pred_check_branch
          %380 = sbr.rel (%p378) target = $region44
        $region43: #{tpu_custom_call.1} parent=11 // pred_region
          _
        $region44: #{tpu_custom_call.1} parent=11 // pred_fallthru
          _
        // Predicated region
        $region45: #{tpu_custom_call.1} parent=11 // pred_check
          %p381 = pneg %p251
        $region46: #{tpu_custom_call.1} parent=11 // pred_check_branch
          %383 = sbr.rel (%p381) target = $region48
        $region47: #{tpu_custom_call.1} parent=11 // pred_region
          _
        $region48: #{tpu_custom_call.1} parent=11 // pred_fallthru
          _
        // Predicated region
        $region49: #{tpu_custom_call.1} parent=11 // pred_check
          %p384 = pneg %p272
        $region50: #{tpu_custom_call.1} parent=11 // pred_check_branch
          %386 = sbr.rel (%p384) target = $region52
        $region51: #{tpu_custom_call.1} parent=11 // pred_region
          _
        $region52: #{tpu_custom_call.1} parent=11 // pred_fallthru
          _
        // Predicated region
        $region53: #{tpu_custom_call.1} parent=11 // pred_check
          %p387 = pneg %p293
        $region54: #{tpu_custom_call.1} parent=11 // pred_check_branch
          %389 = sbr.rel (%p387) target = $region56
        $region55: #{tpu_custom_call.1} parent=11 // pred_region
          _
        $region56: #{tpu_custom_call.1} parent=11 // pred_fallthru
          _
        // Predicated region
        $region57: #{tpu_custom_call.1} parent=11 // pred_check
          %p390 = pneg %p314
        $region58: #{tpu_custom_call.1} parent=11 // pred_check_branch
          %392 = sbr.rel (%p390) target = $region60
        $region59: #{tpu_custom_call.1} parent=11 // pred_region
          _
        $region60: #{tpu_custom_call.1} parent=11 // pred_fallthru
          _
      $region12: #{tpu_custom_call.1} parent=5 // pred_fallthru
        _
      %p393 = scmp.lt.s32.totalorder %s22, 4
      // Predicated region
      $region61: #{tpu_custom_call.1} parent=5 // pred_check
        %p394 = pneg %p393
      $region62: #{tpu_custom_call.1} parent=5 // pred_check_branch
        %396 = sbr.rel (%p394) target = $region64
      $region63: #{tpu_custom_call.1} parent=5 // pred_region
        // Predicated region
        $region65: #{tpu_custom_call.1} parent=63 // pred_check
          %p397 = pneg %p56
        $region66: #{tpu_custom_call.1} parent=63 // pred_check_branch
          %399 = sbr.rel (%p397) target = $region68
        $region67: #{tpu_custom_call.1} parent=63 // pred_region
          %p400 = scmp.lt.s32.totalorder %s29, 1
          %s401 = scalar_select %p400, %s29, 1
          %p402 = scmp.lt.s32.totalorder %s30, 1
          %s403 = scalar_select %p402, %s30, 1
          %s404 = smul.addr %s401, 2
          %s405 = sadd.s32 %s403, %s404
          %s406 = smul.addr %s405, 8
          %s407 = scalar_lea.vmem %s0, %s406
        $region68: #{tpu_custom_call.1} parent=63 // pred_fallthru
          _
      $region64: #{tpu_custom_call.1} parent=5 // pred_fallthru
        _
      %p408 = scmp.le.s32.totalorder 1, %s22
      %p409 = scmp.lt.s32.totalorder %s22, 5
      %p410 = pnand %p408, %p409
      %p411 = pneg %p410
      // Predicated region
      $region69: #{tpu_custom_call.1} parent=5 // pred_check
        _
      $region70: #{tpu_custom_call.1} parent=5 // pred_check_branch
        %413 = sbr.rel (%p410) target = $region72
      $region71: #{tpu_custom_call.1} parent=5 // pred_region
        %s414 = ssub.s32 %s22, 1
        %p415 = scmp.lt.s32.totalorder %s31, 1
        %s416 = scalar_select %p415, %s31, 1
        %p417 = scmp.lt.s32.totalorder %s32, 1
        %s418 = scalar_select %p417, %s32, 1
        %s419 = smul.addr %s416, 2
        %s420 = sadd.s32 %s418, %s419
        %s421 = smul.addr %s420, 8
        %s422 = scalar_lea.vmem %s0, %s421
        %p423 = pneg %p62
        %p424 = pneg %p59
        %p425 = pneg %p83
        %p426 = pneg %p80
        %p427 = pneg %p104
        %p428 = pneg %p101
        %p429 = pneg %p125
        %p430 = pneg %p122
        %p431 = pneg %p146
        %p432 = pneg %p143
        %p433 = pneg %p167
        %p434 = pneg %p164
        %p435 = pneg %p188
        %p436 = pneg %p185
        %p437 = pneg %p209
        %p438 = pneg %p206
        %p439 = pneg %p230
        %p440 = pneg %p227
        %p441 = pneg %p251
        %p442 = pneg %p248
        %p443 = pneg %p272
        %p444 = pneg %p269
        %p445 = pneg %p293
        %p446 = pneg %p290
        %p447 = pneg %p314
        %p448 = pneg %p311
        %p449 = pneg %p342
        %p450 = pneg %p339
        %s451 = sand.u32 %s329, 1
        %s452 = scalar_lea.sflag [#allocation9], %s451
        %s453 = sand.u32 %s329, 1
        %s454 = smul.addr %s453, 8
        %s455 = scalar_lea.vmem [#allocation8], %s454
        %p456 = scmp.lt.s32.totalorder %s31, 1
        %s457 = scalar_select %p456, %s31, 1
        %p458 = scmp.lt.s32.totalorder %s32, 1
        %s459 = scalar_select %p458, %s32, 1
        %s460 = smul.addr %s457, 2
        %s461 = sadd.s32 %s459, %s460
        %s462 = smul.addr %s461, 8
        %s463 = scalar_lea.vmem %s0, %s462
        %p465 = scmp.eq.s32.totalorder %s32, 0
        // Predicated region
        $region73: #{tpu_custom_call.1} parent=71 // pred_check
          %p466 = pneg %p465
        $region74: #{tpu_custom_call.1} parent=71 // pred_check_branch
          %468 = sbr.rel (%p466) target = $region76
        $region75: #{tpu_custom_call.1} parent=71 // pred_region
          %vm469 = vcmask 518144
          %470 = vst.msk [vmem:[#allocation2] sm:$0x7] %vm469, 0.0
          %vm471 = vcmask 523264
          %472 = vst.msk [vmem:[#allocation3] sm:$0xff] %vm471, 0.0
          %473 = vst.msk [vmem:[#allocation3 + $0x8] sm:$0xff] %vm471, 0.0
        $region76: #{tpu_custom_call.1} parent=71 // pred_fallthru
          _
        %p474 = scmp.gt.s32.totalorder %s32, 0
        // Predicated region
        $region77: #{tpu_custom_call.1} parent=71 // pred_check
          %p475 = pneg %p474
        $region78: #{tpu_custom_call.1} parent=71 // pred_check_branch
          %477 = sbr.rel (%p475) target = $region80
        $region79: #{tpu_custom_call.1} parent=71 // pred_region
          %v478 = vld [vmem:[#allocation2 + $0x8] sm:$0x7]
          %vm479 = vcmask 518144
          %480 = vst.msk [vmem:[#allocation2] sm:$0x7] %vm479, %v478
        $region80: #{tpu_custom_call.1} parent=71 // pred_fallthru
          _
        %v481 = vld [vmem:[%s463] sm:$0xff]
        %v482 = vld [vmem:[%s1] sm:$0xf]
        %v483 = vld [vmem:[%s1 + $0x4] sm:$0xf]
        %v484 = vld [vmem:[%s1 + $0x8] sm:$0xf]
        %v485 = vld [vmem:[%s1 + $0xc] sm:$0xf]
        %v486 = vpack.c.bf16 %v481, %v481
        %v487 = vld [vmem:[%s2] sm:$0x1]
        %v489 = vlaneseq
        %v490 = vshrl.u32 %v489, 7
        %v491 = vsub.s32 0, %v490
        %v492 = vrot.slane %v487, %v491
        %v498 = vunpack.c.l.b16 %v482
        %v499 = vunpack.c.l.b16 %v483
        %v500 = vunpack.c.l.b16 %v484
        %v501 = vunpack.c.l.b16 %v485
        %v502 = vpack.c.b16 %v499, %v498
        %v503 = vpack.c.b16 %v501, %v500
        %vm506 = vcmask 261120
        %v508 = vsel %vm506, %v486, 0
        %510 = vmatprep.subr.bf16.mxu0 0
        %511 = vmatpush1.bf16.msra.mxu0 %v502
        %512 = vmatprep.subr.bf16.mxu0 0
        %513 = vmatpush1.bf16.msra.mxu0 %v503
        %514 = vmatprep.subr.bf16.mxu0 0
        %515 = vmatpush1.bf16.msra.mxu0 0
        %516 = vmatprep.subr.bf16.mxu0 0
        %517 = vmatpush1.bf16.msra.mxu0 0
        %518 = vmatprep.subr.bf16.mxu0 0
        %519 = vmatpush1.bf16.msra.mxu0 0
        %520 = vmatprep.subr.bf16.mxu0 0
        %521 = vmatpush1.bf16.msra.mxu0 0
        %522 = vmatprep.subr.bf16.mxu0 0
        %523 = vmatpush1.bf16.msra.mxu0 0
        %524 = vmatprep.subr.bf16.mxu0 0
        %525 = vmatpush1.bf16.msra.mxu0 0
        %526 = vmatprep.subr.bf16.mxu0 0
        %527 = vmatpush1.bf16.msra.mxu0 0
        %528 = vmatprep.subr.bf16.mxu0 0
        %529 = vmatpush1.bf16.msra.mxu0 0
        %530 = vmatprep.subr.bf16.mxu0 0
        %531 = vmatpush1.bf16.msra.mxu0 0
        %532 = vmatprep.subr.bf16.mxu0 0
        %533 = vmatpush1.bf16.msra.mxu0 0
        %534 = vmatprep.subr.bf16.mxu0 0
        %535 = vmatpush1.bf16.msra.mxu0 0
        %536 = vmatprep.subr.bf16.mxu0 0
        %537 = vmatpush1.bf16.msra.mxu0 0
        %538 = vmatprep.subr.bf16.mxu0 0
        %539 = vmatpush1.bf16.msra.mxu0 0
        %540 = vmatprep.subr.bf16.mxu0 0
        %541 = vmatpush1.bf16.msra.mxu0 0
        %542 = vmatprep.mubr.bf16.mxu0 0
        %543 = vmatmul.mubr.bf16.gmra.mrb[0].mxu0 %v508
        %v544 = vpop.f32.mrb[0].mxu0
        %v545 = vadd.f32 %v492, %v544
        %v546 = vpop.f32.mrb[0].mxu0
        %v547 = vpop.f32.mrb[0].mxu0
        %v548 = vpop.f32.mrb[0].mxu0
        %549 = vdwg.mxu0
        %vm550 = vcmask 523264
        %551 = vst.msk [vmem:[#allocation2 + $0x3] sm:$0xff] %vm550, %v545
        %v552 = vld [vmem:[%s4] sm:$0x1]
        %v554 = vlaneseq
        %v555 = vshrl.u32 %v554, 7
        %v556 = vsub.s32 0, %v555
        %v557 = vrot.slane %v552, %v556
        %v559 = vld [vmem:[#allocation2] sm:$0xff]
        %v560 = vld [vmem:[%s3] sm:$0x1]
        %v561 = vlaneseq
        %v562 = vshrl.u32 %v561, 7
        %v563 = vsub.s32 0, %v562
        %v564 = vrot.slane %v560, %v563
        %v565 = vmul.f32 %v559, %v564
        %v566 = vadd.f32 %v557, %v565
        %v567 = vld [vmem:[#allocation2 + $0x1] sm:$0xff]
        %v568 = vld [vmem:[%s3 + $0x1] sm:$0x1]
        %v569 = vlaneseq
        %v570 = vshrl.u32 %v569, 7
        %v571 = vsub.s32 0, %v570
        %v572 = vrot.slane %v568, %v571
        %v573 = vmul.f32 %v567, %v572
        %v574 = vadd.f32 %v566, %v573
        %v575 = vld [vmem:[#allocation2 + $0x2] sm:$0xff]
        %v576 = vld [vmem:[%s3 + $0x2] sm:$0x1]
        %v577 = vlaneseq
        %v578 = vshrl.u32 %v577, 7
        %v579 = vsub.s32 0, %v578
        %v580 = vrot.slane %v576, %v579
        %v581 = vmul.f32 %v575, %v580
        %v582 = vadd.f32 %v574, %v581
        %v583 = vld [vmem:[#allocation2 + $0x3] sm:$0xff]
        %v584 = vld [vmem:[%s3 + $0x3] sm:$0x1]
        %v585 = vlaneseq
        %v586 = vshrl.u32 %v585, 7
        %v587 = vsub.s32 0, %v586
        %v588 = vrot.slane %v584, %v587
        %v589 = vmul.f32 %v583, %v588
        %v590 = vadd.f32 %v582, %v589
        %v591 = vxor.u32 %v590, 2147483648
        %v592 = vmul.f32 %v591, 1.442695
        %v593 = vpow.pop %v592
        %v594 = vadd.f32 %v593, 1.0
        %v595 = vrcp.pop %v594
        %v596 = vmul.f32 1.0, %v595
        %v597 = vmul.f32 %v590, %v596
        %v598 = vld [vmem:[%s5] sm:$0xff]
        %v599 = vld [vmem:[%s5 + $0x8] sm:$0xff]
        %v600 = vld [vmem:[%s5 + $0x10] sm:$0xff]
        %v601 = vld [vmem:[%s5 + $0x18] sm:$0xff]
        %v602 = vld [vmem:[%s5 + $0x20] sm:$0xff]
        %v603 = vld [vmem:[%s5 + $0x28] sm:$0xff]
        %v604 = vld [vmem:[%s5 + $0x30] sm:$0xff]
        %v605 = vld [vmem:[%s5 + $0x38] sm:$0xff]
        %v607 = vsel %vm550, %v597, 0
        %609 = vmatprep.subr.mxu0 0.0
        %v610 = vand.u32 %v598, 4294901760
        %611 = vmatpush1.msra.mxu0 %v610
        %612 = vmatprep.subr.mxu0 0.0
        %v613 = vand.u32 %v599, 4294901760
        %614 = vmatpush1.msra.mxu0 %v613
        %615 = vmatprep.subr.mxu0 0.0
        %v616 = vand.u32 %v600, 4294901760
        %617 = vmatpush1.msra.mxu0 %v616
        %618 = vmatprep.subr.mxu0 0.0
        %v619 = vand.u32 %v601, 4294901760
        %620 = vmatpush1.msra.mxu0 %v619
        %621 = vmatprep.subr.mxu0 0.0
        %v622 = vand.u32 %v602, 4294901760
        %623 = vmatpush1.msra.mxu0 %v622
        %624 = vmatprep.subr.mxu0 0.0
        %v625 = vand.u32 %v603, 4294901760
        %626 = vmatpush1.msra.mxu0 %v625
        %627 = vmatprep.subr.mxu0 0.0
        %v628 = vand.u32 %v604, 4294901760
        %629 = vmatpush1.msra.mxu0 %v628
        %630 = vmatprep.subr.mxu0 0.0
        %v631 = vand.u32 %v605, 4294901760
        %632 = vmatpush1.msra.mxu0 %v631
        %633 = vmatprep.subr.mxu0 0.0
        %634 = vmatpush1.msra.mxu0 0.0
        %635 = vmatprep.subr.mxu0 0.0
        %636 = vmatpush1.msra.mxu0 0.0
        %637 = vmatprep.subr.mxu0 0.0
        %638 = vmatpush1.msra.mxu0 0.0
        %639 = vmatprep.subr.mxu0 0.0
        %640 = vmatpush1.msra.mxu0 0.0
        %641 = vmatprep.subr.mxu0 0.0
        %642 = vmatpush1.msra.mxu0 0.0
        %643 = vmatprep.subr.mxu0 0.0
        %644 = vmatpush1.msra.mxu0 0.0
        %645 = vmatprep.subr.mxu0 0.0
        %646 = vmatpush1.msra.mxu0 0.0
        %647 = vmatprep.subr.mxu0 0.0
        %648 = vmatpush1.msra.mxu0 0.0
        %649 = vmatprep.subr.mxu0 0.0
        %650 = vmatpush1.msra.mxu0 0.0
        %651 = vmatprep.subr.mxu0 0.0
        %652 = vmatpush1.msra.mxu0 0.0
        %653 = vmatprep.subr.mxu0 0.0
        %654 = vmatpush1.msra.mxu0 0.0
        %655 = vmatprep.subr.mxu0 0.0
        %656 = vmatpush1.msra.mxu0 0.0
        %657 = vmatprep.subr.mxu0 0.0
        %658 = vmatpush1.msra.mxu0 0.0
        %659 = vmatprep.subr.mxu0 0.0
        %660 = vmatpush1.msra.mxu0 0.0
        %661 = vmatprep.subr.mxu0 0.0
        %662 = vmatpush1.msra.mxu0 0.0
        %663 = vmatprep.subr.mxu0 0.0
        %664 = vmatpush1.msra.mxu0 0.0
        %665 = vmatprep.subr.mxu0 0.0
        %666 = vmatpush1.msra.mxu0 0.0
        %667 = vmatprep.subr.mxu0 0.0
        %668 = vmatpush1.msra.mxu0 0.0
        %669 = vmatprep.subr.mxu0 0.0
        %670 = vmatpush1.msra.mxu0 0.0
        %671 = vmatprep.subr.mxu0 0.0
        %672 = vmatpush1.msra.mxu0 0.0
        %673 = vmatprep.subr.mxu0 0.0
        %674 = vmatpush1.msra.mxu0 0.0
        %675 = vmatprep.subr.mxu0 0.0
        %676 = vmatpush1.msra.mxu0 0.0
        %677 = vmatprep.subr.mxu0 0.0
        %678 = vmatpush1.msra.mxu0 0.0
        %679 = vmatprep.subr.mxu0 0.0
        %680 = vmatpush1.msra.mxu0 0.0
        %681 = vmatprep.mubr.f32.mxu0 0.0
        %v682 = vand.u32 %v607, 4294901760
        %v683 = vsub.f32 %v607, %v682
        %v684 = vand.u32 %v683, 4294901760
        %v685 = vsub.f32 %v683, %v684
        %v686 = vand.u32 %v685, 4294901760
        %687 = vmatmul.mubr.f32.gmra.mrb[0].mxu0 %v686
        %v688 = vpop.f32.mrb[0].mxu0
        %v689 = vadd.f32 0.0, %v688
        %v690 = vpop.f32.mrb[0].mxu0
        %691 = vdwg.mxu0
        %692 = vmatprep.subr.mxu0 0.0
        %v693 = vand.u32 %v598, 4294901760
        %v694 = vsub.f32 %v598, %v693
        %v695 = vand.u32 %v694, 4294901760
        %v696 = vsub.f32 %v694, %v695
        %v697 = vand.u32 %v696, 4294901760
        %698 = vmatpush1.msra.mxu0 %v697
        %699 = vmatprep.subr.mxu0 0.0
        %v700 = vand.u32 %v599, 4294901760
        %v701 = vsub.f32 %v599, %v700
        %v702 = vand.u32 %v701, 4294901760
        %v703 = vsub.f32 %v701, %v702
        %v704 = vand.u32 %v703, 4294901760
        %705 = vmatpush1.msra.mxu0 %v704
        %706 = vmatprep.subr.mxu0 0.0
        %v707 = vand.u32 %v600, 4294901760
        %v708 = vsub.f32 %v600, %v707
        %v709 = vand.u32 %v708, 4294901760
        %v710 = vsub.f32 %v708, %v709
        %v711 = vand.u32 %v710, 4294901760
        %712 = vmatpush1.msra.mxu0 %v711
        %713 = vmatprep.subr.mxu0 0.0
        %v714 = vand.u32 %v601, 4294901760
        %v715 = vsub.f32 %v601, %v714
        %v716 = vand.u32 %v715, 4294901760
        %v717 = vsub.f32 %v715, %v716
        %v718 = vand.u32 %v717, 4294901760
        %719 = vmatpush1.msra.mxu0 %v718
        %720 = vmatprep.subr.mxu0 0.0
        %v721 = vand.u32 %v602, 4294901760
        %v722 = vsub.f32 %v602, %v721
        %v723 = vand.u32 %v722, 4294901760
        %v724 = vsub.f32 %v722, %v723
        %v725 = vand.u32 %v724, 4294901760
        %726 = vmatpush1.msra.mxu0 %v725
        %727 = vmatprep.subr.mxu0 0.0
        %v728 = vand.u32 %v603, 4294901760
        %v729 = vsub.f32 %v603, %v728
        %v730 = vand.u32 %v729, 4294901760
        %v731 = vsub.f32 %v729, %v730
        %v732 = vand.u32 %v731, 4294901760
        %733 = vmatpush1.msra.mxu0 %v732
        %734 = vmatprep.subr.mxu0 0.0
        %v735 = vand.u32 %v604, 4294901760
        %v736 = vsub.f32 %v604, %v735
        %v737 = vand.u32 %v736, 4294901760
        %v738 = vsub.f32 %v736, %v737
        %v739 = vand.u32 %v738, 4294901760
        %740 = vmatpush1.msra.mxu0 %v739
        %741 = vmatprep.subr.mxu0 0.0
        %v742 = vand.u32 %v605, 4294901760
        %v743 = vsub.f32 %v605, %v742
        %v744 = vand.u32 %v743, 4294901760
        %v745 = vsub.f32 %v743, %v744
        %v746 = vand.u32 %v745, 4294901760
        %747 = vmatpush1.msra.mxu0 %v746
        %748 = vmatprep.subr.mxu0 0.0
        %749 = vmatpush1.msra.mxu0 0.0
        %750 = vmatprep.subr.mxu0 0.0
        %751 = vmatpush1.msra.mxu0 0.0
        %752 = vmatprep.subr.mxu0 0.0
        %753 = vmatpush1.msra.mxu0 0.0
        %754 = vmatprep.subr.mxu0 0.0
        %755 = vmatpush1.msra.mxu0 0.0
        %756 = vmatprep.subr.mxu0 0.0
        %757 = vmatpush1.msra.mxu0 0.0
        %758 = vmatprep.subr.mxu0 0.0
        %759 = vmatpush1.msra.mxu0 0.0
        %760 = vmatprep.subr.mxu0 0.0
        %761 = vmatpush1.msra.mxu0 0.0
        %762 = vmatprep.subr.mxu0 0.0
        %763 = vmatpush1.msra.mxu0 0.0
        %764 = vmatprep.subr.mxu0 0.0
        %765 = vmatpush1.msra.mxu0 0.0
        %766 = vmatprep.subr.mxu0 0.0
        %767 = vmatpush1.msra.mxu0 0.0
        %768 = vmatprep.subr.mxu0 0.0
        %769 = vmatpush1.msra.mxu0 0.0
        %770 = vmatprep.subr.mxu0 0.0
        %771 = vmatpush1.msra.mxu0 0.0
        %772 = vmatprep.subr.mxu0 0.0
        %773 = vmatpush1.msra.mxu0 0.0
        %774 = vmatprep.subr.mxu0 0.0
        %775 = vmatpush1.msra.mxu0 0.0
        %776 = vmatprep.subr.mxu0 0.0
        %777 = vmatpush1.msra.mxu0 0.0
        %778 = vmatprep.subr.mxu0 0.0
        %779 = vmatpush1.msra.mxu0 0.0
        %780 = vmatprep.subr.mxu0 0.0
        %781 = vmatpush1.msra.mxu0 0.0
        %782 = vmatprep.subr.mxu0 0.0
        %783 = vmatpush1.msra.mxu0 0.0
        %784 = vmatprep.subr.mxu0 0.0
        %785 = vmatpush1.msra.mxu0 0.0
        %786 = vmatprep.subr.mxu0 0.0
        %787 = vmatpush1.msra.mxu0 0.0
        %788 = vmatprep.subr.mxu0 0.0
        %789 = vmatpush1.msra.mxu0 0.0
        %790 = vmatprep.subr.mxu0 0.0
        %791 = vmatpush1.msra.mxu0 0.0
        %792 = vmatprep.subr.mxu0 0.0
        %793 = vmatpush1.msra.mxu0 0.0
        %794 = vmatprep.subr.mxu0 0.0
        %795 = vmatpush1.msra.mxu0 0.0
        %796 = vmatprep.mubr.f32.mxu0 0.0
        %v797 = vand.u32 %v607, 4294901760
        %798 = vmatmul.mubr.f32.gmra.mrb[0].mxu0 %v797
        %v799 = vpop.f32.mrb[0].mxu0
        %v800 = vadd.f32 %v689, %v799
        %v801 = vpop.f32.mrb[0].mxu0
        %802 = vdwg.mxu0
        %803 = vmatprep.subr.mxu0 0.0
        %v804 = vand.u32 %v598, 4294901760
        %v805 = vsub.f32 %v598, %v804
        %806 = vmatpush1.msra.mxu0 %v805
        %807 = vmatprep.subr.mxu0 0.0
        %v808 = vand.u32 %v599, 4294901760
        %v809 = vsub.f32 %v599, %v808
        %810 = vmatpush1.msra.mxu0 %v809
        %811 = vmatprep.subr.mxu0 0.0
        %v812 = vand.u32 %v600, 4294901760
        %v813 = vsub.f32 %v600, %v812
        %814 = vmatpush1.msra.mxu0 %v813
        %815 = vmatprep.subr.mxu0 0.0
        %v816 = vand.u32 %v601, 4294901760
        %v817 = vsub.f32 %v601, %v816
        %818 = vmatpush1.msra.mxu0 %v817
        %819 = vmatprep.subr.mxu0 0.0
        %v820 = vand.u32 %v602, 4294901760
        %v821 = vsub.f32 %v602, %v820
        %822 = vmatpush1.msra.mxu0 %v821
        %823 = vmatprep.subr.mxu0 0.0
        %v824 = vand.u32 %v603, 4294901760
        %v825 = vsub.f32 %v603, %v824
        %826 = vmatpush1.msra.mxu0 %v825
        %827 = vmatprep.subr.mxu0 0.0
        %v828 = vand.u32 %v604, 4294901760
        %v829 = vsub.f32 %v604, %v828
        %830 = vmatpush1.msra.mxu0 %v829
        %831 = vmatprep.subr.mxu0 0.0
        %v832 = vand.u32 %v605, 4294901760
        %v833 = vsub.f32 %v605, %v832
        %834 = vmatpush1.msra.mxu0 %v833
        %835 = vmatprep.subr.mxu0 0.0
        %836 = vmatpush1.msra.mxu0 0.0
        %837 = vmatprep.subr.mxu0 0.0
        %838 = vmatpush1.msra.mxu0 0.0
        %839 = vmatprep.subr.mxu0 0.0
        %840 = vmatpush1.msra.mxu0 0.0
        %841 = vmatprep.subr.mxu0 0.0
        %842 = vmatpush1.msra.mxu0 0.0
        %843 = vmatprep.subr.mxu0 0.0
        %844 = vmatpush1.msra.mxu0 0.0
        %845 = vmatprep.subr.mxu0 0.0
        %846 = vmatpush1.msra.mxu0 0.0
        %847 = vmatprep.subr.mxu0 0.0
        %848 = vmatpush1.msra.mxu0 0.0
        %849 = vmatprep.subr.mxu0 0.0
        %850 = vmatpush1.msra.mxu0 0.0
        %851 = vmatprep.subr.mxu0 0.0
        %852 = vmatpush1.msra.mxu0 0.0
        %853 = vmatprep.subr.mxu0 0.0
        %854 = vmatpush1.msra.mxu0 0.0
        %855 = vmatprep.subr.mxu0 0.0
        %856 = vmatpush1.msra.mxu0 0.0
        %857 = vmatprep.subr.mxu0 0.0
        %858 = vmatpush1.msra.mxu0 0.0
        %859 = vmatprep.subr.mxu0 0.0
        %860 = vmatpush1.msra.mxu0 0.0
        %861 = vmatprep.subr.mxu0 0.0
        %862 = vmatpush1.msra.mxu0 0.0
        %863 = vmatprep.subr.mxu0 0.0
        %864 = vmatpush1.msra.mxu0 0.0
        %865 = vmatprep.subr.mxu0 0.0
        %866 = vmatpush1.msra.mxu0 0.0
        %867 = vmatprep.subr.mxu0 0.0
        %868 = vmatpush1.msra.mxu0 0.0
        %869 = vmatprep.subr.mxu0 0.0
        %870 = vmatpush1.msra.mxu0 0.0
        %871 = vmatprep.subr.mxu0 0.0
        %872 = vmatpush1.msra.mxu0 0.0
        %873 = vmatprep.subr.mxu0 0.0
        %874 = vmatpush1.msra.mxu0 0.0
        %875 = vmatprep.subr.mxu0 0.0
        %876 = vmatpush1.msra.mxu0 0.0
        %877 = vmatprep.subr.mxu0 0.0
        %878 = vmatpush1.msra.mxu0 0.0
        %879 = vmatprep.subr.mxu0 0.0
        %880 = vmatpush1.msra.mxu0 0.0
        %881 = vmatprep.subr.mxu0 0.0
        %882 = vmatpush1.msra.mxu0 0.0
        %883 = vmatprep.mubr.f32.mxu0 0.0
        %v884 = vand.u32 %v607, 4294901760
        %v885 = vsub.f32 %v607, %v884
        %886 = vmatmul.mubr.f32.gmra.mrb[0].mxu0 %v885
        %v887 = vpop.f32.mrb[0].mxu0
        %v888 = vadd.f32 %v800, %v887
        %v889 = vpop.f32.mrb[0].mxu0
        %890 = vdwg.mxu0
        %891 = vmatprep.subr.mxu0 0.0
        %v892 = vand.u32 %v598, 4294901760
        %893 = vmatpush1.msra.mxu0 %v892
        %894 = vmatprep.subr.mxu0 0.0
        %v895 = vand.u32 %v599, 4294901760
        %896 = vmatpush1.msra.mxu0 %v895
        %897 = vmatprep.subr.mxu0 0.0
        %v898 = vand.u32 %v600, 4294901760
        %899 = vmatpush1.msra.mxu0 %v898
        %900 = vmatprep.subr.mxu0 0.0
        %v901 = vand.u32 %v601, 4294901760
        %902 = vmatpush1.msra.mxu0 %v901
        %903 = vmatprep.subr.mxu0 0.0
        %v904 = vand.u32 %v602, 4294901760
        %905 = vmatpush1.msra.mxu0 %v904
        %906 = vmatprep.subr.mxu0 0.0
        %v907 = vand.u32 %v603, 4294901760
        %908 = vmatpush1.msra.mxu0 %v907
        %909 = vmatprep.subr.mxu0 0.0
        %v910 = vand.u32 %v604, 4294901760
        %911 = vmatpush1.msra.mxu0 %v910
        %912 = vmatprep.subr.mxu0 0.0
        %v913 = vand.u32 %v605, 4294901760
        %914 = vmatpush1.msra.mxu0 %v913
        %915 = vmatprep.subr.mxu0 0.0
        %916 = vmatpush1.msra.mxu0 0.0
        %917 = vmatprep.subr.mxu0 0.0
        %918 = vmatpush1.msra.mxu0 0.0
        %919 = vmatprep.subr.mxu0 0.0
        %920 = vmatpush1.msra.mxu0 0.0
        %921 = vmatprep.subr.mxu0 0.0
        %922 = vmatpush1.msra.mxu0 0.0
        %923 = vmatprep.subr.mxu0 0.0
        %924 = vmatpush1.msra.mxu0 0.0
        %925 = vmatprep.subr.mxu0 0.0
        %926 = vmatpush1.msra.mxu0 0.0
        %927 = vmatprep.subr.mxu0 0.0
        %928 = vmatpush1.msra.mxu0 0.0
        %929 = vmatprep.subr.mxu0 0.0
        %930 = vmatpush1.msra.mxu0 0.0
        %931 = vmatprep.subr.mxu0 0.0
        %932 = vmatpush1.msra.mxu0 0.0
        %933 = vmatprep.subr.mxu0 0.0
        %934 = vmatpush1.msra.mxu0 0.0
        %935 = vmatprep.subr.mxu0 0.0
        %936 = vmatpush1.msra.mxu0 0.0
        %937 = vmatprep.subr.mxu0 0.0
        %938 = vmatpush1.msra.mxu0 0.0
        %939 = vmatprep.subr.mxu0 0.0
        %940 = vmatpush1.msra.mxu0 0.0
        %941 = vmatprep.subr.mxu0 0.0
        %942 = vmatpush1.msra.mxu0 0.0
        %943 = vmatprep.subr.mxu0 0.0
        %944 = vmatpush1.msra.mxu0 0.0
        %945 = vmatprep.subr.mxu0 0.0
        %946 = vmatpush1.msra.mxu0 0.0
        %947 = vmatprep.subr.mxu0 0.0
        %948 = vmatpush1.msra.mxu0 0.0
        %949 = vmatprep.subr.mxu0 0.0
        %950 = vmatpush1.msra.mxu0 0.0
        %951 = vmatprep.subr.mxu0 0.0
        %952 = vmatpush1.msra.mxu0 0.0
        %953 = vmatprep.subr.mxu0 0.0
        %954 = vmatpush1.msra.mxu0 0.0
        %955 = vmatprep.subr.mxu0 0.0
        %956 = vmatpush1.msra.mxu0 0.0
        %957 = vmatprep.subr.mxu0 0.0
        %958 = vmatpush1.msra.mxu0 0.0
        %959 = vmatprep.subr.mxu0 0.0
        %960 = vmatpush1.msra.mxu0 0.0
        %961 = vmatprep.subr.mxu0 0.0
        %962 = vmatpush1.msra.mxu0 0.0
        %963 = vmatprep.mubr.f32.mxu0 0.0
        %v964 = vand.u32 %v607, 4294901760
        %v965 = vsub.f32 %v607, %v964
        %v966 = vand.u32 %v965, 4294901760
        %967 = vmatmul.mubr.f32.gmra.mrb[0].mxu0 %v966
        %v968 = vpop.f32.mrb[0].mxu0
        %v969 = vadd.f32 %v888, %v968
        %v970 = vpop.f32.mrb[0].mxu0
        %971 = vdwg.mxu0
        %972 = vmatprep.subr.mxu0 0.0
        %v973 = vand.u32 %v598, 4294901760
        %v974 = vsub.f32 %v598, %v973
        %v975 = vand.u32 %v974, 4294901760
        %976 = vmatpush1.msra.mxu0 %v975
        %977 = vmatprep.subr.mxu0 0.0
        %v978 = vand.u32 %v599, 4294901760
        %v979 = vsub.f32 %v599, %v978
        %v980 = vand.u32 %v979, 4294901760
        %981 = vmatpush1.msra.mxu0 %v980
        %982 = vmatprep.subr.mxu0 0.0
        %v983 = vand.u32 %v600, 4294901760
        %v984 = vsub.f32 %v600, %v983
        %v985 = vand.u32 %v984, 4294901760
        %986 = vmatpush1.msra.mxu0 %v985
        %987 = vmatprep.subr.mxu0 0.0
        %v988 = vand.u32 %v601, 4294901760
        %v989 = vsub.f32 %v601, %v988
        %v990 = vand.u32 %v989, 4294901760
        %991 = vmatpush1.msra.mxu0 %v990
        %992 = vmatprep.subr.mxu0 0.0
        %v993 = vand.u32 %v602, 4294901760
        %v994 = vsub.f32 %v602, %v993
        %v995 = vand.u32 %v994, 4294901760
        %996 = vmatpush1.msra.mxu0 %v995
        %997 = vmatprep.subr.mxu0 0.0
        %v998 = vand.u32 %v603, 4294901760
        %v999 = vsub.f32 %v603, %v998
        %v1000 = vand.u32 %v999, 4294901760
        %1001 = vmatpush1.msra.mxu0 %v1000
        %1002 = vmatprep.subr.mxu0 0.0
        %v1003 = vand.u32 %v604, 4294901760
        %v1004 = vsub.f32 %v604, %v1003
        %v1005 = vand.u32 %v1004, 4294901760
        %1006 = vmatpush1.msra.mxu0 %v1005
        %1007 = vmatprep.subr.mxu0 0.0
        %v1008 = vand.u32 %v605, 4294901760
        %v1009 = vsub.f32 %v605, %v1008
        %v1010 = vand.u32 %v1009, 4294901760
        %1011 = vmatpush1.msra.mxu0 %v1010
        %1012 = vmatprep.subr.mxu0 0.0
        %1013 = vmatpush1.msra.mxu0 0.0
        %1014 = vmatprep.subr.mxu0 0.0
        %1015 = vmatpush1.msra.mxu0 0.0
        %1016 = vmatprep.subr.mxu0 0.0
        %1017 = vmatpush1.msra.mxu0 0.0
        %1018 = vmatprep.subr.mxu0 0.0
        %1019 = vmatpush1.msra.mxu0 0.0
        %1020 = vmatprep.subr.mxu0 0.0
        %1021 = vmatpush1.msra.mxu0 0.0
        %1022 = vmatprep.subr.mxu0 0.0
        %1023 = vmatpush1.msra.mxu0 0.0
        %1024 = vmatprep.subr.mxu0 0.0
        %1025 = vmatpush1.msra.mxu0 0.0
        %1026 = vmatprep.subr.mxu0 0.0
        %1027 = vmatpush1.msra.mxu0 0.0
        %1028 = vmatprep.subr.mxu0 0.0
        %1029 = vmatpush1.msra.mxu0 0.0
        %1030 = vmatprep.subr.mxu0 0.0
        %1031 = vmatpush1.msra.mxu0 0.0
        %1032 = vmatprep.subr.mxu0 0.0
        %1033 = vmatpush1.msra.mxu0 0.0
        %1034 = vmatprep.subr.mxu0 0.0
        %1035 = vmatpush1.msra.mxu0 0.0
        %1036 = vmatprep.subr.mxu0 0.0
        %1037 = vmatpush1.msra.mxu0 0.0
        %1038 = vmatprep.subr.mxu0 0.0
        %1039 = vmatpush1.msra.mxu0 0.0
        %1040 = vmatprep.subr.mxu0 0.0
        %1041 = vmatpush1.msra.mxu0 0.0
        %1042 = vmatprep.subr.mxu0 0.0
        %1043 = vmatpush1.msra.mxu0 0.0
        %1044 = vmatprep.subr.mxu0 0.0
        %1045 = vmatpush1.msra.mxu0 0.0
        %1046 = vmatprep.subr.mxu0 0.0
        %1047 = vmatpush1.msra.mxu0 0.0
        %1048 = vmatprep.subr.mxu0 0.0
        %1049 = vmatpush1.msra.mxu0 0.0
        %1050 = vmatprep.subr.mxu0 0.0
        %1051 = vmatpush1.msra.mxu0 0.0
        %1052 = vmatprep.subr.mxu0 0.0
        %1053 = vmatpush1.msra.mxu0 0.0
        %1054 = vmatprep.subr.mxu0 0.0
        %1055 = vmatpush1.msra.mxu0 0.0
        %1056 = vmatprep.subr.mxu0 0.0
        %1057 = vmatpush1.msra.mxu0 0.0
        %1058 = vmatprep.subr.mxu0 0.0
        %1059 = vmatpush1.msra.mxu0 0.0
        %1060 = vmatprep.mubr.f32.mxu0 0.0
        %v1061 = vand.u32 %v607, 4294901760
        %1062 = vmatmul.mubr.f32.gmra.mrb[0].mxu0 %v1061
        %v1063 = vpop.f32.mrb[0].mxu0
        %v1064 = vadd.f32 %v969, %v1063
        %v1065 = vpop.f32.mrb[0].mxu0
        %1066 = vdwg.mxu0
        %1067 = vmatprep.subr.mxu0 0.0
        %v1068 = vand.u32 %v598, 4294901760
        %1069 = vmatpush1.msra.mxu0 %v1068
        %1070 = vmatprep.subr.mxu0 0.0
        %v1071 = vand.u32 %v599, 4294901760
        %1072 = vmatpush1.msra.mxu0 %v1071
        %1073 = vmatprep.subr.mxu0 0.0
        %v1074 = vand.u32 %v600, 4294901760
        %1075 = vmatpush1.msra.mxu0 %v1074
        %1076 = vmatprep.subr.mxu0 0.0
        %v1077 = vand.u32 %v601, 4294901760
        %1078 = vmatpush1.msra.mxu0 %v1077
        %1079 = vmatprep.subr.mxu0 0.0
        %v1080 = vand.u32 %v602, 4294901760
        %1081 = vmatpush1.msra.mxu0 %v1080
        %1082 = vmatprep.subr.mxu0 0.0
        %v1083 = vand.u32 %v603, 4294901760
        %1084 = vmatpush1.msra.mxu0 %v1083
        %1085 = vmatprep.subr.mxu0 0.0
        %v1086 = vand.u32 %v604, 4294901760
        %1087 = vmatpush1.msra.mxu0 %v1086
        %1088 = vmatprep.subr.mxu0 0.0
        %v1089 = vand.u32 %v605, 4294901760
        %1090 = vmatpush1.msra.mxu0 %v1089
        %1091 = vmatprep.subr.mxu0 0.0
        %1092 = vmatpush1.msra.mxu0 0.0
        %1093 = vmatprep.subr.mxu0 0.0
        %1094 = vmatpush1.msra.mxu0 0.0
        %1095 = vmatprep.subr.mxu0 0.0
        %1096 = vmatpush1.msra.mxu0 0.0
        %1097 = vmatprep.subr.mxu0 0.0
        %1098 = vmatpush1.msra.mxu0 0.0
        %1099 = vmatprep.subr.mxu0 0.0
        %1100 = vmatpush1.msra.mxu0 0.0
        %1101 = vmatprep.subr.mxu0 0.0
        %1102 = vmatpush1.msra.mxu0 0.0
        %1103 = vmatprep.subr.mxu0 0.0
        %1104 = vmatpush1.msra.mxu0 0.0
        %1105 = vmatprep.subr.mxu0 0.0
        %1106 = vmatpush1.msra.mxu0 0.0
        %1107 = vmatprep.subr.mxu0 0.0
        %1108 = vmatpush1.msra.mxu0 0.0
        %1109 = vmatprep.subr.mxu0 0.0
        %1110 = vmatpush1.msra.mxu0 0.0
        %1111 = vmatprep.subr.mxu0 0.0
        %1112 = vmatpush1.msra.mxu0 0.0
        %1113 = vmatprep.subr.mxu0 0.0
        %1114 = vmatpush1.msra.mxu0 0.0
        %1115 = vmatprep.subr.mxu0 0.0
        %1116 = vmatpush1.msra.mxu0 0.0
        %1117 = vmatprep.subr.mxu0 0.0
        %1118 = vmatpush1.msra.mxu0 0.0
        %1119 = vmatprep.subr.mxu0 0.0
        %1120 = vmatpush1.msra.mxu0 0.0
        %1121 = vmatprep.subr.mxu0 0.0
        %1122 = vmatpush1.msra.mxu0 0.0
        %1123 = vmatprep.subr.mxu0 0.0
        %1124 = vmatpush1.msra.mxu0 0.0
        %1125 = vmatprep.subr.mxu0 0.0
        %1126 = vmatpush1.msra.mxu0 0.0
        %1127 = vmatprep.subr.mxu0 0.0
        %1128 = vmatpush1.msra.mxu0 0.0
        %1129 = vmatprep.subr.mxu0 0.0
        %1130 = vmatpush1.msra.mxu0 0.0
        %1131 = vmatprep.subr.mxu0 0.0
        %1132 = vmatpush1.msra.mxu0 0.0
        %1133 = vmatprep.subr.mxu0 0.0
        %1134 = vmatpush1.msra.mxu0 0.0
        %1135 = vmatprep.subr.mxu0 0.0
        %1136 = vmatpush1.msra.mxu0 0.0
        %1137 = vmatprep.subr.mxu0 0.0
        %1138 = vmatpush1.msra.mxu0 0.0
        %1139 = vmatprep.mubr.f32.mxu0 0.0
        %v1140 = vand.u32 %v607, 4294901760
        %1141 = vmatmul.mubr.f32.gmra.mrb[0].mxu0 %v1140
        %v1142 = vpop.f32.mrb[0].mxu0
        %v1143 = vadd.f32 %v1064, %v1142
        %v1144 = vpop.f32.mrb[0].mxu0
        %1145 = vdwg.mxu0
        %v1146 = vld [vmem:[%s6] sm:$0xf]
        %v1147 = vld [vmem:[%s6 + $0x4] sm:$0xf]
        %v1148 = vld [vmem:[%s6 + $0x8] sm:$0xf]
        %v1149 = vld [vmem:[%s6 + $0xc] sm:$0xf]
        %v1150 = vld [vmem:[%s6 + $0x10] sm:$0xf]
        %v1151 = vld [vmem:[%s6 + $0x14] sm:$0xf]
        %v1152 = vld [vmem:[%s6 + $0x18] sm:$0xf]
        %v1153 = vld [vmem:[%s6 + $0x1c] sm:$0xf]
        %v1154 = vpack.c.bf16 %v597, %v597
        %v1163 = vunpack.c.l.b16 %v1146
        %v1164 = vunpack.c.l.b16 %v1147
        %v1165 = vunpack.c.l.b16 %v1148
        %v1166 = vunpack.c.l.b16 %v1149
        %v1167 = vunpack.c.l.b16 %v1150
        %v1168 = vunpack.c.l.b16 %v1151
        %v1169 = vunpack.c.l.b16 %v1152
        %v1170 = vunpack.c.l.b16 %v1153
        %v1171 = vpack.c.b16 %v1164, %v1163
        %v1172 = vpack.c.b16 %v1166, %v1165
        %v1173 = vpack.c.b16 %v1168, %v1167
        %v1174 = vpack.c.b16 %v1170, %v1169
        %v1180 = vsel %vm550, %v1154, 0
        %1182 = vmatprep.subr.bf16.mxu0 0
        %1183 = vmatpush1.bf16.msra.mxu0 %v1171
        %1184 = vmatprep.subr.bf16.mxu0 0
        %1185 = vmatpush1.bf16.msra.mxu0 %v1172
        %1186 = vmatprep.subr.bf16.mxu0 0
        %1187 = vmatpush1.bf16.msra.mxu0 %v1173
        %1188 = vmatprep.subr.bf16.mxu0 0
        %1189 = vmatpush1.bf16.msra.mxu0 %v1174
        %1190 = vmatprep.subr.bf16.mxu0 0
        %1191 = vmatpush1.bf16.msra.mxu0 0
        %1192 = vmatprep.subr.bf16.mxu0 0
        %1193 = vmatpush1.bf16.msra.mxu0 0
        %1194 = vmatprep.subr.bf16.mxu0 0
        %1195 = vmatpush1.bf16.msra.mxu0 0
        %1196 = vmatprep.subr.bf16.mxu0 0
        %1197 = vmatpush1.bf16.msra.mxu0 0
        %1198 = vmatprep.subr.bf16.mxu0 0
        %1199 = vmatpush1.bf16.msra.mxu0 0
        %1200 = vmatprep.subr.bf16.mxu0 0
        %1201 = vmatpush1.bf16.msra.mxu0 0
        %1202 = vmatprep.subr.bf16.mxu0 0
        %1203 = vmatpush1.bf16.msra.mxu0 0
        %1204 = vmatprep.subr.bf16.mxu0 0
        %1205 = vmatpush1.bf16.msra.mxu0 0
        %1206 = vmatprep.subr.bf16.mxu0 0
        %1207 = vmatpush1.bf16.msra.mxu0 0
        %1208 = vmatprep.subr.bf16.mxu0 0
        %1209 = vmatpush1.bf16.msra.mxu0 0
        %1210 = vmatprep.subr.bf16.mxu0 0
        %1211 = vmatpush1.bf16.msra.mxu0 0
        %1212 = vmatprep.subr.bf16.mxu0 0
        %1213 = vmatpush1.bf16.msra.mxu0 0
        %1214 = vmatprep.mubr.bf16.mxu0 0
        %1215 = vmatmul.mubr.bf16.gmra.mrb[0].mxu0 %v1180
        %v1216 = vpop.f32.mrb[0].mxu0
        %v1217 = vadd.f32 0.0, %v1216
        %v1218 = vpop.f32.mrb[0].mxu0
        %v1219 = vpop.f32.mrb[0].mxu0
        %v1220 = vpop.f32.mrb[0].mxu0
        %1221 = vdwg.mxu0
        %v1222 = vld [vmem:[%s7] sm:$0xff]
        %v1223 = vld [vmem:[%s8] sm:$0x1]
        %v1225 = vlaneseq
        %v1226 = vshrl.u32 %v1225, 7
        %v1227 = vsub.s32 0, %v1226
        %v1228 = vrot.slane %v1223, %v1227
        %vm1230 = vcmask 64512
        %v1232 = vsel %vm1230, %v1143, 0
        %1234 = vmatprep.subr.mxu0 0.0
        %v1235 = vand.u32 %v1222, 4294901760
        %1236 = vmatpush1.msra.mxu0 %v1235
        %1237 = vmatprep.subr.mxu0 0.0
        %1238 = vmatpush1.msra.mxu0 0.0
        %1239 = vmatprep.subr.mxu0 0.0
        %1240 = vmatpush1.msra.mxu0 0.0
        %1241 = vmatprep.subr.mxu0 0.0
        %1242 = vmatpush1.msra.mxu0 0.0
        %1243 = vmatprep.subr.mxu0 0.0
        %1244 = vmatpush1.msra.mxu0 0.0
        %1245 = vmatprep.subr.mxu0 0.0
        %1246 = vmatpush1.msra.mxu0 0.0
        %1247 = vmatprep.subr.mxu0 0.0
        %1248 = vmatpush1.msra.mxu0 0.0
        %1249 = vmatprep.subr.mxu0 0.0
        %1250 = vmatpush1.msra.mxu0 0.0
        %1251 = vmatprep.subr.mxu0 0.0
        %1252 = vmatpush1.msra.mxu0 0.0
        %1253 = vmatprep.subr.mxu0 0.0
        %1254 = vmatpush1.msra.mxu0 0.0
        %1255 = vmatprep.subr.mxu0 0.0
        %1256 = vmatpush1.msra.mxu0 0.0
        %1257 = vmatprep.subr.mxu0 0.0
        %1258 = vmatpush1.msra.mxu0 0.0
        %1259 = vmatprep.subr.mxu0 0.0
        %1260 = vmatpush1.msra.mxu0 0.0
        %1261 = vmatprep.subr.mxu0 0.0
        %1262 = vmatpush1.msra.mxu0 0.0
        %1263 = vmatprep.subr.mxu0 0.0
        %1264 = vmatpush1.msra.mxu0 0.0
        %1265 = vmatprep.subr.mxu0 0.0
        %1266 = vmatpush1.msra.mxu0 0.0
        %1267 = vmatprep.subr.mxu0 0.0
        %1268 = vmatpush1.msra.mxu0 0.0
        %1269 = vmatprep.subr.mxu0 0.0
        %1270 = vmatpush1.msra.mxu0 0.0
        %1271 = vmatprep.subr.mxu0 0.0
        %1272 = vmatpush1.msra.mxu0 0.0
        %1273 = vmatprep.subr.mxu0 0.0
        %1274 = vmatpush1.msra.mxu0 0.0
        %1275 = vmatprep.subr.mxu0 0.0
        %1276 = vmatpush1.msra.mxu0 0.0
        %1277 = vmatprep.subr.mxu0 0.0
        %1278 = vmatpush1.msra.mxu0 0.0
        %1279 = vmatprep.subr.mxu0 0.0
        %1280 = vmatpush1.msra.mxu0 0.0
        %1281 = vmatprep.subr.mxu0 0.0
        %1282 = vmatpush1.msra.mxu0 0.0
        %1283 = vmatprep.subr.mxu0 0.0
        %1284 = vmatpush1.msra.mxu0 0.0
        %1285 = vmatprep.subr.mxu0 0.0
        %1286 = vmatpush1.msra.mxu0 0.0
        %1287 = vmatprep.subr.mxu0 0.0
        %1288 = vmatpush1.msra.mxu0 0.0
        %1289 = vmatprep.subr.mxu0 0.0
        %1290 = vmatpush1.msra.mxu0 0.0
        %1291 = vmatprep.subr.mxu0 0.0
        %1292 = vmatpush1.msra.mxu0 0.0
        %1293 = vmatprep.subr.mxu0 0.0
        %1294 = vmatpush1.msra.mxu0 0.0
        %1295 = vmatprep.subr.mxu0 0.0
        %1296 = vmatpush1.msra.mxu0 0.0
        %1297 = vmatprep.subr.mxu0 0.0
        %1298 = vmatpush1.msra.mxu0 0.0
        %1299 = vmatprep.mubr.f32.mxu0 0.0
        %v1300 = vand.u32 %v1232, 4294901760
        %v1301 = vsub.f32 %v1232, %v1300
        %v1302 = vand.u32 %v1301, 4294901760
        %v1303 = vsub.f32 %v1301, %v1302
        %v1304 = vand.u32 %v1303, 4294901760
        %1305 = vmatmul.mubr.f32.gmra.mrb[0].mxu0 %v1304
        %v1306 = vpop.f32.mrb[0].mxu0
        %v1307 = vadd.f32 %v1228, %v1306
        %v1308 = vpop.f32.mrb[0].mxu0
        %1309 = vdwg.mxu0
        %1310 = vmatprep.subr.mxu0 0.0
        %v1311 = vand.u32 %v1222, 4294901760
        %v1312 = vsub.f32 %v1222, %v1311
        %v1313 = vand.u32 %v1312, 4294901760
        %v1314 = vsub.f32 %v1312, %v1313
        %v1315 = vand.u32 %v1314, 4294901760
        %1316 = vmatpush1.msra.mxu0 %v1315
        %1317 = vmatprep.subr.mxu0 0.0
        %1318 = vmatpush1.msra.mxu0 0.0
        %1319 = vmatprep.subr.mxu0 0.0
        %1320 = vmatpush1.msra.mxu0 0.0
        %1321 = vmatprep.subr.mxu0 0.0
        %1322 = vmatpush1.msra.mxu0 0.0
        %1323 = vmatprep.subr.mxu0 0.0
        %1324 = vmatpush1.msra.mxu0 0.0
        %1325 = vmatprep.subr.mxu0 0.0
        %1326 = vmatpush1.msra.mxu0 0.0
        %1327 = vmatprep.subr.mxu0 0.0
        %1328 = vmatpush1.msra.mxu0 0.0
        %1329 = vmatprep.subr.mxu0 0.0
        %1330 = vmatpush1.msra.mxu0 0.0
        %1331 = vmatprep.subr.mxu0 0.0
        %1332 = vmatpush1.msra.mxu0 0.0
        %1333 = vmatprep.subr.mxu0 0.0
        %1334 = vmatpush1.msra.mxu0 0.0
        %1335 = vmatprep.subr.mxu0 0.0
        %1336 = vmatpush1.msra.mxu0 0.0
        %1337 = vmatprep.subr.mxu0 0.0
        %1338 = vmatpush1.msra.mxu0 0.0
        %1339 = vmatprep.subr.mxu0 0.0
        %1340 = vmatpush1.msra.mxu0 0.0
        %1341 = vmatprep.subr.mxu0 0.0
        %1342 = vmatpush1.msra.mxu0 0.0
        %1343 = vmatprep.subr.mxu0 0.0
        %1344 = vmatpush1.msra.mxu0 0.0
        %1345 = vmatprep.subr.mxu0 0.0
        %1346 = vmatpush1.msra.mxu0 0.0
        %1347 = vmatprep.subr.mxu0 0.0
        %1348 = vmatpush1.msra.mxu0 0.0
        %1349 = vmatprep.subr.mxu0 0.0
        %1350 = vmatpush1.msra.mxu0 0.0
        %1351 = vmatprep.subr.mxu0 0.0
        %1352 = vmatpush1.msra.mxu0 0.0
        %1353 = vmatprep.subr.mxu0 0.0
        %1354 = vmatpush1.msra.mxu0 0.0
        %1355 = vmatprep.subr.mxu0 0.0
        %1356 = vmatpush1.msra.mxu0 0.0
        %1357 = vmatprep.subr.mxu0 0.0
        %1358 = vmatpush1.msra.mxu0 0.0
        %1359 = vmatprep.subr.mxu0 0.0
        %1360 = vmatpush1.msra.mxu0 0.0
        %1361 = vmatprep.subr.mxu0 0.0
        %1362 = vmatpush1.msra.mxu0 0.0
        %1363 = vmatprep.subr.mxu0 0.0
        %1364 = vmatpush1.msra.mxu0 0.0
        %1365 = vmatprep.subr.mxu0 0.0
        %1366 = vmatpush1.msra.mxu0 0.0
        %1367 = vmatprep.subr.mxu0 0.0
        %1368 = vmatpush1.msra.mxu0 0.0
        %1369 = vmatprep.subr.mxu0 0.0
        %1370 = vmatpush1.msra.mxu0 0.0
        %1371 = vmatprep.subr.mxu0 0.0
        %1372 = vmatpush1.msra.mxu0 0.0
        %1373 = vmatprep.subr.mxu0 0.0
        %1374 = vmatpush1.msra.mxu0 0.0
        %1375 = vmatprep.subr.mxu0 0.0
        %1376 = vmatpush1.msra.mxu0 0.0
        %1377 = vmatprep.subr.mxu0 0.0
        %1378 = vmatpush1.msra.mxu0 0.0
        %1379 = vmatprep.mubr.f32.mxu0 0.0
        %v1380 = vand.u32 %v1232, 4294901760
        %1381 = vmatmul.mubr.f32.gmra.mrb[0].mxu0 %v1380
        %v1382 = vpop.f32.mrb[0].mxu0
        %v1383 = vadd.f32 %v1307, %v1382
        %v1384 = vpop.f32.mrb[0].mxu0
        %1385 = vdwg.mxu0
        %1386 = vmatprep.subr.mxu0 0.0
        %v1387 = vand.u32 %v1222, 4294901760
        %v1388 = vsub.f32 %v1222, %v1387
        %1389 = vmatpush1.msra.mxu0 %v1388
        %1390 = vmatprep.subr.mxu0 0.0
        %1391 = vmatpush1.msra.mxu0 0.0
        %1392 = vmatprep.subr.mxu0 0.0
        %1393 = vmatpush1.msra.mxu0 0.0
        %1394 = vmatprep.subr.mxu0 0.0
        %1395 = vmatpush1.msra.mxu0 0.0
        %1396 = vmatprep.subr.mxu0 0.0
        %1397 = vmatpush1.msra.mxu0 0.0
        %1398 = vmatprep.subr.mxu0 0.0
        %1399 = vmatpush1.msra.mxu0 0.0
        %1400 = vmatprep.subr.mxu0 0.0
        %1401 = vmatpush1.msra.mxu0 0.0
        %1402 = vmatprep.subr.mxu0 0.0
        %1403 = vmatpush1.msra.mxu0 0.0
        %1404 = vmatprep.subr.mxu0 0.0
        %1405 = vmatpush1.msra.mxu0 0.0
        %1406 = vmatprep.subr.mxu0 0.0
        %1407 = vmatpush1.msra.mxu0 0.0
        %1408 = vmatprep.subr.mxu0 0.0
        %1409 = vmatpush1.msra.mxu0 0.0
        %1410 = vmatprep.subr.mxu0 0.0
        %1411 = vmatpush1.msra.mxu0 0.0
        %1412 = vmatprep.subr.mxu0 0.0
        %1413 = vmatpush1.msra.mxu0 0.0
        %1414 = vmatprep.subr.mxu0 0.0
        %1415 = vmatpush1.msra.mxu0 0.0
        %1416 = vmatprep.subr.mxu0 0.0
        %1417 = vmatpush1.msra.mxu0 0.0
        %1418 = vmatprep.subr.mxu0 0.0
        %1419 = vmatpush1.msra.mxu0 0.0
        %1420 = vmatprep.subr.mxu0 0.0
        %1421 = vmatpush1.msra.mxu0 0.0
        %1422 = vmatprep.subr.mxu0 0.0
        %1423 = vmatpush1.msra.mxu0 0.0
        %1424 = vmatprep.subr.mxu0 0.0
        %1425 = vmatpush1.msra.mxu0 0.0
        %1426 = vmatprep.subr.mxu0 0.0
        %1427 = vmatpush1.msra.mxu0 0.0
        %1428 = vmatprep.subr.mxu0 0.0
        %1429 = vmatpush1.msra.mxu0 0.0
        %1430 = vmatprep.subr.mxu0 0.0
        %1431 = vmatpush1.msra.mxu0 0.0
        %1432 = vmatprep.subr.mxu0 0.0
        %1433 = vmatpush1.msra.mxu0 0.0
        %1434 = vmatprep.subr.mxu0 0.0
        %1435 = vmatpush1.msra.mxu0 0.0
        %1436 = vmatprep.subr.mxu0 0.0
        %1437 = vmatpush1.msra.mxu0 0.0
        %1438 = vmatprep.subr.mxu0 0.0
        %1439 = vmatpush1.msra.mxu0 0.0
        %1440 = vmatprep.subr.mxu0 0.0
        %1441 = vmatpush1.msra.mxu0 0.0
        %1442 = vmatprep.subr.mxu0 0.0
        %1443 = vmatpush1.msra.mxu0 0.0
        %1444 = vmatprep.subr.mxu0 0.0
        %1445 = vmatpush1.msra.mxu0 0.0
        %1446 = vmatprep.subr.mxu0 0.0
        %1447 = vmatpush1.msra.mxu0 0.0
        %1448 = vmatprep.subr.mxu0 0.0
        %1449 = vmatpush1.msra.mxu0 0.0
        %1450 = vmatprep.subr.mxu0 0.0
        %1451 = vmatpush1.msra.mxu0 0.0
        %1452 = vmatprep.mubr.f32.mxu0 0.0
        %v1453 = vand.u32 %v1232, 4294901760
        %v1454 = vsub.f32 %v1232, %v1453
        %1455 = vmatmul.mubr.f32.gmra.mrb[0].mxu0 %v1454
        %v1456 = vpop.f32.mrb[0].mxu0
        %v1457 = vadd.f32 %v1383, %v1456
        %v1458 = vpop.f32.mrb[0].mxu0
        %1459 = vdwg.mxu0
        %1460 = vmatprep.subr.mxu0 0.0
        %v1461 = vand.u32 %v1222, 4294901760
        %1462 = vmatpush1.msra.mxu0 %v1461
        %1463 = vmatprep.subr.mxu0 0.0
        %1464 = vmatpush1.msra.mxu0 0.0
        %1465 = vmatprep.subr.mxu0 0.0
        %1466 = vmatpush1.msra.mxu0 0.0
        %1467 = vmatprep.subr.mxu0 0.0
        %1468 = vmatpush1.msra.mxu0 0.0
        %1469 = vmatprep.subr.mxu0 0.0
        %1470 = vmatpush1.msra.mxu0 0.0
        %1471 = vmatprep.subr.mxu0 0.0
        %1472 = vmatpush1.msra.mxu0 0.0
        %1473 = vmatprep.subr.mxu0 0.0
        %1474 = vmatpush1.msra.mxu0 0.0
        %1475 = vmatprep.subr.mxu0 0.0
        %1476 = vmatpush1.msra.mxu0 0.0
        %1477 = vmatprep.subr.mxu0 0.0
        %1478 = vmatpush1.msra.mxu0 0.0
        %1479 = vmatprep.subr.mxu0 0.0
        %1480 = vmatpush1.msra.mxu0 0.0
        %1481 = vmatprep.subr.mxu0 0.0
        %1482 = vmatpush1.msra.mxu0 0.0
        %1483 = vmatprep.subr.mxu0 0.0
        %1484 = vmatpush1.msra.mxu0 0.0
        %1485 = vmatprep.subr.mxu0 0.0
        %1486 = vmatpush1.msra.mxu0 0.0
        %1487 = vmatprep.subr.mxu0 0.0
        %1488 = vmatpush1.msra.mxu0 0.0
        %1489 = vmatprep.subr.mxu0 0.0
        %1490 = vmatpush1.msra.mxu0 0.0
        %1491 = vmatprep.subr.mxu0 0.0
        %1492 = vmatpush1.msra.mxu0 0.0
        %1493 = vmatprep.subr.mxu0 0.0
        %1494 = vmatpush1.msra.mxu0 0.0
        %1495 = vmatprep.subr.mxu0 0.0
        %1496 = vmatpush1.msra.mxu0 0.0
        %1497 = vmatprep.subr.mxu0 0.0
        %1498 = vmatpush1.msra.mxu0 0.0
        %1499 = vmatprep.subr.mxu0 0.0
        %1500 = vmatpush1.msra.mxu0 0.0
        %1501 = vmatprep.subr.mxu0 0.0
        %1502 = vmatpush1.msra.mxu0 0.0
        %1503 = vmatprep.subr.mxu0 0.0
        %1504 = vmatpush1.msra.mxu0 0.0
        %1505 = vmatprep.subr.mxu0 0.0
        %1506 = vmatpush1.msra.mxu0 0.0
        %1507 = vmatprep.subr.mxu0 0.0
        %1508 = vmatpush1.msra.mxu0 0.0
        %1509 = vmatprep.subr.mxu0 0.0
        %1510 = vmatpush1.msra.mxu0 0.0
        %1511 = vmatprep.subr.mxu0 0.0
        %1512 = vmatpush1.msra.mxu0 0.0
        %1513 = vmatprep.subr.mxu0 0.0
        %1514 = vmatpush1.msra.mxu0 0.0
        %1515 = vmatprep.subr.mxu0 0.0
        %1516 = vmatpush1.msra.mxu0 0.0
        %1517 = vmatprep.subr.mxu0 0.0
        %1518 = vmatpush1.msra.mxu0 0.0
        %1519 = vmatprep.subr.mxu0 0.0
        %1520 = vmatpush1.msra.mxu0 0.0
        %1521 = vmatprep.subr.mxu0 0.0
        %1522 = vmatpush1.msra.mxu0 0.0
        %1523 = vmatprep.subr.mxu0 0.0
        %1524 = vmatpush1.msra.mxu0 0.0
        %1525 = vmatprep.mubr.f32.mxu0 0.0
        %v1526 = vand.u32 %v1232, 4294901760
        %v1527 = vsub.f32 %v1232, %v1526
        %v1528 = vand.u32 %v1527, 4294901760
        %1529 = vmatmul.mubr.f32.gmra.mrb[0].mxu0 %v1528
        %v1530 = vpop.f32.mrb[0].mxu0
        %v1531 = vadd.f32 %v1457, %v1530
        %v1532 = vpop.f32.mrb[0].mxu0
        %1533 = vdwg.mxu0
        %1534 = vmatprep.subr.mxu0 0.0
        %v1535 = vand.u32 %v1222, 4294901760
        %v1536 = vsub.f32 %v1222, %v1535
        %v1537 = vand.u32 %v1536, 4294901760
        %1538 = vmatpush1.msra.mxu0 %v1537
        %1539 = vmatprep.subr.mxu0 0.0
        %1540 = vmatpush1.msra.mxu0 0.0
        %1541 = vmatprep.subr.mxu0 0.0
        %1542 = vmatpush1.msra.mxu0 0.0
        %1543 = vmatprep.subr.mxu0 0.0
        %1544 = vmatpush1.msra.mxu0 0.0
        %1545 = vmatprep.subr.mxu0 0.0
        %1546 = vmatpush1.msra.mxu0 0.0
        %1547 = vmatprep.subr.mxu0 0.0
        %1548 = vmatpush1.msra.mxu0 0.0
        %1549 = vmatprep.subr.mxu0 0.0
        %1550 = vmatpush1.msra.mxu0 0.0
        %1551 = vmatprep.subr.mxu0 0.0
        %1552 = vmatpush1.msra.mxu0 0.0
        %1553 = vmatprep.subr.mxu0 0.0
        %1554 = vmatpush1.msra.mxu0 0.0
        %1555 = vmatprep.subr.mxu0 0.0
        %1556 = vmatpush1.msra.mxu0 0.0
        %1557 = vmatprep.subr.mxu0 0.0
        %1558 = vmatpush1.msra.mxu0 0.0
        %1559 = vmatprep.subr.mxu0 0.0
        %1560 = vmatpush1.msra.mxu0 0.0
        %1561 = vmatprep.subr.mxu0 0.0
        %1562 = vmatpush1.msra.mxu0 0.0
        %1563 = vmatprep.subr.mxu0 0.0
        %1564 = vmatpush1.msra.mxu0 0.0
        %1565 = vmatprep.subr.mxu0 0.0
        %1566 = vmatpush1.msra.mxu0 0.0
        %1567 = vmatprep.subr.mxu0 0.0
        %1568 = vmatpush1.msra.mxu0 0.0
        %1569 = vmatprep.subr.mxu0 0.0
        %1570 = vmatpush1.msra.mxu0 0.0
        %1571 = vmatprep.subr.mxu0 0.0
        %1572 = vmatpush1.msra.mxu0 0.0
        %1573 = vmatprep.subr.mxu0 0.0
        %1574 = vmatpush1.msra.mxu0 0.0
        %1575 = vmatprep.subr.mxu0 0.0
        %1576 = vmatpush1.msra.mxu0 0.0
        %1577 = vmatprep.subr.mxu0 0.0
        %1578 = vmatpush1.msra.mxu0 0.0
        %1579 = vmatprep.subr.mxu0 0.0
        %1580 = vmatpush1.msra.mxu0 0.0
        %1581 = vmatprep.subr.mxu0 0.0
        %1582 = vmatpush1.msra.mxu0 0.0
        %1583 = vmatprep.subr.mxu0 0.0
        %1584 = vmatpush1.msra.mxu0 0.0
        %1585 = vmatprep.subr.mxu0 0.0
        %1586 = vmatpush1.msra.mxu0 0.0
        %1587 = vmatprep.subr.mxu0 0.0
        %1588 = vmatpush1.msra.mxu0 0.0
        %1589 = vmatprep.subr.mxu0 0.0
        %1590 = vmatpush1.msra.mxu0 0.0
        %1591 = vmatprep.subr.mxu0 0.0
        %1592 = vmatpush1.msra.mxu0 0.0
        %1593 = vmatprep.subr.mxu0 0.0
        %1594 = vmatpush1.msra.mxu0 0.0
        %1595 = vmatprep.subr.mxu0 0.0
        %1596 = vmatpush1.msra.mxu0 0.0
        %1597 = vmatprep.subr.mxu0 0.0
        %1598 = vmatpush1.msra.mxu0 0.0
        %1599 = vmatprep.subr.mxu0 0.0
        %1600 = vmatpush1.msra.mxu0 0.0
        %1601 = vmatprep.mubr.f32.mxu0 0.0
        %v1602 = vand.u32 %v1232, 4294901760
        %1603 = vmatmul.mubr.f32.gmra.mrb[0].mxu0 %v1602
        %v1604 = vpop.f32.mrb[0].mxu0
        %v1605 = vadd.f32 %v1531, %v1604
        %v1606 = vpop.f32.mrb[0].mxu0
        %1607 = vdwg.mxu0
        %1608 = vmatprep.subr.mxu0 0.0
        %v1609 = vand.u32 %v1222, 4294901760
        %1610 = vmatpush1.msra.mxu0 %v1609
        %1611 = vmatprep.subr.mxu0 0.0
        %1612 = vmatpush1.msra.mxu0 0.0
        %1613 = vmatprep.subr.mxu0 0.0
        %1614 = vmatpush1.msra.mxu0 0.0
        %1615 = vmatprep.subr.mxu0 0.0
        %1616 = vmatpush1.msra.mxu0 0.0
        %1617 = vmatprep.subr.mxu0 0.0
        %1618 = vmatpush1.msra.mxu0 0.0
        %1619 = vmatprep.subr.mxu0 0.0
        %1620 = vmatpush1.msra.mxu0 0.0
        %1621 = vmatprep.subr.mxu0 0.0
        %1622 = vmatpush1.msra.mxu0 0.0
        %1623 = vmatprep.subr.mxu0 0.0
        %1624 = vmatpush1.msra.mxu0 0.0
        %1625 = vmatprep.subr.mxu0 0.0
        %1626 = vmatpush1.msra.mxu0 0.0
        %1627 = vmatprep.subr.mxu0 0.0
        %1628 = vmatpush1.msra.mxu0 0.0
        %1629 = vmatprep.subr.mxu0 0.0
        %1630 = vmatpush1.msra.mxu0 0.0
        %1631 = vmatprep.subr.mxu0 0.0
        %1632 = vmatpush1.msra.mxu0 0.0
        %1633 = vmatprep.subr.mxu0 0.0
        %1634 = vmatpush1.msra.mxu0 0.0
        %1635 = vmatprep.subr.mxu0 0.0
        %1636 = vmatpush1.msra.mxu0 0.0
        %1637 = vmatprep.subr.mxu0 0.0
        %1638 = vmatpush1.msra.mxu0 0.0
        %1639 = vmatprep.subr.mxu0 0.0
        %1640 = vmatpush1.msra.mxu0 0.0
        %1641 = vmatprep.subr.mxu0 0.0
        %1642 = vmatpush1.msra.mxu0 0.0
        %1643 = vmatprep.subr.mxu0 0.0
        %1644 = vmatpush1.msra.mxu0 0.0
        %1645 = vmatprep.subr.mxu0 0.0
        %1646 = vmatpush1.msra.mxu0 0.0
        %1647 = vmatprep.subr.mxu0 0.0
        %1648 = vmatpush1.msra.mxu0 0.0
        %1649 = vmatprep.subr.mxu0 0.0
        %1650 = vmatpush1.msra.mxu0 0.0
        %1651 = vmatprep.subr.mxu0 0.0
        %1652 = vmatpush1.msra.mxu0 0.0
        %1653 = vmatprep.subr.mxu0 0.0
        %1654 = vmatpush1.msra.mxu0 0.0
        %1655 = vmatprep.subr.mxu0 0.0
        %1656 = vmatpush1.msra.mxu0 0.0
        %1657 = vmatprep.subr.mxu0 0.0
        %1658 = vmatpush1.msra.mxu0 0.0
        %1659 = vmatprep.subr.mxu0 0.0
        %1660 = vmatpush1.msra.mxu0 0.0
        %1661 = vmatprep.subr.mxu0 0.0
        %1662 = vmatpush1.msra.mxu0 0.0
        %1663 = vmatprep.subr.mxu0 0.0
        %1664 = vmatpush1.msra.mxu0 0.0
        %1665 = vmatprep.subr.mxu0 0.0
        %1666 = vmatpush1.msra.mxu0 0.0
        %1667 = vmatprep.subr.mxu0 0.0
        %1668 = vmatpush1.msra.mxu0 0.0
        %1669 = vmatprep.subr.mxu0 0.0
        %1670 = vmatpush1.msra.mxu0 0.0
        %1671 = vmatprep.subr.mxu0 0.0
        %1672 = vmatpush1.msra.mxu0 0.0
        %1673 = vmatprep.mubr.f32.mxu0 0.0
        %v1674 = vand.u32 %v1232, 4294901760
        %1675 = vmatmul.mubr.f32.gmra.mrb[0].mxu0 %v1674
        %v1676 = vpop.f32.mrb[0].mxu0
        %v1677 = vadd.f32 %v1605, %v1676
        %v1678 = vpop.f32.mrb[0].mxu0
        %1679 = vdwg.mxu0
        %v1680 = vmax.f32 %v1677, 0.0
        %v1681 = vand.u32 2147483647, %v1677
        %v1682 = vsub.f32 0.0, %v1681
        %v1683 = vmul.f32 %v1682, 1.442695
        %v1684 = vpow.pop %v1683
        %v1685 = vadd.f32 %v1684, 1.0
        %v1686 = vlog2.pop %v1685
        %v1687 = vmul.f32 %v1686, 0.6931472
        %v1688 = vmul.f32 -0.5, %v1684
        %v1689 = vadd.f32 %v1688, 1.0
        %v1690 = vmul.f32 %v1689, %v1684
        %v1691 = vand.u32 2147483647, %v1684
        %vm1692 = vcmp.lt.f32.partialorder %v1691, 0.0004427343
        %v1693 = vsel %vm1692, %v1690, %v1687
        %v1694 = vadd.f32 %v1680, %v1693
        %1695 = vst.msk [vmem:[#allocation4] sm:$0xff] %vm550, %v1694
        %v1696 = vmul.f32 %v1694, %v597
        %1697 = vst.msk [vmem:[#allocation5] sm:$0xff] %vm550, %v1696
        %1698 = vst.msk [vmem:[#allocation6] sm:$0xff] %vm506, %v1217
        %v1699 = vld [vmem:[%s9] sm:$0xff]
        %v1700 = vld [vmem:[%s9 + $0x8] sm:$0xff]
        %v1701 = vlaneseq
        %v1702 = vshrl.u32 %v1701, 7
        %v1703 = vlaneseq
        %v1704 = vand.u32 %v1703, 127
        %vm1705 = vcmp.eq.s32.totalorder %v1702, %v1704
        %v1706 = vsel %vm1705, 1, 0
        %v1707 = vcvt.s32.f32 %v1706
        %v1708 = vld [vmem:[#allocation3] sm:$0xff]
        %v1709 = vld [vmem:[#allocation3 + $0x8] sm:$0xff]
        %v1710 = vld [vmem:[#allocation4] sm:$0xff]
        %v1711 = vld [vmem:[#allocation5] sm:$0xff]
        %v1712 = vld [vmem:[#allocation6] sm:$0xff]
        %1713 = vxpose.xlu0.b32.start [1/16] %v1712, 128
        %1714 = vxpose.xlu0.b32.cont [2/16] 0.0, 128
        %1715 = vxpose.xlu0.b32.cont [3/16] 0.0, 128
        %1716 = vxpose.xlu0.b32.cont [4/16] 0.0, 128
        %1717 = vxpose.xlu0.b32.cont [5/16] 0.0, 128
        %1718 = vxpose.xlu0.b32.cont [6/16] 0.0, 128
        %1719 = vxpose.xlu0.b32.cont [7/16] 0.0, 128
        %1720 = vxpose.xlu0.b32.cont [8/16] 0.0, 128
        %1721 = vxpose.xlu0.b32.cont [9/16] 0.0, 128
        %1722 = vxpose.xlu0.b32.cont [10/16] 0.0, 128
        %1723 = vxpose.xlu0.b32.cont [11/16] 0.0, 128
        %1724 = vxpose.xlu0.b32.cont [12/16] 0.0, 128
        %1725 = vxpose.xlu0.b32.cont [13/16] 0.0, 128
        %1726 = vxpose.xlu0.b32.cont [14/16] 0.0, 128
        %1727 = vxpose.xlu0.b32.cont [15/16] 0.0, 128
        %1728 = vxpose.xlu0.b32.end [16/16] 0.0, 128
        %v1729 = vpop.trf.xlu0
        %v1730 = vpop.trf.xlu0
        %v1731 = vpop.trf.xlu0
        %v1732 = vpop.trf.xlu0
        %v1733 = vpop.trf.xlu0
        %v1734 = vpop.trf.xlu0
        %v1735 = vpop.trf.xlu0
        %v1736 = vpop.trf.xlu0
        %v1737 = vpop.trf.xlu0
        %v1738 = vpop.trf.xlu0
        %v1739 = vpop.trf.xlu0
        %v1740 = vpop.trf.xlu0
        %v1741 = vpop.trf.xlu0
        %v1742 = vpop.trf.xlu0
        %v1743 = vpop.trf.xlu0
        %v1744 = vpop.trf.xlu0
        %v1746 = vsel %vm1230, %v1729, 0
        %v1749 = vsel %vm1230, %v1730, 0
        %v1752 = vsel %vm1230, %v1731, 0
        %v1755 = vsel %vm1230, %v1732, 0
        %1757 = vmatprep.subr.mxu0 0.0
        %v1758 = vand.u32 %v1707, 4294901760
        %1759 = vmatpush1.msra.mxu0 %v1758
        %1760 = vmatprep.subr.mxu0 0.0
        %1761 = vmatpush1.msra.mxu0 0.0
        %1762 = vmatprep.subr.mxu0 0.0
        %1763 = vmatpush1.msra.mxu0 0.0
        %1764 = vmatprep.subr.mxu0 0.0
        %1765 = vmatpush1.msra.mxu0 0.0
        %1766 = vmatprep.subr.mxu0 0.0
        %1767 = vmatpush1.msra.mxu0 0.0
        %1768 = vmatprep.subr.mxu0 0.0
        %1769 = vmatpush1.msra.mxu0 0.0
        %1770 = vmatprep.subr.mxu0 0.0
        %1771 = vmatpush1.msra.mxu0 0.0
        %1772 = vmatprep.subr.mxu0 0.0
        %1773 = vmatpush1.msra.mxu0 0.0
        %1774 = vmatprep.subr.mxu0 0.0
        %1775 = vmatpush1.msra.mxu0 0.0
        %1776 = vmatprep.subr.mxu0 0.0
        %1777 = vmatpush1.msra.mxu0 0.0
        %1778 = vmatprep.subr.mxu0 0.0
        %1779 = vmatpush1.msra.mxu0 0.0
        %1780 = vmatprep.subr.mxu0 0.0
        %1781 = vmatpush1.msra.mxu0 0.0
        %1782 = vmatprep.subr.mxu0 0.0
        %1783 = vmatpush1.msra.mxu0 0.0
        %1784 = vmatprep.subr.mxu0 0.0
        %1785 = vmatpush1.msra.mxu0 0.0
        %1786 = vmatprep.subr.mxu0 0.0
        %1787 = vmatpush1.msra.mxu0 0.0
        %1788 = vmatprep.subr.mxu0 0.0
        %1789 = vmatpush1.msra.mxu0 0.0
        %1790 = vmatprep.subr.mxu0 0.0
        %1791 = vmatpush1.msra.mxu0 0.0
        %1792 = vmatprep.subr.mxu0 0.0
        %1793 = vmatpush1.msra.mxu0 0.0
        %1794 = vmatprep.subr.mxu0 0.0
        %1795 = vmatpush1.msra.mxu0 0.0
        %1796 = vmatprep.subr.mxu0 0.0
        %1797 = vmatpush1.msra.mxu0 0.0
        %1798 = vmatprep.subr.mxu0 0.0
        %1799 = vmatpush1.msra.mxu0 0.0
        %1800 = vmatprep.subr.mxu0 0.0
        %1801 = vmatpush1.msra.mxu0 0.0
        %1802 = vmatprep.subr.mxu0 0.0
        %1803 = vmatpush1.msra.mxu0 0.0
        %1804 = vmatprep.subr.mxu0 0.0
        %1805 = vmatpush1.msra.mxu0 0.0
        %1806 = vmatprep.subr.mxu0 0.0
        %1807 = vmatpush1.msra.mxu0 0.0
        %1808 = vmatprep.subr.mxu0 0.0
        %1809 = vmatpush1.msra.mxu0 0.0
        %1810 = vmatprep.subr.mxu0 0.0
        %1811 = vmatpush1.msra.mxu0 0.0
        %1812 = vmatprep.subr.mxu0 0.0
        %1813 = vmatpush1.msra.mxu0 0.0
        %1814 = vmatprep.subr.mxu0 0.0
        %1815 = vmatpush1.msra.mxu0 0.0
        %1816 = vmatprep.subr.mxu0 0.0
        %1817 = vmatpush1.msra.mxu0 0.0
        %1818 = vmatprep.subr.mxu0 0.0
        %1819 = vmatpush1.msra.mxu0 0.0
        %1820 = vmatprep.subr.mxu0 0.0
        %1821 = vmatpush1.msra.mxu0 0.0
        %1822 = vmatprep.mubr.f32.mxu0 0.0
        %v1823 = vand.u32 %v1746, 4294901760
        %v1824 = vsub.f32 %v1746, %v1823
        %v1825 = vand.u32 %v1824, 4294901760
        %v1826 = vsub.f32 %v1824, %v1825
        %v1827 = vand.u32 %v1826, 4294901760
        %1828 = vmatmul.mubr.f32.gmra.mrb[0].mxu0 %v1827
        %v1829 = vpop.f32.mrb[0].mxu0
        %v1830 = vadd.f32 0.0, %v1829
        %v1831 = vpop.f32.mrb[0].mxu0
        %1832 = vmatprep.mubr.f32.mxu0 0.0
        %v1833 = vand.u32 %v1749, 4294901760
        %v1834 = vsub.f32 %v1749, %v1833
        %v1835 = vand.u32 %v1834, 4294901760
        %v1836 = vsub.f32 %v1834, %v1835
        %v1837 = vand.u32 %v1836, 4294901760
        %1838 = vmatmul.mubr.f32.gmra.mrb[0].mxu0 %v1837
        %v1839 = vpop.f32.mrb[0].mxu0
        %v1840 = vadd.f32 0.0, %v1839
        %v1841 = vpop.f32.mrb[0].mxu0
        %1842 = vmatprep.mubr.f32.mxu0 0.0
        %v1843 = vand.u32 %v1752, 4294901760
        %v1844 = vsub.f32 %v1752, %v1843
        %v1845 = vand.u32 %v1844, 4294901760
        %v1846 = vsub.f32 %v1844, %v1845
        %v1847 = vand.u32 %v1846, 4294901760
        %1848 = vmatmul.mubr.f32.gmra.mrb[0].mxu0 %v1847
        %v1849 = vpop.f32.mrb[0].mxu0
        %v1850 = vadd.f32 0.0, %v1849
        %v1851 = vpop.f32.mrb[0].mxu0
        %1852 = vmatprep.mubr.f32.mxu0 0.0
        %v1853 = vand.u32 %v1755, 4294901760
        %v1854 = vsub.f32 %v1755, %v1853
        %v1855 = vand.u32 %v1854, 4294901760
        %v1856 = vsub.f32 %v1854, %v1855
        %v1857 = vand.u32 %v1856, 4294901760
        %1858 = vmatmul.mubr.f32.gmra.mrb[0].mxu0 %v1857
        %v1859 = vpop.f32.mrb[0].mxu0
        %v1860 = vadd.f32 0.0, %v1859
        %v1861 = vpop.f32.mrb[0].mxu0
        %1862 = vdwg.mxu0
        %1863 = vmatprep.subr.mxu0 0.0
        %v1864 = vand.u32 %v1707, 4294901760
        %v1865 = vsub.f32 %v1707, %v1864
        %v1866 = vand.u32 %v1865, 4294901760
        %v1867 = vsub.f32 %v1865, %v1866
        %v1868 = vand.u32 %v1867, 4294901760
        %1869 = vmatpush1.msra.mxu0 %v1868
        %1870 = vmatprep.subr.mxu0 0.0
        %1871 = vmatpush1.msra.mxu0 0.0
        %1872 = vmatprep.subr.mxu0 0.0
        %1873 = vmatpush1.msra.mxu0 0.0
        %1874 = vmatprep.subr.mxu0 0.0
        %1875 = vmatpush1.msra.mxu0 0.0
        %1876 = vmatprep.subr.mxu0 0.0
        %1877 = vmatpush1.msra.mxu0 0.0
        %1878 = vmatprep.subr.mxu0 0.0
        %1879 = vmatpush1.msra.mxu0 0.0
        %1880 = vmatprep.subr.mxu0 0.0
        %1881 = vmatpush1.msra.mxu0 0.0
        %1882 = vmatprep.subr.mxu0 0.0
        %1883 = vmatpush1.msra.mxu0 0.0
        %1884 = vmatprep.subr.mxu0 0.0
        %1885 = vmatpush1.msra.mxu0 0.0
        %1886 = vmatprep.subr.mxu0 0.0
        %1887 = vmatpush1.msra.mxu0 0.0
        %1888 = vmatprep.subr.mxu0 0.0
        %1889 = vmatpush1.msra.mxu0 0.0
        %1890 = vmatprep.subr.mxu0 0.0
        %1891 = vmatpush1.msra.mxu0 0.0
        %1892 = vmatprep.subr.mxu0 0.0
        %1893 = vmatpush1.msra.mxu0 0.0
        %1894 = vmatprep.subr.mxu0 0.0
        %1895 = vmatpush1.msra.mxu0 0.0
        %1896 = vmatprep.subr.mxu0 0.0
        %1897 = vmatpush1.msra.mxu0 0.0
        %1898 = vmatprep.subr.mxu0 0.0
        %1899 = vmatpush1.msra.mxu0 0.0
        %1900 = vmatprep.subr.mxu0 0.0
        %1901 = vmatpush1.msra.mxu0 0.0
        %1902 = vmatprep.subr.mxu0 0.0
        %1903 = vmatpush1.msra.mxu0 0.0
        %1904 = vmatprep.subr.mxu0 0.0
        %1905 = vmatpush1.msra.mxu0 0.0
        %1906 = vmatprep.subr.mxu0 0.0
        %1907 = vmatpush1.msra.mxu0 0.0
        %1908 = vmatprep.subr.mxu0 0.0
        %1909 = vmatpush1.msra.mxu0 0.0
        %1910 = vmatprep.subr.mxu0 0.0
        %1911 = vmatpush1.msra.mxu0 0.0
        %1912 = vmatprep.subr.mxu0 0.0
        %1913 = vmatpush1.msra.mxu0 0.0
        %1914 = vmatprep.subr.mxu0 0.0
        %1915 = vmatpush1.msra.mxu0 0.0
        %1916 = vmatprep.subr.mxu0 0.0
        %1917 = vmatpush1.msra.mxu0 0.0
        %1918 = vmatprep.subr.mxu0 0.0
        %1919 = vmatpush1.msra.mxu0 0.0
        %1920 = vmatprep.subr.mxu0 0.0
        %1921 = vmatpush1.msra.mxu0 0.0
        %1922 = vmatprep.subr.mxu0 0.0
        %1923 = vmatpush1.msra.mxu0 0.0
        %1924 = vmatprep.subr.mxu0 0.0
        %1925 = vmatpush1.msra.mxu0 0.0
        %1926 = vmatprep.subr.mxu0 0.0
        %1927 = vmatpush1.msra.mxu0 0.0
        %1928 = vmatprep.subr.mxu0 0.0
        %1929 = vmatpush1.msra.mxu0 0.0
        %1930 = vmatprep.subr.mxu0 0.0
        %1931 = vmatpush1.msra.mxu0 0.0
        %1932 = vmatprep.mubr.f32.mxu0 0.0
        %v1933 = vand.u32 %v1746, 4294901760
        %1934 = vmatmul.mubr.f32.gmra.mrb[0].mxu0 %v1933
        %v1935 = vpop.f32.mrb[0].mxu0
        %v1936 = vadd.f32 %v1830, %v1935
        %v1937 = vpop.f32.mrb[0].mxu0
        %1938 = vmatprep.mubr.f32.mxu0 0.0
        %v1939 = vand.u32 %v1749, 4294901760
        %1940 = vmatmul.mubr.f32.gmra.mrb[0].mxu0 %v1939
        %v1941 = vpop.f32.mrb[0].mxu0
        %v1942 = vadd.f32 %v1840, %v1941
        %v1943 = vpop.f32.mrb[0].mxu0
        %1944 = vmatprep.mubr.f32.mxu0 0.0
        %v1945 = vand.u32 %v1752, 4294901760
        %1946 = vmatmul.mubr.f32.gmra.mrb[0].mxu0 %v1945
        %v1947 = vpop.f32.mrb[0].mxu0
        %v1948 = vadd.f32 %v1850, %v1947
        %v1949 = vpop.f32.mrb[0].mxu0
        %1950 = vmatprep.mubr.f32.mxu0 0.0
        %v1951 = vand.u32 %v1755, 4294901760
        %1952 = vmatmul.mubr.f32.gmra.mrb[0].mxu0 %v1951
        %v1953 = vpop.f32.mrb[0].mxu0
        %v1954 = vadd.f32 %v1860, %v1953
        %v1955 = vpop.f32.mrb[0].mxu0
        %1956 = vdwg.mxu0
        %1957 = vmatprep.subr.mxu0 0.0
        %v1958 = vand.u32 %v1707, 4294901760
        %v1959 = vsub.f32 %v1707, %v1958
        %1960 = vmatpush1.msra.mxu0 %v1959
        %1961 = vmatprep.subr.mxu0 0.0
        %1962 = vmatpush1.msra.mxu0 0.0
        %1963 = vmatprep.subr.mxu0 0.0
        %1964 = vmatpush1.msra.mxu0 0.0
        %1965 = vmatprep.subr.mxu0 0.0
        %1966 = vmatpush1.msra.mxu0 0.0
        %1967 = vmatprep.subr.mxu0 0.0
        %1968 = vmatpush1.msra.mxu0 0.0
        %1969 = vmatprep.subr.mxu0 0.0
        %1970 = vmatpush1.msra.mxu0 0.0
        %1971 = vmatprep.subr.mxu0 0.0
        %1972 = vmatpush1.msra.mxu0 0.0
        %1973 = vmatprep.subr.mxu0 0.0
        %1974 = vmatpush1.msra.mxu0 0.0
        %1975 = vmatprep.subr.mxu0 0.0
        %1976 = vmatpush1.msra.mxu0 0.0
        %1977 = vmatprep.subr.mxu0 0.0
        %1978 = vmatpush1.msra.mxu0 0.0
        %1979 = vmatprep.subr.mxu0 0.0
        %1980 = vmatpush1.msra.mxu0 0.0
        %1981 = vmatprep.subr.mxu0 0.0
        %1982 = vmatpush1.msra.mxu0 0.0
        %1983 = vmatprep.subr.mxu0 0.0
        %1984 = vmatpush1.msra.mxu0 0.0
        %1985 = vmatprep.subr.mxu0 0.0
        %1986 = vmatpush1.msra.mxu0 0.0
        %1987 = vmatprep.subr.mxu0 0.0
        %1988 = vmatpush1.msra.mxu0 0.0
        %1989 = vmatprep.subr.mxu0 0.0
        %1990 = vmatpush1.msra.mxu0 0.0
        %1991 = vmatprep.subr.mxu0 0.0
        %1992 = vmatpush1.msra.mxu0 0.0
        %1993 = vmatprep.subr.mxu0 0.0
        %1994 = vmatpush1.msra.mxu0 0.0
        %1995 = vmatprep.subr.mxu0 0.0
        %1996 = vmatpush1.msra.mxu0 0.0
        %1997 = vmatprep.subr.mxu0 0.0
        %1998 = vmatpush1.msra.mxu0 0.0
        %1999 = vmatprep.subr.mxu0 0.0
        %2000 = vmatpush1.msra.mxu0 0.0
        %2001 = vmatprep.subr.mxu0 0.0
        %2002 = vmatpush1.msra.mxu0 0.0
        %2003 = vmatprep.subr.mxu0 0.0
        %2004 = vmatpush1.msra.mxu0 0.0
        %2005 = vmatprep.subr.mxu0 0.0
        %2006 = vmatpush1.msra.mxu0 0.0
        %2007 = vmatprep.subr.mxu0 0.0
        %2008 = vmatpush1.msra.mxu0 0.0
        %2009 = vmatprep.subr.mxu0 0.0
        %2010 = vmatpush1.msra.mxu0 0.0
        %2011 = vmatprep.subr.mxu0 0.0
        %2012 = vmatpush1.msra.mxu0 0.0
        %2013 = vmatprep.subr.mxu0 0.0
        %2014 = vmatpush1.msra.mxu0 0.0
        %2015 = vmatprep.subr.mxu0 0.0
        %2016 = vmatpush1.msra.mxu0 0.0
        %2017 = vmatprep.subr.mxu0 0.0
        %2018 = vmatpush1.msra.mxu0 0.0
        %2019 = vmatprep.subr.mxu0 0.0
        %2020 = vmatpush1.msra.mxu0 0.0
        %2021 = vmatprep.subr.mxu0 0.0
        %2022 = vmatpush1.msra.mxu0 0.0
        %2023 = vmatprep.mubr.f32.mxu0 0.0
        %v2024 = vand.u32 %v1746, 4294901760
        %v2025 = vsub.f32 %v1746, %v2024
        %2026 = vmatmul.mubr.f32.gmra.mrb[0].mxu0 %v2025
        %v2027 = vpop.f32.mrb[0].mxu0
        %v2028 = vadd.f32 %v1936, %v2027
        %v2029 = vpop.f32.mrb[0].mxu0
        %2030 = vmatprep.mubr.f32.mxu0 0.0
        %v2031 = vand.u32 %v1749, 4294901760
        %v2032 = vsub.f32 %v1749, %v2031
        %2033 = vmatmul.mubr.f32.gmra.mrb[0].mxu0 %v2032
        %v2034 = vpop.f32.mrb[0].mxu0
        %v2035 = vadd.f32 %v1942, %v2034
        %v2036 = vpop.f32.mrb[0].mxu0
        %2037 = vmatprep.mubr.f32.mxu0 0.0
        %v2038 = vand.u32 %v1752, 4294901760
        %v2039 = vsub.f32 %v1752, %v2038
        %2040 = vmatmul.mubr.f32.gmra.mrb[0].mxu0 %v2039
        %v2041 = vpop.f32.mrb[0].mxu0
        %v2042 = vadd.f32 %v1948, %v2041
        %v2043 = vpop.f32.mrb[0].mxu0
        %2044 = vmatprep.mubr.f32.mxu0 0.0
        %v2045 = vand.u32 %v1755, 4294901760
        %v2046 = vsub.f32 %v1755, %v2045
        %2047 = vmatmul.mubr.f32.gmra.mrb[0].mxu0 %v2046
        %v2048 = vpop.f32.mrb[0].mxu0
        %v2049 = vadd.f32 %v1954, %v2048
        %v2050 = vpop.f32.mrb[0].mxu0
        %2051 = vdwg.mxu0
        %2052 = vmatprep.subr.mxu0 0.0
        %v2053 = vand.u32 %v1707, 4294901760
        %2054 = vmatpush1.msra.mxu0 %v2053
        %2055 = vmatprep.subr.mxu0 0.0
        %2056 = vmatpush1.msra.mxu0 0.0
        %2057 = vmatprep.subr.mxu0 0.0
        %2058 = vmatpush1.msra.mxu0 0.0
        %2059 = vmatprep.subr.mxu0 0.0
        %2060 = vmatpush1.msra.mxu0 0.0
        %2061 = vmatprep.subr.mxu0 0.0
        %2062 = vmatpush1.msra.mxu0 0.0
        %2063 = vmatprep.subr.mxu0 0.0
        %2064 = vmatpush1.msra.mxu0 0.0
        %2065 = vmatprep.subr.mxu0 0.0
        %2066 = vmatpush1.msra.mxu0 0.0
        %2067 = vmatprep.subr.mxu0 0.0
        %2068 = vmatpush1.msra.mxu0 0.0
        %2069 = vmatprep.subr.mxu0 0.0
        %2070 = vmatpush1.msra.mxu0 0.0
        %2071 = vmatprep.subr.mxu0 0.0
        %2072 = vmatpush1.msra.mxu0 0.0
        %2073 = vmatprep.subr.mxu0 0.0
        %2074 = vmatpush1.msra.mxu0 0.0
        %2075 = vmatprep.subr.mxu0 0.0
        %2076 = vmatpush1.msra.mxu0 0.0
        %2077 = vmatprep.subr.mxu0 0.0
        %2078 = vmatpush1.msra.mxu0 0.0
        %2079 = vmatprep.subr.mxu0 0.0
        %2080 = vmatpush1.msra.mxu0 0.0
        %2081 = vmatprep.subr.mxu0 0.0
        %2082 = vmatpush1.msra.mxu0 0.0
        %2083 = vmatprep.subr.mxu0 0.0
        %2084 = vmatpush1.msra.mxu0 0.0
        %2085 = vmatprep.subr.mxu0 0.0
        %2086 = vmatpush1.msra.mxu0 0.0
        %2087 = vmatprep.subr.mxu0 0.0
        %2088 = vmatpush1.msra.mxu0 0.0
        %2089 = vmatprep.subr.mxu0 0.0
        %2090 = vmatpush1.msra.mxu0 0.0
        %2091 = vmatprep.subr.mxu0 0.0
        %2092 = vmatpush1.msra.mxu0 0.0
        %2093 = vmatprep.subr.mxu0 0.0
        %2094 = vmatpush1.msra.mxu0 0.0
        %2095 = vmatprep.subr.mxu0 0.0
        %2096 = vmatpush1.msra.mxu0 0.0
        %2097 = vmatprep.subr.mxu0 0.0
        %2098 = vmatpush1.msra.mxu0 0.0
        %2099 = vmatprep.subr.mxu0 0.0
        %2100 = vmatpush1.msra.mxu0 0.0
        %2101 = vmatprep.subr.mxu0 0.0
        %2102 = vmatpush1.msra.mxu0 0.0
        %2103 = vmatprep.subr.mxu0 0.0
        %2104 = vmatpush1.msra.mxu0 0.0
        %2105 = vmatprep.subr.mxu0 0.0
        %2106 = vmatpush1.msra.mxu0 0.0
        %2107 = vmatprep.subr.mxu0 0.0
        %2108 = vmatpush1.msra.mxu0 0.0
        %2109 = vmatprep.subr.mxu0 0.0
        %2110 = vmatpush1.msra.mxu0 0.0
        %2111 = vmatprep.subr.mxu0 0.0
        %2112 = vmatpush1.msra.mxu0 0.0
        %2113 = vmatprep.subr.mxu0 0.0
        %2114 = vmatpush1.msra.mxu0 0.0
        %2115 = vmatprep.subr.mxu0 0.0
        %2116 = vmatpush1.msra.mxu0 0.0
        %2117 = vmatprep.mubr.f32.mxu0 0.0
        %v2118 = vand.u32 %v1746, 4294901760
        %v2119 = vsub.f32 %v1746, %v2118
        %v2120 = vand.u32 %v2119, 4294901760
        %2121 = vmatmul.mubr.f32.gmra.mrb[0].mxu0 %v2120
        %v2122 = vpop.f32.mrb[0].mxu0
        %v2123 = vadd.f32 %v2028, %v2122
        %v2124 = vpop.f32.mrb[0].mxu0
        %2125 = vmatprep.mubr.f32.mxu0 0.0
        %v2126 = vand.u32 %v1749, 4294901760
        %v2127 = vsub.f32 %v1749, %v2126
        %v2128 = vand.u32 %v2127, 4294901760
        %2129 = vmatmul.mubr.f32.gmra.mrb[0].mxu0 %v2128
        %v2130 = vpop.f32.mrb[0].mxu0
        %v2131 = vadd.f32 %v2035, %v2130
        %v2132 = vpop.f32.mrb[0].mxu0
        %2133 = vmatprep.mubr.f32.mxu0 0.0
        %v2134 = vand.u32 %v1752, 4294901760
        %v2135 = vsub.f32 %v1752, %v2134
        %v2136 = vand.u32 %v2135, 4294901760
        %2137 = vmatmul.mubr.f32.gmra.mrb[0].mxu0 %v2136
        %v2138 = vpop.f32.mrb[0].mxu0
        %v2139 = vadd.f32 %v2042, %v2138
        %v2140 = vpop.f32.mrb[0].mxu0
        %2141 = vmatprep.mubr.f32.mxu0 0.0
        %v2142 = vand.u32 %v1755, 4294901760
        %v2143 = vsub.f32 %v1755, %v2142
        %v2144 = vand.u32 %v2143, 4294901760
        %2145 = vmatmul.mubr.f32.gmra.mrb[0].mxu0 %v2144
        %v2146 = vpop.f32.mrb[0].mxu0
        %v2147 = vadd.f32 %v2049, %v2146
        %v2148 = vpop.f32.mrb[0].mxu0
        %2149 = vdwg.mxu0
        %2150 = vmatprep.subr.mxu0 0.0
        %v2151 = vand.u32 %v1707, 4294901760
        %v2152 = vsub.f32 %v1707, %v2151
        %v2153 = vand.u32 %v2152, 4294901760
        %2154 = vmatpush1.msra.mxu0 %v2153
        %2155 = vmatprep.subr.mxu0 0.0
        %2156 = vmatpush1.msra.mxu0 0.0
        %2157 = vmatprep.subr.mxu0 0.0
        %2158 = vmatpush1.msra.mxu0 0.0
        %2159 = vmatprep.subr.mxu0 0.0
        %2160 = vmatpush1.msra.mxu0 0.0
        %2161 = vmatprep.subr.mxu0 0.0
        %2162 = vmatpush1.msra.mxu0 0.0
        %2163 = vmatprep.subr.mxu0 0.0
        %2164 = vmatpush1.msra.mxu0 0.0
        %2165 = vmatprep.subr.mxu0 0.0
        %2166 = vmatpush1.msra.mxu0 0.0
        %2167 = vmatprep.subr.mxu0 0.0
        %2168 = vmatpush1.msra.mxu0 0.0
        %2169 = vmatprep.subr.mxu0 0.0
        %2170 = vmatpush1.msra.mxu0 0.0
        %2171 = vmatprep.subr.mxu0 0.0
        %2172 = vmatpush1.msra.mxu0 0.0
        %2173 = vmatprep.subr.mxu0 0.0
        %2174 = vmatpush1.msra.mxu0 0.0
        %2175 = vmatprep.subr.mxu0 0.0
        %2176 = vmatpush1.msra.mxu0 0.0
        %2177 = vmatprep.subr.mxu0 0.0
        %2178 = vmatpush1.msra.mxu0 0.0
        %2179 = vmatprep.subr.mxu0 0.0
        %2180 = vmatpush1.msra.mxu0 0.0
        %2181 = vmatprep.subr.mxu0 0.0
        %2182 = vmatpush1.msra.mxu0 0.0
        %2183 = vmatprep.subr.mxu0 0.0
        %2184 = vmatpush1.msra.mxu0 0.0
        %2185 = vmatprep.subr.mxu0 0.0
        %2186 = vmatpush1.msra.mxu0 0.0
        %2187 = vmatprep.subr.mxu0 0.0
        %2188 = vmatpush1.msra.mxu0 0.0
        %2189 = vmatprep.subr.mxu0 0.0
        %2190 = vmatpush1.msra.mxu0 0.0
        %2191 = vmatprep.subr.mxu0 0.0
        %2192 = vmatpush1.msra.mxu0 0.0
        %2193 = vmatprep.subr.mxu0 0.0
        %2194 = vmatpush1.msra.mxu0 0.0
        %2195 = vmatprep.subr.mxu0 0.0
        %2196 = vmatpush1.msra.mxu0 0.0
        %2197 = vmatprep.subr.mxu0 0.0
        %2198 = vmatpush1.msra.mxu0 0.0
        %2199 = vmatprep.subr.mxu0 0.0
        %2200 = vmatpush1.msra.mxu0 0.0
        %2201 = vmatprep.subr.mxu0 0.0
        %2202 = vmatpush1.msra.mxu0 0.0
        %2203 = vmatprep.subr.mxu0 0.0
        %2204 = vmatpush1.msra.mxu0 0.0
        %2205 = vmatprep.subr.mxu0 0.0
        %2206 = vmatpush1.msra.mxu0 0.0
        %2207 = vmatprep.subr.mxu0 0.0
        %2208 = vmatpush1.msra.mxu0 0.0
        %2209 = vmatprep.subr.mxu0 0.0
        %2210 = vmatpush1.msra.mxu0 0.0
        %2211 = vmatprep.subr.mxu0 0.0
        %2212 = vmatpush1.msra.mxu0 0.0
        %2213 = vmatprep.subr.mxu0 0.0
        %2214 = vmatpush1.msra.mxu0 0.0
        %2215 = vmatprep.subr.mxu0 0.0
        %2216 = vmatpush1.msra.mxu0 0.0
        %2217 = vmatprep.mubr.f32.mxu0 0.0
        %v2218 = vand.u32 %v1746, 4294901760
        %2219 = vmatmul.mubr.f32.gmra.mrb[0].mxu0 %v2218
        %v2220 = vpop.f32.mrb[0].mxu0
        %v2221 = vadd.f32 %v2123, %v2220
        %v2222 = vpop.f32.mrb[0].mxu0
        %2223 = vmatprep.mubr.f32.mxu0 0.0
        %v2224 = vand.u32 %v1749, 4294901760
        %2225 = vmatmul.mubr.f32.gmra.mrb[0].mxu0 %v2224
        %v2226 = vpop.f32.mrb[0].mxu0
        %v2227 = vadd.f32 %v2131, %v2226
        %v2228 = vpop.f32.mrb[0].mxu0
        %2229 = vmatprep.mubr.f32.mxu0 0.0
        %v2230 = vand.u32 %v1752, 4294901760
        %2231 = vmatmul.mubr.f32.gmra.mrb[0].mxu0 %v2230
        %v2232 = vpop.f32.mrb[0].mxu0
        %v2233 = vadd.f32 %v2139, %v2232
        %v2234 = vpop.f32.mrb[0].mxu0
        %2235 = vmatprep.mubr.f32.mxu0 0.0
        %v2236 = vand.u32 %v1755, 4294901760
        %2237 = vmatmul.mubr.f32.gmra.mrb[0].mxu0 %v2236
        %v2238 = vpop.f32.mrb[0].mxu0
        %v2239 = vadd.f32 %v2147, %v2238
        %v2240 = vpop.f32.mrb[0].mxu0
        %2241 = vdwg.mxu0
        %2242 = vmatprep.subr.mxu0 0.0
        %v2243 = vand.u32 %v1707, 4294901760
        %2244 = vmatpush1.msra.mxu0 %v2243
        %2245 = vmatprep.subr.mxu0 0.0
        %2246 = vmatpush1.msra.mxu0 0.0
        %2247 = vmatprep.subr.mxu0 0.0
        %2248 = vmatpush1.msra.mxu0 0.0
        %2249 = vmatprep.subr.mxu0 0.0
        %2250 = vmatpush1.msra.mxu0 0.0
        %2251 = vmatprep.subr.mxu0 0.0
        %2252 = vmatpush1.msra.mxu0 0.0
        %2253 = vmatprep.subr.mxu0 0.0
        %2254 = vmatpush1.msra.mxu0 0.0
        %2255 = vmatprep.subr.mxu0 0.0
        %2256 = vmatpush1.msra.mxu0 0.0
        %2257 = vmatprep.subr.mxu0 0.0
        %2258 = vmatpush1.msra.mxu0 0.0
        %2259 = vmatprep.subr.mxu0 0.0
        %2260 = vmatpush1.msra.mxu0 0.0
        %2261 = vmatprep.subr.mxu0 0.0
        %2262 = vmatpush1.msra.mxu0 0.0
        %2263 = vmatprep.subr.mxu0 0.0
        %2264 = vmatpush1.msra.mxu0 0.0
        %2265 = vmatprep.subr.mxu0 0.0
        %2266 = vmatpush1.msra.mxu0 0.0
        %2267 = vmatprep.subr.mxu0 0.0
        %2268 = vmatpush1.msra.mxu0 0.0
        %2269 = vmatprep.subr.mxu0 0.0
        %2270 = vmatpush1.msra.mxu0 0.0
        %2271 = vmatprep.subr.mxu0 0.0
        %2272 = vmatpush1.msra.mxu0 0.0
        %2273 = vmatprep.subr.mxu0 0.0
        %2274 = vmatpush1.msra.mxu0 0.0
        %2275 = vmatprep.subr.mxu0 0.0
        %2276 = vmatpush1.msra.mxu0 0.0
        %2277 = vmatprep.subr.mxu0 0.0
        %2278 = vmatpush1.msra.mxu0 0.0
        %2279 = vmatprep.subr.mxu0 0.0
        %2280 = vmatpush1.msra.mxu0 0.0
        %2281 = vmatprep.subr.mxu0 0.0
        %2282 = vmatpush1.msra.mxu0 0.0
        %2283 = vmatprep.subr.mxu0 0.0
        %2284 = vmatpush1.msra.mxu0 0.0
        %2285 = vmatprep.subr.mxu0 0.0
        %2286 = vmatpush1.msra.mxu0 0.0
        %2287 = vmatprep.subr.mxu0 0.0
        %2288 = vmatpush1.msra.mxu0 0.0
        %2289 = vmatprep.subr.mxu0 0.0
        %2290 = vmatpush1.msra.mxu0 0.0
        %2291 = vmatprep.subr.mxu0 0.0
        %2292 = vmatpush1.msra.mxu0 0.0
        %2293 = vmatprep.subr.mxu0 0.0
        %2294 = vmatpush1.msra.mxu0 0.0
        %2295 = vmatprep.subr.mxu0 0.0
        %2296 = vmatpush1.msra.mxu0 0.0
        %2297 = vmatprep.subr.mxu0 0.0
        %2298 = vmatpush1.msra.mxu0 0.0
        %2299 = vmatprep.subr.mxu0 0.0
        %2300 = vmatpush1.msra.mxu0 0.0
        %2301 = vmatprep.subr.mxu0 0.0
        %2302 = vmatpush1.msra.mxu0 0.0
        %2303 = vmatprep.subr.mxu0 0.0
        %2304 = vmatpush1.msra.mxu0 0.0
        %2305 = vmatprep.subr.mxu0 0.0
        %2306 = vmatpush1.msra.mxu0 0.0
        %2307 = vmatprep.mubr.f32.mxu0 0.0
        %v2308 = vand.u32 %v1746, 4294901760
        %2309 = vmatmul.mubr.f32.gmra.mrb[0].mxu0 %v2308
        %v2310 = vpop.f32.mrb[0].mxu0
        %v2311 = vadd.f32 %v2221, %v2310
        %v2312 = vpop.f32.mrb[0].mxu0
        %2313 = vmatprep.mubr.f32.mxu0 0.0
        %v2314 = vand.u32 %v1749, 4294901760
        %2315 = vmatmul.mubr.f32.gmra.mrb[0].mxu0 %v2314
        %v2316 = vpop.f32.mrb[0].mxu0
        %v2317 = vadd.f32 %v2227, %v2316
        %v2318 = vpop.f32.mrb[0].mxu0
        %2319 = vmatprep.mubr.f32.mxu0 0.0
        %v2320 = vand.u32 %v1752, 4294901760
        %2321 = vmatmul.mubr.f32.gmra.mrb[0].mxu0 %v2320
        %v2322 = vpop.f32.mrb[0].mxu0
        %v2323 = vadd.f32 %v2233, %v2322
        %v2324 = vpop.f32.mrb[0].mxu0
        %2325 = vmatprep.mubr.f32.mxu0 0.0
        %v2326 = vand.u32 %v1755, 4294901760
        %2327 = vmatmul.mubr.f32.gmra.mrb[0].mxu0 %v2326
        %v2328 = vpop.f32.mrb[0].mxu0
        %v2329 = vadd.f32 %v2239, %v2328
        %v2330 = vpop.f32.mrb[0].mxu0
        %2331 = vdwg.mxu0
        %v2332 = vlaneseq
        %v2333 = vshrl.u32 %v2332, 7
        %v2334 = vsub.s32 0, %v2333
        %v2335 = vrot.slane %v1710, %v2334
        %v2336 = vmul.f32 %v1699, %v2335
        %v2337 = vmul.f32 %v1700, %v2335
        %v2338 = vmul.f32 %v2336, 1.442695
        %v2339 = vpow.pop %v2338
        %v2340 = vmul.f32 %v2337, 1.442695
        %v2341 = vpow.pop %v2340
        %v2342 = vmul.f32 %v2339, %v1708
        %v2343 = vmul.f32 %v2341, %v1709
        %v2344 = vlaneseq
        %v2345 = vshrl.u32 %v2344, 7
        %v2346 = vsub.s32 0, %v2345
        %v2347 = vrot.slane %v1711, %v2346
        %2349 = vset.pattern.permute.xlu0 0
        %2350 = vperm.xlu0 %2349, %v2311
        %v2351 = vpop.permute.xlu0 %2350
        %2354 = vset.pattern.permute.xlu0 0
        %2355 = vperm.xlu0 %2354, %v2317
        %v2356 = vpop.permute.xlu0 %2355
        %v2358 = vmul.f32 %v2347, %v2351
        %v2359 = vmul.f32 %v2347, %v2356
        %v2360 = vadd.f32 %v2342, %v2358
        %v2361 = vadd.f32 %v2343, %v2359
        %2363 = vset.pattern.permute.xlu0 0
        %2364 = vperm.xlu0 %2363, %v2323
        %v2365 = vpop.permute.xlu0 %2364
        %2368 = vset.pattern.permute.xlu0 0
        %2369 = vperm.xlu0 %2368, %v2329
        %v2370 = vpop.permute.xlu0 %2369
        %v2372 = vmul.f32 %v2360, %v2365
        %v2373 = vmul.f32 %v2361, %v2370
        %v2374 = vsel %vm550, %v2372, 0.0
        %v2375 = vsel %vm550, %v2373, 0.0
        %v2376 = vadd.f32 %v2374, %v2375
        %v2377 = vrot.slane %v2376, 4
        %v2378 = vadd.f32 %v2376, %v2377
        %v2379 = vrot.slane %v2378, 2
        %v2380 = vadd.f32 %v2378, %v2379
        %v2381 = vrot.slane %v2380, 1
        %v2382 = vadd.f32 %v2380, %v2381
        %v2383 = vlaneseq
        %v2384 = vshrl.u32 %v2383, 7
        %v2385 = vsub.s32 1, %v2384
        %v2386 = vrot.slane %v1710, %v2385
        %v2387 = vmul.f32 %v1699, %v2386
        %v2388 = vmul.f32 %v1700, %v2386
        %v2389 = vmul.f32 %v2387, 1.442695
        %v2390 = vpow.pop %v2389
        %v2391 = vmul.f32 %v2388, 1.442695
        %v2392 = vpow.pop %v2391
        %v2393 = vmul.f32 %v2390, %v2360
        %v2394 = vmul.f32 %v2392, %v2361
        %v2395 = vlaneseq
        %v2396 = vshrl.u32 %v2395, 7
        %v2397 = vsub.s32 1, %v2396
        %v2398 = vrot.slane %v1711, %v2397
        %2399 = vset.pattern.permute.xlu0 1
        %2400 = vperm.xlu0 %2399, %v2311
        %v2401 = vpop.permute.xlu0 %2400
        %2403 = vset.pattern.permute.xlu0 1
        %2404 = vperm.xlu0 %2403, %v2317
        %v2405 = vpop.permute.xlu0 %2404
        %v2407 = vmul.f32 %v2398, %v2401
        %v2408 = vmul.f32 %v2398, %v2405
        %v2409 = vadd.f32 %v2393, %v2407
        %v2410 = vadd.f32 %v2394, %v2408
        %2411 = vset.pattern.permute.xlu0 1
        %2412 = vperm.xlu0 %2411, %v2323
        %v2413 = vpop.permute.xlu0 %2412
        %2415 = vset.pattern.permute.xlu0 1
        %2416 = vperm.xlu0 %2415, %v2329
        %v2417 = vpop.permute.xlu0 %2416
        %v2419 = vmul.f32 %v2409, %v2413
        %v2420 = vmul.f32 %v2410, %v2417
        %v2421 = vsel %vm550, %v2419, 0.0
        %v2422 = vsel %vm550, %v2420, 0.0
        %v2423 = vadd.f32 %v2421, %v2422
        %v2424 = vrot.slane %v2423, 4
        %v2425 = vadd.f32 %v2423, %v2424
        %v2426 = vrot.slane %v2425, 2
        %v2427 = vadd.f32 %v2425, %v2426
        %v2428 = vrot.slane %v2427, 1
        %v2429 = vadd.f32 %v2427, %v2428
        %v2430 = vlaneseq
        %v2431 = vshrl.u32 %v2430, 7
        %v2432 = vsub.s32 2, %v2431
        %v2433 = vrot.slane %v1710, %v2432
        %v2434 = vmul.f32 %v1699, %v2433
        %v2435 = vmul.f32 %v1700, %v2433
        %v2436 = vmul.f32 %v2434, 1.442695
        %v2437 = vpow.pop %v2436
        %v2438 = vmul.f32 %v2435, 1.442695
        %v2439 = vpow.pop %v2438
        %v2440 = vmul.f32 %v2437, %v2409
        %v2441 = vmul.f32 %v2439, %v2410
        %v2442 = vlaneseq
        %v2443 = vshrl.u32 %v2442, 7
        %v2444 = vsub.s32 2, %v2443
        %v2445 = vrot.slane %v1711, %v2444
        %2446 = vset.pattern.permute.xlu0 2
        %2447 = vperm.xlu0 %2446, %v2311
        %v2448 = vpop.permute.xlu0 %2447
        %2450 = vset.pattern.permute.xlu0 2
        %2451 = vperm.xlu0 %2450, %v2317
        %v2452 = vpop.permute.xlu0 %2451
        %v2454 = vmul.f32 %v2445, %v2448
        %v2455 = vmul.f32 %v2445, %v2452
        %v2456 = vadd.f32 %v2440, %v2454
        %v2457 = vadd.f32 %v2441, %v2455
        %2458 = vset.pattern.permute.xlu0 2
        %2459 = vperm.xlu0 %2458, %v2323
        %v2460 = vpop.permute.xlu0 %2459
        %2462 = vset.pattern.permute.xlu0 2
        %2463 = vperm.xlu0 %2462, %v2329
        %v2464 = vpop.permute.xlu0 %2463
        %v2466 = vmul.f32 %v2456, %v2460
        %v2467 = vmul.f32 %v2457, %v2464
        %v2468 = vsel %vm550, %v2466, 0.0
        %v2469 = vsel %vm550, %v2467, 0.0
        %v2470 = vadd.f32 %v2468, %v2469
        %v2471 = vrot.slane %v2470, 4
        %v2472 = vadd.f32 %v2470, %v2471
        %v2473 = vrot.slane %v2472, 2
        %v2474 = vadd.f32 %v2472, %v2473
        %v2475 = vrot.slane %v2474, 1
        %v2476 = vadd.f32 %v2474, %v2475
        %v2477 = vlaneseq
        %v2478 = vshrl.u32 %v2477, 7
        %v2479 = vsub.s32 3, %v2478
        %v2480 = vrot.slane %v1710, %v2479
        %v2481 = vmul.f32 %v1699, %v2480
        %v2482 = vmul.f32 %v1700, %v2480
        %v2483 = vmul.f32 %v2481, 1.442695
        %v2484 = vpow.pop %v2483
        %v2485 = vmul.f32 %v2482, 1.442695
        %v2486 = vpow.pop %v2485
        %v2487 = vmul.f32 %v2484, %v2456
        %v2488 = vmul.f32 %v2486, %v2457
        %v2489 = vlaneseq
        %v2490 = vshrl.u32 %v2489, 7
        %v2491 = vsub.s32 3, %v2490
        %v2492 = vrot.slane %v1711, %v2491
        %2493 = vset.pattern.permute.xlu0 3
        %2494 = vperm.xlu0 %2493, %v2311
        %v2495 = vpop.permute.xlu0 %2494
        %2497 = vset.pattern.permute.xlu0 3
        %2498 = vperm.xlu0 %2497, %v2317
        %v2499 = vpop.permute.xlu0 %2498
        %v2501 = vmul.f32 %v2492, %v2495
        %v2502 = vmul.f32 %v2492, %v2499
        %v2503 = vadd.f32 %v2487, %v2501
        %v2504 = vadd.f32 %v2488, %v2502
        %2505 = vset.pattern.permute.xlu0 3
        %2506 = vperm.xlu0 %2505, %v2323
        %v2507 = vpop.permute.xlu0 %2506
        %2509 = vset.pattern.permute.xlu0 3
        %2510 = vperm.xlu0 %2509, %v2329
        %v2511 = vpop.permute.xlu0 %2510
        %v2513 = vmul.f32 %v2503, %v2507
        %v2514 = vmul.f32 %v2504, %v2511
        %v2515 = vsel %vm550, %v2513, 0.0
        %v2516 = vsel %vm550, %v2514, 0.0
        %v2517 = vadd.f32 %v2515, %v2516
        %v2518 = vrot.slane %v2517, 4
        %v2519 = vadd.f32 %v2517, %v2518
        %v2520 = vrot.slane %v2519, 2
        %v2521 = vadd.f32 %v2519, %v2520
        %v2522 = vrot.slane %v2521, 1
        %v2523 = vadd.f32 %v2521, %v2522
        %v2524 = vlaneseq
        %v2525 = vshrl.u32 %v2524, 7
        %v2526 = vsub.s32 4, %v2525
        %v2527 = vrot.slane %v1710, %v2526
        %v2528 = vmul.f32 %v1699, %v2527
        %v2529 = vmul.f32 %v1700, %v2527
        %v2530 = vmul.f32 %v2528, 1.442695
        %v2531 = vpow.pop %v2530
        %v2532 = vmul.f32 %v2529, 1.442695
        %v2533 = vpow.pop %v2532
        %v2534 = vmul.f32 %v2531, %v2503
        %v2535 = vmul.f32 %v2533, %v2504
        %v2536 = vlaneseq
        %v2537 = vshrl.u32 %v2536, 7
        %v2538 = vsub.s32 4, %v2537
        %v2539 = vrot.slane %v1711, %v2538
        %2540 = vset.pattern.permute.xlu0 4
        %2541 = vperm.xlu0 %2540, %v2311
        %v2542 = vpop.permute.xlu0 %2541
        %2544 = vset.pattern.permute.xlu0 4
        %2545 = vperm.xlu0 %2544, %v2317
        %v2546 = vpop.permute.xlu0 %2545
        %v2548 = vmul.f32 %v2539, %v2542
        %v2549 = vmul.f32 %v2539, %v2546
        %v2550 = vadd.f32 %v2534, %v2548
        %v2551 = vadd.f32 %v2535, %v2549
        %2552 = vset.pattern.permute.xlu0 4
        %2553 = vperm.xlu0 %2552, %v2323
        %v2554 = vpop.permute.xlu0 %2553
        %2556 = vset.pattern.permute.xlu0 4
        %2557 = vperm.xlu0 %2556, %v2329
        %v2558 = vpop.permute.xlu0 %2557
        %v2560 = vmul.f32 %v2550, %v2554
        %v2561 = vmul.f32 %v2551, %v2558
        %v2562 = vsel %vm550, %v2560, 0.0
        %v2563 = vsel %vm550, %v2561, 0.0
        %v2564 = vadd.f32 %v2562, %v2563
        %v2565 = vrot.slane %v2564, 4
        %v2566 = vadd.f32 %v2564, %v2565
        %v2567 = vrot.slane %v2566, 2
        %v2568 = vadd.f32 %v2566, %v2567
        %v2569 = vrot.slane %v2568, 1
        %v2570 = vadd.f32 %v2568, %v2569
        %v2571 = vlaneseq
        %v2572 = vshrl.u32 %v2571, 7
        %v2573 = vsub.s32 5, %v2572
        %v2574 = vrot.slane %v1710, %v2573
        %v2575 = vmul.f32 %v1699, %v2574
        %v2576 = vmul.f32 %v1700, %v2574
        %v2577 = vmul.f32 %v2575, 1.442695
        %v2578 = vpow.pop %v2577
        %v2579 = vmul.f32 %v2576, 1.442695
        %v2580 = vpow.pop %v2579
        %v2581 = vmul.f32 %v2578, %v2550
        %v2582 = vmul.f32 %v2580, %v2551
        %v2583 = vlaneseq
        %v2584 = vshrl.u32 %v2583, 7
        %v2585 = vsub.s32 5, %v2584
        %v2586 = vrot.slane %v1711, %v2585
        %2587 = vset.pattern.permute.xlu0 5
        %2588 = vperm.xlu0 %2587, %v2311
        %v2589 = vpop.permute.xlu0 %2588
        %2591 = vset.pattern.permute.xlu0 5
        %2592 = vperm.xlu0 %2591, %v2317
        %v2593 = vpop.permute.xlu0 %2592
        %v2595 = vmul.f32 %v2586, %v2589
        %v2596 = vmul.f32 %v2586, %v2593
        %v2597 = vadd.f32 %v2581, %v2595
        %v2598 = vadd.f32 %v2582, %v2596
        %2599 = vset.pattern.permute.xlu0 5
        %2600 = vperm.xlu0 %2599, %v2323
        %v2601 = vpop.permute.xlu0 %2600
        %2603 = vset.pattern.permute.xlu0 5
        %2604 = vperm.xlu0 %2603, %v2329
        %v2605 = vpop.permute.xlu0 %2604
        %v2607 = vmul.f32 %v2597, %v2601
        %v2608 = vmul.f32 %v2598, %v2605
        %v2609 = vsel %vm550, %v2607, 0.0
        %v2610 = vsel %vm550, %v2608, 0.0
        %v2611 = vadd.f32 %v2609, %v2610
        %v2612 = vrot.slane %v2611, 4
        %v2613 = vadd.f32 %v2611, %v2612
        %v2614 = vrot.slane %v2613, 2
        %v2615 = vadd.f32 %v2613, %v2614
        %v2616 = vrot.slane %v2615, 1
        %v2617 = vadd.f32 %v2615, %v2616
        %v2618 = vlaneseq
        %v2619 = vshrl.u32 %v2618, 7
        %v2620 = vsub.s32 6, %v2619
        %v2621 = vrot.slane %v1710, %v2620
        %v2622 = vmul.f32 %v1699, %v2621
        %v2623 = vmul.f32 %v1700, %v2621
        %v2624 = vmul.f32 %v2622, 1.442695
        %v2625 = vpow.pop %v2624
        %v2626 = vmul.f32 %v2623, 1.442695
        %v2627 = vpow.pop %v2626
        %v2628 = vmul.f32 %v2625, %v2597
        %v2629 = vmul.f32 %v2627, %v2598
        %v2630 = vlaneseq
        %v2631 = vshrl.u32 %v2630, 7
        %v2632 = vsub.s32 6, %v2631
        %v2633 = vrot.slane %v1711, %v2632
        %2634 = vset.pattern.permute.xlu0 6
        %2635 = vperm.xlu0 %2634, %v2311
        %v2636 = vpop.permute.xlu0 %2635
        %2638 = vset.pattern.permute.xlu0 6
        %2639 = vperm.xlu0 %2638, %v2317
        %v2640 = vpop.permute.xlu0 %2639
        %v2642 = vmul.f32 %v2633, %v2636
        %v2643 = vmul.f32 %v2633, %v2640
        %v2644 = vadd.f32 %v2628, %v2642
        %v2645 = vadd.f32 %v2629, %v2643
        %2646 = vset.pattern.permute.xlu0 6
        %2647 = vperm.xlu0 %2646, %v2323
        %v2648 = vpop.permute.xlu0 %2647
        %2650 = vset.pattern.permute.xlu0 6
        %2651 = vperm.xlu0 %2650, %v2329
        %v2652 = vpop.permute.xlu0 %2651
        %v2654 = vmul.f32 %v2644, %v2648
        %v2655 = vmul.f32 %v2645, %v2652
        %v2656 = vsel %vm550, %v2654, 0.0
        %v2657 = vsel %vm550, %v2655, 0.0
        %v2658 = vadd.f32 %v2656, %v2657
        %v2659 = vrot.slane %v2658, 4
        %v2660 = vadd.f32 %v2658, %v2659
        %v2661 = vrot.slane %v2660, 2
        %v2662 = vadd.f32 %v2660, %v2661
        %v2663 = vrot.slane %v2662, 1
        %v2664 = vadd.f32 %v2662, %v2663
        %v2665 = vlaneseq
        %v2666 = vshrl.u32 %v2665, 7
        %v2667 = vsub.s32 7, %v2666
        %v2668 = vrot.slane %v1710, %v2667
        %v2669 = vmul.f32 %v1699, %v2668
        %v2670 = vmul.f32 %v1700, %v2668
        %v2671 = vmul.f32 %v2669, 1.442695
        %v2672 = vpow.pop %v2671
        %v2673 = vmul.f32 %v2670, 1.442695
        %v2674 = vpow.pop %v2673
        %v2675 = vmul.f32 %v2672, %v2644
        %v2676 = vmul.f32 %v2674, %v2645
        %v2677 = vlaneseq
        %v2678 = vshrl.u32 %v2677, 7
        %v2679 = vsub.s32 7, %v2678
        %v2680 = vrot.slane %v1711, %v2679
        %2681 = vset.pattern.permute.xlu0 7
        %2682 = vperm.xlu0 %2681, %v2311
        %v2683 = vpop.permute.xlu0 %2682
        %2685 = vset.pattern.permute.xlu0 7
        %2686 = vperm.xlu0 %2685, %v2317
        %v2687 = vpop.permute.xlu0 %2686
        %v2689 = vmul.f32 %v2680, %v2683
        %v2690 = vmul.f32 %v2680, %v2687
        %v2691 = vadd.f32 %v2675, %v2689
        %v2692 = vadd.f32 %v2676, %v2690
        %2693 = vset.pattern.permute.xlu0 7
        %2694 = vperm.xlu0 %2693, %v2323
        %v2695 = vpop.permute.xlu0 %2694
        %2697 = vset.pattern.permute.xlu0 7
        %2698 = vperm.xlu0 %2697, %v2329
        %v2699 = vpop.permute.xlu0 %2698
        %v2701 = vmul.f32 %v2691, %v2695
        %v2702 = vmul.f32 %v2692, %v2699
        %v2703 = vsel %vm550, %v2701, 0.0
        %v2704 = vsel %vm550, %v2702, 0.0
        %v2705 = vadd.f32 %v2703, %v2704
        %v2706 = vrot.slane %v2705, 4
        %v2707 = vadd.f32 %v2705, %v2706
        %v2708 = vrot.slane %v2707, 2
        %v2709 = vadd.f32 %v2707, %v2708
        %v2710 = vrot.slane %v2709, 1
        %v2711 = vadd.f32 %v2709, %v2710
        %vm2712 = vcmask 1040384
        %v2713 = vsel %vm2712, %v2382, %v2429
        %vm2714 = vcmask 1041408
        %v2715 = vsel %vm2714, %v2713, %v2476
        %vm2716 = vcmask 1042432
        %v2717 = vsel %vm2716, %v2715, %v2523
        %vm2718 = vcmask 1043456
        %v2719 = vsel %vm2718, %v2717, %v2570
        %vm2720 = vcmask 1044480
        %v2721 = vsel %vm2720, %v2719, %v2617
        %vm2722 = vcmask 1045504
        %v2723 = vsel %vm2722, %v2721, %v2664
        %vm2724 = vcmask 1046528
        %v2725 = vsel %vm2724, %v2723, %v2711
        %2726 = vst.msk [vmem:[#allocation7] sm:$0xff] %vm550, %v2725
        %2727 = vst.msk [vmem:[#allocation3] sm:$0xff] %vm550, %v2691
        %2728 = vst.msk [vmem:[#allocation3 + $0x8] sm:$0xff] %vm550, %v2692
        %v2729 = vld [vmem:[#allocation7] sm:$0xff]
        %v2730 = vld [vmem:[%s10] sm:$0x1]
        %v2732 = vlaneseq
        %v2733 = vshrl.u32 %v2732, 7
        %v2734 = vsub.s32 0, %v2733
        %v2735 = vrot.slane %v2730, %v2734
        %v2737 = vmul.f32 %v597, %v2735
        %v2738 = vadd.f32 %v2729, %v2737
        %v2739 = vxor.u32 %v545, 2147483648
        %v2740 = vmul.f32 %v2739, 1.442695
        %v2741 = vpow.pop %v2740
        %v2742 = vadd.f32 %v2741, 1.0
        %v2743 = vrcp.pop %v2742
        %v2744 = vmul.f32 1.0, %v2743
        %v2745 = vmul.f32 %v545, %v2744
        %2747 = vrot.lane.b32.xlu0 %v2745, 64
        %v2748 = vpop.permute.xlu0 %2747
        %v2750 = vmul.f32 %v2738, %v2748
        %v2751 = vld [vmem:[%s11] sm:$0xf]
        %v2752 = vld [vmem:[%s11 + $0x4] sm:$0xf]
        %v2753 = vld [vmem:[%s11 + $0x8] sm:$0xf]
        %v2754 = vld [vmem:[%s11 + $0xc] sm:$0xf]
        %v2755 = vld [vmem:[%s11 + $0x10] sm:$0xf]
        %v2756 = vld [vmem:[%s11 + $0x14] sm:$0xf]
        %v2757 = vld [vmem:[%s11 + $0x18] sm:$0xf]
        %v2758 = vld [vmem:[%s11 + $0x1c] sm:$0xf]
        %v2759 = vpack.c.bf16 %v2750, %v2750
        %v2760 = vld [vmem:[%s12] sm:$0x1]
        %v2762 = vlaneseq
        %v2763 = vshrl.u32 %v2762, 7
        %v2764 = vsub.s32 0, %v2763
        %v2765 = vrot.slane %v2760, %v2764
        %v2775 = vunpack.c.l.b16 %v2751
        %v2776 = vunpack.c.l.b16 %v2752
        %v2777 = vunpack.c.l.b16 %v2753
        %v2778 = vunpack.c.l.b16 %v2754
        %v2779 = vunpack.c.l.b16 %v2755
        %v2780 = vunpack.c.l.b16 %v2756
        %v2781 = vunpack.c.l.b16 %v2757
        %v2782 = vunpack.c.l.b16 %v2758
        %v2783 = vpack.c.b16 %v2776, %v2775
        %v2784 = vpack.c.b16 %v2778, %v2777
        %v2785 = vpack.c.b16 %v2780, %v2779
        %v2786 = vpack.c.b16 %v2782, %v2781
        %v2792 = vsel %vm550, %v2759, 0
        %2794 = vmatprep.subr.bf16.mxu0 0
        %2795 = vmatpush1.bf16.msra.mxu0 %v2783
        %2796 = vmatprep.subr.bf16.mxu0 0
        %2797 = vmatpush1.bf16.msra.mxu0 %v2784
        %2798 = vmatprep.subr.bf16.mxu0 0
        %2799 = vmatpush1.bf16.msra.mxu0 %v2785
        %2800 = vmatprep.subr.bf16.mxu0 0
        %2801 = vmatpush1.bf16.msra.mxu0 %v2786
        %2802 = vmatprep.subr.bf16.mxu0 0
        %2803 = vmatpush1.bf16.msra.mxu0 0
        %2804 = vmatprep.subr.bf16.mxu0 0
        %2805 = vmatpush1.bf16.msra.mxu0 0
        %2806 = vmatprep.subr.bf16.mxu0 0
        %2807 = vmatpush1.bf16.msra.mxu0 0
        %2808 = vmatprep.subr.bf16.mxu0 0
        %2809 = vmatpush1.bf16.msra.mxu0 0
        %2810 = vmatprep.subr.bf16.mxu0 0
        %2811 = vmatpush1.bf16.msra.mxu0 0
        %2812 = vmatprep.subr.bf16.mxu0 0
        %2813 = vmatpush1.bf16.msra.mxu0 0
        %2814 = vmatprep.subr.bf16.mxu0 0
        %2815 = vmatpush1.bf16.msra.mxu0 0
        %2816 = vmatprep.subr.bf16.mxu0 0
        %2817 = vmatpush1.bf16.msra.mxu0 0
        %2818 = vmatprep.subr.bf16.mxu0 0
        %2819 = vmatpush1.bf16.msra.mxu0 0
        %2820 = vmatprep.subr.bf16.mxu0 0
        %2821 = vmatpush1.bf16.msra.mxu0 0
        %2822 = vmatprep.subr.bf16.mxu0 0
        %2823 = vmatpush1.bf16.msra.mxu0 0
        %2824 = vmatprep.subr.bf16.mxu0 0
        %2825 = vmatpush1.bf16.msra.mxu0 0
        %2826 = vmatprep.mubr.bf16.mxu0 0
        %2827 = vmatmul.mubr.bf16.gmra.mrb[0].mxu0 %v2792
        %v2828 = vpop.f32.mrb[0].mxu0
        %v2829 = vadd.f32 %v2765, %v2828
        %v2830 = vpop.f32.mrb[0].mxu0
        %v2831 = vpop.f32.mrb[0].mxu0
        %v2832 = vpop.f32.mrb[0].mxu0
        %2833 = vdwg.mxu0
        %2834 = vst.msk [vmem:[%s455] sm:$0xff] %vm506, %v2829
        %s2835 = sand.u32 %s329, 1
        %s2836 = scalar_lea.sflag [#allocation9], %s2835
        %s2837 = sand.u32 %s329, 1
        %s2838 = smul.addr %s2837, 8
        %s2839 = scalar_lea.vmem [#allocation8], %s2838
        // Predicated region
        $region81: #{tpu_custom_call.1} parent=71 // pred_check
          %p2840 = pneg %p339
        $region82: #{tpu_custom_call.1} parent=71 // pred_check_branch
          %2842 = sbr.rel (%p2840) target = $region84
        $region83: #{tpu_custom_call.1} parent=71 // pred_region
          %s2844 = ssub.s32 128, 128
          %2845 = vsyncadd %s2836, %s2844
          %s2846 = smul.addr %s31, 2
          %s2847 = sadd.s32 %s32, %s2846
          %s2848 = smul.addr %s2847, 128
          %s2849 = scalar_lea.hbm %s13, %s2848
          %s2851 = sshll.u32 %s2839, 4
          %s2852 = int_to_ptr.vmem [resolvable:$true] %s2851
          %2854 = dma.vmem_to_hbm [thread:$0]  %s2852, 128, %s2849, %s2836
        $region84: #{tpu_custom_call.1} parent=71 // pred_fallthru
          _
      $region72: #{tpu_custom_call.1} parent=5 // pred_fallthru
        _
      %p2855 = scmp.le.s32.totalorder 2, %s22
      // Predicated region
      $region85: #{tpu_custom_call.1} parent=5 // pred_check
        %p2856 = pneg %p2855
      $region86: #{tpu_custom_call.1} parent=5 // pred_check_branch
        %2858 = sbr.rel (%p2856) target = $region88
      $region87: #{tpu_custom_call.1} parent=5 // pred_region
        %s2859 = ssub.s32 %s22, 2
        // Predicated region
        $region89: #{tpu_custom_call.1} parent=87 // pred_check
          %p2860 = pneg %p345
        $region90: #{tpu_custom_call.1} parent=87 // pred_check_branch
          %2862 = sbr.rel (%p2860) target = $region92
        $region91: #{tpu_custom_call.1} parent=87 // pred_region
          %s2863 = sand.u32 %s330, 1
          %s2864 = scalar_lea.sflag [#allocation9], %s2863
          %s2865 = sand.u32 %s330, 1
          %s2866 = smul.addr %s2865, 8
          %s2867 = scalar_lea.vmem [#allocation8], %s2866
          %2868 = dma.done %s2864, 128
        $region92: #{tpu_custom_call.1} parent=87 // pred_fallthru
          _
      $region88: #{tpu_custom_call.1} parent=5 // pred_fallthru
        _
    $region6: #{tpu_custom_call.1} parent=1 // loop_footer
      %s26 = sadd.s32 1, %s22
    $region7: #{tpu_custom_call.1} parent=1 // loop_footer_branch
      %21 = sbr.rel target = $region3
    $region8: #{tpu_custom_call.1} parent=1 // loop_exit
      _
    %2869 = vsyncpa [#allocation9], 1
    %s2870 = scalar_lea.sflag [#allocation9], 1
    %2871 = vsyncpa %s2870, 1

// kernel: tpu_custom_call.1
$region0: #{tpu_custom_call.1}
  #allocation0 [shape = 'u32[]', space=smem, size = 0x4, offset = 0x4, fixed_abs, tag = 'smem constant byte address 0x4 - core index']
  #allocation1 [shape = 'u32[144,128]{1,0:T(1,128)}', space=vmem, size = 0x12000, scoped, tag = 'internal scratch']
  #allocation2 [shape = 'f32[11,64]{1,0:T(8,128)}', space=vmem, size = 0x2000, scoped, tag = 'scratch operand']
  #allocation3 [shape = 'f32[16,64]{1,0:T(8,128)}', space=vmem, size = 0x2000, scoped, tag = 'scratch operand']
  #allocation4 [shape = 'f32[8,64]{1,0:T(8,128)}', space=vmem, size = 0x1000, scoped, tag = 'scratch operand']
  #allocation5 [shape = 'f32[8,64]{1,0:T(8,128)}', space=vmem, size = 0x1000, scoped, tag = 'scratch operand']
  #allocation6 [shape = 'f32[8,32]{1,0:T(8,128)}', space=vmem, size = 0x1000, scoped, tag = 'scratch operand']
  #allocation7 [shape = 'f32[8,64]{1,0:T(8,128)}', space=vmem, size = 0x1000, scoped, tag = 'scratch operand']
  %s0 = inlined_call_operand.vmem [shape: f32[2,16,32], index: 0, kind: input, shape index: {}]
  %s1 = inlined_call_operand.vmem [shape: bf16[32,128], index: 1, kind: input, shape index: {}]
  %s2 = inlined_call_operand.vmem [shape: f32[1,128], index: 2, kind: input, shape index: {}]
  %s3 = inlined_call_operand.vmem [shape: f32[4,64], index: 3, kind: input, shape index: {}]
  %s4 = inlined_call_operand.vmem [shape: f32[1,64], index: 4, kind: input, shape index: {}]
  %s5 = inlined_call_operand.vmem [shape: f32[64,8], index: 5, kind: input, shape index: {}]
  %s6 = inlined_call_operand.vmem [shape: bf16[64,32], index: 6, kind: input, shape index: {}]
  %s7 = inlined_call_operand.vmem [shape: f32[8,64], index: 7, kind: input, shape index: {}]
  %s8 = inlined_call_operand.vmem [shape: f32[1,64], index: 8, kind: input, shape index: {}]
  %s9 = inlined_call_operand.vmem [shape: f32[16,64], index: 9, kind: input, shape index: {}]
  %s10 = inlined_call_operand.vmem [shape: f32[1,64], index: 10, kind: input, shape index: {}]
  %s11 = inlined_call_operand.vmem [shape: bf16[64,32], index: 11, kind: input, shape index: {}]
  %s12 = inlined_call_operand.vmem [shape: f32[1,32], index: 12, kind: input, shape index: {}]
  %s13 = inlined_call_operand.hbm [shape: f32[2,16,32], index: 13, kind: output, shape index: {}]
  %s14 = sld [smem:[#allocation0]]
  $region93: #{tpu_custom_call.1} parent=0
    _
  %s16 = ssub.s32 1, %s14
  %s17 = scalar_select 0, %s16, %s14
  $region1: #{tpu_custom_call.1} parent=0
    #allocation8 [shape = 'u8[8192]{0}', space=vmem, size = 0x2000, scoped, tag = 'output window, operand 0']
    #allocation9 [shape = 's32[2]{0}', space=sflag, size = 0x8, scoped, tag = 'scoped memory for tpu_custom_call.1']
    %18 = vsyncpa [#allocation9], 0
    %s19 = scalar_lea.sflag [#allocation9], 1
    %20 = vsyncpa %s19, 0
    loop: start=0, step=1, limit=6
    $region2: #{tpu_custom_call.1} parent=1 // loop_pre_header
      _
    $region3: #{tpu_custom_call.1} parent=1 // loop_header
      %s22 = sphi 0, %s26
      %p23 = scmp.ge.s32.totalorder %s22, 6
      %s29 = sphi 0, %s41
      %s30 = sphi 0, %s37
      %s31 = sphi 0, %s29
      %s32 = sphi 0, %s30
      %s33 = sphi 0, %s31
      %s34 = sphi 0, %s32
      %s46 = sphi 0, %s48
      %s49 = sphi 0, %s46
      %s50 = sphi 0, %s49
      %s66 = sphi 0, %s50
      %s70 = sphi 0, %s70
      %s72 = sphi 0, %s70
      %s73 = sphi 0, %s72
      %s87 = sphi 0, %s73
      %s91 = sphi 0, %s91
      %s93 = sphi 0, %s91
      %s94 = sphi 0, %s93
      %s108 = sphi 0, %s94
      %s112 = sphi 0, %s112
      %s114 = sphi 0, %s112
      %s115 = sphi 0, %s114
      %s129 = sphi 0, %s115
      %s133 = sphi 0, %s133
      %s135 = sphi 0, %s133
      %s136 = sphi 0, %s135
      %s150 = sphi 0, %s136
      %s154 = sphi 0, %s154
      %s156 = sphi 0, %s154
      %s157 = sphi 0, %s156
      %s171 = sphi 0, %s157
      %s175 = sphi 0, %s175
      %s177 = sphi 0, %s175
      %s178 = sphi 0, %s177
      %s192 = sphi 0, %s178
      %s196 = sphi 0, %s196
      %s198 = sphi 0, %s196
      %s199 = sphi 0, %s198
      %s213 = sphi 0, %s199
      %s217 = sphi 0, %s217
      %s219 = sphi 0, %s217
      %s220 = sphi 0, %s219
      %s234 = sphi 0, %s220
      %s238 = sphi 0, %s238
      %s240 = sphi 0, %s238
      %s241 = sphi 0, %s240
      %s255 = sphi 0, %s241
      %s259 = sphi 0, %s259
      %s261 = sphi 0, %s259
      %s262 = sphi 0, %s261
      %s276 = sphi 0, %s262
      %s280 = sphi 0, %s280
      %s282 = sphi 0, %s280
      %s283 = sphi 0, %s282
      %s297 = sphi 0, %s283
      %s301 = sphi 0, %s301
      %s303 = sphi 0, %s301
      %s304 = sphi 0, %s303
      %s318 = sphi 0, %s304
      %s326 = sphi 0, %s328
      %s329 = sphi 0, %s326
      %s330 = sphi 0, %s329
      %s346 = sphi 0, %s330
    $region4: #{tpu_custom_call.1} parent=1 // loop_header_branch
      %25 = sbr.rel (%p23) target = $region8
    $region5: #{tpu_custom_call.1} parent=1 // loop_body
      %s27 = ssub.s32 %s22, 1
      %s28 = ssub.s32 %s22, 2
      %s35 = sadd.s32 1, %s30
      %p36 = scmp.ge.s32.totalorder %s35, 2
      %s37 = scalar_select %p36, 0, %s35
      %s38 = sadd.s32 1, %s29
      %s39 = scalar_select %p36, %s38, %s29
      %p40 = scmp.ge.s32.totalorder %s39, 2
      %s41 = scalar_select %p40, 0, %s39
      %s42 = ssub.s32 %s29, %s41
      %s43 = ssub.s32 %s30, %s37
      %s44 = sor.u32 %s42, %s43
      %p45 = scmp.eq.s32.totalorder %s44, 0
      %s47 = sadd.s32 %s46, 1
      %s48 = scalar_select %p45, %s46, %s47
      %p51 = pneg %p45
      %p52 = scmp.eq.s32.totalorder %s22, 3
      %p53 = por %p51, %p52
      %p54 = scmp.ne.s32.totalorder %s46, %s49
      %p55 = scmp.eq.s32.totalorder %s22, 0
      %p56 = por %p54, %p55
      %p57 = scmp.ne.s32.totalorder %s46, %s49
      %p58 = scmp.eq.s32.totalorder %s27, 3
      %p59 = por %p57, %p58
      %p60 = scmp.ne.s32.totalorder %s49, %s50
      %p61 = scmp.eq.s32.totalorder %s27, 0
      %p62 = por %p60, %p61
      %p63 = scmp.ne.s32.totalorder %s49, %s50
      %p64 = scmp.eq.s32.totalorder %s28, 3
      %p65 = por %p63, %p64
      %p67 = scmp.ne.s32.totalorder %s50, %s66
      %p68 = scmp.eq.s32.totalorder %s28, 0
      %p69 = por %p67, %p68
      %s71 = sadd.s32 %s70, 1
      %p74 = scmp.eq.s32.totalorder %s22, 3
      %p75 = scmp.ne.s32.totalorder %s70, %s72
      %p76 = scmp.eq.s32.totalorder %s22, 0
      %p77 = por %p75, %p76
      %p78 = scmp.ne.s32.totalorder %s70, %s72
      %p79 = scmp.eq.s32.totalorder %s27, 3
      %p80 = por %p78, %p79
      %p81 = scmp.ne.s32.totalorder %s72, %s73
      %p82 = scmp.eq.s32.totalorder %s27, 0
      %p83 = por %p81, %p82
      %p84 = scmp.ne.s32.totalorder %s72, %s73
      %p85 = scmp.eq.s32.totalorder %s28, 3
      %p86 = por %p84, %p85
      %p88 = scmp.ne.s32.totalorder %s73, %s87
      %p89 = scmp.eq.s32.totalorder %s28, 0
      %p90 = por %p88, %p89
      %s92 = sadd.s32 %s91, 1
      %p95 = scmp.eq.s32.totalorder %s22, 3
      %p96 = scmp.ne.s32.totalorder %s91, %s93
      %p97 = scmp.eq.s32.totalorder %s22, 0
      %p98 = por %p96, %p97
      %p99 = scmp.ne.s32.totalorder %s91, %s93
      %p100 = scmp.eq.s32.totalorder %s27, 3
      %p101 = por %p99, %p100
      %p102 = scmp.ne.s32.totalorder %s93, %s94
      %p103 = scmp.eq.s32.totalorder %s27, 0
      %p104 = por %p102, %p103
      %p105 = scmp.ne.s32.totalorder %s93, %s94
      %p106 = scmp.eq.s32.totalorder %s28, 3
      %p107 = por %p105, %p106
      %p109 = scmp.ne.s32.totalorder %s94, %s108
      %p110 = scmp.eq.s32.totalorder %s28, 0
      %p111 = por %p109, %p110
      %s113 = sadd.s32 %s112, 1
      %p116 = scmp.eq.s32.totalorder %s22, 3
      %p117 = scmp.ne.s32.totalorder %s112, %s114
      %p118 = scmp.eq.s32.totalorder %s22, 0
      %p119 = por %p117, %p118
      %p120 = scmp.ne.s32.totalorder %s112, %s114
      %p121 = scmp.eq.s32.totalorder %s27, 3
      %p122 = por %p120, %p121
      %p123 = scmp.ne.s32.totalorder %s114, %s115
      %p124 = scmp.eq.s32.totalorder %s27, 0
      %p125 = por %p123, %p124
      %p126 = scmp.ne.s32.totalorder %s114, %s115
      %p127 = scmp.eq.s32.totalorder %s28, 3
      %p128 = por %p126, %p127
      %p130 = scmp.ne.s32.totalorder %s115, %s129
      %p131 = scmp.eq.s32.totalorder %s28, 0
      %p132 = por %p130, %p131
      %s134 = sadd.s32 %s133, 1
      %p137 = scmp.eq.s32.totalorder %s22, 3
      %p138 = scmp.ne.s32.totalorder %s133, %s135
      %p139 = scmp.eq.s32.totalorder %s22, 0
      %p140 = por %p138, %p139
      %p141 = scmp.ne.s32.totalorder %s133, %s135
      %p142 = scmp.eq.s32.totalorder %s27, 3
      %p143 = por %p141, %p142
      %p144 = scmp.ne.s32.totalorder %s135, %s136
      %p145 = scmp.eq.s32.totalorder %s27, 0
      %p146 = por %p144, %p145
      %p147 = scmp.ne.s32.totalorder %s135, %s136
      %p148 = scmp.eq.s32.totalorder %s28, 3
      %p149 = por %p147, %p148
      %p151 = scmp.ne.s32.totalorder %s136, %s150
      %p152 = scmp.eq.s32.totalorder %s28, 0
      %p153 = por %p151, %p152
      %s155 = sadd.s32 %s154, 1
      %p158 = scmp.eq.s32.totalorder %s22, 3
      %p159 = scmp.ne.s32.totalorder %s154, %s156
      %p160 = scmp.eq.s32.totalorder %s22, 0
      %p161 = por %p159, %p160
      %p162 = scmp.ne.s32.totalorder %s154, %s156
      %p163 = scmp.eq.s32.totalorder %s27, 3
      %p164 = por %p162, %p163
      %p165 = scmp.ne.s32.totalorder %s156, %s157
      %p166 = scmp.eq.s32.totalorder %s27, 0
      %p167 = por %p165, %p166
      %p168 = scmp.ne.s32.totalorder %s156, %s157
      %p169 = scmp.eq.s32.totalorder %s28, 3
      %p170 = por %p168, %p169
      %p172 = scmp.ne.s32.totalorder %s157, %s171
      %p173 = scmp.eq.s32.totalorder %s28, 0
      %p174 = por %p172, %p173
      %s176 = sadd.s32 %s175, 1
      %p179 = scmp.eq.s32.totalorder %s22, 3
      %p180 = scmp.ne.s32.totalorder %s175, %s177
      %p181 = scmp.eq.s32.totalorder %s22, 0
      %p182 = por %p180, %p181
      %p183 = scmp.ne.s32.totalorder %s175, %s177
      %p184 = scmp.eq.s32.totalorder %s27, 3
      %p185 = por %p183, %p184
      %p186 = scmp.ne.s32.totalorder %s177, %s178
      %p187 = scmp.eq.s32.totalorder %s27, 0
      %p188 = por %p186, %p187
      %p189 = scmp.ne.s32.totalorder %s177, %s178
      %p190 = scmp.eq.s32.totalorder %s28, 3
      %p191 = por %p189, %p190
      %p193 = scmp.ne.s32.totalorder %s178, %s192
      %p194 = scmp.eq.s32.totalorder %s28, 0
      %p195 = por %p193, %p194
      %s197 = sadd.s32 %s196, 1
      %p200 = scmp.eq.s32.totalorder %s22, 3
      %p201 = scmp.ne.s32.totalorder %s196, %s198
      %p202 = scmp.eq.s32.totalorder %s22, 0
      %p203 = por %p201, %p202
      %p204 = scmp.ne.s32.totalorder %s196, %s198
      %p205 = scmp.eq.s32.totalorder %s27, 3
      %p206 = por %p204, %p205
      %p207 = scmp.ne.s32.totalorder %s198, %s199
      %p208 = scmp.eq.s32.totalorder %s27, 0
      %p209 = por %p207, %p208
      %p210 = scmp.ne.s32.totalorder %s198, %s199
      %p211 = scmp.eq.s32.totalorder %s28, 3
      %p212 = por %p210, %p211
      %p214 = scmp.ne.s32.totalorder %s199, %s213
      %p215 = scmp.eq.s32.totalorder %s28, 0
      %p216 = por %p214, %p215
      %s218 = sadd.s32 %s217, 1
      %p221 = scmp.eq.s32.totalorder %s22, 3
      %p222 = scmp.ne.s32.totalorder %s217, %s219
      %p223 = scmp.eq.s32.totalorder %s22, 0
      %p224 = por %p222, %p223
      %p225 = scmp.ne.s32.totalorder %s217, %s219
      %p226 = scmp.eq.s32.totalorder %s27, 3
      %p227 = por %p225, %p226
      %p228 = scmp.ne.s32.totalorder %s219, %s220
      %p229 = scmp.eq.s32.totalorder %s27, 0
      %p230 = por %p228, %p229
      %p231 = scmp.ne.s32.totalorder %s219, %s220
      %p232 = scmp.eq.s32.totalorder %s28, 3
      %p233 = por %p231, %p232
      %p235 = scmp.ne.s32.totalorder %s220, %s234
      %p236 = scmp.eq.s32.totalorder %s28, 0
      %p237 = por %p235, %p236
      %s239 = sadd.s32 %s238, 1
      %p242 = scmp.eq.s32.totalorder %s22, 3
      %p243 = scmp.ne.s32.totalorder %s238, %s240
      %p244 = scmp.eq.s32.totalorder %s22, 0
      %p245 = por %p243, %p244
      %p246 = scmp.ne.s32.totalorder %s238, %s240
      %p247 = scmp.eq.s32.totalorder %s27, 3
      %p248 = por %p246, %p247
      %p249 = scmp.ne.s32.totalorder %s240, %s241
      %p250 = scmp.eq.s32.totalorder %s27, 0
      %p251 = por %p249, %p250
      %p252 = scmp.ne.s32.totalorder %s240, %s241
      %p253 = scmp.eq.s32.totalorder %s28, 3
      %p254 = por %p252, %p253
      %p256 = scmp.ne.s32.totalorder %s241, %s255
      %p257 = scmp.eq.s32.totalorder %s28, 0
      %p258 = por %p256, %p257
      %s260 = sadd.s32 %s259, 1
      %p263 = scmp.eq.s32.totalorder %s22, 3
      %p264 = scmp.ne.s32.totalorder %s259, %s261
      %p265 = scmp.eq.s32.totalorder %s22, 0
      %p266 = por %p264, %p265
      %p267 = scmp.ne.s32.totalorder %s259, %s261
      %p268 = scmp.eq.s32.totalorder %s27, 3
      %p269 = por %p267, %p268
      %p270 = scmp.ne.s32.totalorder %s261, %s262
      %p271 = scmp.eq.s32.totalorder %s27, 0
      %p272 = por %p270, %p271
      %p273 = scmp.ne.s32.totalorder %s261, %s262
      %p274 = scmp.eq.s32.totalorder %s28, 3
      %p275 = por %p273, %p274
      %p277 = scmp.ne.s32.totalorder %s262, %s276
      %p278 = scmp.eq.s32.totalorder %s28, 0
      %p279 = por %p277, %p278
      %s281 = sadd.s32 %s280, 1
      %p284 = scmp.eq.s32.totalorder %s22, 3
      %p285 = scmp.ne.s32.totalorder %s280, %s282
      %p286 = scmp.eq.s32.totalorder %s22, 0
      %p287 = por %p285, %p286
      %p288 = scmp.ne.s32.totalorder %s280, %s282
      %p289 = scmp.eq.s32.totalorder %s27, 3
      %p290 = por %p288, %p289
      %p291 = scmp.ne.s32.totalorder %s282, %s283
      %p292 = scmp.eq.s32.totalorder %s27, 0
      %p293 = por %p291, %p292
      %p294 = scmp.ne.s32.totalorder %s282, %s283
      %p295 = scmp.eq.s32.totalorder %s28, 3
      %p296 = por %p294, %p295
      %p298 = scmp.ne.s32.totalorder %s283, %s297
      %p299 = scmp.eq.s32.totalorder %s28, 0
      %p300 = por %p298, %p299
      %s302 = sadd.s32 %s301, 1
      %p305 = scmp.eq.s32.totalorder %s22, 3
      %p306 = scmp.ne.s32.totalorder %s301, %s303
      %p307 = scmp.eq.s32.totalorder %s22, 0
      %p308 = por %p306, %p307
      %p309 = scmp.ne.s32.totalorder %s301, %s303
      %p310 = scmp.eq.s32.totalorder %s27, 3
      %p311 = por %p309, %p310
      %p312 = scmp.ne.s32.totalorder %s303, %s304
      %p313 = scmp.eq.s32.totalorder %s27, 0
      %p314 = por %p312, %p313
      %p315 = scmp.ne.s32.totalorder %s303, %s304
      %p316 = scmp.eq.s32.totalorder %s28, 3
      %p317 = por %p315, %p316
      %p319 = scmp.ne.s32.totalorder %s304, %s318
      %p320 = scmp.eq.s32.totalorder %s28, 0
      %p321 = por %p319, %p320
      %s322 = ssub.s32 %s29, %s41
      %s323 = ssub.s32 %s30, %s37
      %s324 = sor.u32 %s322, %s323
      %p325 = scmp.eq.s32.totalorder %s324, 0
      %s327 = sadd.s32 %s326, 1
      %s328 = scalar_select %p325, %s326, %s327
      %p331 = pneg %p325
      %p332 = scmp.eq.s32.totalorder %s22, 3
      %p333 = por %p331, %p332
      %p334 = scmp.ne.s32.totalorder %s326, %s329
      %p335 = scmp.eq.s32.totalorder %s22, 0
      %p336 = por %p334, %p335
      %p337 = scmp.ne.s32.totalorder %s326, %s329
      %p338 = scmp.eq.s32.totalorder %s27, 3
      %p339 = por %p337, %p338
      %p340 = scmp.ne.s32.totalorder %s329, %s330
      %p341 = scmp.eq.s32.totalorder %s27, 0
      %p342 = por %p340, %p341
      %p343 = scmp.ne.s32.totalorder %s329, %s330
      %p344 = scmp.eq.s32.totalorder %s28, 3
      %p345 = por %p343, %p344
      %p347 = scmp.ne.s32.totalorder %s330, %s346
      %p348 = scmp.eq.s32.totalorder %s28, 0
      %p349 = por %p347, %p348
      %p350 = scmp.le.s32.totalorder 1, %s22
      %p351 = scmp.lt.s32.totalorder %s22, 5
      %p352 = pnand %p350, %p351
      %p353 = pneg %p352
      // Predicated region
      $region9: #{tpu_custom_call.1} parent=5 // pred_check
        _
      $region10: #{tpu_custom_call.1} parent=5 // pred_check_branch
        %355 = sbr.rel (%p352) target = $region12
      $region11: #{tpu_custom_call.1} parent=5 // pred_region
        %s356 = ssub.s32 %s22, 1
        // Predicated region
        $region13: #{tpu_custom_call.1} parent=11 // pred_check
          %p357 = pneg %p83
        $region14: #{tpu_custom_call.1} parent=11 // pred_check_branch
          %359 = sbr.rel (%p357) target = $region16
        $region15: #{tpu_custom_call.1} parent=11 // pred_region
          _
        $region16: #{tpu_custom_call.1} parent=11 // pred_fallthru
          _
        // Predicated region
        $region17: #{tpu_custom_call.1} parent=11 // pred_check
          %p360 = pneg %p104
        $region18: #{tpu_custom_call.1} parent=11 // pred_check_branch
          %362 = sbr.rel (%p360) target = $region20
        $region19: #{tpu_custom_call.1} parent=11 // pred_region
          _
        $region20: #{tpu_custom_call.1} parent=11 // pred_fallthru
          _
        // Predicated region
        $region21: #{tpu_custom_call.1} parent=11 // pred_check
          %p363 = pneg %p125
        $region22: #{tpu_custom_call.1} parent=11 // pred_check_branch
          %365 = sbr.rel (%p363) target = $region24
        $region23: #{tpu_custom_call.1} parent=11 // pred_region
          _
        $region24: #{tpu_custom_call.1} parent=11 // pred_fallthru
          _
        // Predicated region
        $region25: #{tpu_custom_call.1} parent=11 // pred_check
          %p366 = pneg %p146
        $region26: #{tpu_custom_call.1} parent=11 // pred_check_branch
          %368 = sbr.rel (%p366) target = $region28
        $region27: #{tpu_custom_call.1} parent=11 // pred_region
          _
        $region28: #{tpu_custom_call.1} parent=11 // pred_fallthru
          _
        // Predicated region
        $region29: #{tpu_custom_call.1} parent=11 // pred_check
          %p369 = pneg %p167
        $region30: #{tpu_custom_call.1} parent=11 // pred_check_branch
          %371 = sbr.rel (%p369) target = $region32
        $region31: #{tpu_custom_call.1} parent=11 // pred_region
          _
        $region32: #{tpu_custom_call.1} parent=11 // pred_fallthru
          _
        // Predicated region
        $region33: #{tpu_custom_call.1} parent=11 // pred_check
          %p372 = pneg %p188
        $region34: #{tpu_custom_call.1} parent=11 // pred_check_branch
          %374 = sbr.rel (%p372) target = $region36
        $region35: #{tpu_custom_call.1} parent=11 // pred_region
          _
        $region36: #{tpu_custom_call.1} parent=11 // pred_fallthru
          _
        // Predicated region
        $region37: #{tpu_custom_call.1} parent=11 // pred_check
          %p375 = pneg %p209
        $region38: #{tpu_custom_call.1} parent=11 // pred_check_branch
          %377 = sbr.rel (%p375) target = $region40
        $region39: #{tpu_custom_call.1} parent=11 // pred_region
          _
        $region40: #{tpu_custom_call.1} parent=11 // pred_fallthru
          _
        // Predicated region
        $region41: #{tpu_custom_call.1} parent=11 // pred_check
          %p378 = pneg %p230
        $region42: #{tpu_custom_call.1} parent=11 // pred_check_branch
          %380 = sbr.rel (%p378) target = $region44
        $region43: #{tpu_custom_call.1} parent=11 // pred_region
          _
        $region44: #{tpu_custom_call.1} parent=11 // pred_fallthru
          _
        // Predicated region
        $region45: #{tpu_custom_call.1} parent=11 // pred_check
          %p381 = pneg %p251
        $region46: #{tpu_custom_call.1} parent=11 // pred_check_branch
          %383 = sbr.rel (%p381) target = $region48
        $region47: #{tpu_custom_call.1} parent=11 // pred_region
          _
        $region48: #{tpu_custom_call.1} parent=11 // pred_fallthru
          _
        // Predicated region
        $region49: #{tpu_custom_call.1} parent=11 // pred_check
          %p384 = pneg %p272
        $region50: #{tpu_custom_call.1} parent=11 // pred_check_branch
          %386 = sbr.rel (%p384) target = $region52
        $region51: #{tpu_custom_call.1} parent=11 // pred_region
          _
        $region52: #{tpu_custom_call.1} parent=11 // pred_fallthru
          _
        // Predicated region
        $region53: #{tpu_custom_call.1} parent=11 // pred_check
          %p387 = pneg %p293
        $region54: #{tpu_custom_call.1} parent=11 // pred_check_branch
          %389 = sbr.rel (%p387) target = $region56
        $region55: #{tpu_custom_call.1} parent=11 // pred_region
          _
        $region56: #{tpu_custom_call.1} parent=11 // pred_fallthru
          _
        // Predicated region
        $region57: #{tpu_custom_call.1} parent=11 // pred_check
          %p390 = pneg %p314
        $region58: #{tpu_custom_call.1} parent=11 // pred_check_branch
          %392 = sbr.rel (%p390) target = $region60
        $region59: #{tpu_custom_call.1} parent=11 // pred_region
          _
        $region60: #{tpu_custom_call.1} parent=11 // pred_fallthru
          _
      $region12: #{tpu_custom_call.1} parent=5 // pred_fallthru
        _
      %p393 = scmp.lt.s32.totalorder %s22, 4
      // Predicated region
      $region61: #{tpu_custom_call.1} parent=5 // pred_check
        %p394 = pneg %p393
      $region62: #{tpu_custom_call.1} parent=5 // pred_check_branch
        %396 = sbr.rel (%p394) target = $region64
      $region63: #{tpu_custom_call.1} parent=5 // pred_region
        // Predicated region
        $region65: #{tpu_custom_call.1} parent=63 // pred_check
          %p397 = pneg %p56
        $region66: #{tpu_custom_call.1} parent=63 // pred_check_branch
          %399 = sbr.rel (%p397) target = $region68
        $region67: #{tpu_custom_call.1} parent=63 // pred_region
          %p400 = scmp.lt.s32.totalorder %s29, 1
          %s401 = scalar_select %p400, %s29, 1
          %p402 = scmp.lt.s32.totalorder %s30, 1
          %s403 = scalar_select %p402, %s30, 1
          %s404 = smul.addr %s401, 2
          %s405 = sadd.s32 %s403, %s404
          %s406 = smul.addr %s405, 8
          %s407 = scalar_lea.vmem %s0, %s406
        $region68: #{tpu_custom_call.1} parent=63 // pred_fallthru
          _
      $region64: #{tpu_custom_call.1} parent=5 // pred_fallthru
        _
      %p408 = scmp.le.s32.totalorder 1, %s22
      %p409 = scmp.lt.s32.totalorder %s22, 5
      %p410 = pnand %p408, %p409
      %p411 = pneg %p410
      // Predicated region
      $region69: #{tpu_custom_call.1} parent=5 // pred_check
        _
      $region70: #{tpu_custom_call.1} parent=5 // pred_check_branch
        %413 = sbr.rel (%p410) target = $region72
      $region71: #{tpu_custom_call.1} parent=5 // pred_region
        %s414 = ssub.s32 %s22, 1
        %p415 = scmp.lt.s32.totalorder %s31, 1
        %s416 = scalar_select %p415, %s31, 1
        %p417 = scmp.lt.s32.totalorder %s32, 1
        %s418 = scalar_select %p417, %s32, 1
        %s419 = smul.addr %s416, 2
        %s420 = sadd.s32 %s418, %s419
        %s421 = smul.addr %s420, 8
        %s422 = scalar_lea.vmem %s0, %s421
        %p423 = pneg %p62
        %p424 = pneg %p59
        %p425 = pneg %p83
        %p426 = pneg %p80
        %p427 = pneg %p104
        %p428 = pneg %p101
        %p429 = pneg %p125
        %p430 = pneg %p122
        %p431 = pneg %p146
        %p432 = pneg %p143
        %p433 = pneg %p167
        %p434 = pneg %p164
        %p435 = pneg %p188
        %p436 = pneg %p185
        %p437 = pneg %p209
        %p438 = pneg %p206
        %p439 = pneg %p230
        %p440 = pneg %p227
        %p441 = pneg %p251
        %p442 = pneg %p248
        %p443 = pneg %p272
        %p444 = pneg %p269
        %p445 = pneg %p293
        %p446 = pneg %p290
        %p447 = pneg %p314
        %p448 = pneg %p311
        %p449 = pneg %p342
        %p450 = pneg %p339
        %s451 = sand.u32 %s329, 1
        %s452 = scalar_lea.sflag [#allocation9], %s451
        %s453 = sand.u32 %s329, 1
        %s454 = smul.addr %s453, 8
        %s455 = scalar_lea.vmem [#allocation8], %s454
        %p456 = scmp.lt.s32.totalorder %s31, 1
        %s457 = scalar_select %p456, %s31, 1
        %p458 = scmp.lt.s32.totalorder %s32, 1
        %s459 = scalar_select %p458, %s32, 1
        %s460 = smul.addr %s457, 2
        %s461 = sadd.s32 %s459, %s460
        %s462 = smul.addr %s461, 8
        %s463 = scalar_lea.vmem %s0, %s462
        %p465 = scmp.eq.s32.totalorder %s32, 0
        // Predicated region
        $region73: #{tpu_custom_call.1} parent=71 // pred_check
          %p466 = pneg %p465
        $region74: #{tpu_custom_call.1} parent=71 // pred_check_branch
          %468 = sbr.rel (%p466) target = $region76
        $region75: #{tpu_custom_call.1} parent=71 // pred_region
          %vm469 = vcmask 518144
          %470 = vst.msk [vmem:[#allocation2] sm:$0x7] %vm469, 0.0
          %vm471 = vcmask 523264
          %472 = vst.msk [vmem:[#allocation3] sm:$0xff] %vm471, 0.0
          %473 = vst.msk [vmem:[#allocation3 + $0x8] sm:$0xff] %vm471, 0.0
        $region76: #{tpu_custom_call.1} parent=71 // pred_fallthru
          _
        %p474 = scmp.gt.s32.totalorder %s32, 0
        // Predicated region
        $region77: #{tpu_custom_call.1} parent=71 // pred_check
          %p475 = pneg %p474
        $region78: #{tpu_custom_call.1} parent=71 // pred_check_branch
          %477 = sbr.rel (%p475) target = $region80
        $region79: #{tpu_custom_call.1} parent=71 // pred_region
          %v478 = vld [vmem:[#allocation2 + $0x8] sm:$0x7]
          %vm479 = vcmask 518144
          %480 = vst.msk [vmem:[#allocation2] sm:$0x7] %vm479, %v478
        $region80: #{tpu_custom_call.1} parent=71 // pred_fallthru
          _
        %v481 = vld [vmem:[%s463] sm:$0xff]
        %v482 = vld [vmem:[%s1] sm:$0xf]
        %v483 = vld [vmem:[%s1 + $0x4] sm:$0xf]
        %v484 = vld [vmem:[%s1 + $0x8] sm:$0xf]
        %v485 = vld [vmem:[%s1 + $0xc] sm:$0xf]
        %v486 = vpack.c.bf16 %v481, %v481
        %v487 = vld [vmem:[%s2] sm:$0x1]
        %v489 = vlaneseq
        %v490 = vshrl.u32 %v489, 7
        %v491 = vsub.s32 0, %v490
        %v492 = vrot.slane %v487, %v491
        %v498 = vunpack.c.l.b16 %v482
        %v499 = vunpack.c.l.b16 %v483
        %v500 = vunpack.c.l.b16 %v484
        %v501 = vunpack.c.l.b16 %v485
        %v502 = vpack.c.b16 %v499, %v498
        %v503 = vpack.c.b16 %v501, %v500
        %vm506 = vcmask 261120
        %v508 = vsel %vm506, %v486, 0
        %510 = vmatprep.subr.bf16.mxu0 0
        %511 = vmatpush1.bf16.msra.mxu0 %v502
        %512 = vmatprep.subr.bf16.mxu0 0
        %513 = vmatpush1.bf16.msra.mxu0 %v503
        %514 = vmatprep.subr.bf16.mxu0 0
        %515 = vmatpush1.bf16.msra.mxu0 0
        %516 = vmatprep.subr.bf16.mxu0 0
        %517 = vmatpush1.bf16.msra.mxu0 0
        %518 = vmatprep.subr.bf16.mxu0 0
        %519 = vmatpush1.bf16.msra.mxu0 0
        %520 = vmatprep.subr.bf16.mxu0 0
        %521 = vmatpush1.bf16.msra.mxu0 0
        %522 = vmatprep.subr.bf16.mxu0 0
        %523 = vmatpush1.bf16.msra.mxu0 0
        %524 = vmatprep.subr.bf16.mxu0 0
        %525 = vmatpush1.bf16.msra.mxu0 0
        %526 = vmatprep.subr.bf16.mxu0 0
        %527 = vmatpush1.bf16.msra.mxu0 0
        %528 = vmatprep.subr.bf16.mxu0 0
        %529 = vmatpush1.bf16.msra.mxu0 0
        %530 = vmatprep.subr.bf16.mxu0 0
        %531 = vmatpush1.bf16.msra.mxu0 0
        %532 = vmatprep.subr.bf16.mxu0 0
        %533 = vmatpush1.bf16.msra.mxu0 0
        %534 = vmatprep.subr.bf16.mxu0 0
        %535 = vmatpush1.bf16.msra.mxu0 0
        %536 = vmatprep.subr.bf16.mxu0 0
        %537 = vmatpush1.bf16.msra.mxu0 0
        %538 = vmatprep.subr.bf16.mxu0 0
        %539 = vmatpush1.bf16.msra.mxu0 0
        %540 = vmatprep.subr.bf16.mxu0 0
        %541 = vmatpush1.bf16.msra.mxu0 0
        %542 = vmatprep.mubr.bf16.mxu0 0
        %543 = vmatmul.mubr.bf16.gmra.mrb[0].mxu0 %v508
        %v544 = vpop.f32.mrb[0].mxu0
        %v545 = vadd.f32 %v492, %v544
        %v546 = vpop.f32.mrb[0].mxu0
        %v547 = vpop.f32.mrb[0].mxu0
        %v548 = vpop.f32.mrb[0].mxu0
        %549 = vdwg.mxu0
        %vm550 = vcmask 523264
        %551 = vst.msk [vmem:[#allocation2 + $0x3] sm:$0xff] %vm550, %v545
        %v552 = vld [vmem:[%s4] sm:$0x1]
        %v554 = vlaneseq
        %v555 = vshrl.u32 %v554, 7
        %v556 = vsub.s32 0, %v555
        %v557 = vrot.slane %v552, %v556
        %v559 = vld [vmem:[#allocation2] sm:$0xff]
        %v560 = vld [vmem:[%s3] sm:$0x1]
        %v561 = vlaneseq
        %v562 = vshrl.u32 %v561, 7
        %v563 = vsub.s32 0, %v562
        %v564 = vrot.slane %v560, %v563
        %v565 = vmul.f32 %v559, %v564
        %v566 = vadd.f32 %v557, %v565
        %v567 = vld [vmem:[#allocation2 + $0x1] sm:$0xff]
        %v568 = vld [vmem:[%s3 + $0x1] sm:$0x1]
        %v569 = vlaneseq
        %v570 = vshrl.u32 %v569, 7
        %v571 = vsub.s32 0, %v570
        %v572 = vrot.slane %v568, %v571
        %v573 = vmul.f32 %v567, %v572
        %v574 = vadd.f32 %v566, %v573
        %v575 = vld [vmem:[#allocation2 + $0x2] sm:$0xff]
        %v576 = vld [vmem:[%s3 + $0x2] sm:$0x1]
        %v577 = vlaneseq
        %v578 = vshrl.u32 %v577, 7
        %v579 = vsub.s32 0, %v578
        %v580 = vrot.slane %v576, %v579
        %v581 = vmul.f32 %v575, %v580
        %v582 = vadd.f32 %v574, %v581
        %v583 = vld [vmem:[#allocation2 + $0x3] sm:$0xff]
        %v584 = vld [vmem:[%s3 + $0x3] sm:$0x1]
        %v585 = vlaneseq
        %v586 = vshrl.u32 %v585, 7
        %v587 = vsub.s32 0, %v586
        %v588 = vrot.slane %v584, %v587
        %v589 = vmul.f32 %v583, %v588
        %v590 = vadd.f32 %v582, %v589
        %v591 = vxor.u32 %v590, 2147483648
        %v592 = vmul.f32 %v591, 1.442695
        %v593 = vpow.pop %v592
        %v594 = vadd.f32 %v593, 1.0
        %v595 = vrcp.pop %v594
        %v596 = vmul.f32 1.0, %v595
        %v597 = vmul.f32 %v590, %v596
        %v598 = vld [vmem:[%s5] sm:$0xff]
        %v599 = vld [vmem:[%s5 + $0x8] sm:$0xff]
        %v600 = vld [vmem:[%s5 + $0x10] sm:$0xff]
        %v601 = vld [vmem:[%s5 + $0x18] sm:$0xff]
        %v602 = vld [vmem:[%s5 + $0x20] sm:$0xff]
        %v603 = vld [vmem:[%s5 + $0x28] sm:$0xff]
        %v604 = vld [vmem:[%s5 + $0x30] sm:$0xff]
        %v605 = vld [vmem:[%s5 + $0x38] sm:$0xff]
        %v607 = vsel %vm550, %v597, 0
        %609 = vmatprep.subr.mxu0 0.0
        %v610 = vand.u32 %v598, 4294901760
        %611 = vmatpush1.msra.mxu0 %v610
        %612 = vmatprep.subr.mxu0 0.0
        %v613 = vand.u32 %v599, 4294901760
        %614 = vmatpush1.msra.mxu0 %v613
        %615 = vmatprep.subr.mxu0 0.0
        %v616 = vand.u32 %v600, 4294901760
        %617 = vmatpush1.msra.mxu0 %v616
        %618 = vmatprep.subr.mxu0 0.0
        %v619 = vand.u32 %v601, 4294901760
        %620 = vmatpush1.msra.mxu0 %v619
        %621 = vmatprep.subr.mxu0 0.0
        %v622 = vand.u32 %v602, 4294901760
        %623 = vmatpush1.msra.mxu0 %v622
        %624 = vmatprep.subr.mxu0 0.0
        %v625 = vand.u32 %v603, 4294901760
        %626 = vmatpush1.msra.mxu0 %v625
        %627 = vmatprep.subr.mxu0 0.0
        %v628 = vand.u32 %v604, 4294901760
        %629 = vmatpush1.msra.mxu0 %v628
        %630 = vmatprep.subr.mxu0 0.0
        %v631 = vand.u32 %v605, 4294901760
        %632 = vmatpush1.msra.mxu0 %v631
        %633 = vmatprep.subr.mxu0 0.0
        %634 = vmatpush1.msra.mxu0 0.0
        %635 = vmatprep.subr.mxu0 0.0
        %636 = vmatpush1.msra.mxu0 0.0
        %637 = vmatprep.subr.mxu0 0.0
        %638 = vmatpush1.msra.mxu0 0.0
        %639 = vmatprep.subr.mxu0 0.0
        %640 = vmatpush1.msra.mxu0 0.0
        %641 = vmatprep.subr.mxu0 0.0
        %642 = vmatpush1.msra.mxu0 0.0
        %643 = vmatprep.subr.mxu0 0.0
        %644 = vmatpush1.msra.mxu0 0.0
        %645 = vmatprep.subr.mxu0 0.0
        %646 = vmatpush1.msra.mxu0 0.0
        %647 = vmatprep.subr.mxu0 0.0
        %648 = vmatpush1.msra.mxu0 0.0
        %649 = vmatprep.subr.mxu0 0.0
        %650 = vmatpush1.msra.mxu0 0.0
        %651 = vmatprep.subr.mxu0 0.0
        %652 = vmatpush1.msra.mxu0 0.0
        %653 = vmatprep.subr.mxu0 0.0
        %654 = vmatpush1.msra.mxu0 0.0
        %655 = vmatprep.subr.mxu0 0.0
        %656 = vmatpush1.msra.mxu0 0.0
        %657 = vmatprep.subr.mxu0 0.0
        %658 = vmatpush1.msra.mxu0 0.0
        %659 = vmatprep.subr.mxu0 0.0
        %660 = vmatpush1.msra.mxu0 0.0
        %661 = vmatprep.subr.mxu0 0.0
        %662 = vmatpush1.msra.mxu0 0.0
        %663 = vmatprep.subr.mxu0 0.0
        %664 = vmatpush1.msra.mxu0 0.0
        %665 = vmatprep.subr.mxu0 0.0
        %666 = vmatpush1.msra.mxu0 0.0
        %667 = vmatprep.subr.mxu0 0.0
        %668 = vmatpush1.msra.mxu0 0.0
        %669 = vmatprep.subr.mxu0 0.0
        %670 = vmatpush1.msra.mxu0 0.0
        %671 = vmatprep.subr.mxu0 0.0
        %672 = vmatpush1.msra.mxu0 0.0
        %673 = vmatprep.subr.mxu0 0.0
        %674 = vmatpush1.msra.mxu0 0.0
        %675 = vmatprep.subr.mxu0 0.0
        %676 = vmatpush1.msra.mxu0 0.0
        %677 = vmatprep.subr.mxu0 0.0
        %678 = vmatpush1.msra.mxu0 0.0
        %679 = vmatprep.subr.mxu0 0.0
        %680 = vmatpush1.msra.mxu0 0.0
        %681 = vmatprep.mubr.f32.mxu0 0.0
        %v682 = vand.u32 %v607, 4294901760
        %v683 = vsub.f32 %v607, %v682
        %v684 = vand.u32 %v683, 4294901760
        %v685 = vsub.f32 %v683, %v684
        %v686 = vand.u32 %v685, 4294901760
        %687 = vmatmul.mubr.f32.gmra.mrb[0].mxu0 %v686
        %v688 = vpop.f32.mrb[0].mxu0
        %v689 = vadd.f32 0.0, %v688
        %v690 = vpop.f32.mrb[0].mxu0
        %691 = vdwg.mxu0
        %692 = vmatprep.subr.mxu0 0.0
        %v693 = vand.u32 %v598, 4294901760
        %v694 = vsub.f32 %v598, %v693
        %v695 = vand.u32 %v694, 4294901760
        %v696 = vsub.f32 %v694, %v695
        %v697 = vand.u32 %v696, 4294901760
        %698 = vmatpush1.msra.mxu0 %v697
        %699 = vmatprep.subr.mxu0 0.0
        %v700 = vand.u32 %v599, 4294901760
        %v701 = vsub.f32 %v599, %v700
        %v702 = vand.u32 %v701, 4294901760
        %v703 = vsub.f32 %v701, %v702
        %v704 = vand.u32 %v703, 4294901760
        %705 = vmatpush1.msra.mxu0 %v704
        %706 = vmatprep.subr.mxu0 0.0
        %v707 = vand.u32 %v600, 4294901760
        %v708 = vsub.f32 %v600, %v707
        %v709 = vand.u32 %v708, 4294901760
        %v710 = vsub.f32 %v708, %v709
        %v711 = vand.u32 %v710, 4294901760
        %712 = vmatpush1.msra.mxu0 %v711
        %713 = vmatprep.subr.mxu0 0.0
        %v714 = vand.u32 %v601, 4294901760
        %v715 = vsub.f32 %v601, %v714
        %v716 = vand.u32 %v715, 4294901760
        %v717 = vsub.f32 %v715, %v716
        %v718 = vand.u32 %v717, 4294901760
        %719 = vmatpush1.msra.mxu0 %v718
        %720 = vmatprep.subr.mxu0 0.0
        %v721 = vand.u32 %v602, 4294901760
        %v722 = vsub.f32 %v602, %v721
        %v723 = vand.u32 %v722, 4294901760
        %v724 = vsub.f32 %v722, %v723
        %v725 = vand.u32 %v724, 4294901760
        %726 = vmatpush1.msra.mxu0 %v725
        %727 = vmatprep.subr.mxu0 0.0
        %v728 = vand.u32 %v603, 4294901760
        %v729 = vsub.f32 %v603, %v728
        %v730 = vand.u32 %v729, 4294901760
        %v731 = vsub.f32 %v729, %v730
        %v732 = vand.u32 %v731, 4294901760
        %733 = vmatpush1.msra.mxu0 %v732
        %734 = vmatprep.subr.mxu0 0.0
        %v735 = vand.u32 %v604, 4294901760
        %v736 = vsub.f32 %v604, %v735
        %v737 = vand.u32 %v736, 4294901760
        %v738 = vsub.f32 %v736, %v737
        %v739 = vand.u32 %v738, 4294901760
        %740 = vmatpush1.msra.mxu0 %v739
        %741 = vmatprep.subr.mxu0 0.0
        %v742 = vand.u32 %v605, 4294901760
        %v743 = vsub.f32 %v605, %v742
        %v744 = vand.u32 %v743, 4294901760
        %v745 = vsub.f32 %v743, %v744
        %v746 = vand.u32 %v745, 4294901760
        %747 = vmatpush1.msra.mxu0 %v746
        %748 = vmatprep.subr.mxu0 0.0
        %749 = vmatpush1.msra.mxu0 0.0
        %750 = vmatprep.subr.mxu0 0.0
        %751 = vmatpush1.msra.mxu0 0.0
        %752 = vmatprep.subr.mxu0 0.0
        %753 = vmatpush1.msra.mxu0 0.0
        %754 = vmatprep.subr.mxu0 0.0
        %755 = vmatpush1.msra.mxu0 0.0
        %756 = vmatprep.subr.mxu0 0.0
        %757 = vmatpush1.msra.mxu0 0.0
        %758 = vmatprep.subr.mxu0 0.0
        %759 = vmatpush1.msra.mxu0 0.0
        %760 = vmatprep.subr.mxu0 0.0
        %761 = vmatpush1.msra.mxu0 0.0
        %762 = vmatprep.subr.mxu0 0.0
        %763 = vmatpush1.msra.mxu0 0.0
        %764 = vmatprep.subr.mxu0 0.0
        %765 = vmatpush1.msra.mxu0 0.0
        %766 = vmatprep.subr.mxu0 0.0
        %767 = vmatpush1.msra.mxu0 0.0
        %768 = vmatprep.subr.mxu0 0.0
        %769 = vmatpush1.msra.mxu0 0.0
        %770 = vmatprep.subr.mxu0 0.0
        %771 = vmatpush1.msra.mxu0 0.0
        %772 = vmatprep.subr.mxu0 0.0
        %773 = vmatpush1.msra.mxu0 0.0
        %774 = vmatprep.subr.mxu0 0.0
        %775 = vmatpush1.msra.mxu0 0.0
        %776 = vmatprep.subr.mxu0 0.0
        %777 = vmatpush1.msra.mxu0 0.0
        %778 = vmatprep.subr.mxu0 0.0
        %779 = vmatpush1.msra.mxu0 0.0
        %780 = vmatprep.subr.mxu0 0.0
        %781 = vmatpush1.msra.mxu0 0.0
        %782 = vmatprep.subr.mxu0 0.0
        %783 = vmatpush1.msra.mxu0 0.0
        %784 = vmatprep.subr.mxu0 0.0
        %785 = vmatpush1.msra.mxu0 0.0
        %786 = vmatprep.subr.mxu0 0.0
        %787 = vmatpush1.msra.mxu0 0.0
        %788 = vmatprep.subr.mxu0 0.0
        %789 = vmatpush1.msra.mxu0 0.0
        %790 = vmatprep.subr.mxu0 0.0
        %791 = vmatpush1.msra.mxu0 0.0
        %792 = vmatprep.subr.mxu0 0.0
        %793 = vmatpush1.msra.mxu0 0.0
        %794 = vmatprep.subr.mxu0 0.0
        %795 = vmatpush1.msra.mxu0 0.0
        %796 = vmatprep.mubr.f32.mxu0 0.0
        %v797 = vand.u32 %v607, 4294901760
        %798 = vmatmul.mubr.f32.gmra.mrb[0].mxu0 %v797
        %v799 = vpop.f32.mrb[0].mxu0
        %v800 = vadd.f32 %v689, %v799
        %v801 = vpop.f32.mrb[0].mxu0
        %802 = vdwg.mxu0
        %803 = vmatprep.subr.mxu0 0.0
        %v804 = vand.u32 %v598, 4294901760
        %v805 = vsub.f32 %v598, %v804
        %806 = vmatpush1.msra.mxu0 %v805
        %807 = vmatprep.subr.mxu0 0.0
        %v808 = vand.u32 %v599, 4294901760
        %v809 = vsub.f32 %v599, %v808
        %810 = vmatpush1.msra.mxu0 %v809
        %811 = vmatprep.subr.mxu0 0.0
        %v812 = vand.u32 %v600, 4294901760
        %v813 = vsub.f32 %v600, %v812
        %814 = vmatpush1.msra.mxu0 %v813
        %815 = vmatprep.subr.mxu0 0.0
        %v816 = vand.u32 %v601, 4294901760
        %v817 = vsub.f32 %v601, %v816
        %818 = vmatpush1.msra.mxu0 %v817
        %819 = vmatprep.subr.mxu0 0.0
        %v820 = vand.u32 %v602, 4294901760
        %v821 = vsub.f32 %v602, %v820
        %822 = vmatpush1.msra.mxu0 %v821
        %823 = vmatprep.subr.mxu0 0.0
        %v824 = vand.u32 %v603, 4294901760
        %v825 = vsub.f32 %v603, %v824
        %826 = vmatpush1.msra.mxu0 %v825
        %827 = vmatprep.subr.mxu0 0.0
        %v828 = vand.u32 %v604, 4294901760
        %v829 = vsub.f32 %v604, %v828
        %830 = vmatpush1.msra.mxu0 %v829
        %831 = vmatprep.subr.mxu0 0.0
        %v832 = vand.u32 %v605, 4294901760
        %v833 = vsub.f32 %v605, %v832
        %834 = vmatpush1.msra.mxu0 %v833
        %835 = vmatprep.subr.mxu0 0.0
        %836 = vmatpush1.msra.mxu0 0.0
        %837 = vmatprep.subr.mxu0 0.0
        %838 = vmatpush1.msra.mxu0 0.0
        %839 = vmatprep.subr.mxu0 0.0
        %840 = vmatpush1.msra.mxu0 0.0
        %841 = vmatprep.subr.mxu0 0.0
        %842 = vmatpush1.msra.mxu0 0.0
        %843 = vmatprep.subr.mxu0 0.0
        %844 = vmatpush1.msra.mxu0 0.0
        %845 = vmatprep.subr.mxu0 0.0
        %846 = vmatpush1.msra.mxu0 0.0
        %847 = vmatprep.subr.mxu0 0.0
        %848 = vmatpush1.msra.mxu0 0.0
        %849 = vmatprep.subr.mxu0 0.0
        %850 = vmatpush1.msra.mxu0 0.0
        %851 = vmatprep.subr.mxu0 0.0
        %852 = vmatpush1.msra.mxu0 0.0
        %853 = vmatprep.subr.mxu0 0.0
        %854 = vmatpush1.msra.mxu0 0.0
        %855 = vmatprep.subr.mxu0 0.0
        %856 = vmatpush1.msra.mxu0 0.0
        %857 = vmatprep.subr.mxu0 0.0
        %858 = vmatpush1.msra.mxu0 0.0
        %859 = vmatprep.subr.mxu0 0.0
        %860 = vmatpush1.msra.mxu0 0.0
        %861 = vmatprep.subr.mxu0 0.0
        %862 = vmatpush1.msra.mxu0 0.0
        %863 = vmatprep.subr.mxu0 0.0
        %864 = vmatpush1.msra.mxu0 0.0
        %865 = vmatprep.subr.mxu0 0.0
        %866 = vmatpush1.msra.mxu0 0.0
        %867 = vmatprep.subr.mxu0 0.0
        %868 = vmatpush1.msra.mxu0 0.0
        %869 = vmatprep.subr.mxu0 0.0
        %870 = vmatpush1.msra.mxu0 0.0
        %871 = vmatprep.subr.mxu0 0.0
        %872 = vmatpush1.msra.mxu0 0.0
        %873 = vmatprep.subr.mxu0 0.0
        %874 = vmatpush1.msra.mxu0 0.0
        %875 = vmatprep.subr.mxu0 0.0
        %876 = vmatpush1.msra.mxu0 0.0
        %877 = vmatprep.subr.mxu0 0.0
        %878 = vmatpush1.msra.mxu0 0.0
        %879 = vmatprep.subr.mxu0 0.0
        %880 = vmatpush1.msra.mxu0 0.0
        %881 = vmatprep.subr.mxu0 0.0
        %882 = vmatpush1.msra.mxu0 0.0
        %883 = vmatprep.mubr.f32.mxu0 0.0
        %v884 = vand.u32 %v607, 4294901760
        %v885 = vsub.f32 %v607, %v884
        %886 = vmatmul.mubr.f32.gmra.mrb[0].mxu0 %v885
        %v887 = vpop.f32.mrb[0].mxu0
        %v888 = vadd.f32 %v800, %v887
        %v889 = vpop.f32.mrb[0].mxu0
        %890 = vdwg.mxu0
        %891 = vmatprep.subr.mxu0 0.0
        %v892 = vand.u32 %v598, 4294901760
        %893 = vmatpush1.msra.mxu0 %v892
        %894 = vmatprep.subr.mxu0 0.0
        %v895 = vand.u32 %v599, 4294901760
        %896 = vmatpush1.msra.mxu0 %v895
        %897 = vmatprep.subr.mxu0 0.0
        %v898 = vand.u32 %v600, 4294901760
        %899 = vmatpush1.msra.mxu0 %v898
        %900 = vmatprep.subr.mxu0 0.0
        %v901 = vand.u32 %v601, 4294901760
        %902 = vmatpush1.msra.mxu0 %v901
        %903 = vmatprep.subr.mxu0 0.0
        %v904 = vand.u32 %v602, 4294901760
        %905 = vmatpush1.msra.mxu0 %v904
        %906 = vmatprep.subr.mxu0 0.0
        %v907 = vand.u32 %v603, 4294901760
        %908 = vmatpush1.msra.mxu0 %v907
        %909 = vmatprep.subr.mxu0 0.0
        %v910 = vand.u32 %v604, 4294901760
        %911 = vmatpush1.msra.mxu0 %v910
        %912 = vmatprep.subr.mxu0 0.0
        %v913 = vand.u32 %v605, 4294901760
        %914 = vmatpush1.msra.mxu0 %v913
        %915 = vmatprep.subr.mxu0 0.0
        %916 = vmatpush1.msra.mxu0 0.0
        %917 = vmatprep.subr.mxu0 0.0
        %918 = vmatpush1.msra.mxu0 0.0
        %919 = vmatprep.subr.mxu0 0.0
        %920 = vmatpush1.msra.mxu0 0.0
        %921 = vmatprep.subr.mxu0 0.0
        %922 = vmatpush1.msra.mxu0 0.0
        %923 = vmatprep.subr.mxu0 0.0
        %924 = vmatpush1.msra.mxu0 0.0
        %925 = vmatprep.subr.mxu0 0.0
        %926 = vmatpush1.msra.mxu0 0.0
        %927 = vmatprep.subr.mxu0 0.0
        %928 = vmatpush1.msra.mxu0 0.0
        %929 = vmatprep.subr.mxu0 0.0
        %930 = vmatpush1.msra.mxu0 0.0
        %931 = vmatprep.subr.mxu0 0.0
        %932 = vmatpush1.msra.mxu0 0.0
        %933 = vmatprep.subr.mxu0 0.0
        %934 = vmatpush1.msra.mxu0 0.0
        %935 = vmatprep.subr.mxu0 0.0
        %936 = vmatpush1.msra.mxu0 0.0
        %937 = vmatprep.subr.mxu0 0.0
        %938 = vmatpush1.msra.mxu0 0.0
        %939 = vmatprep.subr.mxu0 0.0
        %940 = vmatpush1.msra.mxu0 0.0
        %941 = vmatprep.subr.mxu0 0.0
        %942 = vmatpush1.msra.mxu0 0.0
        %943 = vmatprep.subr.mxu0 0.0
        %944 = vmatpush1.msra.mxu0 0.0
        %945 = vmatprep.subr.mxu0 0.0
        %946 = vmatpush1.msra.mxu0 0.0
        %947 = vmatprep.subr.mxu0 0.0
        %948 = vmatpush1.msra.mxu0 0.0
        %949 = vmatprep.subr.mxu0 0.0
        %950 = vmatpush1.msra.mxu0 0.0
        %951 = vmatprep.subr.mxu0 0.0
        %952 = vmatpush1.msra.mxu0 0.0
        %953 = vmatprep.subr.mxu0 0.0
        %954 = vmatpush1.msra.mxu0 0.0
        %955 = vmatprep.subr.mxu0 0.0
        %956 = vmatpush1.msra.mxu0 0.0
        %957 = vmatprep.subr.mxu0 0.0
        %958 = vmatpush1.msra.mxu0 0.0
        %959 = vmatprep.subr.mxu0 0.0
        %960 = vmatpush1.msra.mxu0 0.0
        %961 = vmatprep.subr.mxu0 0.0
        %962 = vmatpush1.msra.mxu0 0.0
        %963 = vmatprep.mubr.f32.mxu0 0.0
        %v964 = vand.u32 %v607, 4294901760
        %v965 = vsub.f32 %v607, %v964
        %v966 = vand.u32 %v965, 4294901760
        %967 = vmatmul.mubr.f32.gmra.mrb[0].mxu0 %v966
        %v968 = vpop.f32.mrb[0].mxu0
        %v969 = vadd.f32 %v888, %v968
        %v970 = vpop.f32.mrb[0].mxu0
        %971 = vdwg.mxu0
        %972 = vmatprep.subr.mxu0 0.0
        %v973 = vand.u32 %v598, 4294901760
        %v974 = vsub.f32 %v598, %v973
        %v975 = vand.u32 %v974, 4294901760
        %976 = vmatpush1.msra.mxu0 %v975
        %977 = vmatprep.subr.mxu0 0.0
        %v978 = vand.u32 %v599, 4294901760
        %v979 = vsub.f32 %v599, %v978
        %v980 = vand.u32 %v979, 4294901760
        %981 = vmatpush1.msra.mxu0 %v980
        %982 = vmatprep.subr.mxu0 0.0
        %v983 = vand.u32 %v600, 4294901760
        %v984 = vsub.f32 %v600, %v983
        %v985 = vand.u32 %v984, 4294901760
        %986 = vmatpush1.msra.mxu0 %v985
        %987 = vmatprep.subr.mxu0 0.0
        %v988 = vand.u32 %v601, 4294901760
        %v989 = vsub.f32 %v601, %v988
        %v990 = vand.u32 %v989, 4294901760
        %991 = vmatpush1.msra.mxu0 %v990
        %992 = vmatprep.subr.mxu0 0.0
        %v993 = vand.u32 %v602, 4294901760
        %v994 = vsub.f32 %v602, %v993
        %v995 = vand.u32 %v994, 4294901760
        %996 = vmatpush1.msra.mxu0 %v995
        %997 = vmatprep.subr.mxu0 0.0
        %v998 = vand.u32 %v603, 4294901760
        %v999 = vsub.f32 %v603, %v998
        %v1000 = vand.u32 %v999, 4294901760
        %1001 = vmatpush1.msra.mxu0 %v1000
        %1002 = vmatprep.subr.mxu0 0.0
        %v1003 = vand.u32 %v604, 4294901760
        %v1004 = vsub.f32 %v604, %v1003
        %v1005 = vand.u32 %v1004, 4294901760
        %1006 = vmatpush1.msra.mxu0 %v1005
        %1007 = vmatprep.subr.mxu0 0.0
        %v1008 = vand.u32 %v605, 4294901760
        %v1009 = vsub.f32 %v605, %v1008
        %v1010 = vand.u32 %v1009, 4294901760
        %1011 = vmatpush1.msra.mxu0 %v1010
        %1012 = vmatprep.subr.mxu0 0.0
        %1013 = vmatpush1.msra.mxu0 0.0
        %1014 = vmatprep.subr.mxu0 0.0
        %1015 = vmatpush1.msra.mxu0 0.0
        %1016 = vmatprep.subr.mxu0 0.0
        %1017 = vmatpush1.msra.mxu0 0.0
        %1018 = vmatprep.subr.mxu0 0.0
        %1019 = vmatpush1.msra.mxu0 0.0
        %1020 = vmatprep.subr.mxu0 0.0
        %1021 = vmatpush1.msra.mxu0 0.0
        %1022 = vmatprep.subr.mxu0 0.0
        %1023 = vmatpush1.msra.mxu0 0.0
        %1024 = vmatprep.subr.mxu0 0.0
        %1025 = vmatpush1.msra.mxu0 0.0
        %1026 = vmatprep.subr.mxu0 0.0
        %1027 = vmatpush1.msra.mxu0 0.0
        %1028 = vmatprep.subr.mxu0 0.0
        %1029 = vmatpush1.msra.mxu0 0.0
        %1030 = vmatprep.subr.mxu0 0.0
        %1031 = vmatpush1.msra.mxu0 0.0
        %1032 = vmatprep.subr.mxu0 0.0
        %1033 = vmatpush1.msra.mxu0 0.0
        %1034 = vmatprep.subr.mxu0 0.0
        %1035 = vmatpush1.msra.mxu0 0.0
        %1036 = vmatprep.subr.mxu0 0.0
        %1037 = vmatpush1.msra.mxu0 0.0
        %1038 = vmatprep.subr.mxu0 0.0
        %1039 = vmatpush1.msra.mxu0 0.0
        %1040 = vmatprep.subr.mxu0 0.0
        %1041 = vmatpush1.msra.mxu0 0.0
        %1042 = vmatprep.subr.mxu0 0.0
        %1043 = vmatpush1.msra.mxu0 0.0
        %1044 = vmatprep.subr.mxu0 0.0
        %1045 = vmatpush1.msra.mxu0 0.0
        %1046 = vmatprep.subr.mxu0 0.0
        %1047 = vmatpush1.msra.mxu0 0.0
        %1048 = vmatprep.subr.mxu0 0.0
        %1049 = vmatpush1.msra.mxu0 0.0
        %1050 = vmatprep.subr.mxu0 0.0
        %1051 = vmatpush1.msra.mxu0 0.0
        %1052 = vmatprep.subr.mxu0 0.0
        %1053 = vmatpush1.msra.mxu0 0.0
        %1054 = vmatprep.subr.mxu0 0.0
        %1055 = vmatpush1.msra.mxu0 0.0
        %1056 = vmatprep.subr.mxu0 0.0
        %1057 = vmatpush1.msra.mxu0 0.0
        %1058 = vmatprep.subr.mxu0 0.0
        %1059 = vmatpush1.msra.mxu0 0.0
        %1060 = vmatprep.mubr.f32.mxu0 0.0
        %v1061 = vand.u32 %v607, 4294901760
        %1062 = vmatmul.mubr.f32.gmra.mrb[0].mxu0 %v1061
        %v1063 = vpop.f32.mrb[0].mxu0
        %v1064 = vadd.f32 %v969, %v1063
        %v1065 = vpop.f32.mrb[0].mxu0
        %1066 = vdwg.mxu0
        %1067 = vmatprep.subr.mxu0 0.0
        %v1068 = vand.u32 %v598, 4294901760
        %1069 = vmatpush1.msra.mxu0 %v1068
        %1070 = vmatprep.subr.mxu0 0.0
        %v1071 = vand.u32 %v599, 4294901760
        %1072 = vmatpush1.msra.mxu0 %v1071
        %1073 = vmatprep.subr.mxu0 0.0
        %v1074 = vand.u32 %v600, 4294901760
        %1075 = vmatpush1.msra.mxu0 %v1074
        %1076 = vmatprep.subr.mxu0 0.0
        %v1077 = vand.u32 %v601, 4294901760
        %1078 = vmatpush1.msra.mxu0 %v1077
        %1079 = vmatprep.subr.mxu0 0.0
        %v1080 = vand.u32 %v602, 4294901760
        %1081 = vmatpush1.msra.mxu0 %v1080
        %1082 = vmatprep.subr.mxu0 0.0
        %v1083 = vand.u32 %v603, 4294901760
        %1084 = vmatpush1.msra.mxu0 %v1083
        %1085 = vmatprep.subr.mxu0 0.0
        %v1086 = vand.u32 %v604, 4294901760
        %1087 = vmatpush1.msra.mxu0 %v1086
        %1088 = vmatprep.subr.mxu0 0.0
        %v1089 = vand.u32 %v605, 4294901760
        %1090 = vmatpush1.msra.mxu0 %v1089
        %1091 = vmatprep.subr.mxu0 0.0
        %1092 = vmatpush1.msra.mxu0 0.0
        %1093 = vmatprep.subr.mxu0 0.0
        %1094 = vmatpush1.msra.mxu0 0.0
        %1095 = vmatprep.subr.mxu0 0.0
        %1096 = vmatpush1.msra.mxu0 0.0
        %1097 = vmatprep.subr.mxu0 0.0
        %1098 = vmatpush1.msra.mxu0 0.0
        %1099 = vmatprep.subr.mxu0 0.0
        %1100 = vmatpush1.msra.mxu0 0.0
        %1101 = vmatprep.subr.mxu0 0.0
        %1102 = vmatpush1.msra.mxu0 0.0
        %1103 = vmatprep.subr.mxu0 0.0
        %1104 = vmatpush1.msra.mxu0 0.0
        %1105 = vmatprep.subr.mxu0 0.0
        %1106 = vmatpush1.msra.mxu0 0.0
        %1107 = vmatprep.subr.mxu0 0.0
        %1108 = vmatpush1.msra.mxu0 0.0
        %1109 = vmatprep.subr.mxu0 0.0
        %1110 = vmatpush1.msra.mxu0 0.0
        %1111 = vmatprep.subr.mxu0 0.0
        %1112 = vmatpush1.msra.mxu0 0.0
        %1113 = vmatprep.subr.mxu0 0.0
        %1114 = vmatpush1.msra.mxu0 0.0
        %1115 = vmatprep.subr.mxu0 0.0
        %1116 = vmatpush1.msra.mxu0 0.0
        %1117 = vmatprep.subr.mxu0 0.0
        %1118 = vmatpush1.msra.mxu0 0.0
        %1119 = vmatprep.subr.mxu0 0.0
        %1120 = vmatpush1.msra.mxu0 0.0
        %1121 = vmatprep.subr.mxu0 0.0
        %1122 = vmatpush1.msra.mxu0 0.0
        %1123 = vmatprep.subr.mxu0 0.0
        %1124 = vmatpush1.msra.mxu0 0.0
        %1125 = vmatprep.subr.mxu0 0.0
        %1126 = vmatpush1.msra.mxu0 0.0
        %1127 = vmatprep.subr.mxu0 0.0
        %1128 = vmatpush1.msra.mxu0 0.0
        %1129 = vmatprep.subr.mxu0 0.0
        %1130 = vmatpush1.msra.mxu0 0.0
        %1131 = vmatprep.subr.mxu0 0.0
        %1132 = vmatpush1.msra.mxu0 0.0
        %1133 = vmatprep.subr.mxu0 0.0
        %1134 = vmatpush1.msra.mxu0 0.0
        %1135 = vmatprep.subr.mxu0 0.0
        %1136 = vmatpush1.msra.mxu0 0.0
        %1137 = vmatprep.subr.mxu0 0.0
        %1138 = vmatpush1.msra.mxu0 0.0
        %1139 = vmatprep.mubr.f32.mxu0 0.0
        %v1140 = vand.u32 %v607, 4294901760
        %1141 = vmatmul.mubr.f32.gmra.mrb[0].mxu0 %v1140
        %v1142 = vpop.f32.mrb[0].mxu0
        %v1143 = vadd.f32 %v1064, %v1142
        %v1144 = vpop.f32.mrb[0].mxu0
        %1145 = vdwg.mxu0
        %v1146 = vld [vmem:[%s6] sm:$0xf]
        %v1147 = vld [vmem:[%s6 + $0x4] sm:$0xf]
        %v1148 = vld [vmem:[%s6 + $0x8] sm:$0xf]
        %v1149 = vld [vmem:[%s6 + $0xc] sm:$0xf]
        %v1150 = vld [vmem:[%s6 + $0x10] sm:$0xf]
        %v1151 = vld [vmem:[%s6 + $0x14] sm:$0xf]
        %v1152 = vld [vmem:[%s6 + $0x18] sm:$0xf]
        %v1153 = vld [vmem:[%s6 + $0x1c] sm:$0xf]
        %v1154 = vpack.c.bf16 %v597, %v597
        %v1163 = vunpack.c.l.b16 %v1146
        %v1164 = vunpack.c.l.b16 %v1147
        %v1165 = vunpack.c.l.b16 %v1148
        %v1166 = vunpack.c.l.b16 %v1149
        %v1167 = vunpack.c.l.b16 %v1150
        %v1168 = vunpack.c.l.b16 %v1151
        %v1169 = vunpack.c.l.b16 %v1152
        %v1170 = vunpack.c.l.b16 %v1153
        %v1171 = vpack.c.b16 %v1164, %v1163
        %v1172 = vpack.c.b16 %v1166, %v1165
        %v1173 = vpack.c.b16 %v1168, %v1167
        %v1174 = vpack.c.b16 %v1170, %v1169
        %v1180 = vsel %vm550, %v1154, 0
        %1182 = vmatprep.subr.bf16.mxu0 0
        %1183 = vmatpush1.bf16.msra.mxu0 %v1171
        %1184 = vmatprep.subr.bf16.mxu0 0
        %1185 = vmatpush1.bf16.msra.mxu0 %v1172
        %1186 = vmatprep.subr.bf16.mxu0 0
        %1187 = vmatpush1.bf16.msra.mxu0 %v1173
        %1188 = vmatprep.subr.bf16.mxu0 0
        %1189 = vmatpush1.bf16.msra.mxu0 %v1174
        %1190 = vmatprep.subr.bf16.mxu0 0
        %1191 = vmatpush1.bf16.msra.mxu0 0
        %1192 = vmatprep.subr.bf16.mxu0 0
        %1193 = vmatpush1.bf16.msra.mxu0 0
        %1194 = vmatprep.subr.bf16.mxu0 0
        %1195 = vmatpush1.bf16.msra.mxu0 0
        %1196 = vmatprep.subr.bf16.mxu0 0
        %1197 = vmatpush1.bf16.msra.mxu0 0
        %1198 = vmatprep.subr.bf16.mxu0 0
        %1199 = vmatpush1.bf16.msra.mxu0 0
        %1200 = vmatprep.subr.bf16.mxu0 0
        %1201 = vmatpush1.bf16.msra.mxu0 0
        %1202 = vmatprep.subr.bf16.mxu0 0
        %1203 = vmatpush1.bf16.msra.mxu0 0
        %1204 = vmatprep.subr.bf16.mxu0 0
        %1205 = vmatpush1.bf16.msra.mxu0 0
        %1206 = vmatprep.subr.bf16.mxu0 0
        %1207 = vmatpush1.bf16.msra.mxu0 0
        %1208 = vmatprep.subr.bf16.mxu0 0
        %1209 = vmatpush1.bf16.msra.mxu0 0
        %1210 = vmatprep.subr.bf16.mxu0 0
        %1211 = vmatpush1.bf16.msra.mxu0 0
        %1212 = vmatprep.subr.bf16.mxu0 0
        %1213 = vmatpush1.bf16.msra.mxu0 0
        %1214 = vmatprep.mubr.bf16.mxu0 0
        %1215 = vmatmul.mubr.bf16.gmra.mrb[0].mxu0 %v1180
        %v1216 = vpop.f32.mrb[0].mxu0
        %v1217 = vadd.f32 0.0, %v1216
        %v1218 = vpop.f32.mrb[0].mxu0
        %v1219 = vpop.f32.mrb[0].mxu0
        %v1220 = vpop.f32.mrb[0].mxu0
        %1221 = vdwg.mxu0
        %v1222 = vld [vmem:[%s7] sm:$0xff]
        %v1223 = vld [vmem:[%s8] sm:$0x1]
        %v1225 = vlaneseq
        %v1226 = vshrl.u32 %v1225, 7
        %v1227 = vsub.s32 0, %v1226
        %v1228 = vrot.slane %v1223, %v1227
        %vm1230 = vcmask 64512
        %v1232 = vsel %vm1230, %v1143, 0
        %1234 = vmatprep.subr.mxu0 0.0
        %v1235 = vand.u32 %v1222, 4294901760
        %1236 = vmatpush1.msra.mxu0 %v1235
        %1237 = vmatprep.subr.mxu0 0.0
        %1238 = vmatpush1.msra.mxu0 0.0
        %1239 = vmatprep.subr.mxu0 0.0
        %1240 = vmatpush1.msra.mxu0 0.0
        %1241 = vmatprep.subr.mxu0 0.0
        %1242 = vmatpush1.msra.mxu0 0.0
        %1243 = vmatprep.subr.mxu0 0.0
        %1244 = vmatpush1.msra.mxu0 0.0
        %1245 = vmatprep.subr.mxu0 0.0
        %1246 = vmatpush1.msra.mxu0 0.0
        %1247 = vmatprep.subr.mxu0 0.0
        %1248 = vmatpush1.msra.mxu0 0.0
        %1249 = vmatprep.subr.mxu0 0.0
        %1250 = vmatpush1.msra.mxu0 0.0
        %1251 = vmatprep.subr.mxu0 0.0
        %1252 = vmatpush1.msra.mxu0 0.0
        %1253 = vmatprep.subr.mxu0 0.0
        %1254 = vmatpush1.msra.mxu0 0.0
        %1255 = vmatprep.subr.mxu0 0.0
        %1256 = vmatpush1.msra.mxu0 0.0
        %1257 = vmatprep.subr.mxu0 0.0
        %1258 = vmatpush1.msra.mxu0 0.0
        %1259 = vmatprep.subr.mxu0 0.0
        %1260 = vmatpush1.msra.mxu0 0.0
        %1261 = vmatprep.subr.mxu0 0.0
        %1262 = vmatpush1.msra.mxu0 0.0
        %1263 = vmatprep.subr.mxu0 0.0
        %1264 = vmatpush1.msra.mxu0 0.0
        %1265 = vmatprep.subr.mxu0 0.0
        %1266 = vmatpush1.msra.mxu0 0.0
        %1267 = vmatprep.subr.mxu0 0.0
        %1268 = vmatpush1.msra.mxu0 0.0
        %1269 = vmatprep.subr.mxu0 0.0
        %1270 = vmatpush1.msra.mxu0 0.0
        %1271 = vmatprep.subr.mxu0 0.0
        %1272 = vmatpush1.msra.mxu0 0.0
        %1273 = vmatprep.subr.mxu0 0.0
        %1274 = vmatpush1.msra.mxu0 0.0
        %1275 = vmatprep.subr.mxu0 0.0
        %1276 = vmatpush1.msra.mxu0 0.0
        %1277 = vmatprep.subr.mxu0 0.0
        %1278 = vmatpush1.msra.mxu0 0.0
        %1279 = vmatprep.subr.mxu0 0.0
        %1280 = vmatpush1.msra.mxu0 0.0
        %1281 = vmatprep.subr.mxu0 0.0
        %1282 = vmatpush1.msra.mxu0 0.0
        %1283 = vmatprep.subr.mxu0 0.0
        %1284 = vmatpush1.msra.mxu0 0.0
        %1285 = vmatprep.subr.mxu0 0.0
        %1286 = vmatpush1.msra.mxu0 0.0
        %1287 = vmatprep.subr.mxu0 0.0
        %1288 = vmatpush1.msra.mxu0 0.0
        %1289 = vmatprep.subr.mxu0 0.0
        %1290 = vmatpush1.msra.mxu0 0.0
        %1291 = vmatprep.subr.mxu0 0.0
        %1292 = vmatpush1.msra.mxu0 0.0
        %1293 = vmatprep.subr.mxu0 0.0
        %1294 = vmatpush1.msra.mxu0 0.0
        %1295 = vmatprep.subr.mxu0 0.0
        %1296 = vmatpush1.msra.mxu0 0.0
        %1297 = vmatprep.subr.mxu0 0.0
        %1298 = vmatpush1.msra.mxu0 0.0
        %1299 = vmatprep.mubr.f32.mxu0 0.0
        %v1300 = vand.u32 %v1232, 4294901760
        %v1301 = vsub.f32 %v1232, %v1300
        %v1302 = vand.u32 %v1301, 4294901760
        %v1303 = vsub.f32 %v1301, %v1302
        %v1304 = vand.u32 %v1303, 4294901760
        %1305 = vmatmul.mubr.f32.gmra.mrb[0].mxu0 %v1304
        %v1306 = vpop.f32.mrb[0].mxu0
        %v1307 = vadd.f32 %v1228, %v1306
        %v1308 = vpop.f32.mrb[0].mxu0
        %1309 = vdwg.mxu0
        %1310 = vmatprep.subr.mxu0 0.0
        %v1311 = vand.u32 %v1222, 4294901760
        %v1312 = vsub.f32 %v1222, %v1311
        %v1313 = vand.u32 %v1312, 4294901760
        %v1314 = vsub.f32 %v1312, %v1313
        %v1315 = vand.u32 %v1314, 4294901760
        %1316 = vmatpush1.msra.mxu0 %v1315
        %1317 = vmatprep.subr.mxu0 0.0
        %1318 = vmatpush1.msra.mxu0 0.0
        %1319 = vmatprep.subr.mxu0 0.0
        %1320 = vmatpush1.msra.mxu0 0.0
        %1321 = vmatprep.subr.mxu0 0.0
        %1322 = vmatpush1.msra.mxu0 0.0
        %1323 = vmatprep.subr.mxu0 0.0
        %1324 = vmatpush1.msra.mxu0 0.0
        %1325 = vmatprep.subr.mxu0 0.0
        %1326 = vmatpush1.msra.mxu0 0.0
        %1327 = vmatprep.subr.mxu0 0.0
        %1328 = vmatpush1.msra.mxu0 0.0
        %1329 = vmatprep.subr.mxu0 0.0
        %1330 = vmatpush1.msra.mxu0 0.0
        %1331 = vmatprep.subr.mxu0 0.0
        %1332 = vmatpush1.msra.mxu0 0.0
        %1333 = vmatprep.subr.mxu0 0.0
        %1334 = vmatpush1.msra.mxu0 0.0
        %1335 = vmatprep.subr.mxu0 0.0
        %1336 = vmatpush1.msra.mxu0 0.0
        %1337 = vmatprep.subr.mxu0 0.0
        %1338 = vmatpush1.msra.mxu0 0.0
        %1339 = vmatprep.subr.mxu0 0.0
        %1340 = vmatpush1.msra.mxu0 0.0
        %1341 = vmatprep.subr.mxu0 0.0
        %1342 = vmatpush1.msra.mxu0 0.0
        %1343 = vmatprep.subr.mxu0 0.0
        %1344 = vmatpush1.msra.mxu0 0.0
        %1345 = vmatprep.subr.mxu0 0.0
        %1346 = vmatpush1.msra.mxu0 0.0
        %1347 = vmatprep.subr.mxu0 0.0
        %1348 = vmatpush1.msra.mxu0 0.0
        %1349 = vmatprep.subr.mxu0 0.0
        %1350 = vmatpush1.msra.mxu0 0.0
        %1351 = vmatprep.subr.mxu0 0.0
        %1352 = vmatpush1.msra.mxu0 0.0
        %1353 = vmatprep.subr.mxu0 0.0
        %1354 = vmatpush1.msra.mxu0 0.0
        %1355 = vmatprep.subr.mxu0 0.0
        %1356 = vmatpush1.msra.mxu0 0.0
        %1357 = vmatprep.subr.mxu0 0.0
        %1358 = vmatpush1.msra.mxu0 0.0
        %1359 = vmatprep.subr.mxu0 0.0
        %1360 = vmatpush1.msra.mxu0 0.0
        %1361 = vmatprep.subr.mxu0 0.0
        %1362 = vmatpush1.msra.mxu0 0.0
        %1363 = vmatprep.subr.mxu0 0.0
        %1364 = vmatpush1.msra.mxu0 0.0
        %1365 = vmatprep.subr.mxu0 0.0
        %1366 = vmatpush1.msra.mxu0 0.0
        %1367 = vmatprep.subr.mxu0 0.0
        %1368 = vmatpush1.msra.mxu0 0.0
        %1369 = vmatprep.subr.mxu0 0.0
        %1370 = vmatpush1.msra.mxu0 0.0
        %1371 = vmatprep.subr.mxu0 0.0
        %1372 = vmatpush1.msra.mxu0 0.0
        %1373 = vmatprep.subr.mxu0 0.0
        %1374 = vmatpush1.msra.mxu0 0.0
        %1375 = vmatprep.subr.mxu0 0.0
        %1376 = vmatpush1.msra.mxu0 0.0
        %1377 = vmatprep.subr.mxu0 0.0
        %1378 = vmatpush1.msra.mxu0 0.0
        %1379 = vmatprep.mubr.f32.mxu0 0.0
        %v1380 = vand.u32 %v1232, 4294901760
        %1381 = vmatmul.mubr.f32.gmra.mrb[0].mxu0 %v1380
        %v1382 = vpop.f32.mrb[0].mxu0
        %v1383 = vadd.f32 %v1307, %v1382
        %v1384 = vpop.f32.mrb[0].mxu0
        %1385 = vdwg.mxu0
        %1386 = vmatprep.subr.mxu0 0.0
        %v1387 = vand.u32 %v1222, 4294901760
        %v1388 = vsub.f32 %v1222, %v1387
        %1389 = vmatpush1.msra.mxu0 %v1388
        %1390 = vmatprep.subr.mxu0 0.0
        %1391 = vmatpush1.msra.mxu0 0.0
        %1392 = vmatprep.subr.mxu0 0.0
        %1393 = vmatpush1.msra.mxu0 0.0
        %1394 = vmatprep.subr.mxu0 0.0
        %1395 = vmatpush1.msra.mxu0 0.0
        %1396 = vmatprep.subr.mxu0 0.0
        %1397 = vmatpush1.msra.mxu0 0.0
        %1398 = vmatprep.subr.mxu0 0.0
        %1399 = vmatpush1.msra.mxu0 0.0
        %1400 = vmatprep.subr.mxu0 0.0
        %1401 = vmatpush1.msra.mxu0 0.0
        %1402 = vmatprep.subr.mxu0 0.0
        %1403 = vmatpush1.msra.mxu0 0.0
        %1404 = vmatprep.subr.mxu0 0.0
        %1405 = vmatpush1.msra.mxu0 0.0
        %1406 = vmatprep.subr.mxu0 0.0
        %1407 = vmatpush1.msra.mxu0 0.0
        %1408 = vmatprep.subr.mxu0 0.0
        %1409 = vmatpush1.msra.mxu0 0.0
        %1410 = vmatprep.subr.mxu0 0.0
        %1411 = vmatpush1.msra.mxu0 0.0
        %1412 = vmatprep.subr.mxu0 0.0
        %1413 = vmatpush1.msra.mxu0 0.0
        %1414 = vmatprep.subr.mxu0 0.0
        %1415 = vmatpush1.msra.mxu0 0.0
        %1416 = vmatprep.subr.mxu0 0.0
        %1417 = vmatpush1.msra.mxu0 0.0
        %1418 = vmatprep.subr.mxu0 0.0
        %1419 = vmatpush1.msra.mxu0 0.0
        %1420 = vmatprep.subr.mxu0 0.0
        %1421 = vmatpush1.msra.mxu0 0.0
        %1422 = vmatprep.subr.mxu0 0.0
        %1423 = vmatpush1.msra.mxu0 0.0
        %1424 = vmatprep.subr.mxu0 0.0
        %1425 = vmatpush1.msra.mxu0 0.0
        %1426 = vmatprep.subr.mxu0 0.0
        %1427 = vmatpush1.msra.mxu0 0.0
        %1428 = vmatprep.subr.mxu0 0.0
        %1429 = vmatpush1.msra.mxu0 0.0
        %1430 = vmatprep.subr.mxu0 0.0
        %1431 = vmatpush1.msra.mxu0 0.0
        %1432 = vmatprep.subr.mxu0 0.0
        %1433 = vmatpush1.msra.mxu0 0.0
        %1434 = vmatprep.subr.mxu0 0.0
        %1435 = vmatpush1.msra.mxu0 0.0
        %1436 = vmatprep.subr.mxu0 0.0
        %1437 = vmatpush1.msra.mxu0 0.0
        %1438 = vmatprep.subr.mxu0 0.0
        %1439 = vmatpush1.msra.mxu0 0.0
        %1440 = vmatprep.subr.mxu0 0.0
        %1441 = vmatpush1.msra.mxu0 0.0
        %1442 = vmatprep.subr.mxu0 0.0
        %1443 = vmatpush1.msra.mxu0 0.0
        %1444 = vmatprep.subr.mxu0 0.0
        %1445 = vmatpush1.msra.mxu0 0.0
        %1446 = vmatprep.subr.mxu0 0.0
        %1447 = vmatpush1.msra.mxu0 0.0
        %1448 = vmatprep.subr.mxu0 0.0
        %1449 = vmatpush1.msra.mxu0 0.0
        %1450 = vmatprep.subr.mxu0 0.0
        %1451 = vmatpush1.msra.mxu0 0.0
        %1452 = vmatprep.mubr.f32.mxu0 0.0
        %v1453 = vand.u32 %v1232, 4294901760
        %v1454 = vsub.f32 %v1232, %v1453
        %1455 = vmatmul.mubr.f32.gmra.mrb[0].mxu0 %v1454
        %v1456 = vpop.f32.mrb[0].mxu0
        %v1457 = vadd.f32 %v1383, %v1456
        %v1458 = vpop.f32.mrb[0].mxu0
        %1459 = vdwg.mxu0
        %1460 = vmatprep.subr.mxu0 0.0
        %v1461 = vand.u32 %v1222, 4294901760
        %1462 = vmatpush1.msra.mxu0 %v1461
        %1463 = vmatprep.subr.mxu0 0.0
        %1464 = vmatpush1.msra.mxu0 0.0
        %1465 = vmatprep.subr.mxu0 0.0
        %1466 = vmatpush1.msra.mxu0 0.0
        %1467 = vmatprep.subr.mxu0 0.0
        %1468 = vmatpush1.msra.mxu0 0.0
        %1469 = vmatprep.subr.mxu0 0.0
        %1470 = vmatpush1.msra.mxu0 0.0
        %1471 = vmatprep.subr.mxu0 0.0
        %1472 = vmatpush1.msra.mxu0 0.0
        %1473 = vmatprep.subr.mxu0 0.0
        %1474 = vmatpush1.msra.mxu0 0.0
        %1475 = vmatprep.subr.mxu0 0.0
        %1476 = vmatpush1.msra.mxu0 0.0
        %1477 = vmatprep.subr.mxu0 0.0
        %1478 = vmatpush1.msra.mxu0 0.0
        %1479 = vmatprep.subr.mxu0 0.0
        %1480 = vmatpush1.msra.mxu0 0.0
        %1481 = vmatprep.subr.mxu0 0.0
        %1482 = vmatpush1.msra.mxu0 0.0
        %1483 = vmatprep.subr.mxu0 0.0
        %1484 = vmatpush1.msra.mxu0 0.0
        %1485 = vmatprep.subr.mxu0 0.0
        %1486 = vmatpush1.msra.mxu0 0.0
        %1487 = vmatprep.subr.mxu0 0.0
        %1488 = vmatpush1.msra.mxu0 0.0
        %1489 = vmatprep.subr.mxu0 0.0
        %1490 = vmatpush1.msra.mxu0 0.0
        %1491 = vmatprep.subr.mxu0 0.0
        %1492 = vmatpush1.msra.mxu0 0.0
        %1493 = vmatprep.subr.mxu0 0.0
        %1494 = vmatpush1.msra.mxu0 0.0
        %1495 = vmatprep.subr.mxu0 0.0
        %1496 = vmatpush1.msra.mxu0 0.0
        %1497 = vmatprep.subr.mxu0 0.0
        %1498 = vmatpush1.msra.mxu0 0.0
        %1499 = vmatprep.subr.mxu0 0.0
        %1500 = vmatpush1.msra.mxu0 0.0
        %1501 = vmatprep.subr.mxu0 0.0
        %1502 = vmatpush1.msra.mxu0 0.0
        %1503 = vmatprep.subr.mxu0 0.0
        %1504 = vmatpush1.msra.mxu0 0.0
        %1505 = vmatprep.subr.mxu0 0.0
        %1506 = vmatpush1.msra.mxu0 0.0
        %1507 = vmatprep.subr.mxu0 0.0
        %1508 = vmatpush1.msra.mxu0 0.0
        %1509 = vmatprep.subr.mxu0 0.0
        %1510 = vmatpush1.msra.mxu0 0.0
        %1511 = vmatprep.subr.mxu0 0.0
        %1512 = vmatpush1.msra.mxu0 0.0
        %1513 = vmatprep.subr.mxu0 0.0
        %1514 = vmatpush1.msra.mxu0 0.0
        %1515 = vmatprep.subr.mxu0 0.0
        %1516 = vmatpush1.msra.mxu0 0.0
        %1517 = vmatprep.subr.mxu0 0.0
        %1518 = vmatpush1.msra.mxu0 0.0
        %1519 = vmatprep.subr.mxu0 0.0
        %1520 = vmatpush1.msra.mxu0 0.0
        %1521 = vmatprep.subr.mxu0 0.0
        %1522 = vmatpush1.msra.mxu0 0.0
        %1523 = vmatprep.subr.mxu0 0.0
        %1524 = vmatpush1.msra.mxu0 0.0
        %1525 = vmatprep.mubr.f32.mxu0 0.0
        %v1526 = vand.u32 %v1232, 4294901760
        %v1527 = vsub.f32 %v1232, %v1526
        %v1528 = vand.u32 %v1527, 4294901760
        %1529 = vmatmul.mubr.f32.gmra.mrb[0].mxu0 %v1528
        %v1530 = vpop.f32.mrb[0].mxu0
        %v1531 = vadd.f32 %v1457, %v1530
        %v1532 = vpop.f32.mrb[0].mxu0
        %1533 = vdwg.mxu0
        %1534 = vmatprep.subr.mxu0 0.0
        %v1535 = vand.u32 %v1222, 4294901760
        %v1536 = vsub.f32 %v1222, %v1535
        %v1537 = vand.u32 %v1536, 4294901760
        %1538 = vmatpush1.msra.mxu0 %v1537
        %1539 = vmatprep.subr.mxu0 0.0
        %1540 = vmatpush1.msra.mxu0 0.0
        %1541 = vmatprep.subr.mxu0 0.0
        %1542 = vmatpush1.msra.mxu0 0.0
        %1543 = vmatprep.subr.mxu0 0.0
        %1544 = vmatpush1.msra.mxu0 0.0
        %1545 = vmatprep.subr.mxu0 0.0
        %1546 = vmatpush1.msra.mxu0 0.0
        %1547 = vmatprep.subr.mxu0 0.0
        %1548 = vmatpush1.msra.mxu0 0.0
        %1549 = vmatprep.subr.mxu0 0.0
        %1550 = vmatpush1.msra.mxu0 0.0
        %1551 = vmatprep.subr.mxu0 0.0
        %1552 = vmatpush1.msra.mxu0 0.0
        %1553 = vmatprep.subr.mxu0 0.0
        %1554 = vmatpush1.msra.mxu0 0.0
        %1555 = vmatprep.subr.mxu0 0.0
        %1556 = vmatpush1.msra.mxu0 0.0
        %1557 = vmatprep.subr.mxu0 0.0
        %1558 = vmatpush1.msra.mxu0 0.0
        %1559 = vmatprep.subr.mxu0 0.0
        %1560 = vmatpush1.msra.mxu0 0.0
        %1561 = vmatprep.subr.mxu0 0.0
        %1562 = vmatpush1.msra.mxu0 0.0
        %1563 = vmatprep.subr.mxu0 0.0
        %1564 = vmatpush1.msra.mxu0 0.0
        %1565 = vmatprep.subr.mxu0 0.0
        %1566 = vmatpush1.msra.mxu0 0.0
        %1567 = vmatprep.subr.mxu0 0.0
        %1568 = vmatpush1.msra.mxu0 0.0
        %1569 = vmatprep.subr.mxu0 0.0
        %1570 = vmatpush1.msra.mxu0 0.0
        %1571 = vmatprep.subr.mxu0 0.0
        %1572 = vmatpush1.msra.mxu0 0.0
        %1573 = vmatprep.subr.mxu0 0.0
        %1574 = vmatpush1.msra.mxu0 0.0
        %1575 = vmatprep.subr.mxu0 0.0
        %1576 = vmatpush1.msra.mxu0 0.0
        %1577 = vmatprep.subr.mxu0 0.0
        %1578 = vmatpush1.msra.mxu0 0.0
        %1579 = vmatprep.subr.mxu0 0.0
        %1580 = vmatpush1.msra.mxu0 0.0
        %1581 = vmatprep.subr.mxu0 0.0
        %1582 = vmatpush1.msra.mxu0 0.0
        %1583 = vmatprep.subr.mxu0 0.0
        %1584 = vmatpush1.msra.mxu0 0.0
        %1585 = vmatprep.subr.mxu0 0.0
        %1586 = vmatpush1.msra.mxu0 0.0
        %1587 = vmatprep.subr.mxu0 0.0
        %1588 = vmatpush1.msra.mxu0 0.0
        %1589 = vmatprep.subr.mxu0 0.0
        %1590 = vmatpush1.msra.mxu0 0.0
        %1591 = vmatprep.subr.mxu0 0.0
        %1592 = vmatpush1.msra.mxu0 0.0
        %1593 = vmatprep.subr.mxu0 0.0
        %1594 = vmatpush1.msra.mxu0 0.0
        %1595 = vmatprep.subr.mxu0 0.0
        %1596 = vmatpush1.msra.mxu0 0.0
        %1597 = vmatprep.subr.mxu0 0.0
        %1598 = vmatpush1.msra.mxu0 0.0
        %1599 = vmatprep.subr.mxu0 0.0
        %1600 = vmatpush1.msra.mxu0 0.0
        %1601 = vmatprep.mubr.f32.mxu0 0.0
        %v1602 = vand.u32 %v1232, 4294901760
        %1603 = vmatmul.mubr.f32.gmra.mrb[0].mxu0 %v1602
        %v1604 = vpop.f32.mrb[0].mxu0
        %v1605 = vadd.f32 %v1531, %v1604
        %v1606 = vpop.f32.mrb[0].mxu0
        %1607 = vdwg.mxu0
        %1608 = vmatprep.subr.mxu0 0.0
        %v1609 = vand.u32 %v1222, 4294901760
        %1610 = vmatpush1.msra.mxu0 %v1609
        %1611 = vmatprep.subr.mxu0 0.0
        %1612 = vmatpush1.msra.mxu0 0.0
        %1613 = vmatprep.subr.mxu0 0.0
        %1614 = vmatpush1.msra.mxu0 0.0
        %1615 = vmatprep.subr.mxu0 0.0
        %1616 = vmatpush1.msra.mxu0 0.0
        %1617 = vmatprep.subr.mxu0 0.0
        %1618 = vmatpush1.msra.mxu0 0.0
        %1619 = vmatprep.subr.mxu0 0.0
        %1620 = vmatpush1.msra.mxu0 0.0
        %1621 = vmatprep.subr.mxu0 0.0
        %1622 = vmatpush1.msra.mxu0 0.0
        %1623 = vmatprep.subr.mxu0 0.0
        %1624 = vmatpush1.msra.mxu0 0.0
        %1625 = vmatprep.subr.mxu0 0.0
        %1626 = vmatpush1.msra.mxu0 0.0
        %1627 = vmatprep.subr.mxu0 0.0
        %1628 = vmatpush1.msra.mxu0 0.0
        %1629 = vmatprep.subr.mxu0 0.0
        %1630 = vmatpush1.msra.mxu0 0.0
        %1631 = vmatprep.subr.mxu0 0.0
        %1632 = vmatpush1.msra.mxu0 0.0
        %1633 = vmatprep.subr.mxu0 0.0
        %1634 = vmatpush1.msra.mxu0 0.0
        %1635 = vmatprep.subr.mxu0 0.0
        %1636 = vmatpush1.msra.mxu0 0.0
        %1637 = vmatprep.subr.mxu0 0.0
        %1638 = vmatpush1.msra.mxu0 0.0
        %1639 = vmatprep.subr.mxu0 0.0
        %1640 = vmatpush1.msra.mxu0 0.0
        %1641 = vmatprep.subr.mxu0 0.0
        %1642 = vmatpush1.msra.mxu0 0.0
        %1643 = vmatprep.subr.mxu0 0.0
        %1644 = vmatpush1.msra.mxu0 0.0
        %1645 = vmatprep.subr.mxu0 0.0
        %1646 = vmatpush1.msra.mxu0 0.0
        %1647 = vmatprep.subr.mxu0 0.0
        %1648 = vmatpush1.msra.mxu0 0.0
        %1649 = vmatprep.subr.mxu0 0.0
        %1650 = vmatpush1.msra.mxu0 0.0
        %1651 = vmatprep.subr.mxu0 0.0
        %1652 = vmatpush1.msra.mxu0 0.0
        %1653 = vmatprep.subr.mxu0 0.0
        %1654 = vmatpush1.msra.mxu0 0.0
        %1655 = vmatprep.subr.mxu0 0.0
        %1656 = vmatpush1.msra.mxu0 0.0
        %1657 = vmatprep.subr.mxu0 0.0
        %1658 = vmatpush1.msra.mxu0 0.0
        %1659 = vmatprep.subr.mxu0 0.0
        %1660 = vmatpush1.msra.mxu0 0.0
        %1661 = vmatprep.subr.mxu0 0.0
        %1662 = vmatpush1.msra.mxu0 0.0
        %1663 = vmatprep.subr.mxu0 0.0
        %1664 = vmatpush1.msra.mxu0 0.0
        %1665 = vmatprep.subr.mxu0 0.0
        %1666 = vmatpush1.msra.mxu0 0.0
        %1667 = vmatprep.subr.mxu0 0.0
        %1668 = vmatpush1.msra.mxu0 0.0
        %1669 = vmatprep.subr.mxu0 0.0
        %1670 = vmatpush1.msra.mxu0 0.0
        %1671 = vmatprep.subr.mxu0 0.0
        %1672 = vmatpush1.msra.mxu0 0.0
        %1673 = vmatprep.mubr.f32.mxu0 0.0
        %v1674 = vand.u32 %v1232, 4294901760
        %1675 = vmatmul.mubr.f32.gmra.mrb[0].mxu0 %v1674
        %v1676 = vpop.f32.mrb[0].mxu0
        %v1677 = vadd.f32 %v1605, %v1676
        %v1678 = vpop.f32.mrb[0].mxu0
        %1679 = vdwg.mxu0
        %v1680 = vmax.f32 %v1677, 0.0
        %v1681 = vand.u32 2147483647, %v1677
        %v1682 = vsub.f32 0.0, %v1681
        %v1683 = vmul.f32 %v1682, 1.442695
        %v1684 = vpow.pop %v1683
        %v1685 = vadd.f32 %v1684, 1.0
        %v1686 = vlog2.pop %v1685
        %v1687 = vmul.f32 %v1686, 0.6931472
        %v1688 = vmul.f32 -0.5, %v1684
        %v1689 = vadd.f32 %v1688, 1.0
        %v1690 = vmul.f32 %v1689, %v1684
        %v1691 = vand.u32 2147483647, %v1684
        %vm1692 = vcmp.lt.f32.partialorder %v1691, 0.0004427343
        %v1693 = vsel %vm1692, %v1690, %v1687
        %v1694 = vadd.f32 %v1680, %v1693
        %1695 = vst.msk [vmem:[#allocation4] sm:$0xff] %vm550, %v1694
        %v1696 = vmul.f32 %v1694, %v597
        %1697 = vst.msk [vmem:[#allocation5] sm:$0xff] %vm550, %v1696
        %1698 = vst.msk [vmem:[#allocation6] sm:$0xff] %vm506, %v1217
        %v1699 = vld [vmem:[%s9] sm:$0xff]
        %v1700 = vld [vmem:[%s9 + $0x8] sm:$0xff]
        %v1701 = vlaneseq
        %v1702 = vshrl.u32 %v1701, 7
        %v1703 = vlaneseq
        %v1704 = vand.u32 %v1703, 127
        %vm1705 = vcmp.eq.s32.totalorder %v1702, %v1704
        %v1706 = vsel %vm1705, 1, 0
        %v1707 = vcvt.s32.f32 %v1706
        %v1708 = vld [vmem:[#allocation3] sm:$0xff]
        %v1709 = vld [vmem:[#allocation3 + $0x8] sm:$0xff]
        %v1710 = vld [vmem:[#allocation4] sm:$0xff]
        %v1711 = vld [vmem:[#allocation5] sm:$0xff]
        %v1712 = vld [vmem:[#allocation6] sm:$0xff]
        %1713 = vxpose.xlu0.b32.start [1/16] %v1712, 128
        %1714 = vxpose.xlu0.b32.cont [2/16] 0.0, 128
        %1715 = vxpose.xlu0.b32.cont [3/16] 0.0, 128
        %1716 = vxpose.xlu0.b32.cont [4/16] 0.0, 128
        %1717 = vxpose.xlu0.b32.cont [5/16] 0.0, 128
        %1718 = vxpose.xlu0.b32.cont [6/16] 0.0, 128
        %1719 = vxpose.xlu0.b32.cont [7/16] 0.0, 128
        %1720 = vxpose.xlu0.b32.cont [8/16] 0.0, 128
        %1721 = vxpose.xlu0.b32.cont [9/16] 0.0, 128
        %1722 = vxpose.xlu0.b32.cont [10/16] 0.0, 128
        %1723 = vxpose.xlu0.b32.cont [11/16] 0.0, 128
        %1724 = vxpose.xlu0.b32.cont [12/16] 0.0, 128
        %1725 = vxpose.xlu0.b32.cont [13/16] 0.0, 128
        %1726 = vxpose.xlu0.b32.cont [14/16] 0.0, 128
        %1727 = vxpose.xlu0.b32.cont [15/16] 0.0, 128
        %1728 = vxpose.xlu0.b32.end [16/16] 0.0, 128
        %v1729 = vpop.trf.xlu0
        %v1730 = vpop.trf.xlu0
        %v1731 = vpop.trf.xlu0
        %v1732 = vpop.trf.xlu0
        %v1733 = vpop.trf.xlu0
        %v1734 = vpop.trf.xlu0
        %v1735 = vpop.trf.xlu0
        %v1736 = vpop.trf.xlu0
        %v1737 = vpop.trf.xlu0
        %v1738 = vpop.trf.xlu0
        %v1739 = vpop.trf.xlu0
        %v1740 = vpop.trf.xlu0
        %v1741 = vpop.trf.xlu0
        %v1742 = vpop.trf.xlu0
        %v1743 = vpop.trf.xlu0
        %v1744 = vpop.trf.xlu0
        %v1746 = vsel %vm1230, %v1729, 0
        %v1749 = vsel %vm1230, %v1730, 0
        %v1752 = vsel %vm1230, %v1731, 0
        %v1755 = vsel %vm1230, %v1732, 0
        %1757 = vmatprep.subr.mxu0 0.0
        %v1758 = vand.u32 %v1707, 4294901760
        %1759 = vmatpush1.msra.mxu0 %v1758
        %1760 = vmatprep.subr.mxu0 0.0
        %1761 = vmatpush1.msra.mxu0 0.0
        %1762 = vmatprep.subr.mxu0 0.0
        %1763 = vmatpush1.msra.mxu0 0.0
        %1764 = vmatprep.subr.mxu0 0.0
        %1765 = vmatpush1.msra.mxu0 0.0
        %1766 = vmatprep.subr.mxu0 0.0
        %1767 = vmatpush1.msra.mxu0 0.0
        %1768 = vmatprep.subr.mxu0 0.0
        %1769 = vmatpush1.msra.mxu0 0.0
        %1770 = vmatprep.subr.mxu0 0.0
        %1771 = vmatpush1.msra.mxu0 0.0
        %1772 = vmatprep.subr.mxu0 0.0
        %1773 = vmatpush1.msra.mxu0 0.0
        %1774 = vmatprep.subr.mxu0 0.0
        %1775 = vmatpush1.msra.mxu0 0.0
        %1776 = vmatprep.subr.mxu0 0.0
        %1777 = vmatpush1.msra.mxu0 0.0
        %1778 = vmatprep.subr.mxu0 0.0
        %1779 = vmatpush1.msra.mxu0 0.0
        %1780 = vmatprep.subr.mxu0 0.0
        %1781 = vmatpush1.msra.mxu0 0.0
        %1782 = vmatprep.subr.mxu0 0.0
        %1783 = vmatpush1.msra.mxu0 0.0
        %1784 = vmatprep.subr.mxu0 0.0
        %1785 = vmatpush1.msra.mxu0 0.0
        %1786 = vmatprep.subr.mxu0 0.0
        %1787 = vmatpush1.msra.mxu0 0.0
        %1788 = vmatprep.subr.mxu0 0.0
        %1789 = vmatpush1.msra.mxu0 0.0
        %1790 = vmatprep.subr.mxu0 0.0
        %1791 = vmatpush1.msra.mxu0 0.0
        %1792 = vmatprep.subr.mxu0 0.0
        %1793 = vmatpush1.msra.mxu0 0.0
        %1794 = vmatprep.subr.mxu0 0.0
        %1795 = vmatpush1.msra.mxu0 0.0
        %1796 = vmatprep.subr.mxu0 0.0
        %1797 = vmatpush1.msra.mxu0 0.0
        %1798 = vmatprep.subr.mxu0 0.0
        %1799 = vmatpush1.msra.mxu0 0.0
        %1800 = vmatprep.subr.mxu0 0.0
        %1801 = vmatpush1.msra.mxu0 0.0
        %1802 = vmatprep.subr.mxu0 0.0
        %1803 = vmatpush1.msra.mxu0 0.0
        %1804 = vmatprep.subr.mxu0 0.0
        %1805 = vmatpush1.msra.mxu0 0.0
        %1806 = vmatprep.subr.mxu0 0.0
        %1807 = vmatpush1.msra.mxu0 0.0
        %1808 = vmatprep.subr.mxu0 0.0
        %1809 = vmatpush1.msra.mxu0 0.0
        %1810 = vmatprep.subr.mxu0 0.0
        %1811 = vmatpush1.msra.mxu0 0.0
        %1812 = vmatprep.subr.mxu0 0.0
        %1813 = vmatpush1.msra.mxu0 0.0
        %1814 = vmatprep.subr.mxu0 0.0
        %1815 = vmatpush1.msra.mxu0 0.0
        %1816 = vmatprep.subr.mxu0 0.0
        %1817 = vmatpush1.msra.mxu0 0.0
        %1818 = vmatprep.subr.mxu0 0.0
        %1819 = vmatpush1.msra.mxu0 0.0
        %1820 = vmatprep.subr.mxu0 0.0
        %1821 = vmatpush1.msra.mxu0 0.0
        %1822 = vmatprep.mubr.f32.mxu0 0.0
        %v1823 = vand.u32 %v1746, 4294901760
        %v1824 = vsub.f32 %v1746, %v1823
        %v1825 = vand.u32 %v1824, 4294901760
        %v1826 = vsub.f32 %v1824, %v1825
        %v1827 = vand.u32 %v1826, 4294901760
        %1828 = vmatmul.mubr.f32.gmra.mrb[0].mxu0 %v1827
        %v1829 = vpop.f32.mrb[0].mxu0
        %v1830 = vadd.f32 0.0, %v1829
        %v1831 = vpop.f32.mrb[0].mxu0
        %1832 = vmatprep.mubr.f32.mxu0 0.0
        %v1833 = vand.u32 %v1749, 4294901760
        %v1834 = vsub.f32 %v1749, %v1833
        %v1835 = vand.u32 %v1834, 4294901760
        %v1836 = vsub.f32 %v1834, %v1835
        %v1837 = vand.u32 %v1836, 4294901760
        %1838 = vmatmul.mubr.f32.gmra.mrb[0].mxu0 %v1837
        %v1839 = vpop.f32.mrb[0].mxu0
        %v1840 = vadd.f32 0.0, %v1839
        %v1841 = vpop.f32.mrb[0].mxu0
        %1842 = vmatprep.mubr.f32.mxu0 0.0
        %v1843 = vand.u32 %v1752, 4294901760
        %v1844 = vsub.f32 %v1752, %v1843
        %v1845 = vand.u32 %v1844, 4294901760
        %v1846 = vsub.f32 %v1844, %v1845
        %v1847 = vand.u32 %v1846, 4294901760
        %1848 = vmatmul.mubr.f32.gmra.mrb[0].mxu0 %v1847
        %v1849 = vpop.f32.mrb[0].mxu0
        %v1850 = vadd.f32 0.0, %v1849
        %v1851 = vpop.f32.mrb[0].mxu0
        %1852 = vmatprep.mubr.f32.mxu0 0.0
        %v1853 = vand.u32 %v1755, 4294901760
        %v1854 = vsub.f32 %v1755, %v1853
        %v1855 = vand.u32 %v1854, 4294901760
        %v1856 = vsub.f32 %v1854, %v1855
        %v1857 = vand.u32 %v1856, 4294901760
        %1858 = vmatmul.mubr.f32.gmra.mrb[0].mxu0 %v1857
        %v1859 = vpop.f32.mrb[0].mxu0
        %v1860 = vadd.f32 0.0, %v1859
        %v1861 = vpop.f32.mrb[0].mxu0
        %1862 = vdwg.mxu0
        %1863 = vmatprep.subr.mxu0 0.0
        %v1864 = vand.u32 %v1707, 4294901760
        %v1865 = vsub.f32 %v1707, %v1864
        %v1866 = vand.u32 %v1865, 4294901760
        %v1867 = vsub.f32 %v1865, %v1866
        %v1868 = vand.u32 %v1867, 4294901760
        %1869 = vmatpush1.msra.mxu0 %v1868
        %1870 = vmatprep.subr.mxu0 0.0
        %1871 = vmatpush1.msra.mxu0 0.0
        %1872 = vmatprep.subr.mxu0 0.0
        %1873 = vmatpush1.msra.mxu0 0.0
        %1874 = vmatprep.subr.mxu0 0.0
        %1875 = vmatpush1.msra.mxu0 0.0
        %1876 = vmatprep.subr.mxu0 0.0
        %1877 = vmatpush1.msra.mxu0 0.0
        %1878 = vmatprep.subr.mxu0 0.0
        %1879 = vmatpush1.msra.mxu0 0.0
        %1880 = vmatprep.subr.mxu0 0.0
        %1881 = vmatpush1.msra.mxu0 0.0
        %1882 = vmatprep.subr.mxu0 0.0
        %1883 = vmatpush1.msra.mxu0 0.0
        %1884 = vmatprep.subr.mxu0 0.0
        %1885 = vmatpush1.msra.mxu0 0.0
        %1886 = vmatprep.subr.mxu0 0.0
        %1887 = vmatpush1.msra.mxu0 0.0
        %1888 = vmatprep.subr.mxu0 0.0
        %1889 = vmatpush1.msra.mxu0 0.0
        %1890 = vmatprep.subr.mxu0 0.0
        %1891 = vmatpush1.msra.mxu0 0.0
        %1892 = vmatprep.subr.mxu0 0.0
        %1893 = vmatpush1.msra.mxu0 0.0
        %1894 = vmatprep.subr.mxu0 0.0
        %1895 = vmatpush1.msra.mxu0 0.0
        %1896 = vmatprep.subr.mxu0 0.0
        %1897 = vmatpush1.msra.mxu0 0.0
        %1898 = vmatprep.subr.mxu0 0.0
        %1899 = vmatpush1.msra.mxu0 0.0
        %1900 = vmatprep.subr.mxu0 0.0
        %1901 = vmatpush1.msra.mxu0 0.0
        %1902 = vmatprep.subr.mxu0 0.0
        %1903 = vmatpush1.msra.mxu0 0.0
        %1904 = vmatprep.subr.mxu0 0.0
        %1905 = vmatpush1.msra.mxu0 0.0
        %1906 = vmatprep.subr.mxu0 0.0
        %1907 = vmatpush1.msra.mxu0 0.0
        %1908 = vmatprep.subr.mxu0 0.0
        %1909 = vmatpush1.msra.mxu0 0.0
        %1910 = vmatprep.subr.mxu0 0.0
        %1911 = vmatpush1.msra.mxu0 0.0
        %1912 = vmatprep.subr.mxu0 0.0
        %1913 = vmatpush1.msra.mxu0 0.0
        %1914 = vmatprep.subr.mxu0 0.0
        %1915 = vmatpush1.msra.mxu0 0.0
        %1916 = vmatprep.subr.mxu0 0.0
        %1917 = vmatpush1.msra.mxu0 0.0
        %1918 = vmatprep.subr.mxu0 0.0
        %1919 = vmatpush1.msra.mxu0 0.0
        %1920 = vmatprep.subr.mxu0 0.0
        %1921 = vmatpush1.msra.mxu0 0.0
        %1922 = vmatprep.subr.mxu0 0.0
        %1923 = vmatpush1.msra.mxu0 0.0
        %1924 = vmatprep.subr.mxu0 0.0
        %1925 = vmatpush1.msra.mxu0 0.0
        %1926 = vmatprep.subr.mxu0 0.0
        %1927 = vmatpush1.msra.mxu0 0.0
        %1928 = vmatprep.subr.mxu0 0.0
        %1929 = vmatpush1.msra.mxu0 0.0
        %1930 = vmatprep.subr.mxu0 0.0
        %1931 = vmatpush1.msra.mxu0 0.0
        %1932 = vmatprep.mubr.f32.mxu0 0.0
        %v1933 = vand.u32 %v1746, 4294901760
        %1934 = vmatmul.mubr.f32.gmra.mrb[0].mxu0 %v1933
        %v1935 = vpop.f32.mrb[0].mxu0
        %v1936 = vadd.f32 %v1830, %v1935
        %v1937 = vpop.f32.mrb[0].mxu0
        %1938 = vmatprep.mubr.f32.mxu0 0.0
        %v1939 = vand.u32 %v1749, 4294901760
        %1940 = vmatmul.mubr.f32.gmra.mrb[0].mxu0 %v1939
        %v1941 = vpop.f32.mrb[0].mxu0
        %v1942 = vadd.f32 %v1840, %v1941
        %v1943 = vpop.f32.mrb[0].mxu0
        %1944 = vmatprep.mubr.f32.mxu0 0.0
        %v1945 = vand.u32 %v1752, 4294901760
        %1946 = vmatmul.mubr.f32.gmra.mrb[0].mxu0 %v1945
        %v1947 = vpop.f32.mrb[0].mxu0
        %v1948 = vadd.f32 %v1850, %v1947
        %v1949 = vpop.f32.mrb[0].mxu0
        %1950 = vmatprep.mubr.f32.mxu0 0.0
        %v1951 = vand.u32 %v1755, 4294901760
        %1952 = vmatmul.mubr.f32.gmra.mrb[0].mxu0 %v1951
        %v1953 = vpop.f32.mrb[0].mxu0
        %v1954 = vadd.f32 %v1860, %v1953
        %v1955 = vpop.f32.mrb[0].mxu0
        %1956 = vdwg.mxu0
        %1957 = vmatprep.subr.mxu0 0.0
        %v1958 = vand.u32 %v1707, 4294901760
        %v1959 = vsub.f32 %v1707, %v1958
        %1960 = vmatpush1.msra.mxu0 %v1959
        %1961 = vmatprep.subr.mxu0 0.0
        %1962 = vmatpush1.msra.mxu0 0.0
        %1963 = vmatprep.subr.mxu0 0.0
        %1964 = vmatpush1.msra.mxu0 0.0
        %1965 = vmatprep.subr.mxu0 0.0
        %1966 = vmatpush1.msra.mxu0 0.0
        %1967 = vmatprep.subr.mxu0 0.0
        %1968 = vmatpush1.msra.mxu0 0.0
        %1969 = vmatprep.subr.mxu0 0.0
        %1970 = vmatpush1.msra.mxu0 0.0
        %1971 = vmatprep.subr.mxu0 0.0
        %1972 = vmatpush1.msra.mxu0 0.0
        %1973 = vmatprep.subr.mxu0 0.0
        %1974 = vmatpush1.msra.mxu0 0.0
        %1975 = vmatprep.subr.mxu0 0.0
        %1976 = vmatpush1.msra.mxu0 0.0
        %1977 = vmatprep.subr.mxu0 0.0
        %1978 = vmatpush1.msra.mxu0 0.0
        %1979 = vmatprep.subr.mxu0 0.0
        %1980 = vmatpush1.msra.mxu0 0.0
        %1981 = vmatprep.subr.mxu0 0.0
        %1982 = vmatpush1.msra.mxu0 0.0
        %1983 = vmatprep.subr.mxu0 0.0
        %1984 = vmatpush1.msra.mxu0 0.0
        %1985 = vmatprep.subr.mxu0 0.0
        %1986 = vmatpush1.msra.mxu0 0.0
        %1987 = vmatprep.subr.mxu0 0.0
        %1988 = vmatpush1.msra.mxu0 0.0
        %1989 = vmatprep.subr.mxu0 0.0
        %1990 = vmatpush1.msra.mxu0 0.0
        %1991 = vmatprep.subr.mxu0 0.0
        %1992 = vmatpush1.msra.mxu0 0.0
        %1993 = vmatprep.subr.mxu0 0.0
        %1994 = vmatpush1.msra.mxu0 0.0
        %1995 = vmatprep.subr.mxu0 0.0
        %1996 = vmatpush1.msra.mxu0 0.0
        %1997 = vmatprep.subr.mxu0 0.0
        %1998 = vmatpush1.msra.mxu0 0.0
        %1999 = vmatprep.subr.mxu0 0.0
        %2000 = vmatpush1.msra.mxu0 0.0
        %2001 = vmatprep.subr.mxu0 0.0
        %2002 = vmatpush1.msra.mxu0 0.0
        %2003 = vmatprep.subr.mxu0 0.0
        %2004 = vmatpush1.msra.mxu0 0.0
        %2005 = vmatprep.subr.mxu0 0.0
        %2006 = vmatpush1.msra.mxu0 0.0
        %2007 = vmatprep.subr.mxu0 0.0
        %2008 = vmatpush1.msra.mxu0 0.0
        %2009 = vmatprep.subr.mxu0 0.0
        %2010 = vmatpush1.msra.mxu0 0.0
        %2011 = vmatprep.subr.mxu0 0.0
        %2012 = vmatpush1.msra.mxu0 0.0
        %2013 = vmatprep.subr.mxu0 0.0
        %2014 = vmatpush1.msra.mxu0 0.0
        %2015 = vmatprep.subr.mxu0 0.0
        %2016 = vmatpush1.msra.mxu0 0.0
        %2017 = vmatprep.subr.mxu0 0.0
        %2018 = vmatpush1.msra.mxu0 0.0
        %2019 = vmatprep.subr.mxu0 0.0
        %2020 = vmatpush1.msra.mxu0 0.0
        %2021 = vmatprep.subr.mxu0 0.0
        %2022 = vmatpush1.msra.mxu0 0.0
        %2023 = vmatprep.mubr.f32.mxu0 0.0
        %v2024 = vand.u32 %v1746, 4294901760
        %v2025 = vsub.f32 %v1746, %v2024
        %2026 = vmatmul.mubr.f32.gmra.mrb[0].mxu0 %v2025
        %v2027 = vpop.f32.mrb[0].mxu0
        %v2028 = vadd.f32 %v1936, %v2027
        %v2029 = vpop.f32.mrb[0].mxu0
        %2030 = vmatprep.mubr.f32.mxu0 0.0
        %v2031 = vand.u32 %v1749, 4294901760
        %v2032 = vsub.f32 %v1749, %v2031
        %2033 = vmatmul.mubr.f32.gmra.mrb[0].mxu0 %v2032
        %v2034 = vpop.f32.mrb[0].mxu0
        %v2035 = vadd.f32 %v1942, %v2034
        %v2036 = vpop.f32.mrb[0].mxu0
        %2037 = vmatprep.mubr.f32.mxu0 0.0
        %v2038 = vand.u32 %v1752, 4294901760
        %v2039 = vsub.f32 %v1752, %v2038
        %2040 = vmatmul.mubr.f32.gmra.mrb[0].mxu0 %v2039
        %v2041 = vpop.f32.mrb[0].mxu0
        %v2042 = vadd.f32 %v1948, %v2041
        %v2043 = vpop.f32.mrb[0].mxu0
        %2044 = vmatprep.mubr.f32.mxu0 0.0
        %v2045 = vand.u32 %v1755, 4294901760
        %v2046 = vsub.f32 %v1755, %v2045
        %2047 = vmatmul.mubr.f32.gmra.mrb[0].mxu0 %v2046
        %v2048 = vpop.f32.mrb[0].mxu0
        %v2049 = vadd.f32 %v1954, %v2048
        %v2050 = vpop.f32.mrb[0].mxu0
        %2051 = vdwg.mxu0
        %2052 = vmatprep.subr.mxu0 0.0
        %v2053 = vand.u32 %v1707, 4294901760
        %2054 = vmatpush1.msra.mxu0 %v2053
        %2055 = vmatprep.subr.mxu0 0.0
        %2056 = vmatpush1.msra.mxu0 0.0
        %2057 = vmatprep.subr.mxu0 0.0
        %2058 = vmatpush1.msra.mxu0 0.0
        %2059 = vmatprep.subr.mxu0 0.0
        %2060 = vmatpush1.msra.mxu0 0.0
        %2061 = vmatprep.subr.mxu0 0.0
        %2062 = vmatpush1.msra.mxu0 0.0
        %2063 = vmatprep.subr.mxu0 0.0
        %2064 = vmatpush1.msra.mxu0 0.0
        %2065 = vmatprep.subr.mxu0 0.0
        %2066 = vmatpush1.msra.mxu0 0.0
        %2067 = vmatprep.subr.mxu0 0.0
        %2068 = vmatpush1.msra.mxu0 0.0
        %2069 = vmatprep.subr.mxu0 0.0
        %2070 = vmatpush1.msra.mxu0 0.0
        %2071 = vmatprep.subr.mxu0 0.0
        %2072 = vmatpush1.msra.mxu0 0.0
        %2073 = vmatprep.subr.mxu0 0.0
        %2074 = vmatpush1.msra.mxu0 0.0
        %2075 = vmatprep.subr.mxu0 0.0
        %2076 = vmatpush1.msra.mxu0 0.0
        %2077 = vmatprep.subr.mxu0 0.0
        %2078 = vmatpush1.msra.mxu0 0.0
        %2079 = vmatprep.subr.mxu0 0.0
        %2080 = vmatpush1.msra.mxu0 0.0
        %2081 = vmatprep.subr.mxu0 0.0
        %2082 = vmatpush1.msra.mxu0 0.0
        %2083 = vmatprep.subr.mxu0 0.0
        %2084 = vmatpush1.msra.mxu0 0.0
        %2085 = vmatprep.subr.mxu0 0.0
        %2086 = vmatpush1.msra.mxu0 0.0
        %2087 = vmatprep.subr.mxu0 0.0
        %2088 = vmatpush1.msra.mxu0 0.0
        %2089 = vmatprep.subr.mxu0 0.0
        %2090 = vmatpush1.msra.mxu0 0.0
        %2091 = vmatprep.subr.mxu0 0.0
        %2092 = vmatpush1.msra.mxu0 0.0
        %2093 = vmatprep.subr.mxu0 0.0
        %2094 = vmatpush1.msra.mxu0 0.0
        %2095 = vmatprep.subr.mxu0 0.0
        %2096 = vmatpush1.msra.mxu0 0.0
        %2097 = vmatprep.subr.mxu0 0.0
        %2098 = vmatpush1.msra.mxu0 0.0
        %2099 = vmatprep.subr.mxu0 0.0
        %2100 = vmatpush1.msra.mxu0 0.0
        %2101 = vmatprep.subr.mxu0 0.0
        %2102 = vmatpush1.msra.mxu0 0.0
        %2103 = vmatprep.subr.mxu0 0.0
        %2104 = vmatpush1.msra.mxu0 0.0
        %2105 = vmatprep.subr.mxu0 0.0
        %2106 = vmatpush1.msra.mxu0 0.0
        %2107 = vmatprep.subr.mxu0 0.0
        %2108 = vmatpush1.msra.mxu0 0.0
        %2109 = vmatprep.subr.mxu0 0.0
        %2110 = vmatpush1.msra.mxu0 0.0
        %2111 = vmatprep.subr.mxu0 0.0
        %2112 = vmatpush1.msra.mxu0 0.0
        %2113 = vmatprep.subr.mxu0 0.0
        %2114 = vmatpush1.msra.mxu0 0.0
        %2115 = vmatprep.subr.mxu0 0.0
        %2116 = vmatpush1.msra.mxu0 0.0
        %2117 = vmatprep.mubr.f32.mxu0 0.0
        %v2118 = vand.u32 %v1746, 4294901760
        %v2119 = vsub.f32 %v1746, %v2118
        %v2120 = vand.u32 %v2119, 4294901760
        %2121 = vmatmul.mubr.f32.gmra.mrb[0].mxu0 %v2120
        %v2122 = vpop.f32.mrb[0].mxu0
        %v2123 = vadd.f32 %v2028, %v2122
        %v2124 = vpop.f32.mrb[0].mxu0
        %2125 = vmatprep.mubr.f32.mxu0 0.0
        %v2126 = vand.u32 %v1749, 4294901760
        %v2127 = vsub.f32 %v1749, %v2126
        %v2128 = vand.u32 %v2127, 4294901760
        %2129 = vmatmul.mubr.f32.gmra.mrb[0].mxu0 %v2128
        %v2130 = vpop.f32.mrb[0].mxu0
        %v2131 = vadd.f32 %v2035, %v2130
        %v2132 = vpop.f32.mrb[0].mxu0
        %2133 = vmatprep.mubr.f32.mxu0 0.0
        %v2134 = vand.u32 %v1752, 4294901760
        %v2135 = vsub.f32 %v1752, %v2134
        %v2136 = vand.u32 %v2135, 4294901760
        %2137 = vmatmul.mubr.f32.gmra.mrb[0].mxu0 %v2136
        %v2138 = vpop.f32.mrb[0].mxu0
        %v2139 = vadd.f32 %v2042, %v2138
        %v2140 = vpop.f32.mrb[0].mxu0
        %2141 = vmatprep.mubr.f32.mxu0 0.0
        %v2142 = vand.u32 %v1755, 4294901760
        %v2143 = vsub.f32 %v1755, %v2142
        %v2144 = vand.u32 %v2143, 4294901760
        %2145 = vmatmul.mubr.f32.gmra.mrb[0].mxu0 %v2144
        %v2146 = vpop.f32.mrb[0].mxu0
        %v2147 = vadd.f32 %v2049, %v2146
        %v2148 = vpop.f32.mrb[0].mxu0
        %2149 = vdwg.mxu0
        %2150 = vmatprep.subr.mxu0 0.0
        %v2151 = vand.u32 %v1707, 4294901760
        %v2152 = vsub.f32 %v1707, %v2151
        %v2153 = vand.u32 %v2152, 4294901760
        %2154 = vmatpush1.msra.mxu0 %v2153
        %2155 = vmatprep.subr.mxu0 0.0
        %2156 = vmatpush1.msra.mxu0 0.0
        %2157 = vmatprep.subr.mxu0 0.0
        %2158 = vmatpush1.msra.mxu0 0.0
        %2159 = vmatprep.subr.mxu0 0.0
        %2160 = vmatpush1.msra.mxu0 0.0
        %2161 = vmatprep.subr.mxu0 0.0
        %2162 = vmatpush1.msra.mxu0 0.0
        %2163 = vmatprep.subr.mxu0 0.0
        %2164 = vmatpush1.msra.mxu0 0.0
        %2165 = vmatprep.subr.mxu0 0.0
        %2166 = vmatpush1.msra.mxu0 0.0
        %2167 = vmatprep.subr.mxu0 0.0
        %2168 = vmatpush1.msra.mxu0 0.0
        %2169 = vmatprep.subr.mxu0 0.0
        %2170 = vmatpush1.msra.mxu0 0.0
        %2171 = vmatprep.subr.mxu0 0.0
        %2172 = vmatpush1.msra.mxu0 0.0
        %2173 = vmatprep.subr.mxu0 0.0
        %2174 = vmatpush1.msra.mxu0 0.0
        %2175 = vmatprep.subr.mxu0 0.0
        %2176 = vmatpush1.msra.mxu0 0.0
        %2177 = vmatprep.subr.mxu0 0.0
        %2178 = vmatpush1.msra.mxu0 0.0
        %2179 = vmatprep.subr.mxu0 0.0
        %2180 = vmatpush1.msra.mxu0 0.0
        %2181 = vmatprep.subr.mxu0 0.0
        %2182 = vmatpush1.msra.mxu0 0.0
        %2183 = vmatprep.subr.mxu0 0.0
        %2184 = vmatpush1.msra.mxu0 0.0
        %2185 = vmatprep.subr.mxu0 0.0
        %2186 = vmatpush1.msra.mxu0 0.0
        %2187 = vmatprep.subr.mxu0 0.0
        %2188 = vmatpush1.msra.mxu0 0.0
        %2189 = vmatprep.subr.mxu0 0.0
        %2190 = vmatpush1.msra.mxu0 0.0
        %2191 = vmatprep.subr.mxu0 0.0
        %2192 = vmatpush1.msra.mxu0 0.0
        %2193 = vmatprep.subr.mxu0 0.0
        %2194 = vmatpush1.msra.mxu0 0.0
        %2195 = vmatprep.subr.mxu0 0.0
        %2196 = vmatpush1.msra.mxu0 0.0
        %2197 = vmatprep.subr.mxu0 0.0
        %2198 = vmatpush1.msra.mxu0 0.0
        %2199 = vmatprep.subr.mxu0 0.0
        %2200 = vmatpush1.msra.mxu0 0.0
        %2201 = vmatprep.subr.mxu0 0.0
        %2202 = vmatpush1.msra.mxu0 0.0
        %2203 = vmatprep.subr.mxu0 0.0
        %2204 = vmatpush1.msra.mxu0 0.0
        %2205 = vmatprep.subr.mxu0 0.0
        %2206 = vmatpush1.msra.mxu0 0.0
        %2207 = vmatprep.subr.mxu0 0.0
        %2208 = vmatpush1.msra.mxu0 0.0
        %2209 = vmatprep.subr.mxu0 0.0
        %2210 = vmatpush1.msra.mxu0 0.0
        %2211 = vmatprep.subr.mxu0 0.0
        %2212 = vmatpush1.msra.mxu0 0.0
        %2213 = vmatprep.subr.mxu0 0.0
        %2214 = vmatpush1.msra.mxu0 0.0
        %2215 = vmatprep.subr.mxu0 0.0
        %2216 = vmatpush1.msra.mxu0 0.0
        %2217 = vmatprep.mubr.f32.mxu0 0.0
        %v2218 = vand.u32 %v1746, 4294901760
        %2219 = vmatmul.mubr.f32.gmra.mrb[0].mxu0 %v2218
        %v2220 = vpop.f32.mrb[0].mxu0
        %v2221 = vadd.f32 %v2123, %v2220
        %v2222 = vpop.f32.mrb[0].mxu0
        %2223 = vmatprep.mubr.f32.mxu0 0.0
        %v2224 = vand.u32 %v1749, 4294901760
        %2225 = vmatmul.mubr.f32.gmra.mrb[0].mxu0 %v2224
        %v2226 = vpop.f32.mrb[0].mxu0
        %v2227 = vadd.f32 %v2131, %v2226
        %v2228 = vpop.f32.mrb[0].mxu0
        %2229 = vmatprep.mubr.f32.mxu0 0.0
        %v2230 = vand.u32 %v1752, 4294901760
        %2231 = vmatmul.mubr.f32.gmra.mrb[0].mxu0 %v2230
        %v2232 = vpop.f32.mrb[0].mxu0
        %v2233 = vadd.f32 %v2139, %v2232
        %v2234 = vpop.f32.mrb[0].mxu0
        %2235 = vmatprep.mubr.f32.mxu0 0.0
        %v2236 = vand.u32 %v1755, 4294901760
        %2237 = vmatmul.mubr.f32.gmra.mrb[0].mxu0 %v2236
        %v2238 = vpop.f32.mrb[0].mxu0
        %v2239 = vadd.f32 %v2147, %v2238
        %v2240 = vpop.f32.mrb[0].mxu0
        %2241 = vdwg.mxu0
        %2242 = vmatprep.subr.mxu0 0.0
        %v2243 = vand.u32 %v1707, 4294901760
        %2244 = vmatpush1.msra.mxu0 %v2243
        %2245 = vmatprep.subr.mxu0 0.0
        %2246 = vmatpush1.msra.mxu0 0.0
        %2247 = vmatprep.subr.mxu0 0.0
        %2248 = vmatpush1.msra.mxu0 0.0
        %2249 = vmatprep.subr.mxu0 0.0
        %2250 = vmatpush1.msra.mxu0 0.0
        %2251 = vmatprep.subr.mxu0 0.0
        %2252 = vmatpush1.msra.mxu0 0.0
        %2253 = vmatprep.subr.mxu0 0.0
        %2254 = vmatpush1.msra.mxu0 0.0
        %2255 = vmatprep.subr.mxu0 0.0
        %2256 = vmatpush1.msra.mxu0 0.0
        %2257 = vmatprep.subr.mxu0 0.0
        %2258 = vmatpush1.msra.mxu0 0.0
        %2259 = vmatprep.subr.mxu0 0.0
        %2260 = vmatpush1.msra.mxu0 0.0
        %2261 = vmatprep.subr.mxu0 0.0
        %2262 = vmatpush1.msra.mxu0 0.0
        %2263 = vmatprep.subr.mxu0 0.0
        %2264 = vmatpush1.msra.mxu0 0.0
        %2265 = vmatprep.subr.mxu0 0.0
        %2266 = vmatpush1.msra.mxu0 0.0
        %2267 = vmatprep.subr.mxu0 0.0
        %2268 = vmatpush1.msra.mxu0 0.0
        %2269 = vmatprep.subr.mxu0 0.0
        %2270 = vmatpush1.msra.mxu0 0.0
        %2271 = vmatprep.subr.mxu0 0.0
        %2272 = vmatpush1.msra.mxu0 0.0
        %2273 = vmatprep.subr.mxu0 0.0
        %2274 = vmatpush1.msra.mxu0 0.0
        %2275 = vmatprep.subr.mxu0 0.0
        %2276 = vmatpush1.msra.mxu0 0.0
        %2277 = vmatprep.subr.mxu0 0.0
        %2278 = vmatpush1.msra.mxu0 0.0
        %2279 = vmatprep.subr.mxu0 0.0
        %2280 = vmatpush1.msra.mxu0 0.0
        %2281 = vmatprep.subr.mxu0 0.0
        %2282 = vmatpush1.msra.mxu0 0.0
        %2283 = vmatprep.subr.mxu0 0.0
        %2284 = vmatpush1.msra.mxu0 0.0
        %2285 = vmatprep.subr.mxu0 0.0
        %2286 = vmatpush1.msra.mxu0 0.0
        %2287 = vmatprep.subr.mxu0 0.0
        %2288 = vmatpush1.msra.mxu0 0.0
        %2289 = vmatprep.subr.mxu0 0.0
        %2290 = vmatpush1.msra.mxu0 0.0
        %2291 = vmatprep.subr.mxu0 0.0
        %2292 = vmatpush1.msra.mxu0 0.0
        %2293 = vmatprep.subr.mxu0 0.0
        %2294 = vmatpush1.msra.mxu0 0.0
        %2295 = vmatprep.subr.mxu0 0.0
        %2296 = vmatpush1.msra.mxu0 0.0
        %2297 = vmatprep.subr.mxu0 0.0
        %2298 = vmatpush1.msra.mxu0 0.0
        %2299 = vmatprep.subr.mxu0 0.0
        %2300 = vmatpush1.msra.mxu0 0.0
        %2301 = vmatprep.subr.mxu0 0.0
        %2302 = vmatpush1.msra.mxu0 0.0
        %2303 = vmatprep.subr.mxu0 0.0
        %2304 = vmatpush1.msra.mxu0 0.0
        %2305 = vmatprep.subr.mxu0 0.0
        %2306 = vmatpush1.msra.mxu0 0.0
        %2307 = vmatprep.mubr.f32.mxu0 0.0
        %v2308 = vand.u32 %v1746, 4294901760
        %2309 = vmatmul.mubr.f32.gmra.mrb[0].mxu0 %v2308
        %v2310 = vpop.f32.mrb[0].mxu0
        %v2311 = vadd.f32 %v2221, %v2310
        %v2312 = vpop.f32.mrb[0].mxu0
        %2313 = vmatprep.mubr.f32.mxu0 0.0
        %v2314 = vand.u32 %v1749, 4294901760
        %2315 = vmatmul.mubr.f32.gmra.mrb[0].mxu0 %v2314
        %v2316 = vpop.f32.mrb[0].mxu0
        %v2317 = vadd.f32 %v2227, %v2316
        %v2318 = vpop.f32.mrb[0].mxu0
        %2319 = vmatprep.mubr.f32.mxu0 0.0
        %v2320 = vand.u32 %v1752, 4294901760
        %2321 = vmatmul.mubr.f32.gmra.mrb[0].mxu0 %v2320
        %v2322 = vpop.f32.mrb[0].mxu0
        %v2323 = vadd.f32 %v2233, %v2322
        %v2324 = vpop.f32.mrb[0].mxu0
        %2325 = vmatprep.mubr.f32.mxu0 0.0
        %v2326 = vand.u32 %v1755, 4294901760
        %2327 = vmatmul.mubr.f32.gmra.mrb[0].mxu0 %v2326
        %v2328 = vpop.f32.mrb[0].mxu0
        %v2329 = vadd.f32 %v2239, %v2328
        %v2330 = vpop.f32.mrb[0].mxu0
        %2331 = vdwg.mxu0
        %v2332 = vlaneseq
        %v2333 = vshrl.u32 %v2332, 7
        %v2334 = vsub.s32 0, %v2333
        %v2335 = vrot.slane %v1710, %v2334
        %v2336 = vmul.f32 %v1699, %v2335
        %v2337 = vmul.f32 %v1700, %v2335
        %v2338 = vmul.f32 %v2336, 1.442695
        %v2339 = vpow.pop %v2338
        %v2340 = vmul.f32 %v2337, 1.442695
        %v2341 = vpow.pop %v2340
        %v2342 = vmul.f32 %v2339, %v1708
        %v2343 = vmul.f32 %v2341, %v1709
        %v2344 = vlaneseq
        %v2345 = vshrl.u32 %v2344, 7
        %v2346 = vsub.s32 0, %v2345
        %v2347 = vrot.slane %v1711, %v2346
        %2349 = vset.pattern.permute.xlu0 0
        %2350 = vperm.xlu0 %2349, %v2311
        %v2351 = vpop.permute.xlu0 %2350
        %2354 = vset.pattern.permute.xlu0 0
        %2355 = vperm.xlu0 %2354, %v2317
        %v2356 = vpop.permute.xlu0 %2355
        %v2358 = vmul.f32 %v2347, %v2351
        %v2359 = vmul.f32 %v2347, %v2356
        %v2360 = vadd.f32 %v2342, %v2358
        %v2361 = vadd.f32 %v2343, %v2359
        %2363 = vset.pattern.permute.xlu0 0
        %2364 = vperm.xlu0 %2363, %v2323
        %v2365 = vpop.permute.xlu0 %2364
        %2368 = vset.pattern.permute.xlu0 0
        %2369 = vperm.xlu0 %2368, %v2329
        %v2370 = vpop.permute.xlu0 %2369
        %v2372 = vmul.f32 %v2360, %v2365
        %v2373 = vmul.f32 %v2361, %v2370
        %v2374 = vsel %vm550, %v2372, 0.0
        %v2375 = vsel %vm550, %v2373, 0.0
        %v2376 = vadd.f32 %v2374, %v2375
        %v2377 = vrot.slane %v2376, 4
        %v2378 = vadd.f32 %v2376, %v2377
        %v2379 = vrot.slane %v2378, 2
        %v2380 = vadd.f32 %v2378, %v2379
        %v2381 = vrot.slane %v2380, 1
        %v2382 = vadd.f32 %v2380, %v2381
        %v2383 = vlaneseq
        %v2384 = vshrl.u32 %v2383, 7
        %v2385 = vsub.s32 1, %v2384
        %v2386 = vrot.slane %v1710, %v2385
        %v2387 = vmul.f32 %v1699, %v2386
        %v2388 = vmul.f32 %v1700, %v2386
        %v2389 = vmul.f32 %v2387, 1.442695
        %v2390 = vpow.pop %v2389
        %v2391 = vmul.f32 %v2388, 1.442695
        %v2392 = vpow.pop %v2391
        %v2393 = vmul.f32 %v2390, %v2360
        %v2394 = vmul.f32 %v2392, %v2361
        %v2395 = vlaneseq
        %v2396 = vshrl.u32 %v2395, 7
        %v2397 = vsub.s32 1, %v2396
        %v2398 = vrot.slane %v1711, %v2397
        %2399 = vset.pattern.permute.xlu0 1
        %2400 = vperm.xlu0 %2399, %v2311
        %v2401 = vpop.permute.xlu0 %2400
        %2403 = vset.pattern.permute.xlu0 1
        %2404 = vperm.xlu0 %2403, %v2317
        %v2405 = vpop.permute.xlu0 %2404
        %v2407 = vmul.f32 %v2398, %v2401
        %v2408 = vmul.f32 %v2398, %v2405
        %v2409 = vadd.f32 %v2393, %v2407
        %v2410 = vadd.f32 %v2394, %v2408
        %2411 = vset.pattern.permute.xlu0 1
        %2412 = vperm.xlu0 %2411, %v2323
        %v2413 = vpop.permute.xlu0 %2412
        %2415 = vset.pattern.permute.xlu0 1
        %2416 = vperm.xlu0 %2415, %v2329
        %v2417 = vpop.permute.xlu0 %2416
        %v2419 = vmul.f32 %v2409, %v2413
        %v2420 = vmul.f32 %v2410, %v2417
        %v2421 = vsel %vm550, %v2419, 0.0
        %v2422 = vsel %vm550, %v2420, 0.0
        %v2423 = vadd.f32 %v2421, %v2422
        %v2424 = vrot.slane %v2423, 4
        %v2425 = vadd.f32 %v2423, %v2424
        %v2426 = vrot.slane %v2425, 2
        %v2427 = vadd.f32 %v2425, %v2426
        %v2428 = vrot.slane %v2427, 1
        %v2429 = vadd.f32 %v2427, %v2428
        %v2430 = vlaneseq
        %v2431 = vshrl.u32 %v2430, 7
        %v2432 = vsub.s32 2, %v2431
        %v2433 = vrot.slane %v1710, %v2432
        %v2434 = vmul.f32 %v1699, %v2433
        %v2435 = vmul.f32 %v1700, %v2433
        %v2436 = vmul.f32 %v2434, 1.442695
        %v2437 = vpow.pop %v2436
        %v2438 = vmul.f32 %v2435, 1.442695
        %v2439 = vpow.pop %v2438
        %v2440 = vmul.f32 %v2437, %v2409
        %v2441 = vmul.f32 %v2439, %v2410
        %v2442 = vlaneseq
        %v2443 = vshrl.u32 %v2442, 7
        %v2444 = vsub.s32 2, %v2443
        %v2445 = vrot.slane %v1711, %v2444
        %2446 = vset.pattern.permute.xlu0 2
        %2447 = vperm.xlu0 %2446, %v2311
        %v2448 = vpop.permute.xlu0 %2447
        %2450 = vset.pattern.permute.xlu0 2
        %2451 = vperm.xlu0 %2450, %v2317
        %v2452 = vpop.permute.xlu0 %2451
        %v2454 = vmul.f32 %v2445, %v2448
        %v2455 = vmul.f32 %v2445, %v2452
        %v2456 = vadd.f32 %v2440, %v2454
        %v2457 = vadd.f32 %v2441, %v2455
        %2458 = vset.pattern.permute.xlu0 2
        %2459 = vperm.xlu0 %2458, %v2323
        %v2460 = vpop.permute.xlu0 %2459
        %2462 = vset.pattern.permute.xlu0 2
        %2463 = vperm.xlu0 %2462, %v2329
        %v2464 = vpop.permute.xlu0 %2463
        %v2466 = vmul.f32 %v2456, %v2460
        %v2467 = vmul.f32 %v2457, %v2464
        %v2468 = vsel %vm550, %v2466, 0.0
        %v2469 = vsel %vm550, %v2467, 0.0
        %v2470 = vadd.f32 %v2468, %v2469
        %v2471 = vrot.slane %v2470, 4
        %v2472 = vadd.f32 %v2470, %v2471
        %v2473 = vrot.slane %v2472, 2
        %v2474 = vadd.f32 %v2472, %v2473
        %v2475 = vrot.slane %v2474, 1
        %v2476 = vadd.f32 %v2474, %v2475
        %v2477 = vlaneseq
        %v2478 = vshrl.u32 %v2477, 7
        %v2479 = vsub.s32 3, %v2478
        %v2480 = vrot.slane %v1710, %v2479
        %v2481 = vmul.f32 %v1699, %v2480
        %v2482 = vmul.f32 %v1700, %v2480
        %v2483 = vmul.f32 %v2481, 1.442695
        %v2484 = vpow.pop %v2483
        %v2485 = vmul.f32 %v2482, 1.442695
        %v2486 = vpow.pop %v2485
        %v2487 = vmul.f32 %v2484, %v2456
        %v2488 = vmul.f32 %v2486, %v2457
        %v2489 = vlaneseq
        %v2490 = vshrl.u32 %v2489, 7
        %v2491 = vsub.s32 3, %v2490
        %v2492 = vrot.slane %v1711, %v2491
        %2493 = vset.pattern.permute.xlu0 3
        %2494 = vperm.xlu0 %2493, %v2311
        %v2495 = vpop.permute.xlu0 %2494
        %2497 = vset.pattern.permute.xlu0 3
        %2498 = vperm.xlu0 %2497, %v2317
        %v2499 = vpop.permute.xlu0 %2498
        %v2501 = vmul.f32 %v2492, %v2495
        %v2502 = vmul.f32 %v2492, %v2499
        %v2503 = vadd.f32 %v2487, %v2501
        %v2504 = vadd.f32 %v2488, %v2502
        %2505 = vset.pattern.permute.xlu0 3
        %2506 = vperm.xlu0 %2505, %v2323
        %v2507 = vpop.permute.xlu0 %2506
        %2509 = vset.pattern.permute.xlu0 3
        %2510 = vperm.xlu0 %2509, %v2329
        %v2511 = vpop.permute.xlu0 %2510
        %v2513 = vmul.f32 %v2503, %v2507
        %v2514 = vmul.f32 %v2504, %v2511
        %v2515 = vsel %vm550, %v2513, 0.0
        %v2516 = vsel %vm550, %v2514, 0.0
        %v2517 = vadd.f32 %v2515, %v2516
        %v2518 = vrot.slane %v2517, 4
        %v2519 = vadd.f32 %v2517, %v2518
        %v2520 = vrot.slane %v2519, 2
        %v2521 = vadd.f32 %v2519, %v2520
        %v2522 = vrot.slane %v2521, 1
        %v2523 = vadd.f32 %v2521, %v2522
        %v2524 = vlaneseq
        %v2525 = vshrl.u32 %v2524, 7
        %v2526 = vsub.s32 4, %v2525
        %v2527 = vrot.slane %v1710, %v2526
        %v2528 = vmul.f32 %v1699, %v2527
        %v2529 = vmul.f32 %v1700, %v2527
        %v2530 = vmul.f32 %v2528, 1.442695
        %v2531 = vpow.pop %v2530
        %v2532 = vmul.f32 %v2529, 1.442695
        %v2533 = vpow.pop %v2532
        %v2534 = vmul.f32 %v2531, %v2503
        %v2535 = vmul.f32 %v2533, %v2504
        %v2536 = vlaneseq
        %v2537 = vshrl.u32 %v2536, 7
        %v2538 = vsub.s32 4, %v2537
        %v2539 = vrot.slane %v1711, %v2538
        %2540 = vset.pattern.permute.xlu0 4
        %2541 = vperm.xlu0 %2540, %v2311
        %v2542 = vpop.permute.xlu0 %2541
        %2544 = vset.pattern.permute.xlu0 4
        %2545 = vperm.xlu0 %2544, %v2317
        %v2546 = vpop.permute.xlu0 %2545
        %v2548 = vmul.f32 %v2539, %v2542
        %v2549 = vmul.f32 %v2539, %v2546
        %v2550 = vadd.f32 %v2534, %v2548
        %v2551 = vadd.f32 %v2535, %v2549
        %2552 = vset.pattern.permute.xlu0 4
        %2553 = vperm.xlu0 %2552, %v2323
        %v2554 = vpop.permute.xlu0 %2553
        %2556 = vset.pattern.permute.xlu0 4
        %2557 = vperm.xlu0 %2556, %v2329
        %v2558 = vpop.permute.xlu0 %2557
        %v2560 = vmul.f32 %v2550, %v2554
        %v2561 = vmul.f32 %v2551, %v2558
        %v2562 = vsel %vm550, %v2560, 0.0
        %v2563 = vsel %vm550, %v2561, 0.0
        %v2564 = vadd.f32 %v2562, %v2563
        %v2565 = vrot.slane %v2564, 4
        %v2566 = vadd.f32 %v2564, %v2565
        %v2567 = vrot.slane %v2566, 2
        %v2568 = vadd.f32 %v2566, %v2567
        %v2569 = vrot.slane %v2568, 1
        %v2570 = vadd.f32 %v2568, %v2569
        %v2571 = vlaneseq
        %v2572 = vshrl.u32 %v2571, 7
        %v2573 = vsub.s32 5, %v2572
        %v2574 = vrot.slane %v1710, %v2573
        %v2575 = vmul.f32 %v1699, %v2574
        %v2576 = vmul.f32 %v1700, %v2574
        %v2577 = vmul.f32 %v2575, 1.442695
        %v2578 = vpow.pop %v2577
        %v2579 = vmul.f32 %v2576, 1.442695
        %v2580 = vpow.pop %v2579
        %v2581 = vmul.f32 %v2578, %v2550
        %v2582 = vmul.f32 %v2580, %v2551
        %v2583 = vlaneseq
        %v2584 = vshrl.u32 %v2583, 7
        %v2585 = vsub.s32 5, %v2584
        %v2586 = vrot.slane %v1711, %v2585
        %2587 = vset.pattern.permute.xlu0 5
        %2588 = vperm.xlu0 %2587, %v2311
        %v2589 = vpop.permute.xlu0 %2588
        %2591 = vset.pattern.permute.xlu0 5
        %2592 = vperm.xlu0 %2591, %v2317
        %v2593 = vpop.permute.xlu0 %2592
        %v2595 = vmul.f32 %v2586, %v2589
        %v2596 = vmul.f32 %v2586, %v2593
        %v2597 = vadd.f32 %v2581, %v2595
        %v2598 = vadd.f32 %v2582, %v2596
        %2599 = vset.pattern.permute.xlu0 5
        %2600 = vperm.xlu0 %2599, %v2323
        %v2601 = vpop.permute.xlu0 %2600
        %2603 = vset.pattern.permute.xlu0 5
        %2604 = vperm.xlu0 %2603, %v2329
        %v2605 = vpop.permute.xlu0 %2604
        %v2607 = vmul.f32 %v2597, %v2601
        %v2608 = vmul.f32 %v2598, %v2605
        %v2609 = vsel %vm550, %v2607, 0.0
        %v2610 = vsel %vm550, %v2608, 0.0
        %v2611 = vadd.f32 %v2609, %v2610
        %v2612 = vrot.slane %v2611, 4
        %v2613 = vadd.f32 %v2611, %v2612
        %v2614 = vrot.slane %v2613, 2
        %v2615 = vadd.f32 %v2613, %v2614
        %v2616 = vrot.slane %v2615, 1
        %v2617 = vadd.f32 %v2615, %v2616
        %v2618 = vlaneseq
        %v2619 = vshrl.u32 %v2618, 7
        %v2620 = vsub.s32 6, %v2619
        %v2621 = vrot.slane %v1710, %v2620
        %v2622 = vmul.f32 %v1699, %v2621
        %v2623 = vmul.f32 %v1700, %v2621
        %v2624 = vmul.f32 %v2622, 1.442695
        %v2625 = vpow.pop %v2624
        %v2626 = vmul.f32 %v2623, 1.442695
        %v2627 = vpow.pop %v2626
        %v2628 = vmul.f32 %v2625, %v2597
        %v2629 = vmul.f32 %v2627, %v2598
        %v2630 = vlaneseq
        %v2631 = vshrl.u32 %v2630, 7
        %v2632 = vsub.s32 6, %v2631
        %v2633 = vrot.slane %v1711, %v2632
        %2634 = vset.pattern.permute.xlu0 6
        %2635 = vperm.xlu0 %2634, %v2311
        %v2636 = vpop.permute.xlu0 %2635
        %2638 = vset.pattern.permute.xlu0 6
        %2639 = vperm.xlu0 %2638, %v2317
        %v2640 = vpop.permute.xlu0 %2639
        %v2642 = vmul.f32 %v2633, %v2636
        %v2643 = vmul.f32 %v2633, %v2640
        %v2644 = vadd.f32 %v2628, %v2642
        %v2645 = vadd.f32 %v2629, %v2643
        %2646 = vset.pattern.permute.xlu0 6
        %2647 = vperm.xlu0 %2646, %v2323
        %v2648 = vpop.permute.xlu0 %2647
        %2650 = vset.pattern.permute.xlu0 6
        %2651 = vperm.xlu0 %2650, %v2329
        %v2652 = vpop.permute.xlu0 %2651
        %v2654 = vmul.f32 %v2644, %v2648
        %v2655 = vmul.f32 %v2645, %v2652
        %v2656 = vsel %vm550, %v2654, 0.0
        %v2657 = vsel %vm550, %v2655, 0.0
        %v2658 = vadd.f32 %v2656, %v2657
        %v2659 = vrot.slane %v2658, 4
        %v2660 = vadd.f32 %v2658, %v2659
        %v2661 = vrot.slane %v2660, 2
        %v2662 = vadd.f32 %v2660, %v2661
        %v2663 = vrot.slane %v2662, 1
        %v2664 = vadd.f32 %v2662, %v2663
        %v2665 = vlaneseq
        %v2666 = vshrl.u32 %v2665, 7
        %v2667 = vsub.s32 7, %v2666
        %v2668 = vrot.slane %v1710, %v2667
        %v2669 = vmul.f32 %v1699, %v2668
        %v2670 = vmul.f32 %v1700, %v2668
        %v2671 = vmul.f32 %v2669, 1.442695
        %v2672 = vpow.pop %v2671
        %v2673 = vmul.f32 %v2670, 1.442695
        %v2674 = vpow.pop %v2673
        %v2675 = vmul.f32 %v2672, %v2644
        %v2676 = vmul.f32 %v2674, %v2645
        %v2677 = vlaneseq
        %v2678 = vshrl.u32 %v2677, 7
        %v2679 = vsub.s32 7, %v2678
        %v2680 = vrot.slane %v1711, %v2679
        %2681 = vset.pattern.permute.xlu0 7
        %2682 = vperm.xlu0 %2681, %v2311
        %v2683 = vpop.permute.xlu0 %2682
        %2685 = vset.pattern.permute.xlu0 7
        %2686 = vperm.xlu0 %2685, %v2317
        %v2687 = vpop.permute.xlu0 %2686
        %v2689 = vmul.f32 %v2680, %v2683
        %v2690 = vmul.f32 %v2680, %v2687
        %v2691 = vadd.f32 %v2675, %v2689
        %v2692 = vadd.f32 %v2676, %v2690
        %2693 = vset.pattern.permute.xlu0 7
        %2694 = vperm.xlu0 %2693, %v2323
        %v2695 = vpop.permute.xlu0 %2694
        %2697 = vset.pattern.permute.xlu0 7
        %2698 = vperm.xlu0 %2697, %v2329
        %v2699 = vpop.permute.xlu0 %2698
        %v2701 = vmul.f32 %v2691, %v2695
        %v2702 = vmul.f32 %v2692, %v2699
        %v2703 = vsel %vm550, %v2701, 0.0
        %v2704 = vsel %vm550, %v2702, 0.0
        %v2705 = vadd.f32 %v2703, %v2704
        %v2706 = vrot.slane %v2705, 4
        %v2707 = vadd.f32 %v2705, %v2706
        %v2708 = vrot.slane %v2707, 2
        %v2709 = vadd.f32 %v2707, %v2708
        %v2710 = vrot.slane %v2709, 1
        %v2711 = vadd.f32 %v2709, %v2710
        %vm2712 = vcmask 1040384
        %v2713 = vsel %vm2712, %v2382, %v2429
        %vm2714 = vcmask 1041408
        %v2715 = vsel %vm2714, %v2713, %v2476
        %vm2716 = vcmask 1042432
        %v2717 = vsel %vm2716, %v2715, %v2523
        %vm2718 = vcmask 1043456
        %v2719 = vsel %vm2718, %v2717, %v2570
        %vm2720 = vcmask 1044480
        %v2721 = vsel %vm2720, %v2719, %v2617
        %vm2722 = vcmask 1045504
        %v2723 = vsel %vm2722, %v2721, %v2664
        %vm2724 = vcmask 1046528
        %v2725 = vsel %vm2724, %v2723, %v2711
        %2726 = vst.msk [vmem:[#allocation7] sm:$0xff] %vm550, %v2725
        %2727 = vst.msk [vmem:[#allocation3] sm:$0xff] %vm550, %v2691
        %2728 = vst.msk [vmem:[#allocation3 + $0x8] sm:$0xff] %vm550, %v2692
        %v2729 = vld [vmem:[#allocation7] sm:$0xff]
        %v2730 = vld [vmem:[%s10] sm:$0x1]
        %v2732 = vlaneseq
        %v2733 = vshrl.u32 %v2732, 7
        %v2734 = vsub.s32 0, %v2733
        %v2735 = vrot.slane %v2730, %v2734
        %v2737 = vmul.f32 %v597, %v2735
        %v2738 = vadd.f32 %v2729, %v2737
        %v2739 = vxor.u32 %v545, 2147483648
        %v2740 = vmul.f32 %v2739, 1.442695
        %v2741 = vpow.pop %v2740
        %v2742 = vadd.f32 %v2741, 1.0
        %v2743 = vrcp.pop %v2742
        %v2744 = vmul.f32 1.0, %v2743
        %v2745 = vmul.f32 %v545, %v2744
        %2747 = vrot.lane.b32.xlu0 %v2745, 64
        %v2748 = vpop.permute.xlu0 %2747
        %v2750 = vmul.f32 %v2738, %v2748
        %v2751 = vld [vmem:[%s11] sm:$0xf]
        %v2752 = vld [vmem:[%s11 + $0x4] sm:$0xf]
        %v2753 = vld [vmem:[%s11 + $0x8] sm:$0xf]
        %v2754 = vld [vmem:[%s11 + $0xc] sm:$0xf]
        %v2755 = vld [vmem:[%s11 + $0x10] sm:$0xf]
        %v2756 = vld [vmem:[%s11 + $0x14] sm:$0xf]
        %v2757 = vld [vmem:[%s11 + $0x18] sm:$0xf]
        %v2758 = vld [vmem:[%s11 + $0x1c] sm:$0xf]
        %v2759 = vpack.c.bf16 %v2750, %v2750
        %v2760 = vld [vmem:[%s12] sm:$0x1]
        %v2762 = vlaneseq
        %v2763 = vshrl.u32 %v2762, 7
        %v2764 = vsub.s32 0, %v2763
        %v2765 = vrot.slane %v2760, %v2764
        %v2775 = vunpack.c.l.b16 %v2751
        %v2776 = vunpack.c.l.b16 %v2752
        %v2777 = vunpack.c.l.b16 %v2753
        %v2778 = vunpack.c.l.b16 %v2754
        %v2779 = vunpack.c.l.b16 %v2755
        %v2780 = vunpack.c.l.b16 %v2756
        %v2781 = vunpack.c.l.b16 %v2757
        %v2782 = vunpack.c.l.b16 %v2758
        %v2783 = vpack.c.b16 %v2776, %v2775
        %v2784 = vpack.c.b16 %v2778, %v2777
        %v2785 = vpack.c.b16 %v2780, %v2779
        %v2786 = vpack.c.b16 %v2782, %v2781
        %v2792 = vsel %vm550, %v2759, 0
        %2794 = vmatprep.subr.bf16.mxu0 0
        %2795 = vmatpush1.bf16.msra.mxu0 %v2783
        %2796 = vmatprep.subr.bf16.mxu0 0
        %2797 = vmatpush1.bf16.msra.mxu0 %v2784
        %2798 = vmatprep.subr.bf16.mxu0 0
        %2799 = vmatpush1.bf16.msra.mxu0 %v2785
        %2800 = vmatprep.subr.bf16.mxu0 0
        %2801 = vmatpush1.bf16.msra.mxu0 %v2786
        %2802 = vmatprep.subr.bf16.mxu0 0
        %2803 = vmatpush1.bf16.msra.mxu0 0
        %2804 = vmatprep.subr.bf16.mxu0 0
        %2805 = vmatpush1.bf16.msra.mxu0 0
        %2806 = vmatprep.subr.bf16.mxu0 0
        %2807 = vmatpush1.bf16.msra.mxu0 0
        %2808 = vmatprep.subr.bf16.mxu0 0
        %2809 = vmatpush1.bf16.msra.mxu0 0
        %2810 = vmatprep.subr.bf16.mxu0 0
        %2811 = vmatpush1.bf16.msra.mxu0 0
        %2812 = vmatprep.subr.bf16.mxu0 0
        %2813 = vmatpush1.bf16.msra.mxu0 0
        %2814 = vmatprep.subr.bf16.mxu0 0
        %2815 = vmatpush1.bf16.msra.mxu0 0
        %2816 = vmatprep.subr.bf16.mxu0 0
        %2817 = vmatpush1.bf16.msra.mxu0 0
        %2818 = vmatprep.subr.bf16.mxu0 0
        %2819 = vmatpush1.bf16.msra.mxu0 0
        %2820 = vmatprep.subr.bf16.mxu0 0
        %2821 = vmatpush1.bf16.msra.mxu0 0
        %2822 = vmatprep.subr.bf16.mxu0 0
        %2823 = vmatpush1.bf16.msra.mxu0 0
        %2824 = vmatprep.subr.bf16.mxu0 0
        %2825 = vmatpush1.bf16.msra.mxu0 0
        %2826 = vmatprep.mubr.bf16.mxu0 0
        %2827 = vmatmul.mubr.bf16.gmra.mrb[0].mxu0 %v2792
        %v2828 = vpop.f32.mrb[0].mxu0
        %v2829 = vadd.f32 %v2765, %v2828
        %v2830 = vpop.f32.mrb[0].mxu0
        %v2831 = vpop.f32.mrb[0].mxu0
        %v2832 = vpop.f32.mrb[0].mxu0
        %2833 = vdwg.mxu0
        %2834 = vst.msk [vmem:[%s455] sm:$0xff] %vm506, %v2829
        %s2835 = sand.u32 %s329, 1
        %s2836 = scalar_lea.sflag [#allocation9], %s2835
        %s2837 = sand.u32 %s329, 1
        %s2838 = smul.addr %s2837, 8
        %s2839 = scalar_lea.vmem [#allocation8], %s2838
        // Predicated region
        $region81: #{tpu_custom_call.1} parent=71 // pred_check
          %p2840 = pneg %p339
        $region82: #{tpu_custom_call.1} parent=71 // pred_check_branch
          %2842 = sbr.rel (%p2840) target = $region84
        $region83: #{tpu_custom_call.1} parent=71 // pred_region
          %s2844 = ssub.s32 128, 128
          %2845 = vsyncadd %s2836, %s2844
          %s2846 = smul.addr %s31, 2
          %s2847 = sadd.s32 %s32, %s2846
          %s2848 = smul.addr %s2847, 128
          %s2849 = scalar_lea.hbm %s13, %s2848
          %s2851 = sshll.u32 %s2839, 4
          %s2852 = int_to_ptr.vmem [resolvable:$true] %s2851
          %2854 = dma.vmem_to_hbm [thread:$0]  %s2852, 128, %s2849, %s2836
        $region84: #{tpu_custom_call.1} parent=71 // pred_fallthru
          _
      $region72: #{tpu_custom_call.1} parent=5 // pred_fallthru
        _
      %p2855 = scmp.le.s32.totalorder 2, %s22
      // Predicated region
      $region85: #{tpu_custom_call.1} parent=5 // pred_check
        %p2856 = pneg %p2855
      $region86: #{tpu_custom_call.1} parent=5 // pred_check_branch
        %2858 = sbr.rel (%p2856) target = $region88
      $region87: #{tpu_custom_call.1} parent=5 // pred_region
        %s2859 = ssub.s32 %s22, 2
        // Predicated region
        $region89: #{tpu_custom_call.1} parent=87 // pred_check
          %p2860 = pneg %p345
        $region90: #{tpu_custom_call.1} parent=87 // pred_check_branch
          %2862 = sbr.rel (%p2860) target = $region92
        $region91: #{tpu_custom_call.1} parent=87 // pred_region
          %s2863 = sand.u32 %s330, 1
          %s2864 = scalar_lea.sflag [#allocation9], %s2863
          %s2865 = sand.u32 %s330, 1
          %s2866 = smul.addr %s2865, 8
          %s2867 = scalar_lea.vmem [#allocation8], %s2866
          %2868 = dma.done %s2864, 128
        $region92: #{tpu_custom_call.1} parent=87 // pred_fallthru
          _
      $region88: #{tpu_custom_call.1} parent=5 // pred_fallthru
        _
    $region6: #{tpu_custom_call.1} parent=1 // loop_footer
      %s26 = sadd.s32 1, %s22
    $region7: #{tpu_custom_call.1} parent=1 // loop_footer_branch
      %21 = sbr.rel target = $region3
    $region8: #{tpu_custom_call.1} parent=1 // loop_exit
      _
    %2869 = vsyncpa [#allocation9], 1
    %s2870 = scalar_lea.sflag [#allocation9], 1
    %2871 = vsyncpa %s2870, 1

</llo_original>
